<compile_context>
chip_gen: v6e
topology: v6e:2x2x1
jax: 0.10.0
libtpu: 0.0.40
codegen_flags: <defaults>
</compile_context>

<pallas_src>
import functools
import math

import jax
import jax.numpy as jnp
from jax.experimental import pallas as pl
from jax.experimental.pallas import tpu as pltpu

SEQ_LEN = 20
RNN_HID_SIZE = 10   # args.air config
NFEATURES = 14      # args.air config
VAR = 2             # args.air config


def rits2_kernel(values_ref, masks_ref, deltas_ref,
                 w_td_sum_ref, b_td_ref, w_reg_ref, b_reg_ref,
                 w_ih_x_ref, w_ih_m_ref, w_ih_var_ref, w_hh_ref, b_gate_ref,
                 loss_ref, imp_ref, *, reverse):
    seq, B, NF = values_ref.shape
    H = w_hh_ref.shape[0]
    G = 4 * H

    # Load the small parameter tiles once and hoist every broadcast out of the loop.
    w_ih_x_T = w_ih_x_ref[...]                                   # (NF, 4H)
    w_hh_T = w_hh_ref[...]                                       # (H, 4H)
    w_td_sum_b = jnp.broadcast_to(w_td_sum_ref[...], (B, H))     # rowsum(W_td)
    b_td_b = jnp.broadcast_to(b_td_ref[...], (B, H))
    w_reg_b = jnp.broadcast_to(w_reg_ref[...], (B, H))
    b_reg_b = jnp.broadcast_to(b_reg_ref[...], (B, 1))
    w_m_b = jnp.broadcast_to(w_ih_m_ref[...], (B, G))            # W_ih[:, NF]
    w_var_b = jnp.broadcast_to(w_ih_var_ref[...], (B, G))        # W_ih[:, VAR]
    b_gate_b = jnp.broadcast_to(b_gate_ref[...], (B, G))         # b_ih + b_hh

    h = jnp.zeros((B, H), jnp.float32)
    c = jnp.zeros((B, H), jnp.float32)
    loss = jnp.zeros((1, 1), jnp.float32)
    cols = []

    ts = range(seq - 1, -1, -1) if reverse else range(seq)
    for t in ts:                       # fully unrolled: t is a Python int (static slices)
        x = values_ref[t]              # (B, NF)
        m = masks_ref[t]               # (B, 1)
        d = deltas_ref[t]              # (B, 1)

        # Non-recurrent half of the gates: x @ W_ih[:, :NF]^T + m * W_ih[:, NF] + biases.
        # Independent of h/c, so the scheduler can overlap it with the recurrence.
        pre_g = (jnp.dot(x, w_ih_x_T, preferred_element_type=jnp.float32)
                 + m * w_m_b + b_gate_b)                                   # (B, 4H)

        # TemporalDecay without a matmul: d is scalar per sample, so
        # d_full @ W_td^T == d * rowsum(W_td).
        gamma = jnp.exp(-jnp.maximum(d * w_td_sum_b + b_td_b, 0.0))        # (B, H)
        h = h * gamma

        # Regression (output width 1): VPU multiply + lane reduce, no MXU round trip.
        x_h = jnp.sum(h * w_reg_b, axis=1, keepdims=True) + b_reg_b        # (B, 1)

        # Impute feature VAR: x[:, VAR] = x[:, VAR]*m + (1-m)*x_h
        xv_old = x[:, VAR:VAR + 1]                                         # (B, 1)
        xv_new = xv_old * m + (1.0 - m) * x_h                              # (B, 1)

        # Per-step masked L1 loss (torch uses the already-updated x[:, VAR]).
        num = jnp.sum(jnp.abs(xv_new - x_h) * m, keepdims=True)            # (1, 1)
        den = jnp.sum(m, keepdims=True) + 1e-5                             # (1, 1)
        loss = loss + num * pl.reciprocal(den, approx=True)

        # LSTMCell: the imputation overwrite becomes a rank-1 correction on the gates;
        # the only matmul sitting on the recurrence is h @ W_hh^T.
        gates = (pre_g + (xv_new - xv_old) * w_var_b
                 + jnp.dot(h, w_hh_T, preferred_element_type=jnp.float32)) # (B, 4H)
        sig = jax.nn.sigmoid(gates)    # one EUP pass over the whole tile
        th = jnp.tanh(gates)
        i_g = sig[:, 0:H]
        f_g = sig[:, H:2 * H]
        g_g = th[:, 2 * H:3 * H]
        o_g = sig[:, 3 * H:4 * H]
        c = f_g * c + i_g * g_g
        h = o_g * jnp.tanh(c)

        cols.append(xv_new)            # appended in iteration order (like torch)

    loss_ref[...] = loss
    imp_ref[...] = jnp.concatenate(cols, axis=1)   # single lane-dense (B, S) store


def rits2_forward(values, masks, deltas, params, direct="forward"):
    B, S, NF = values.shape
    H = params["w_hh"].shape[1]
    G = 4 * H

    vals_t = jnp.transpose(values, (1, 0, 2)).astype(jnp.float32)             # (S, B, NF)
    masks_t = jnp.transpose(masks, (1, 0))[:, :, None].astype(jnp.float32)    # (S, B, 1)
    deltas_t = jnp.transpose(deltas, (1, 0))[:, :, None].astype(jnp.float32)  # (S, B, 1)

    f32 = lambda a: a.astype(jnp.float32)
    w_ih = f32(params["w_ih"])                                  # (4H, NF+1)
    # Re-parameterized / pre-transposed weights (all (in, out) layout; no in-kernel .T).
    w_td_sum = jnp.sum(f32(params["w_td"]), axis=1).reshape(1, H)
    b_td = f32(params["b_td"]).reshape(1, H)
    w_reg = f32(params["w_reg"]).reshape(1, H)
    b_reg = f32(params["b_reg"]).reshape(1, 1)
    w_ih_x_T = w_ih[:, :NF].T                                   # (NF, 4H)
    w_ih_m = w_ih[:, NF].reshape(1, G)                          # mask column
    w_ih_var = w_ih[:, VAR].reshape(1, G)                       # imputed-feature column
    w_hh_T = f32(params["w_hh"]).T                              # (H, 4H)
    b_gate = (f32(params["b_ih"]) + f32(params["b_hh"])).reshape(1, G)

    kernel = functools.partial(rits2_kernel, reverse=(direct == "backward"))
    vmem = pl.BlockSpec(memory_space=pltpu.MemorySpace.VMEM)

    loss_sum, imp = pl.pallas_call(
        kernel,
        out_shape=(jax.ShapeDtypeStruct((1, 1), jnp.float32),
                   jax.ShapeDtypeStruct((B, S), jnp.float32)),
        in_specs=[vmem] * 12,
        out_specs=(vmem, vmem),
    )(vals_t, masks_t, deltas_t,
      w_td_sum, b_td, w_reg, b_reg,
      w_ih_x_T, w_ih_m, w_ih_var, w_hh_T, b_gate)

    loss = loss_sum[0, 0] / S
    return {"loss": loss, "imputations": imp}


def rits2_reference(values, masks, deltas, params, direct="forward"):
    """Pure-JAX reference matching the PyTorch semantics (for validation)."""
    B, S, NF = values.shape
    H = params["w_hh"].shape[1]
    h = jnp.zeros((B, H), jnp.float32)
    c = jnp.zeros((B, H), jnp.float32)
    loss = jnp.float32(0.0)
    imps = []
    ts = range(S) if direct == "forward" else range(S - 1, -1, -1)
    for t in ts:
        x = values[:, t, :]
        m = masks[:, t]
        d = jnp.broadcast_to(deltas[:, t][:, None], (B, NF))
        gamma = jnp.exp(-jax.nn.relu(d @ params["w_td"].T + params["b_td"]))
        h = h * gamma
        x_h = h @ params["w_reg"].T + params["b_reg"]
        xv = x[:, VAR] * m + (1.0 - m) * x_h[:, 0]
        x_c = x.at[:, VAR].set(xv)
        loss = loss + jnp.sum(jnp.abs(xv - x_h[:, 0]) * m) / (jnp.sum(m) + 1e-5)
        inputs = jnp.concatenate([x_c, m[:, None]], axis=1)
        gates = inputs @ params["w_ih"].T + params["b_ih"] + h @ params["w_hh"].T + params["b_hh"]
        i_g = jax.nn.sigmoid(gates[:, :H])
        f_g = jax.nn.sigmoid(gates[:, H:2 * H])
        g_g = jnp.tanh(gates[:, 2 * H:3 * H])
        o_g = jax.nn.sigmoid(gates[:, 3 * H:])
        c = f_g * c + i_g * g_g
        h = o_g * jnp.tanh(c)
        imps.append(xv[:, None])
    return {"loss": loss / S, "imputations": jnp.concatenate(imps, axis=1)}


def init_params(key, nfeat, hid):
    stdv = 1.0 / math.sqrt(hid)
    ks = jax.random.split(key, 8)
    u = lambda k, shape: jax.random.uniform(k, shape, jnp.float32, -stdv, stdv)
    return {
        "w_td": u(ks[0], (hid, nfeat)),
        "b_td": u(ks[1], (hid,)),
        "w_reg": u(ks[2], (1, hid)),
        "b_reg": u(ks[3], (1,)),
        "w_ih": u(ks[4], (4 * hid, nfeat + 1)),
        "b_ih": u(ks[5], (4 * hid,)),
        "w_hh": u(ks[6], (4 * hid, hid)),
        "b_hh": u(ks[7], (4 * hid,)),
    }


if __name__ == "__main__":
    B = 2
    key = jax.random.PRNGKey(0)
    k_v, k_m, k_d, k_p = jax.random.split(key, 4)

    values = jax.random.normal(k_v, (B, SEQ_LEN, NFEATURES), jnp.float32)
    masks = (jax.random.uniform(k_m, (B, SEQ_LEN)) > 0.3).astype(jnp.float32)
    deltas = jax.random.uniform(k_d, (B, SEQ_LEN), jnp.float32, 0.0, 2.0)
    params = init_params(k_p, NFEATURES, RNN_HID_SIZE)

    out = rits2_forward(values, masks, deltas, params, direct="forward")
    jax.block_until_ready(out)

    ref = rits2_reference(values, masks, deltas, params, direct="forward")
    assert jnp.allclose(out["loss"], ref["loss"], atol=1e-3, rtol=1e-3)
    assert jnp.allclose(out["imputations"], ref["imputations"], atol=1e-3, rtol=1e-3)

    print("KERNEL_OK")
</pallas_src>

<mosaic_0001>
module attributes {stable_mosaic.version = 11 : i64} {
  func.func @rits2_kernel(%arg0: memref<20x2x14xf32, #tpu.memory_space<vmem>>, %arg1: memref<20x2x1xf32, #tpu.memory_space<vmem>>, %arg2: memref<20x2x1xf32, #tpu.memory_space<vmem>>, %arg3: memref<1x10xf32, #tpu.memory_space<vmem>>, %arg4: memref<1x10xf32, #tpu.memory_space<vmem>>, %arg5: memref<1x10xf32, #tpu.memory_space<vmem>>, %arg6: memref<1x1xf32, #tpu.memory_space<vmem>>, %arg7: memref<14x40xf32, #tpu.memory_space<vmem>>, %arg8: memref<1x40xf32, #tpu.memory_space<vmem>>, %arg9: memref<1x40xf32, #tpu.memory_space<vmem>>, %arg10: memref<10x40xf32, #tpu.memory_space<vmem>>, %arg11: memref<1x40xf32, #tpu.memory_space<vmem>>, %arg12: memref<1x1xf32, #tpu.memory_space<vmem>>, %arg13: memref<2x20xf32, #tpu.memory_space<vmem>>) attributes {dimension_semantics = [], scalar_prefetch = 0 : i64, scratch_operands = 0 : i64, tpu.core_type = #tpu.core_type<tc>} {
    %c0 = arith.constant 0 : index
    %c0_0 = arith.constant 0 : index
    %0 = vector.load %arg7[%c0, %c0_0] : memref<14x40xf32, #tpu.memory_space<vmem>>, vector<14x40xf32>
    %c0_1 = arith.constant 0 : index
    %c0_2 = arith.constant 0 : index
    %1 = vector.load %arg10[%c0_1, %c0_2] : memref<10x40xf32, #tpu.memory_space<vmem>>, vector<10x40xf32>
    %c0_3 = arith.constant 0 : index
    %c0_4 = arith.constant 0 : index
    %2 = vector.load %arg3[%c0_3, %c0_4] : memref<1x10xf32, #tpu.memory_space<vmem>>, vector<1x10xf32>
    %3 = vector.shape_cast %2 : vector<1x10xf32> to vector<1x10xf32>
    %4 = vector.broadcast %3 : vector<1x10xf32> to vector<2x10xf32>
    %c0_5 = arith.constant 0 : index
    %c0_6 = arith.constant 0 : index
    %5 = vector.load %arg4[%c0_5, %c0_6] : memref<1x10xf32, #tpu.memory_space<vmem>>, vector<1x10xf32>
    %6 = vector.shape_cast %5 : vector<1x10xf32> to vector<1x10xf32>
    %7 = vector.broadcast %6 : vector<1x10xf32> to vector<2x10xf32>
    %c0_7 = arith.constant 0 : index
    %c0_8 = arith.constant 0 : index
    %8 = vector.load %arg5[%c0_7, %c0_8] : memref<1x10xf32, #tpu.memory_space<vmem>>, vector<1x10xf32>
    %9 = vector.shape_cast %8 : vector<1x10xf32> to vector<1x10xf32>
    %10 = vector.broadcast %9 : vector<1x10xf32> to vector<2x10xf32>
    %c0_9 = arith.constant 0 : index
    %c0_10 = arith.constant 0 : index
    %11 = vector.load %arg6[%c0_9, %c0_10] : memref<1x1xf32, #tpu.memory_space<vmem>>, vector<1x1xf32>
    %12 = vector.shape_cast %11 : vector<1x1xf32> to vector<1x1xf32>
    %13 = vector.broadcast %12 : vector<1x1xf32> to vector<2x1xf32>
    %c0_11 = arith.constant 0 : index
    %c0_12 = arith.constant 0 : index
    %14 = vector.load %arg8[%c0_11, %c0_12] : memref<1x40xf32, #tpu.memory_space<vmem>>, vector<1x40xf32>
    %15 = vector.shape_cast %14 : vector<1x40xf32> to vector<1x40xf32>
    %16 = vector.broadcast %15 : vector<1x40xf32> to vector<2x40xf32>
    %c0_13 = arith.constant 0 : index
    %c0_14 = arith.constant 0 : index
    %17 = vector.load %arg9[%c0_13, %c0_14] : memref<1x40xf32, #tpu.memory_space<vmem>>, vector<1x40xf32>
    %18 = vector.shape_cast %17 : vector<1x40xf32> to vector<1x40xf32>
    %19 = vector.broadcast %18 : vector<1x40xf32> to vector<2x40xf32>
    %c0_15 = arith.constant 0 : index
    %c0_16 = arith.constant 0 : index
    %20 = vector.load %arg11[%c0_15, %c0_16] : memref<1x40xf32, #tpu.memory_space<vmem>>, vector<1x40xf32>
    %21 = vector.shape_cast %20 : vector<1x40xf32> to vector<1x40xf32>
    %22 = vector.broadcast %21 : vector<1x40xf32> to vector<2x40xf32>
    %cst = arith.constant 0.000000e+00 : f32
    %23 = vector.broadcast %cst : f32 to vector<2x10xf32>
    %cst_17 = arith.constant 0.000000e+00 : f32
    %24 = vector.broadcast %cst_17 : f32 to vector<2x10xf32>
    %cst_18 = arith.constant 0.000000e+00 : f32
    %25 = vector.broadcast %cst_18 : f32 to vector<1x1xf32>
    %c0_19 = arith.constant 0 : index
    %c0_20 = arith.constant 0 : index
    %c0_21 = arith.constant 0 : index
    %26 = vector.load %arg0[%c0_19, %c0_20, %c0_21] : memref<20x2x14xf32, #tpu.memory_space<vmem>>, vector<1x2x14xf32>
    %27 = vector.shape_cast %26 : vector<1x2x14xf32> to vector<2x14xf32>
    %c0_22 = arith.constant 0 : index
    %c0_23 = arith.constant 0 : index
    %c0_24 = arith.constant 0 : index
    %28 = vector.load %arg1[%c0_22, %c0_23, %c0_24] : memref<20x2x1xf32, #tpu.memory_space<vmem>>, vector<1x2x1xf32>
    %29 = vector.shape_cast %28 : vector<1x2x1xf32> to vector<2x1xf32>
    %c0_25 = arith.constant 0 : index
    %c0_26 = arith.constant 0 : index
    %c0_27 = arith.constant 0 : index
    %30 = vector.load %arg2[%c0_25, %c0_26, %c0_27] : memref<20x2x1xf32, #tpu.memory_space<vmem>>, vector<1x2x1xf32>
    %31 = vector.shape_cast %30 : vector<1x2x1xf32> to vector<2x1xf32>
    %cst_28 = arith.constant dense<0.000000e+00> : vector<2x40xf32>
    %32 = tpu.matmul %27, %0, %cst_28 {dimension_numbers = #tpu.dot_dimension_numbers<[1], [0], [0], [1], [0, 0, 1, 1], [], []>} : vector<2x14xf32>, vector<14x40xf32>, vector<2x40xf32> -> vector<2x40xf32>
    %33 = vector.broadcast %29 : vector<2x1xf32> to vector<2x40xf32>
    %34 = arith.mulf %33, %16 : vector<2x40xf32>
    %35 = arith.addf %32, %34 : vector<2x40xf32>
    %36 = arith.addf %35, %22 : vector<2x40xf32>
    %37 = vector.broadcast %31 : vector<2x1xf32> to vector<2x10xf32>
    %38 = arith.mulf %37, %4 : vector<2x10xf32>
    %39 = arith.addf %38, %7 : vector<2x10xf32>
    %cst_29 = arith.constant 0.000000e+00 : f32
    %40 = vector.broadcast %cst_29 : f32 to vector<2x10xf32>
    %41 = arith.maximumf %39, %40 : vector<2x10xf32>
    %cst_30 = arith.constant 0.000000e+00 : f32
    %42 = vector.broadcast %cst_30 : f32 to vector<2x10xf32>
    %43 = arith.subf %42, %41 : vector<2x10xf32>
    %44 = math.exp %43 : vector<2x10xf32>
    %45 = arith.mulf %23, %44 : vector<2x10xf32>
    %46 = arith.mulf %45, %10 : vector<2x10xf32>
    %cst_31 = arith.constant dense<0.000000e+00> : vector<2xf32>
    %47 = vector.multi_reduction <add>, %46, %cst_31 [1] : vector<2x10xf32> to vector<2xf32>
    %48 = vector.shape_cast %47 : vector<2xf32> to vector<2x1xf32>
    %49 = arith.addf %48, %13 : vector<2x1xf32>
    %50 = vector.extract_strided_slice %27 {offsets = [0, 2], sizes = [2, 1], strides = [1, 1]} : vector<2x14xf32> to vector<2x1xf32>
    %51 = arith.mulf %50, %29 : vector<2x1xf32>
    %cst_32 = arith.constant 1.000000e+00 : f32
    %52 = vector.broadcast %cst_32 : f32 to vector<2x1xf32>
    %53 = arith.subf %52, %29 : vector<2x1xf32>
    %54 = arith.mulf %53, %49 : vector<2x1xf32>
    %55 = arith.addf %51, %54 : vector<2x1xf32>
    %56 = arith.subf %55, %49 : vector<2x1xf32>
    %57 = math.absf %56 : vector<2x1xf32>
    %58 = arith.mulf %57, %29 : vector<2x1xf32>
    %59 = vector.shape_cast %58 : vector<2x1xf32> to vector<1x2x1xf32>
    %cst_33 = arith.constant dense<0.000000e+00> : vector<1xf32>
    %60 = vector.multi_reduction <add>, %59, %cst_33 [1, 2] : vector<1x2x1xf32> to vector<1xf32>
    %61 = vector.shape_cast %60 : vector<1xf32> to vector<1x1x1xf32>
    %62 = vector.extract %61[0, 0, 0] : f32 from vector<1x1x1xf32>
    %63 = vector.broadcast %62 : f32 to vector<1x1xf32>
    %64 = vector.shape_cast %29 : vector<2x1xf32> to vector<1x2x1xf32>
    %cst_34 = arith.constant dense<0.000000e+00> : vector<1xf32>
    %65 = vector.multi_reduction <add>, %64, %cst_34 [1, 2] : vector<1x2x1xf32> to vector<1xf32>
    %66 = vector.shape_cast %65 : vector<1xf32> to vector<1x1x1xf32>
    %67 = vector.extract %66[0, 0, 0] : f32 from vector<1x1x1xf32>
    %68 = vector.broadcast %67 : f32 to vector<1x1xf32>
    %cst_35 = arith.constant 9.99999974E-6 : f32
    %69 = vector.broadcast %cst_35 : f32 to vector<1x1xf32>
    %70 = arith.addf %68, %69 : vector<1x1xf32>
    %71 = tpu.reciprocal %70 {approx = true} : vector<1x1xf32> -> vector<1x1xf32>
    %72 = arith.mulf %63, %71 : vector<1x1xf32>
    %73 = arith.addf %25, %72 : vector<1x1xf32>
    %74 = arith.subf %55, %50 : vector<2x1xf32>
    %75 = vector.broadcast %74 : vector<2x1xf32> to vector<2x40xf32>
    %76 = arith.mulf %75, %19 : vector<2x40xf32>
    %77 = arith.addf %36, %76 : vector<2x40xf32>
    %cst_36 = arith.constant dense<0.000000e+00> : vector<2x40xf32>
    %78 = tpu.matmul %45, %1, %cst_36 {dimension_numbers = #tpu.dot_dimension_numbers<[1], [0], [0], [1], [0, 0, 1, 1], [], []>} : vector<2x10xf32>, vector<10x40xf32>, vector<2x40xf32> -> vector<2x40xf32>
    %79 = arith.addf %77, %78 : vector<2x40xf32>
    %80 = arith.negf %79 : vector<2x40xf32>
    %81 = math.exp %80 : vector<2x40xf32>
    %cst_37 = arith.constant 1.000000e+00 : f32
    %82 = vector.broadcast %cst_37 : f32 to vector<2x40xf32>
    %83 = arith.addf %82, %81 : vector<2x40xf32>
    %84 = arith.divf %82, %83 : vector<2x40xf32>
    %85 = math.tanh %79 : vector<2x40xf32>
    %86 = vector.extract_strided_slice %84 {offsets = [0, 0], sizes = [2, 10], strides = [1, 1]} : vector<2x40xf32> to vector<2x10xf32>
    %87 = vector.extract_strided_slice %84 {offsets = [0, 10], sizes = [2, 10], strides = [1, 1]} : vector<2x40xf32> to vector<2x10xf32>
    %88 = vector.extract_strided_slice %85 {offsets = [0, 20], sizes = [2, 10], strides = [1, 1]} : vector<2x40xf32> to vector<2x10xf32>
    %89 = vector.extract_strided_slice %84 {offsets = [0, 30], sizes = [2, 10], strides = [1, 1]} : vector<2x40xf32> to vector<2x10xf32>
    %90 = arith.mulf %87, %24 : vector<2x10xf32>
    %91 = arith.mulf %86, %88 : vector<2x10xf32>
    %92 = arith.addf %90, %91 : vector<2x10xf32>
    %93 = math.tanh %92 : vector<2x10xf32>
    %94 = arith.mulf %89, %93 : vector<2x10xf32>
    %c1 = arith.constant 1 : index
    %c0_38 = arith.constant 0 : index
    %c0_39 = arith.constant 0 : index
    %95 = vector.load %arg0[%c1, %c0_38, %c0_39] : memref<20x2x14xf32, #tpu.memory_space<vmem>>, vector<1x2x14xf32>
    %96 = vector.shape_cast %95 : vector<1x2x14xf32> to vector<2x14xf32>
    %c1_40 = arith.constant 1 : index
    %c0_41 = arith.constant 0 : index
    %c0_42 = arith.constant 0 : index
    %97 = vector.load %arg1[%c1_40, %c0_41, %c0_42] : memref<20x2x1xf32, #tpu.memory_space<vmem>>, vector<1x2x1xf32>
    %98 = vector.shape_cast %97 : vector<1x2x1xf32> to vector<2x1xf32>
    %c1_43 = arith.constant 1 : index
    %c0_44 = arith.constant 0 : index
    %c0_45 = arith.constant 0 : index
    %99 = vector.load %arg2[%c1_43, %c0_44, %c0_45] : memref<20x2x1xf32, #tpu.memory_space<vmem>>, vector<1x2x1xf32>
    %100 = vector.shape_cast %99 : vector<1x2x1xf32> to vector<2x1xf32>
    %cst_46 = arith.constant dense<0.000000e+00> : vector<2x40xf32>
    %101 = tpu.matmul %96, %0, %cst_46 {dimension_numbers = #tpu.dot_dimension_numbers<[1], [0], [0], [1], [0, 0, 1, 1], [], []>} : vector<2x14xf32>, vector<14x40xf32>, vector<2x40xf32> -> vector<2x40xf32>
    %102 = vector.broadcast %98 : vector<2x1xf32> to vector<2x40xf32>
    %103 = arith.mulf %102, %16 : vector<2x40xf32>
    %104 = arith.addf %101, %103 : vector<2x40xf32>
    %105 = arith.addf %104, %22 : vector<2x40xf32>
    %106 = vector.broadcast %100 : vector<2x1xf32> to vector<2x10xf32>
    %107 = arith.mulf %106, %4 : vector<2x10xf32>
    %108 = arith.addf %107, %7 : vector<2x10xf32>
    %cst_47 = arith.constant 0.000000e+00 : f32
    %109 = vector.broadcast %cst_47 : f32 to vector<2x10xf32>
    %110 = arith.maximumf %108, %109 : vector<2x10xf32>
    %cst_48 = arith.constant 0.000000e+00 : f32
    %111 = vector.broadcast %cst_48 : f32 to vector<2x10xf32>
    %112 = arith.subf %111, %110 : vector<2x10xf32>
    %113 = math.exp %112 : vector<2x10xf32>
    %114 = arith.mulf %94, %113 : vector<2x10xf32>
    %115 = arith.mulf %114, %10 : vector<2x10xf32>
    %cst_49 = arith.constant dense<0.000000e+00> : vector<2xf32>
    %116 = vector.multi_reduction <add>, %115, %cst_49 [1] : vector<2x10xf32> to vector<2xf32>
    %117 = vector.shape_cast %116 : vector<2xf32> to vector<2x1xf32>
    %118 = arith.addf %117, %13 : vector<2x1xf32>
    %119 = vector.extract_strided_slice %96 {offsets = [0, 2], sizes = [2, 1], strides = [1, 1]} : vector<2x14xf32> to vector<2x1xf32>
    %120 = arith.mulf %119, %98 : vector<2x1xf32>
    %cst_50 = arith.constant 1.000000e+00 : f32
    %121 = vector.broadcast %cst_50 : f32 to vector<2x1xf32>
    %122 = arith.subf %121, %98 : vector<2x1xf32>
    %123 = arith.mulf %122, %118 : vector<2x1xf32>
    %124 = arith.addf %120, %123 : vector<2x1xf32>
    %125 = arith.subf %124, %118 : vector<2x1xf32>
    %126 = math.absf %125 : vector<2x1xf32>
    %127 = arith.mulf %126, %98 : vector<2x1xf32>
    %128 = vector.shape_cast %127 : vector<2x1xf32> to vector<1x2x1xf32>
    %cst_51 = arith.constant dense<0.000000e+00> : vector<1xf32>
    %129 = vector.multi_reduction <add>, %128, %cst_51 [1, 2] : vector<1x2x1xf32> to vector<1xf32>
    %130 = vector.shape_cast %129 : vector<1xf32> to vector<1x1x1xf32>
    %131 = vector.extract %130[0, 0, 0] : f32 from vector<1x1x1xf32>
    %132 = vector.broadcast %131 : f32 to vector<1x1xf32>
    %133 = vector.shape_cast %98 : vector<2x1xf32> to vector<1x2x1xf32>
    %cst_52 = arith.constant dense<0.000000e+00> : vector<1xf32>
    %134 = vector.multi_reduction <add>, %133, %cst_52 [1, 2] : vector<1x2x1xf32> to vector<1xf32>
    %135 = vector.shape_cast %134 : vector<1xf32> to vector<1x1x1xf32>
    %136 = vector.extract %135[0, 0, 0] : f32 from vector<1x1x1xf32>
    %137 = vector.broadcast %136 : f32 to vector<1x1xf32>
    %cst_53 = arith.constant 9.99999974E-6 : f32
    %138 = vector.broadcast %cst_53 : f32 to vector<1x1xf32>
    %139 = arith.addf %137, %138 : vector<1x1xf32>
    %140 = tpu.reciprocal %139 {approx = true} : vector<1x1xf32> -> vector<1x1xf32>
    %141 = arith.mulf %132, %140 : vector<1x1xf32>
    %142 = arith.addf %73, %141 : vector<1x1xf32>
    %143 = arith.subf %124, %119 : vector<2x1xf32>
    %144 = vector.broadcast %143 : vector<2x1xf32> to vector<2x40xf32>
    %145 = arith.mulf %144, %19 : vector<2x40xf32>
    %146 = arith.addf %105, %145 : vector<2x40xf32>
    %cst_54 = arith.constant dense<0.000000e+00> : vector<2x40xf32>
    %147 = tpu.matmul %114, %1, %cst_54 {dimension_numbers = #tpu.dot_dimension_numbers<[1], [0], [0], [1], [0, 0, 1, 1], [], []>} : vector<2x10xf32>, vector<10x40xf32>, vector<2x40xf32> -> vector<2x40xf32>
    %148 = arith.addf %146, %147 : vector<2x40xf32>
    %149 = arith.negf %148 : vector<2x40xf32>
    %150 = math.exp %149 : vector<2x40xf32>
    %cst_55 = arith.constant 1.000000e+00 : f32
    %151 = vector.broadcast %cst_55 : f32 to vector<2x40xf32>
    %152 = arith.addf %151, %150 : vector<2x40xf32>
    %153 = arith.divf %151, %152 : vector<2x40xf32>
    %154 = math.tanh %148 : vector<2x40xf32>
    %155 = vector.extract_strided_slice %153 {offsets = [0, 0], sizes = [2, 10], strides = [1, 1]} : vector<2x40xf32> to vector<2x10xf32>
    %156 = vector.extract_strided_slice %153 {offsets = [0, 10], sizes = [2, 10], strides = [1, 1]} : vector<2x40xf32> to vector<2x10xf32>
    %157 = vector.extract_strided_slice %154 {offsets = [0, 20], sizes = [2, 10], strides = [1, 1]} : vector<2x40xf32> to vector<2x10xf32>
    %158 = vector.extract_strided_slice %153 {offsets = [0, 30], sizes = [2, 10], strides = [1, 1]} : vector<2x40xf32> to vector<2x10xf32>
    %159 = arith.mulf %156, %92 : vector<2x10xf32>
    %160 = arith.mulf %155, %157 : vector<2x10xf32>
    %161 = arith.addf %159, %160 : vector<2x10xf32>
    %162 = math.tanh %161 : vector<2x10xf32>
    %163 = arith.mulf %158, %162 : vector<2x10xf32>
    %c2 = arith.constant 2 : index
    %c0_56 = arith.constant 0 : index
    %c0_57 = arith.constant 0 : index
    %164 = vector.load %arg0[%c2, %c0_56, %c0_57] : memref<20x2x14xf32, #tpu.memory_space<vmem>>, vector<1x2x14xf32>
    %165 = vector.shape_cast %164 : vector<1x2x14xf32> to vector<2x14xf32>
    %c2_58 = arith.constant 2 : index
    %c0_59 = arith.constant 0 : index
    %c0_60 = arith.constant 0 : index
    %166 = vector.load %arg1[%c2_58, %c0_59, %c0_60] : memref<20x2x1xf32, #tpu.memory_space<vmem>>, vector<1x2x1xf32>
    %167 = vector.shape_cast %166 : vector<1x2x1xf32> to vector<2x1xf32>
    %c2_61 = arith.constant 2 : index
    %c0_62 = arith.constant 0 : index
    %c0_63 = arith.constant 0 : index
    %168 = vector.load %arg2[%c2_61, %c0_62, %c0_63] : memref<20x2x1xf32, #tpu.memory_space<vmem>>, vector<1x2x1xf32>
    %169 = vector.shape_cast %168 : vector<1x2x1xf32> to vector<2x1xf32>
    %cst_64 = arith.constant dense<0.000000e+00> : vector<2x40xf32>
    %170 = tpu.matmul %165, %0, %cst_64 {dimension_numbers = #tpu.dot_dimension_numbers<[1], [0], [0], [1], [0, 0, 1, 1], [], []>} : vector<2x14xf32>, vector<14x40xf32>, vector<2x40xf32> -> vector<2x40xf32>
    %171 = vector.broadcast %167 : vector<2x1xf32> to vector<2x40xf32>
    %172 = arith.mulf %171, %16 : vector<2x40xf32>
    %173 = arith.addf %170, %172 : vector<2x40xf32>
    %174 = arith.addf %173, %22 : vector<2x40xf32>
    %175 = vector.broadcast %169 : vector<2x1xf32> to vector<2x10xf32>
    %176 = arith.mulf %175, %4 : vector<2x10xf32>
    %177 = arith.addf %176, %7 : vector<2x10xf32>
    %cst_65 = arith.constant 0.000000e+00 : f32
    %178 = vector.broadcast %cst_65 : f32 to vector<2x10xf32>
    %179 = arith.maximumf %177, %178 : vector<2x10xf32>
    %cst_66 = arith.constant 0.000000e+00 : f32
    %180 = vector.broadcast %cst_66 : f32 to vector<2x10xf32>
    %181 = arith.subf %180, %179 : vector<2x10xf32>
    %182 = math.exp %181 : vector<2x10xf32>
    %183 = arith.mulf %163, %182 : vector<2x10xf32>
    %184 = arith.mulf %183, %10 : vector<2x10xf32>
    %cst_67 = arith.constant dense<0.000000e+00> : vector<2xf32>
    %185 = vector.multi_reduction <add>, %184, %cst_67 [1] : vector<2x10xf32> to vector<2xf32>
    %186 = vector.shape_cast %185 : vector<2xf32> to vector<2x1xf32>
    %187 = arith.addf %186, %13 : vector<2x1xf32>
    %188 = vector.extract_strided_slice %165 {offsets = [0, 2], sizes = [2, 1], strides = [1, 1]} : vector<2x14xf32> to vector<2x1xf32>
    %189 = arith.mulf %188, %167 : vector<2x1xf32>
    %cst_68 = arith.constant 1.000000e+00 : f32
    %190 = vector.broadcast %cst_68 : f32 to vector<2x1xf32>
    %191 = arith.subf %190, %167 : vector<2x1xf32>
    %192 = arith.mulf %191, %187 : vector<2x1xf32>
    %193 = arith.addf %189, %192 : vector<2x1xf32>
    %194 = arith.subf %193, %187 : vector<2x1xf32>
    %195 = math.absf %194 : vector<2x1xf32>
    %196 = arith.mulf %195, %167 : vector<2x1xf32>
    %197 = vector.shape_cast %196 : vector<2x1xf32> to vector<1x2x1xf32>
    %cst_69 = arith.constant dense<0.000000e+00> : vector<1xf32>
    %198 = vector.multi_reduction <add>, %197, %cst_69 [1, 2] : vector<1x2x1xf32> to vector<1xf32>
    %199 = vector.shape_cast %198 : vector<1xf32> to vector<1x1x1xf32>
    %200 = vector.extract %199[0, 0, 0] : f32 from vector<1x1x1xf32>
    %201 = vector.broadcast %200 : f32 to vector<1x1xf32>
    %202 = vector.shape_cast %167 : vector<2x1xf32> to vector<1x2x1xf32>
    %cst_70 = arith.constant dense<0.000000e+00> : vector<1xf32>
    %203 = vector.multi_reduction <add>, %202, %cst_70 [1, 2] : vector<1x2x1xf32> to vector<1xf32>
    %204 = vector.shape_cast %203 : vector<1xf32> to vector<1x1x1xf32>
    %205 = vector.extract %204[0, 0, 0] : f32 from vector<1x1x1xf32>
    %206 = vector.broadcast %205 : f32 to vector<1x1xf32>
    %cst_71 = arith.constant 9.99999974E-6 : f32
    %207 = vector.broadcast %cst_71 : f32 to vector<1x1xf32>
    %208 = arith.addf %206, %207 : vector<1x1xf32>
    %209 = tpu.reciprocal %208 {approx = true} : vector<1x1xf32> -> vector<1x1xf32>
    %210 = arith.mulf %201, %209 : vector<1x1xf32>
    %211 = arith.addf %142, %210 : vector<1x1xf32>
    %212 = arith.subf %193, %188 : vector<2x1xf32>
    %213 = vector.broadcast %212 : vector<2x1xf32> to vector<2x40xf32>
    %214 = arith.mulf %213, %19 : vector<2x40xf32>
    %215 = arith.addf %174, %214 : vector<2x40xf32>
    %cst_72 = arith.constant dense<0.000000e+00> : vector<2x40xf32>
    %216 = tpu.matmul %183, %1, %cst_72 {dimension_numbers = #tpu.dot_dimension_numbers<[1], [0], [0], [1], [0, 0, 1, 1], [], []>} : vector<2x10xf32>, vector<10x40xf32>, vector<2x40xf32> -> vector<2x40xf32>
    %217 = arith.addf %215, %216 : vector<2x40xf32>
    %218 = arith.negf %217 : vector<2x40xf32>
    %219 = math.exp %218 : vector<2x40xf32>
    %cst_73 = arith.constant 1.000000e+00 : f32
    %220 = vector.broadcast %cst_73 : f32 to vector<2x40xf32>
    %221 = arith.addf %220, %219 : vector<2x40xf32>
    %222 = arith.divf %220, %221 : vector<2x40xf32>
    %223 = math.tanh %217 : vector<2x40xf32>
    %224 = vector.extract_strided_slice %222 {offsets = [0, 0], sizes = [2, 10], strides = [1, 1]} : vector<2x40xf32> to vector<2x10xf32>
    %225 = vector.extract_strided_slice %222 {offsets = [0, 10], sizes = [2, 10], strides = [1, 1]} : vector<2x40xf32> to vector<2x10xf32>
    %226 = vector.extract_strided_slice %223 {offsets = [0, 20], sizes = [2, 10], strides = [1, 1]} : vector<2x40xf32> to vector<2x10xf32>
    %227 = vector.extract_strided_slice %222 {offsets = [0, 30], sizes = [2, 10], strides = [1, 1]} : vector<2x40xf32> to vector<2x10xf32>
    %228 = arith.mulf %225, %161 : vector<2x10xf32>
    %229 = arith.mulf %224, %226 : vector<2x10xf32>
    %230 = arith.addf %228, %229 : vector<2x10xf32>
    %231 = math.tanh %230 : vector<2x10xf32>
    %232 = arith.mulf %227, %231 : vector<2x10xf32>
    %c3 = arith.constant 3 : index
    %c0_74 = arith.constant 0 : index
    %c0_75 = arith.constant 0 : index
    %233 = vector.load %arg0[%c3, %c0_74, %c0_75] : memref<20x2x14xf32, #tpu.memory_space<vmem>>, vector<1x2x14xf32>
    %234 = vector.shape_cast %233 : vector<1x2x14xf32> to vector<2x14xf32>
    %c3_76 = arith.constant 3 : index
    %c0_77 = arith.constant 0 : index
    %c0_78 = arith.constant 0 : index
    %235 = vector.load %arg1[%c3_76, %c0_77, %c0_78] : memref<20x2x1xf32, #tpu.memory_space<vmem>>, vector<1x2x1xf32>
    %236 = vector.shape_cast %235 : vector<1x2x1xf32> to vector<2x1xf32>
    %c3_79 = arith.constant 3 : index
    %c0_80 = arith.constant 0 : index
    %c0_81 = arith.constant 0 : index
    %237 = vector.load %arg2[%c3_79, %c0_80, %c0_81] : memref<20x2x1xf32, #tpu.memory_space<vmem>>, vector<1x2x1xf32>
    %238 = vector.shape_cast %237 : vector<1x2x1xf32> to vector<2x1xf32>
    %cst_82 = arith.constant dense<0.000000e+00> : vector<2x40xf32>
    %239 = tpu.matmul %234, %0, %cst_82 {dimension_numbers = #tpu.dot_dimension_numbers<[1], [0], [0], [1], [0, 0, 1, 1], [], []>} : vector<2x14xf32>, vector<14x40xf32>, vector<2x40xf32> -> vector<2x40xf32>
    %240 = vector.broadcast %236 : vector<2x1xf32> to vector<2x40xf32>
    %241 = arith.mulf %240, %16 : vector<2x40xf32>
    %242 = arith.addf %239, %241 : vector<2x40xf32>
    %243 = arith.addf %242, %22 : vector<2x40xf32>
    %244 = vector.broadcast %238 : vector<2x1xf32> to vector<2x10xf32>
    %245 = arith.mulf %244, %4 : vector<2x10xf32>
    %246 = arith.addf %245, %7 : vector<2x10xf32>
    %cst_83 = arith.constant 0.000000e+00 : f32
    %247 = vector.broadcast %cst_83 : f32 to vector<2x10xf32>
    %248 = arith.maximumf %246, %247 : vector<2x10xf32>
    %cst_84 = arith.constant 0.000000e+00 : f32
    %249 = vector.broadcast %cst_84 : f32 to vector<2x10xf32>
    %250 = arith.subf %249, %248 : vector<2x10xf32>
    %251 = math.exp %250 : vector<2x10xf32>
    %252 = arith.mulf %232, %251 : vector<2x10xf32>
    %253 = arith.mulf %252, %10 : vector<2x10xf32>
    %cst_85 = arith.constant dense<0.000000e+00> : vector<2xf32>
    %254 = vector.multi_reduction <add>, %253, %cst_85 [1] : vector<2x10xf32> to vector<2xf32>
    %255 = vector.shape_cast %254 : vector<2xf32> to vector<2x1xf32>
    %256 = arith.addf %255, %13 : vector<2x1xf32>
    %257 = vector.extract_strided_slice %234 {offsets = [0, 2], sizes = [2, 1], strides = [1, 1]} : vector<2x14xf32> to vector<2x1xf32>
    %258 = arith.mulf %257, %236 : vector<2x1xf32>
    %cst_86 = arith.constant 1.000000e+00 : f32
    %259 = vector.broadcast %cst_86 : f32 to vector<2x1xf32>
    %260 = arith.subf %259, %236 : vector<2x1xf32>
    %261 = arith.mulf %260, %256 : vector<2x1xf32>
    %262 = arith.addf %258, %261 : vector<2x1xf32>
    %263 = arith.subf %262, %256 : vector<2x1xf32>
    %264 = math.absf %263 : vector<2x1xf32>
    %265 = arith.mulf %264, %236 : vector<2x1xf32>
    %266 = vector.shape_cast %265 : vector<2x1xf32> to vector<1x2x1xf32>
    %cst_87 = arith.constant dense<0.000000e+00> : vector<1xf32>
    %267 = vector.multi_reduction <add>, %266, %cst_87 [1, 2] : vector<1x2x1xf32> to vector<1xf32>
    %268 = vector.shape_cast %267 : vector<1xf32> to vector<1x1x1xf32>
    %269 = vector.extract %268[0, 0, 0] : f32 from vector<1x1x1xf32>
    %270 = vector.broadcast %269 : f32 to vector<1x1xf32>
    %271 = vector.shape_cast %236 : vector<2x1xf32> to vector<1x2x1xf32>
    %cst_88 = arith.constant dense<0.000000e+00> : vector<1xf32>
    %272 = vector.multi_reduction <add>, %271, %cst_88 [1, 2] : vector<1x2x1xf32> to vector<1xf32>
    %273 = vector.shape_cast %272 : vector<1xf32> to vector<1x1x1xf32>
    %274 = vector.extract %273[0, 0, 0] : f32 from vector<1x1x1xf32>
    %275 = vector.broadcast %274 : f32 to vector<1x1xf32>
    %cst_89 = arith.constant 9.99999974E-6 : f32
    %276 = vector.broadcast %cst_89 : f32 to vector<1x1xf32>
    %277 = arith.addf %275, %276 : vector<1x1xf32>
    %278 = tpu.reciprocal %277 {approx = true} : vector<1x1xf32> -> vector<1x1xf32>
    %279 = arith.mulf %270, %278 : vector<1x1xf32>
    %280 = arith.addf %211, %279 : vector<1x1xf32>
    %281 = arith.subf %262, %257 : vector<2x1xf32>
    %282 = vector.broadcast %281 : vector<2x1xf32> to vector<2x40xf32>
    %283 = arith.mulf %282, %19 : vector<2x40xf32>
    %284 = arith.addf %243, %283 : vector<2x40xf32>
    %cst_90 = arith.constant dense<0.000000e+00> : vector<2x40xf32>
    %285 = tpu.matmul %252, %1, %cst_90 {dimension_numbers = #tpu.dot_dimension_numbers<[1], [0], [0], [1], [0, 0, 1, 1], [], []>} : vector<2x10xf32>, vector<10x40xf32>, vector<2x40xf32> -> vector<2x40xf32>
    %286 = arith.addf %284, %285 : vector<2x40xf32>
    %287 = arith.negf %286 : vector<2x40xf32>
    %288 = math.exp %287 : vector<2x40xf32>
    %cst_91 = arith.constant 1.000000e+00 : f32
    %289 = vector.broadcast %cst_91 : f32 to vector<2x40xf32>
    %290 = arith.addf %289, %288 : vector<2x40xf32>
    %291 = arith.divf %289, %290 : vector<2x40xf32>
    %292 = math.tanh %286 : vector<2x40xf32>
    %293 = vector.extract_strided_slice %291 {offsets = [0, 0], sizes = [2, 10], strides = [1, 1]} : vector<2x40xf32> to vector<2x10xf32>
    %294 = vector.extract_strided_slice %291 {offsets = [0, 10], sizes = [2, 10], strides = [1, 1]} : vector<2x40xf32> to vector<2x10xf32>
    %295 = vector.extract_strided_slice %292 {offsets = [0, 20], sizes = [2, 10], strides = [1, 1]} : vector<2x40xf32> to vector<2x10xf32>
    %296 = vector.extract_strided_slice %291 {offsets = [0, 30], sizes = [2, 10], strides = [1, 1]} : vector<2x40xf32> to vector<2x10xf32>
    %297 = arith.mulf %294, %230 : vector<2x10xf32>
    %298 = arith.mulf %293, %295 : vector<2x10xf32>
    %299 = arith.addf %297, %298 : vector<2x10xf32>
    %300 = math.tanh %299 : vector<2x10xf32>
    %301 = arith.mulf %296, %300 : vector<2x10xf32>
    %c4 = arith.constant 4 : index
    %c0_92 = arith.constant 0 : index
    %c0_93 = arith.constant 0 : index
    %302 = vector.load %arg0[%c4, %c0_92, %c0_93] : memref<20x2x14xf32, #tpu.memory_space<vmem>>, vector<1x2x14xf32>
    %303 = vector.shape_cast %302 : vector<1x2x14xf32> to vector<2x14xf32>
    %c4_94 = arith.constant 4 : index
    %c0_95 = arith.constant 0 : index
    %c0_96 = arith.constant 0 : index
    %304 = vector.load %arg1[%c4_94, %c0_95, %c0_96] : memref<20x2x1xf32, #tpu.memory_space<vmem>>, vector<1x2x1xf32>
    %305 = vector.shape_cast %304 : vector<1x2x1xf32> to vector<2x1xf32>
    %c4_97 = arith.constant 4 : index
    %c0_98 = arith.constant 0 : index
    %c0_99 = arith.constant 0 : index
    %306 = vector.load %arg2[%c4_97, %c0_98, %c0_99] : memref<20x2x1xf32, #tpu.memory_space<vmem>>, vector<1x2x1xf32>
    %307 = vector.shape_cast %306 : vector<1x2x1xf32> to vector<2x1xf32>
    %cst_100 = arith.constant dense<0.000000e+00> : vector<2x40xf32>
    %308 = tpu.matmul %303, %0, %cst_100 {dimension_numbers = #tpu.dot_dimension_numbers<[1], [0], [0], [1], [0, 0, 1, 1], [], []>} : vector<2x14xf32>, vector<14x40xf32>, vector<2x40xf32> -> vector<2x40xf32>
    %309 = vector.broadcast %305 : vector<2x1xf32> to vector<2x40xf32>
    %310 = arith.mulf %309, %16 : vector<2x40xf32>
    %311 = arith.addf %308, %310 : vector<2x40xf32>
    %312 = arith.addf %311, %22 : vector<2x40xf32>
    %313 = vector.broadcast %307 : vector<2x1xf32> to vector<2x10xf32>
    %314 = arith.mulf %313, %4 : vector<2x10xf32>
    %315 = arith.addf %314, %7 : vector<2x10xf32>
    %cst_101 = arith.constant 0.000000e+00 : f32
    %316 = vector.broadcast %cst_101 : f32 to vector<2x10xf32>
    %317 = arith.maximumf %315, %316 : vector<2x10xf32>
    %cst_102 = arith.constant 0.000000e+00 : f32
    %318 = vector.broadcast %cst_102 : f32 to vector<2x10xf32>
    %319 = arith.subf %318, %317 : vector<2x10xf32>
    %320 = math.exp %319 : vector<2x10xf32>
    %321 = arith.mulf %301, %320 : vector<2x10xf32>
    %322 = arith.mulf %321, %10 : vector<2x10xf32>
    %cst_103 = arith.constant dense<0.000000e+00> : vector<2xf32>
    %323 = vector.multi_reduction <add>, %322, %cst_103 [1] : vector<2x10xf32> to vector<2xf32>
    %324 = vector.shape_cast %323 : vector<2xf32> to vector<2x1xf32>
    %325 = arith.addf %324, %13 : vector<2x1xf32>
    %326 = vector.extract_strided_slice %303 {offsets = [0, 2], sizes = [2, 1], strides = [1, 1]} : vector<2x14xf32> to vector<2x1xf32>
    %327 = arith.mulf %326, %305 : vector<2x1xf32>
    %cst_104 = arith.constant 1.000000e+00 : f32
    %328 = vector.broadcast %cst_104 : f32 to vector<2x1xf32>
    %329 = arith.subf %328, %305 : vector<2x1xf32>
    %330 = arith.mulf %329, %325 : vector<2x1xf32>
    %331 = arith.addf %327, %330 : vector<2x1xf32>
    %332 = arith.subf %331, %325 : vector<2x1xf32>
    %333 = math.absf %332 : vector<2x1xf32>
    %334 = arith.mulf %333, %305 : vector<2x1xf32>
    %335 = vector.shape_cast %334 : vector<2x1xf32> to vector<1x2x1xf32>
    %cst_105 = arith.constant dense<0.000000e+00> : vector<1xf32>
    %336 = vector.multi_reduction <add>, %335, %cst_105 [1, 2] : vector<1x2x1xf32> to vector<1xf32>
    %337 = vector.shape_cast %336 : vector<1xf32> to vector<1x1x1xf32>
    %338 = vector.extract %337[0, 0, 0] : f32 from vector<1x1x1xf32>
    %339 = vector.broadcast %338 : f32 to vector<1x1xf32>
    %340 = vector.shape_cast %305 : vector<2x1xf32> to vector<1x2x1xf32>
    %cst_106 = arith.constant dense<0.000000e+00> : vector<1xf32>
    %341 = vector.multi_reduction <add>, %340, %cst_106 [1, 2] : vector<1x2x1xf32> to vector<1xf32>
    %342 = vector.shape_cast %341 : vector<1xf32> to vector<1x1x1xf32>
    %343 = vector.extract %342[0, 0, 0] : f32 from vector<1x1x1xf32>
    %344 = vector.broadcast %343 : f32 to vector<1x1xf32>
    %cst_107 = arith.constant 9.99999974E-6 : f32
    %345 = vector.broadcast %cst_107 : f32 to vector<1x1xf32>
    %346 = arith.addf %344, %345 : vector<1x1xf32>
    %347 = tpu.reciprocal %346 {approx = true} : vector<1x1xf32> -> vector<1x1xf32>
    %348 = arith.mulf %339, %347 : vector<1x1xf32>
    %349 = arith.addf %280, %348 : vector<1x1xf32>
    %350 = arith.subf %331, %326 : vector<2x1xf32>
    %351 = vector.broadcast %350 : vector<2x1xf32> to vector<2x40xf32>
    %352 = arith.mulf %351, %19 : vector<2x40xf32>
    %353 = arith.addf %312, %352 : vector<2x40xf32>
    %cst_108 = arith.constant dense<0.000000e+00> : vector<2x40xf32>
    %354 = tpu.matmul %321, %1, %cst_108 {dimension_numbers = #tpu.dot_dimension_numbers<[1], [0], [0], [1], [0, 0, 1, 1], [], []>} : vector<2x10xf32>, vector<10x40xf32>, vector<2x40xf32> -> vector<2x40xf32>
    %355 = arith.addf %353, %354 : vector<2x40xf32>
    %356 = arith.negf %355 : vector<2x40xf32>
    %357 = math.exp %356 : vector<2x40xf32>
    %cst_109 = arith.constant 1.000000e+00 : f32
    %358 = vector.broadcast %cst_109 : f32 to vector<2x40xf32>
    %359 = arith.addf %358, %357 : vector<2x40xf32>
    %360 = arith.divf %358, %359 : vector<2x40xf32>
    %361 = math.tanh %355 : vector<2x40xf32>
    %362 = vector.extract_strided_slice %360 {offsets = [0, 0], sizes = [2, 10], strides = [1, 1]} : vector<2x40xf32> to vector<2x10xf32>
    %363 = vector.extract_strided_slice %360 {offsets = [0, 10], sizes = [2, 10], strides = [1, 1]} : vector<2x40xf32> to vector<2x10xf32>
    %364 = vector.extract_strided_slice %361 {offsets = [0, 20], sizes = [2, 10], strides = [1, 1]} : vector<2x40xf32> to vector<2x10xf32>
    %365 = vector.extract_strided_slice %360 {offsets = [0, 30], sizes = [2, 10], strides = [1, 1]} : vector<2x40xf32> to vector<2x10xf32>
    %366 = arith.mulf %363, %299 : vector<2x10xf32>
    %367 = arith.mulf %362, %364 : vector<2x10xf32>
    %368 = arith.addf %366, %367 : vector<2x10xf32>
    %369 = math.tanh %368 : vector<2x10xf32>
    %370 = arith.mulf %365, %369 : vector<2x10xf32>
    %c5 = arith.constant 5 : index
    %c0_110 = arith.constant 0 : index
    %c0_111 = arith.constant 0 : index
    %371 = vector.load %arg0[%c5, %c0_110, %c0_111] : memref<20x2x14xf32, #tpu.memory_space<vmem>>, vector<1x2x14xf32>
    %372 = vector.shape_cast %371 : vector<1x2x14xf32> to vector<2x14xf32>
    %c5_112 = arith.constant 5 : index
    %c0_113 = arith.constant 0 : index
    %c0_114 = arith.constant 0 : index
    %373 = vector.load %arg1[%c5_112, %c0_113, %c0_114] : memref<20x2x1xf32, #tpu.memory_space<vmem>>, vector<1x2x1xf32>
    %374 = vector.shape_cast %373 : vector<1x2x1xf32> to vector<2x1xf32>
    %c5_115 = arith.constant 5 : index
    %c0_116 = arith.constant 0 : index
    %c0_117 = arith.constant 0 : index
    %375 = vector.load %arg2[%c5_115, %c0_116, %c0_117] : memref<20x2x1xf32, #tpu.memory_space<vmem>>, vector<1x2x1xf32>
    %376 = vector.shape_cast %375 : vector<1x2x1xf32> to vector<2x1xf32>
    %cst_118 = arith.constant dense<0.000000e+00> : vector<2x40xf32>
    %377 = tpu.matmul %372, %0, %cst_118 {dimension_numbers = #tpu.dot_dimension_numbers<[1], [0], [0], [1], [0, 0, 1, 1], [], []>} : vector<2x14xf32>, vector<14x40xf32>, vector<2x40xf32> -> vector<2x40xf32>
    %378 = vector.broadcast %374 : vector<2x1xf32> to vector<2x40xf32>
    %379 = arith.mulf %378, %16 : vector<2x40xf32>
    %380 = arith.addf %377, %379 : vector<2x40xf32>
    %381 = arith.addf %380, %22 : vector<2x40xf32>
    %382 = vector.broadcast %376 : vector<2x1xf32> to vector<2x10xf32>
    %383 = arith.mulf %382, %4 : vector<2x10xf32>
    %384 = arith.addf %383, %7 : vector<2x10xf32>
    %cst_119 = arith.constant 0.000000e+00 : f32
    %385 = vector.broadcast %cst_119 : f32 to vector<2x10xf32>
    %386 = arith.maximumf %384, %385 : vector<2x10xf32>
    %cst_120 = arith.constant 0.000000e+00 : f32
    %387 = vector.broadcast %cst_120 : f32 to vector<2x10xf32>
    %388 = arith.subf %387, %386 : vector<2x10xf32>
    %389 = math.exp %388 : vector<2x10xf32>
    %390 = arith.mulf %370, %389 : vector<2x10xf32>
    %391 = arith.mulf %390, %10 : vector<2x10xf32>
    %cst_121 = arith.constant dense<0.000000e+00> : vector<2xf32>
    %392 = vector.multi_reduction <add>, %391, %cst_121 [1] : vector<2x10xf32> to vector<2xf32>
    %393 = vector.shape_cast %392 : vector<2xf32> to vector<2x1xf32>
    %394 = arith.addf %393, %13 : vector<2x1xf32>
    %395 = vector.extract_strided_slice %372 {offsets = [0, 2], sizes = [2, 1], strides = [1, 1]} : vector<2x14xf32> to vector<2x1xf32>
    %396 = arith.mulf %395, %374 : vector<2x1xf32>
    %cst_122 = arith.constant 1.000000e+00 : f32
    %397 = vector.broadcast %cst_122 : f32 to vector<2x1xf32>
    %398 = arith.subf %397, %374 : vector<2x1xf32>
    %399 = arith.mulf %398, %394 : vector<2x1xf32>
    %400 = arith.addf %396, %399 : vector<2x1xf32>
    %401 = arith.subf %400, %394 : vector<2x1xf32>
    %402 = math.absf %401 : vector<2x1xf32>
    %403 = arith.mulf %402, %374 : vector<2x1xf32>
    %404 = vector.shape_cast %403 : vector<2x1xf32> to vector<1x2x1xf32>
    %cst_123 = arith.constant dense<0.000000e+00> : vector<1xf32>
    %405 = vector.multi_reduction <add>, %404, %cst_123 [1, 2] : vector<1x2x1xf32> to vector<1xf32>
    %406 = vector.shape_cast %405 : vector<1xf32> to vector<1x1x1xf32>
    %407 = vector.extract %406[0, 0, 0] : f32 from vector<1x1x1xf32>
    %408 = vector.broadcast %407 : f32 to vector<1x1xf32>
    %409 = vector.shape_cast %374 : vector<2x1xf32> to vector<1x2x1xf32>
    %cst_124 = arith.constant dense<0.000000e+00> : vector<1xf32>
    %410 = vector.multi_reduction <add>, %409, %cst_124 [1, 2] : vector<1x2x1xf32> to vector<1xf32>
    %411 = vector.shape_cast %410 : vector<1xf32> to vector<1x1x1xf32>
    %412 = vector.extract %411[0, 0, 0] : f32 from vector<1x1x1xf32>
    %413 = vector.broadcast %412 : f32 to vector<1x1xf32>
    %cst_125 = arith.constant 9.99999974E-6 : f32
    %414 = vector.broadcast %cst_125 : f32 to vector<1x1xf32>
    %415 = arith.addf %413, %414 : vector<1x1xf32>
    %416 = tpu.reciprocal %415 {approx = true} : vector<1x1xf32> -> vector<1x1xf32>
    %417 = arith.mulf %408, %416 : vector<1x1xf32>
    %418 = arith.addf %349, %417 : vector<1x1xf32>
    %419 = arith.subf %400, %395 : vector<2x1xf32>
    %420 = vector.broadcast %419 : vector<2x1xf32> to vector<2x40xf32>
    %421 = arith.mulf %420, %19 : vector<2x40xf32>
    %422 = arith.addf %381, %421 : vector<2x40xf32>
    %cst_126 = arith.constant dense<0.000000e+00> : vector<2x40xf32>
    %423 = tpu.matmul %390, %1, %cst_126 {dimension_numbers = #tpu.dot_dimension_numbers<[1], [0], [0], [1], [0, 0, 1, 1], [], []>} : vector<2x10xf32>, vector<10x40xf32>, vector<2x40xf32> -> vector<2x40xf32>
    %424 = arith.addf %422, %423 : vector<2x40xf32>
    %425 = arith.negf %424 : vector<2x40xf32>
    %426 = math.exp %425 : vector<2x40xf32>
    %cst_127 = arith.constant 1.000000e+00 : f32
    %427 = vector.broadcast %cst_127 : f32 to vector<2x40xf32>
    %428 = arith.addf %427, %426 : vector<2x40xf32>
    %429 = arith.divf %427, %428 : vector<2x40xf32>
    %430 = math.tanh %424 : vector<2x40xf32>
    %431 = vector.extract_strided_slice %429 {offsets = [0, 0], sizes = [2, 10], strides = [1, 1]} : vector<2x40xf32> to vector<2x10xf32>
    %432 = vector.extract_strided_slice %429 {offsets = [0, 10], sizes = [2, 10], strides = [1, 1]} : vector<2x40xf32> to vector<2x10xf32>
    %433 = vector.extract_strided_slice %430 {offsets = [0, 20], sizes = [2, 10], strides = [1, 1]} : vector<2x40xf32> to vector<2x10xf32>
    %434 = vector.extract_strided_slice %429 {offsets = [0, 30], sizes = [2, 10], strides = [1, 1]} : vector<2x40xf32> to vector<2x10xf32>
    %435 = arith.mulf %432, %368 : vector<2x10xf32>
    %436 = arith.mulf %431, %433 : vector<2x10xf32>
    %437 = arith.addf %435, %436 : vector<2x10xf32>
    %438 = math.tanh %437 : vector<2x10xf32>
    %439 = arith.mulf %434, %438 : vector<2x10xf32>
    %c6 = arith.constant 6 : index
    %c0_128 = arith.constant 0 : index
    %c0_129 = arith.constant 0 : index
    %440 = vector.load %arg0[%c6, %c0_128, %c0_129] : memref<20x2x14xf32, #tpu.memory_space<vmem>>, vector<1x2x14xf32>
    %441 = vector.shape_cast %440 : vector<1x2x14xf32> to vector<2x14xf32>
    %c6_130 = arith.constant 6 : index
    %c0_131 = arith.constant 0 : index
    %c0_132 = arith.constant 0 : index
    %442 = vector.load %arg1[%c6_130, %c0_131, %c0_132] : memref<20x2x1xf32, #tpu.memory_space<vmem>>, vector<1x2x1xf32>
    %443 = vector.shape_cast %442 : vector<1x2x1xf32> to vector<2x1xf32>
    %c6_133 = arith.constant 6 : index
    %c0_134 = arith.constant 0 : index
    %c0_135 = arith.constant 0 : index
    %444 = vector.load %arg2[%c6_133, %c0_134, %c0_135] : memref<20x2x1xf32, #tpu.memory_space<vmem>>, vector<1x2x1xf32>
    %445 = vector.shape_cast %444 : vector<1x2x1xf32> to vector<2x1xf32>
    %cst_136 = arith.constant dense<0.000000e+00> : vector<2x40xf32>
    %446 = tpu.matmul %441, %0, %cst_136 {dimension_numbers = #tpu.dot_dimension_numbers<[1], [0], [0], [1], [0, 0, 1, 1], [], []>} : vector<2x14xf32>, vector<14x40xf32>, vector<2x40xf32> -> vector<2x40xf32>
    %447 = vector.broadcast %443 : vector<2x1xf32> to vector<2x40xf32>
    %448 = arith.mulf %447, %16 : vector<2x40xf32>
    %449 = arith.addf %446, %448 : vector<2x40xf32>
    %450 = arith.addf %449, %22 : vector<2x40xf32>
    %451 = vector.broadcast %445 : vector<2x1xf32> to vector<2x10xf32>
    %452 = arith.mulf %451, %4 : vector<2x10xf32>
    %453 = arith.addf %452, %7 : vector<2x10xf32>
    %cst_137 = arith.constant 0.000000e+00 : f32
    %454 = vector.broadcast %cst_137 : f32 to vector<2x10xf32>
    %455 = arith.maximumf %453, %454 : vector<2x10xf32>
    %cst_138 = arith.constant 0.000000e+00 : f32
    %456 = vector.broadcast %cst_138 : f32 to vector<2x10xf32>
    %457 = arith.subf %456, %455 : vector<2x10xf32>
    %458 = math.exp %457 : vector<2x10xf32>
    %459 = arith.mulf %439, %458 : vector<2x10xf32>
    %460 = arith.mulf %459, %10 : vector<2x10xf32>
    %cst_139 = arith.constant dense<0.000000e+00> : vector<2xf32>
    %461 = vector.multi_reduction <add>, %460, %cst_139 [1] : vector<2x10xf32> to vector<2xf32>
    %462 = vector.shape_cast %461 : vector<2xf32> to vector<2x1xf32>
    %463 = arith.addf %462, %13 : vector<2x1xf32>
    %464 = vector.extract_strided_slice %441 {offsets = [0, 2], sizes = [2, 1], strides = [1, 1]} : vector<2x14xf32> to vector<2x1xf32>
    %465 = arith.mulf %464, %443 : vector<2x1xf32>
    %cst_140 = arith.constant 1.000000e+00 : f32
    %466 = vector.broadcast %cst_140 : f32 to vector<2x1xf32>
    %467 = arith.subf %466, %443 : vector<2x1xf32>
    %468 = arith.mulf %467, %463 : vector<2x1xf32>
    %469 = arith.addf %465, %468 : vector<2x1xf32>
    %470 = arith.subf %469, %463 : vector<2x1xf32>
    %471 = math.absf %470 : vector<2x1xf32>
    %472 = arith.mulf %471, %443 : vector<2x1xf32>
    %473 = vector.shape_cast %472 : vector<2x1xf32> to vector<1x2x1xf32>
    %cst_141 = arith.constant dense<0.000000e+00> : vector<1xf32>
    %474 = vector.multi_reduction <add>, %473, %cst_141 [1, 2] : vector<1x2x1xf32> to vector<1xf32>
    %475 = vector.shape_cast %474 : vector<1xf32> to vector<1x1x1xf32>
    %476 = vector.extract %475[0, 0, 0] : f32 from vector<1x1x1xf32>
    %477 = vector.broadcast %476 : f32 to vector<1x1xf32>
    %478 = vector.shape_cast %443 : vector<2x1xf32> to vector<1x2x1xf32>
    %cst_142 = arith.constant dense<0.000000e+00> : vector<1xf32>
    %479 = vector.multi_reduction <add>, %478, %cst_142 [1, 2] : vector<1x2x1xf32> to vector<1xf32>
    %480 = vector.shape_cast %479 : vector<1xf32> to vector<1x1x1xf32>
    %481 = vector.extract %480[0, 0, 0] : f32 from vector<1x1x1xf32>
    %482 = vector.broadcast %481 : f32 to vector<1x1xf32>
    %cst_143 = arith.constant 9.99999974E-6 : f32
    %483 = vector.broadcast %cst_143 : f32 to vector<1x1xf32>
    %484 = arith.addf %482, %483 : vector<1x1xf32>
    %485 = tpu.reciprocal %484 {approx = true} : vector<1x1xf32> -> vector<1x1xf32>
    %486 = arith.mulf %477, %485 : vector<1x1xf32>
    %487 = arith.addf %418, %486 : vector<1x1xf32>
    %488 = arith.subf %469, %464 : vector<2x1xf32>
    %489 = vector.broadcast %488 : vector<2x1xf32> to vector<2x40xf32>
    %490 = arith.mulf %489, %19 : vector<2x40xf32>
    %491 = arith.addf %450, %490 : vector<2x40xf32>
    %cst_144 = arith.constant dense<0.000000e+00> : vector<2x40xf32>
    %492 = tpu.matmul %459, %1, %cst_144 {dimension_numbers = #tpu.dot_dimension_numbers<[1], [0], [0], [1], [0, 0, 1, 1], [], []>} : vector<2x10xf32>, vector<10x40xf32>, vector<2x40xf32> -> vector<2x40xf32>
    %493 = arith.addf %491, %492 : vector<2x40xf32>
    %494 = arith.negf %493 : vector<2x40xf32>
    %495 = math.exp %494 : vector<2x40xf32>
    %cst_145 = arith.constant 1.000000e+00 : f32
    %496 = vector.broadcast %cst_145 : f32 to vector<2x40xf32>
    %497 = arith.addf %496, %495 : vector<2x40xf32>
    %498 = arith.divf %496, %497 : vector<2x40xf32>
    %499 = math.tanh %493 : vector<2x40xf32>
    %500 = vector.extract_strided_slice %498 {offsets = [0, 0], sizes = [2, 10], strides = [1, 1]} : vector<2x40xf32> to vector<2x10xf32>
    %501 = vector.extract_strided_slice %498 {offsets = [0, 10], sizes = [2, 10], strides = [1, 1]} : vector<2x40xf32> to vector<2x10xf32>
    %502 = vector.extract_strided_slice %499 {offsets = [0, 20], sizes = [2, 10], strides = [1, 1]} : vector<2x40xf32> to vector<2x10xf32>
    %503 = vector.extract_strided_slice %498 {offsets = [0, 30], sizes = [2, 10], strides = [1, 1]} : vector<2x40xf32> to vector<2x10xf32>
    %504 = arith.mulf %501, %437 : vector<2x10xf32>
    %505 = arith.mulf %500, %502 : vector<2x10xf32>
    %506 = arith.addf %504, %505 : vector<2x10xf32>
    %507 = math.tanh %506 : vector<2x10xf32>
    %508 = arith.mulf %503, %507 : vector<2x10xf32>
    %c7 = arith.constant 7 : index
    %c0_146 = arith.constant 0 : index
    %c0_147 = arith.constant 0 : index
    %509 = vector.load %arg0[%c7, %c0_146, %c0_147] : memref<20x2x14xf32, #tpu.memory_space<vmem>>, vector<1x2x14xf32>
    %510 = vector.shape_cast %509 : vector<1x2x14xf32> to vector<2x14xf32>
    %c7_148 = arith.constant 7 : index
    %c0_149 = arith.constant 0 : index
    %c0_150 = arith.constant 0 : index
    %511 = vector.load %arg1[%c7_148, %c0_149, %c0_150] : memref<20x2x1xf32, #tpu.memory_space<vmem>>, vector<1x2x1xf32>
    %512 = vector.shape_cast %511 : vector<1x2x1xf32> to vector<2x1xf32>
    %c7_151 = arith.constant 7 : index
    %c0_152 = arith.constant 0 : index
    %c0_153 = arith.constant 0 : index
    %513 = vector.load %arg2[%c7_151, %c0_152, %c0_153] : memref<20x2x1xf32, #tpu.memory_space<vmem>>, vector<1x2x1xf32>
    %514 = vector.shape_cast %513 : vector<1x2x1xf32> to vector<2x1xf32>
    %cst_154 = arith.constant dense<0.000000e+00> : vector<2x40xf32>
    %515 = tpu.matmul %510, %0, %cst_154 {dimension_numbers = #tpu.dot_dimension_numbers<[1], [0], [0], [1], [0, 0, 1, 1], [], []>} : vector<2x14xf32>, vector<14x40xf32>, vector<2x40xf32> -> vector<2x40xf32>
    %516 = vector.broadcast %512 : vector<2x1xf32> to vector<2x40xf32>
    %517 = arith.mulf %516, %16 : vector<2x40xf32>
    %518 = arith.addf %515, %517 : vector<2x40xf32>
    %519 = arith.addf %518, %22 : vector<2x40xf32>
    %520 = vector.broadcast %514 : vector<2x1xf32> to vector<2x10xf32>
    %521 = arith.mulf %520, %4 : vector<2x10xf32>
    %522 = arith.addf %521, %7 : vector<2x10xf32>
    %cst_155 = arith.constant 0.000000e+00 : f32
    %523 = vector.broadcast %cst_155 : f32 to vector<2x10xf32>
    %524 = arith.maximumf %522, %523 : vector<2x10xf32>
    %cst_156 = arith.constant 0.000000e+00 : f32
    %525 = vector.broadcast %cst_156 : f32 to vector<2x10xf32>
    %526 = arith.subf %525, %524 : vector<2x10xf32>
    %527 = math.exp %526 : vector<2x10xf32>
    %528 = arith.mulf %508, %527 : vector<2x10xf32>
    %529 = arith.mulf %528, %10 : vector<2x10xf32>
    %cst_157 = arith.constant dense<0.000000e+00> : vector<2xf32>
    %530 = vector.multi_reduction <add>, %529, %cst_157 [1] : vector<2x10xf32> to vector<2xf32>
    %531 = vector.shape_cast %530 : vector<2xf32> to vector<2x1xf32>
    %532 = arith.addf %531, %13 : vector<2x1xf32>
    %533 = vector.extract_strided_slice %510 {offsets = [0, 2], sizes = [2, 1], strides = [1, 1]} : vector<2x14xf32> to vector<2x1xf32>
    %534 = arith.mulf %533, %512 : vector<2x1xf32>
    %cst_158 = arith.constant 1.000000e+00 : f32
    %535 = vector.broadcast %cst_158 : f32 to vector<2x1xf32>
    %536 = arith.subf %535, %512 : vector<2x1xf32>
    %537 = arith.mulf %536, %532 : vector<2x1xf32>
    %538 = arith.addf %534, %537 : vector<2x1xf32>
    %539 = arith.subf %538, %532 : vector<2x1xf32>
    %540 = math.absf %539 : vector<2x1xf32>
    %541 = arith.mulf %540, %512 : vector<2x1xf32>
    %542 = vector.shape_cast %541 : vector<2x1xf32> to vector<1x2x1xf32>
    %cst_159 = arith.constant dense<0.000000e+00> : vector<1xf32>
    %543 = vector.multi_reduction <add>, %542, %cst_159 [1, 2] : vector<1x2x1xf32> to vector<1xf32>
    %544 = vector.shape_cast %543 : vector<1xf32> to vector<1x1x1xf32>
    %545 = vector.extract %544[0, 0, 0] : f32 from vector<1x1x1xf32>
    %546 = vector.broadcast %545 : f32 to vector<1x1xf32>
    %547 = vector.shape_cast %512 : vector<2x1xf32> to vector<1x2x1xf32>
    %cst_160 = arith.constant dense<0.000000e+00> : vector<1xf32>
    %548 = vector.multi_reduction <add>, %547, %cst_160 [1, 2] : vector<1x2x1xf32> to vector<1xf32>
    %549 = vector.shape_cast %548 : vector<1xf32> to vector<1x1x1xf32>
    %550 = vector.extract %549[0, 0, 0] : f32 from vector<1x1x1xf32>
    %551 = vector.broadcast %550 : f32 to vector<1x1xf32>
    %cst_161 = arith.constant 9.99999974E-6 : f32
    %552 = vector.broadcast %cst_161 : f32 to vector<1x1xf32>
    %553 = arith.addf %551, %552 : vector<1x1xf32>
    %554 = tpu.reciprocal %553 {approx = true} : vector<1x1xf32> -> vector<1x1xf32>
    %555 = arith.mulf %546, %554 : vector<1x1xf32>
    %556 = arith.addf %487, %555 : vector<1x1xf32>
    %557 = arith.subf %538, %533 : vector<2x1xf32>
    %558 = vector.broadcast %557 : vector<2x1xf32> to vector<2x40xf32>
    %559 = arith.mulf %558, %19 : vector<2x40xf32>
    %560 = arith.addf %519, %559 : vector<2x40xf32>
    %cst_162 = arith.constant dense<0.000000e+00> : vector<2x40xf32>
    %561 = tpu.matmul %528, %1, %cst_162 {dimension_numbers = #tpu.dot_dimension_numbers<[1], [0], [0], [1], [0, 0, 1, 1], [], []>} : vector<2x10xf32>, vector<10x40xf32>, vector<2x40xf32> -> vector<2x40xf32>
    %562 = arith.addf %560, %561 : vector<2x40xf32>
    %563 = arith.negf %562 : vector<2x40xf32>
    %564 = math.exp %563 : vector<2x40xf32>
    %cst_163 = arith.constant 1.000000e+00 : f32
    %565 = vector.broadcast %cst_163 : f32 to vector<2x40xf32>
    %566 = arith.addf %565, %564 : vector<2x40xf32>
    %567 = arith.divf %565, %566 : vector<2x40xf32>
    %568 = math.tanh %562 : vector<2x40xf32>
    %569 = vector.extract_strided_slice %567 {offsets = [0, 0], sizes = [2, 10], strides = [1, 1]} : vector<2x40xf32> to vector<2x10xf32>
    %570 = vector.extract_strided_slice %567 {offsets = [0, 10], sizes = [2, 10], strides = [1, 1]} : vector<2x40xf32> to vector<2x10xf32>
    %571 = vector.extract_strided_slice %568 {offsets = [0, 20], sizes = [2, 10], strides = [1, 1]} : vector<2x40xf32> to vector<2x10xf32>
    %572 = vector.extract_strided_slice %567 {offsets = [0, 30], sizes = [2, 10], strides = [1, 1]} : vector<2x40xf32> to vector<2x10xf32>
    %573 = arith.mulf %570, %506 : vector<2x10xf32>
    %574 = arith.mulf %569, %571 : vector<2x10xf32>
    %575 = arith.addf %573, %574 : vector<2x10xf32>
    %576 = math.tanh %575 : vector<2x10xf32>
    %577 = arith.mulf %572, %576 : vector<2x10xf32>
    %c8 = arith.constant 8 : index
    %c0_164 = arith.constant 0 : index
    %c0_165 = arith.constant 0 : index
    %578 = vector.load %arg0[%c8, %c0_164, %c0_165] : memref<20x2x14xf32, #tpu.memory_space<vmem>>, vector<1x2x14xf32>
    %579 = vector.shape_cast %578 : vector<1x2x14xf32> to vector<2x14xf32>
    %c8_166 = arith.constant 8 : index
    %c0_167 = arith.constant 0 : index
    %c0_168 = arith.constant 0 : index
    %580 = vector.load %arg1[%c8_166, %c0_167, %c0_168] : memref<20x2x1xf32, #tpu.memory_space<vmem>>, vector<1x2x1xf32>
    %581 = vector.shape_cast %580 : vector<1x2x1xf32> to vector<2x1xf32>
    %c8_169 = arith.constant 8 : index
    %c0_170 = arith.constant 0 : index
    %c0_171 = arith.constant 0 : index
    %582 = vector.load %arg2[%c8_169, %c0_170, %c0_171] : memref<20x2x1xf32, #tpu.memory_space<vmem>>, vector<1x2x1xf32>
    %583 = vector.shape_cast %582 : vector<1x2x1xf32> to vector<2x1xf32>
    %cst_172 = arith.constant dense<0.000000e+00> : vector<2x40xf32>
    %584 = tpu.matmul %579, %0, %cst_172 {dimension_numbers = #tpu.dot_dimension_numbers<[1], [0], [0], [1], [0, 0, 1, 1], [], []>} : vector<2x14xf32>, vector<14x40xf32>, vector<2x40xf32> -> vector<2x40xf32>
    %585 = vector.broadcast %581 : vector<2x1xf32> to vector<2x40xf32>
    %586 = arith.mulf %585, %16 : vector<2x40xf32>
    %587 = arith.addf %584, %586 : vector<2x40xf32>
    %588 = arith.addf %587, %22 : vector<2x40xf32>
    %589 = vector.broadcast %583 : vector<2x1xf32> to vector<2x10xf32>
    %590 = arith.mulf %589, %4 : vector<2x10xf32>
    %591 = arith.addf %590, %7 : vector<2x10xf32>
    %cst_173 = arith.constant 0.000000e+00 : f32
    %592 = vector.broadcast %cst_173 : f32 to vector<2x10xf32>
    %593 = arith.maximumf %591, %592 : vector<2x10xf32>
    %cst_174 = arith.constant 0.000000e+00 : f32
    %594 = vector.broadcast %cst_174 : f32 to vector<2x10xf32>
    %595 = arith.subf %594, %593 : vector<2x10xf32>
    %596 = math.exp %595 : vector<2x10xf32>
    %597 = arith.mulf %577, %596 : vector<2x10xf32>
    %598 = arith.mulf %597, %10 : vector<2x10xf32>
    %cst_175 = arith.constant dense<0.000000e+00> : vector<2xf32>
    %599 = vector.multi_reduction <add>, %598, %cst_175 [1] : vector<2x10xf32> to vector<2xf32>
    %600 = vector.shape_cast %599 : vector<2xf32> to vector<2x1xf32>
    %601 = arith.addf %600, %13 : vector<2x1xf32>
    %602 = vector.extract_strided_slice %579 {offsets = [0, 2], sizes = [2, 1], strides = [1, 1]} : vector<2x14xf32> to vector<2x1xf32>
    %603 = arith.mulf %602, %581 : vector<2x1xf32>
    %cst_176 = arith.constant 1.000000e+00 : f32
    %604 = vector.broadcast %cst_176 : f32 to vector<2x1xf32>
    %605 = arith.subf %604, %581 : vector<2x1xf32>
    %606 = arith.mulf %605, %601 : vector<2x1xf32>
    %607 = arith.addf %603, %606 : vector<2x1xf32>
    %608 = arith.subf %607, %601 : vector<2x1xf32>
    %609 = math.absf %608 : vector<2x1xf32>
    %610 = arith.mulf %609, %581 : vector<2x1xf32>
    %611 = vector.shape_cast %610 : vector<2x1xf32> to vector<1x2x1xf32>
    %cst_177 = arith.constant dense<0.000000e+00> : vector<1xf32>
    %612 = vector.multi_reduction <add>, %611, %cst_177 [1, 2] : vector<1x2x1xf32> to vector<1xf32>
    %613 = vector.shape_cast %612 : vector<1xf32> to vector<1x1x1xf32>
    %614 = vector.extract %613[0, 0, 0] : f32 from vector<1x1x1xf32>
    %615 = vector.broadcast %614 : f32 to vector<1x1xf32>
    %616 = vector.shape_cast %581 : vector<2x1xf32> to vector<1x2x1xf32>
    %cst_178 = arith.constant dense<0.000000e+00> : vector<1xf32>
    %617 = vector.multi_reduction <add>, %616, %cst_178 [1, 2] : vector<1x2x1xf32> to vector<1xf32>
    %618 = vector.shape_cast %617 : vector<1xf32> to vector<1x1x1xf32>
    %619 = vector.extract %618[0, 0, 0] : f32 from vector<1x1x1xf32>
    %620 = vector.broadcast %619 : f32 to vector<1x1xf32>
    %cst_179 = arith.constant 9.99999974E-6 : f32
    %621 = vector.broadcast %cst_179 : f32 to vector<1x1xf32>
    %622 = arith.addf %620, %621 : vector<1x1xf32>
    %623 = tpu.reciprocal %622 {approx = true} : vector<1x1xf32> -> vector<1x1xf32>
    %624 = arith.mulf %615, %623 : vector<1x1xf32>
    %625 = arith.addf %556, %624 : vector<1x1xf32>
    %626 = arith.subf %607, %602 : vector<2x1xf32>
    %627 = vector.broadcast %626 : vector<2x1xf32> to vector<2x40xf32>
    %628 = arith.mulf %627, %19 : vector<2x40xf32>
    %629 = arith.addf %588, %628 : vector<2x40xf32>
    %cst_180 = arith.constant dense<0.000000e+00> : vector<2x40xf32>
    %630 = tpu.matmul %597, %1, %cst_180 {dimension_numbers = #tpu.dot_dimension_numbers<[1], [0], [0], [1], [0, 0, 1, 1], [], []>} : vector<2x10xf32>, vector<10x40xf32>, vector<2x40xf32> -> vector<2x40xf32>
    %631 = arith.addf %629, %630 : vector<2x40xf32>
    %632 = arith.negf %631 : vector<2x40xf32>
    %633 = math.exp %632 : vector<2x40xf32>
    %cst_181 = arith.constant 1.000000e+00 : f32
    %634 = vector.broadcast %cst_181 : f32 to vector<2x40xf32>
    %635 = arith.addf %634, %633 : vector<2x40xf32>
    %636 = arith.divf %634, %635 : vector<2x40xf32>
    %637 = math.tanh %631 : vector<2x40xf32>
    %638 = vector.extract_strided_slice %636 {offsets = [0, 0], sizes = [2, 10], strides = [1, 1]} : vector<2x40xf32> to vector<2x10xf32>
    %639 = vector.extract_strided_slice %636 {offsets = [0, 10], sizes = [2, 10], strides = [1, 1]} : vector<2x40xf32> to vector<2x10xf32>
    %640 = vector.extract_strided_slice %637 {offsets = [0, 20], sizes = [2, 10], strides = [1, 1]} : vector<2x40xf32> to vector<2x10xf32>
    %641 = vector.extract_strided_slice %636 {offsets = [0, 30], sizes = [2, 10], strides = [1, 1]} : vector<2x40xf32> to vector<2x10xf32>
    %642 = arith.mulf %639, %575 : vector<2x10xf32>
    %643 = arith.mulf %638, %640 : vector<2x10xf32>
    %644 = arith.addf %642, %643 : vector<2x10xf32>
    %645 = math.tanh %644 : vector<2x10xf32>
    %646 = arith.mulf %641, %645 : vector<2x10xf32>
    %c9 = arith.constant 9 : index
    %c0_182 = arith.constant 0 : index
    %c0_183 = arith.constant 0 : index
    %647 = vector.load %arg0[%c9, %c0_182, %c0_183] : memref<20x2x14xf32, #tpu.memory_space<vmem>>, vector<1x2x14xf32>
    %648 = vector.shape_cast %647 : vector<1x2x14xf32> to vector<2x14xf32>
    %c9_184 = arith.constant 9 : index
    %c0_185 = arith.constant 0 : index
    %c0_186 = arith.constant 0 : index
    %649 = vector.load %arg1[%c9_184, %c0_185, %c0_186] : memref<20x2x1xf32, #tpu.memory_space<vmem>>, vector<1x2x1xf32>
    %650 = vector.shape_cast %649 : vector<1x2x1xf32> to vector<2x1xf32>
    %c9_187 = arith.constant 9 : index
    %c0_188 = arith.constant 0 : index
    %c0_189 = arith.constant 0 : index
    %651 = vector.load %arg2[%c9_187, %c0_188, %c0_189] : memref<20x2x1xf32, #tpu.memory_space<vmem>>, vector<1x2x1xf32>
    %652 = vector.shape_cast %651 : vector<1x2x1xf32> to vector<2x1xf32>
    %cst_190 = arith.constant dense<0.000000e+00> : vector<2x40xf32>
    %653 = tpu.matmul %648, %0, %cst_190 {dimension_numbers = #tpu.dot_dimension_numbers<[1], [0], [0], [1], [0, 0, 1, 1], [], []>} : vector<2x14xf32>, vector<14x40xf32>, vector<2x40xf32> -> vector<2x40xf32>
    %654 = vector.broadcast %650 : vector<2x1xf32> to vector<2x40xf32>
    %655 = arith.mulf %654, %16 : vector<2x40xf32>
    %656 = arith.addf %653, %655 : vector<2x40xf32>
    %657 = arith.addf %656, %22 : vector<2x40xf32>
    %658 = vector.broadcast %652 : vector<2x1xf32> to vector<2x10xf32>
    %659 = arith.mulf %658, %4 : vector<2x10xf32>
    %660 = arith.addf %659, %7 : vector<2x10xf32>
    %cst_191 = arith.constant 0.000000e+00 : f32
    %661 = vector.broadcast %cst_191 : f32 to vector<2x10xf32>
    %662 = arith.maximumf %660, %661 : vector<2x10xf32>
    %cst_192 = arith.constant 0.000000e+00 : f32
    %663 = vector.broadcast %cst_192 : f32 to vector<2x10xf32>
    %664 = arith.subf %663, %662 : vector<2x10xf32>
    %665 = math.exp %664 : vector<2x10xf32>
    %666 = arith.mulf %646, %665 : vector<2x10xf32>
    %667 = arith.mulf %666, %10 : vector<2x10xf32>
    %cst_193 = arith.constant dense<0.000000e+00> : vector<2xf32>
    %668 = vector.multi_reduction <add>, %667, %cst_193 [1] : vector<2x10xf32> to vector<2xf32>
    %669 = vector.shape_cast %668 : vector<2xf32> to vector<2x1xf32>
    %670 = arith.addf %669, %13 : vector<2x1xf32>
    %671 = vector.extract_strided_slice %648 {offsets = [0, 2], sizes = [2, 1], strides = [1, 1]} : vector<2x14xf32> to vector<2x1xf32>
    %672 = arith.mulf %671, %650 : vector<2x1xf32>
    %cst_194 = arith.constant 1.000000e+00 : f32
    %673 = vector.broadcast %cst_194 : f32 to vector<2x1xf32>
    %674 = arith.subf %673, %650 : vector<2x1xf32>
    %675 = arith.mulf %674, %670 : vector<2x1xf32>
    %676 = arith.addf %672, %675 : vector<2x1xf32>
    %677 = arith.subf %676, %670 : vector<2x1xf32>
    %678 = math.absf %677 : vector<2x1xf32>
    %679 = arith.mulf %678, %650 : vector<2x1xf32>
    %680 = vector.shape_cast %679 : vector<2x1xf32> to vector<1x2x1xf32>
    %cst_195 = arith.constant dense<0.000000e+00> : vector<1xf32>
    %681 = vector.multi_reduction <add>, %680, %cst_195 [1, 2] : vector<1x2x1xf32> to vector<1xf32>
    %682 = vector.shape_cast %681 : vector<1xf32> to vector<1x1x1xf32>
    %683 = vector.extract %682[0, 0, 0] : f32 from vector<1x1x1xf32>
    %684 = vector.broadcast %683 : f32 to vector<1x1xf32>
    %685 = vector.shape_cast %650 : vector<2x1xf32> to vector<1x2x1xf32>
    %cst_196 = arith.constant dense<0.000000e+00> : vector<1xf32>
    %686 = vector.multi_reduction <add>, %685, %cst_196 [1, 2] : vector<1x2x1xf32> to vector<1xf32>
    %687 = vector.shape_cast %686 : vector<1xf32> to vector<1x1x1xf32>
    %688 = vector.extract %687[0, 0, 0] : f32 from vector<1x1x1xf32>
    %689 = vector.broadcast %688 : f32 to vector<1x1xf32>
    %cst_197 = arith.constant 9.99999974E-6 : f32
    %690 = vector.broadcast %cst_197 : f32 to vector<1x1xf32>
    %691 = arith.addf %689, %690 : vector<1x1xf32>
    %692 = tpu.reciprocal %691 {approx = true} : vector<1x1xf32> -> vector<1x1xf32>
    %693 = arith.mulf %684, %692 : vector<1x1xf32>
    %694 = arith.addf %625, %693 : vector<1x1xf32>
    %695 = arith.subf %676, %671 : vector<2x1xf32>
    %696 = vector.broadcast %695 : vector<2x1xf32> to vector<2x40xf32>
    %697 = arith.mulf %696, %19 : vector<2x40xf32>
    %698 = arith.addf %657, %697 : vector<2x40xf32>
    %cst_198 = arith.constant dense<0.000000e+00> : vector<2x40xf32>
    %699 = tpu.matmul %666, %1, %cst_198 {dimension_numbers = #tpu.dot_dimension_numbers<[1], [0], [0], [1], [0, 0, 1, 1], [], []>} : vector<2x10xf32>, vector<10x40xf32>, vector<2x40xf32> -> vector<2x40xf32>
    %700 = arith.addf %698, %699 : vector<2x40xf32>
    %701 = arith.negf %700 : vector<2x40xf32>
    %702 = math.exp %701 : vector<2x40xf32>
    %cst_199 = arith.constant 1.000000e+00 : f32
    %703 = vector.broadcast %cst_199 : f32 to vector<2x40xf32>
    %704 = arith.addf %703, %702 : vector<2x40xf32>
    %705 = arith.divf %703, %704 : vector<2x40xf32>
    %706 = math.tanh %700 : vector<2x40xf32>
    %707 = vector.extract_strided_slice %705 {offsets = [0, 0], sizes = [2, 10], strides = [1, 1]} : vector<2x40xf32> to vector<2x10xf32>
    %708 = vector.extract_strided_slice %705 {offsets = [0, 10], sizes = [2, 10], strides = [1, 1]} : vector<2x40xf32> to vector<2x10xf32>
    %709 = vector.extract_strided_slice %706 {offsets = [0, 20], sizes = [2, 10], strides = [1, 1]} : vector<2x40xf32> to vector<2x10xf32>
    %710 = vector.extract_strided_slice %705 {offsets = [0, 30], sizes = [2, 10], strides = [1, 1]} : vector<2x40xf32> to vector<2x10xf32>
    %711 = arith.mulf %708, %644 : vector<2x10xf32>
    %712 = arith.mulf %707, %709 : vector<2x10xf32>
    %713 = arith.addf %711, %712 : vector<2x10xf32>
    %714 = math.tanh %713 : vector<2x10xf32>
    %715 = arith.mulf %710, %714 : vector<2x10xf32>
    %c10 = arith.constant 10 : index
    %c0_200 = arith.constant 0 : index
    %c0_201 = arith.constant 0 : index
    %716 = vector.load %arg0[%c10, %c0_200, %c0_201] : memref<20x2x14xf32, #tpu.memory_space<vmem>>, vector<1x2x14xf32>
    %717 = vector.shape_cast %716 : vector<1x2x14xf32> to vector<2x14xf32>
    %c10_202 = arith.constant 10 : index
    %c0_203 = arith.constant 0 : index
    %c0_204 = arith.constant 0 : index
    %718 = vector.load %arg1[%c10_202, %c0_203, %c0_204] : memref<20x2x1xf32, #tpu.memory_space<vmem>>, vector<1x2x1xf32>
    %719 = vector.shape_cast %718 : vector<1x2x1xf32> to vector<2x1xf32>
    %c10_205 = arith.constant 10 : index
    %c0_206 = arith.constant 0 : index
    %c0_207 = arith.constant 0 : index
    %720 = vector.load %arg2[%c10_205, %c0_206, %c0_207] : memref<20x2x1xf32, #tpu.memory_space<vmem>>, vector<1x2x1xf32>
    %721 = vector.shape_cast %720 : vector<1x2x1xf32> to vector<2x1xf32>
    %cst_208 = arith.constant dense<0.000000e+00> : vector<2x40xf32>
    %722 = tpu.matmul %717, %0, %cst_208 {dimension_numbers = #tpu.dot_dimension_numbers<[1], [0], [0], [1], [0, 0, 1, 1], [], []>} : vector<2x14xf32>, vector<14x40xf32>, vector<2x40xf32> -> vector<2x40xf32>
    %723 = vector.broadcast %719 : vector<2x1xf32> to vector<2x40xf32>
    %724 = arith.mulf %723, %16 : vector<2x40xf32>
    %725 = arith.addf %722, %724 : vector<2x40xf32>
    %726 = arith.addf %725, %22 : vector<2x40xf32>
    %727 = vector.broadcast %721 : vector<2x1xf32> to vector<2x10xf32>
    %728 = arith.mulf %727, %4 : vector<2x10xf32>
    %729 = arith.addf %728, %7 : vector<2x10xf32>
    %cst_209 = arith.constant 0.000000e+00 : f32
    %730 = vector.broadcast %cst_209 : f32 to vector<2x10xf32>
    %731 = arith.maximumf %729, %730 : vector<2x10xf32>
    %cst_210 = arith.constant 0.000000e+00 : f32
    %732 = vector.broadcast %cst_210 : f32 to vector<2x10xf32>
    %733 = arith.subf %732, %731 : vector<2x10xf32>
    %734 = math.exp %733 : vector<2x10xf32>
    %735 = arith.mulf %715, %734 : vector<2x10xf32>
    %736 = arith.mulf %735, %10 : vector<2x10xf32>
    %cst_211 = arith.constant dense<0.000000e+00> : vector<2xf32>
    %737 = vector.multi_reduction <add>, %736, %cst_211 [1] : vector<2x10xf32> to vector<2xf32>
    %738 = vector.shape_cast %737 : vector<2xf32> to vector<2x1xf32>
    %739 = arith.addf %738, %13 : vector<2x1xf32>
    %740 = vector.extract_strided_slice %717 {offsets = [0, 2], sizes = [2, 1], strides = [1, 1]} : vector<2x14xf32> to vector<2x1xf32>
    %741 = arith.mulf %740, %719 : vector<2x1xf32>
    %cst_212 = arith.constant 1.000000e+00 : f32
    %742 = vector.broadcast %cst_212 : f32 to vector<2x1xf32>
    %743 = arith.subf %742, %719 : vector<2x1xf32>
    %744 = arith.mulf %743, %739 : vector<2x1xf32>
    %745 = arith.addf %741, %744 : vector<2x1xf32>
    %746 = arith.subf %745, %739 : vector<2x1xf32>
    %747 = math.absf %746 : vector<2x1xf32>
    %748 = arith.mulf %747, %719 : vector<2x1xf32>
    %749 = vector.shape_cast %748 : vector<2x1xf32> to vector<1x2x1xf32>
    %cst_213 = arith.constant dense<0.000000e+00> : vector<1xf32>
    %750 = vector.multi_reduction <add>, %749, %cst_213 [1, 2] : vector<1x2x1xf32> to vector<1xf32>
    %751 = vector.shape_cast %750 : vector<1xf32> to vector<1x1x1xf32>
    %752 = vector.extract %751[0, 0, 0] : f32 from vector<1x1x1xf32>
    %753 = vector.broadcast %752 : f32 to vector<1x1xf32>
    %754 = vector.shape_cast %719 : vector<2x1xf32> to vector<1x2x1xf32>
    %cst_214 = arith.constant dense<0.000000e+00> : vector<1xf32>
    %755 = vector.multi_reduction <add>, %754, %cst_214 [1, 2] : vector<1x2x1xf32> to vector<1xf32>
    %756 = vector.shape_cast %755 : vector<1xf32> to vector<1x1x1xf32>
    %757 = vector.extract %756[0, 0, 0] : f32 from vector<1x1x1xf32>
    %758 = vector.broadcast %757 : f32 to vector<1x1xf32>
    %cst_215 = arith.constant 9.99999974E-6 : f32
    %759 = vector.broadcast %cst_215 : f32 to vector<1x1xf32>
    %760 = arith.addf %758, %759 : vector<1x1xf32>
    %761 = tpu.reciprocal %760 {approx = true} : vector<1x1xf32> -> vector<1x1xf32>
    %762 = arith.mulf %753, %761 : vector<1x1xf32>
    %763 = arith.addf %694, %762 : vector<1x1xf32>
    %764 = arith.subf %745, %740 : vector<2x1xf32>
    %765 = vector.broadcast %764 : vector<2x1xf32> to vector<2x40xf32>
    %766 = arith.mulf %765, %19 : vector<2x40xf32>
    %767 = arith.addf %726, %766 : vector<2x40xf32>
    %cst_216 = arith.constant dense<0.000000e+00> : vector<2x40xf32>
    %768 = tpu.matmul %735, %1, %cst_216 {dimension_numbers = #tpu.dot_dimension_numbers<[1], [0], [0], [1], [0, 0, 1, 1], [], []>} : vector<2x10xf32>, vector<10x40xf32>, vector<2x40xf32> -> vector<2x40xf32>
    %769 = arith.addf %767, %768 : vector<2x40xf32>
    %770 = arith.negf %769 : vector<2x40xf32>
    %771 = math.exp %770 : vector<2x40xf32>
    %cst_217 = arith.constant 1.000000e+00 : f32
    %772 = vector.broadcast %cst_217 : f32 to vector<2x40xf32>
    %773 = arith.addf %772, %771 : vector<2x40xf32>
    %774 = arith.divf %772, %773 : vector<2x40xf32>
    %775 = math.tanh %769 : vector<2x40xf32>
    %776 = vector.extract_strided_slice %774 {offsets = [0, 0], sizes = [2, 10], strides = [1, 1]} : vector<2x40xf32> to vector<2x10xf32>
    %777 = vector.extract_strided_slice %774 {offsets = [0, 10], sizes = [2, 10], strides = [1, 1]} : vector<2x40xf32> to vector<2x10xf32>
    %778 = vector.extract_strided_slice %775 {offsets = [0, 20], sizes = [2, 10], strides = [1, 1]} : vector<2x40xf32> to vector<2x10xf32>
    %779 = vector.extract_strided_slice %774 {offsets = [0, 30], sizes = [2, 10], strides = [1, 1]} : vector<2x40xf32> to vector<2x10xf32>
    %780 = arith.mulf %777, %713 : vector<2x10xf32>
    %781 = arith.mulf %776, %778 : vector<2x10xf32>
    %782 = arith.addf %780, %781 : vector<2x10xf32>
    %783 = math.tanh %782 : vector<2x10xf32>
    %784 = arith.mulf %779, %783 : vector<2x10xf32>
    %c11 = arith.constant 11 : index
    %c0_218 = arith.constant 0 : index
    %c0_219 = arith.constant 0 : index
    %785 = vector.load %arg0[%c11, %c0_218, %c0_219] : memref<20x2x14xf32, #tpu.memory_space<vmem>>, vector<1x2x14xf32>
    %786 = vector.shape_cast %785 : vector<1x2x14xf32> to vector<2x14xf32>
    %c11_220 = arith.constant 11 : index
    %c0_221 = arith.constant 0 : index
    %c0_222 = arith.constant 0 : index
    %787 = vector.load %arg1[%c11_220, %c0_221, %c0_222] : memref<20x2x1xf32, #tpu.memory_space<vmem>>, vector<1x2x1xf32>
    %788 = vector.shape_cast %787 : vector<1x2x1xf32> to vector<2x1xf32>
    %c11_223 = arith.constant 11 : index
    %c0_224 = arith.constant 0 : index
    %c0_225 = arith.constant 0 : index
    %789 = vector.load %arg2[%c11_223, %c0_224, %c0_225] : memref<20x2x1xf32, #tpu.memory_space<vmem>>, vector<1x2x1xf32>
    %790 = vector.shape_cast %789 : vector<1x2x1xf32> to vector<2x1xf32>
    %cst_226 = arith.constant dense<0.000000e+00> : vector<2x40xf32>
    %791 = tpu.matmul %786, %0, %cst_226 {dimension_numbers = #tpu.dot_dimension_numbers<[1], [0], [0], [1], [0, 0, 1, 1], [], []>} : vector<2x14xf32>, vector<14x40xf32>, vector<2x40xf32> -> vector<2x40xf32>
    %792 = vector.broadcast %788 : vector<2x1xf32> to vector<2x40xf32>
    %793 = arith.mulf %792, %16 : vector<2x40xf32>
    %794 = arith.addf %791, %793 : vector<2x40xf32>
    %795 = arith.addf %794, %22 : vector<2x40xf32>
    %796 = vector.broadcast %790 : vector<2x1xf32> to vector<2x10xf32>
    %797 = arith.mulf %796, %4 : vector<2x10xf32>
    %798 = arith.addf %797, %7 : vector<2x10xf32>
    %cst_227 = arith.constant 0.000000e+00 : f32
    %799 = vector.broadcast %cst_227 : f32 to vector<2x10xf32>
    %800 = arith.maximumf %798, %799 : vector<2x10xf32>
    %cst_228 = arith.constant 0.000000e+00 : f32
    %801 = vector.broadcast %cst_228 : f32 to vector<2x10xf32>
    %802 = arith.subf %801, %800 : vector<2x10xf32>
    %803 = math.exp %802 : vector<2x10xf32>
    %804 = arith.mulf %784, %803 : vector<2x10xf32>
    %805 = arith.mulf %804, %10 : vector<2x10xf32>
    %cst_229 = arith.constant dense<0.000000e+00> : vector<2xf32>
    %806 = vector.multi_reduction <add>, %805, %cst_229 [1] : vector<2x10xf32> to vector<2xf32>
    %807 = vector.shape_cast %806 : vector<2xf32> to vector<2x1xf32>
    %808 = arith.addf %807, %13 : vector<2x1xf32>
    %809 = vector.extract_strided_slice %786 {offsets = [0, 2], sizes = [2, 1], strides = [1, 1]} : vector<2x14xf32> to vector<2x1xf32>
    %810 = arith.mulf %809, %788 : vector<2x1xf32>
    %cst_230 = arith.constant 1.000000e+00 : f32
    %811 = vector.broadcast %cst_230 : f32 to vector<2x1xf32>
    %812 = arith.subf %811, %788 : vector<2x1xf32>
    %813 = arith.mulf %812, %808 : vector<2x1xf32>
    %814 = arith.addf %810, %813 : vector<2x1xf32>
    %815 = arith.subf %814, %808 : vector<2x1xf32>
    %816 = math.absf %815 : vector<2x1xf32>
    %817 = arith.mulf %816, %788 : vector<2x1xf32>
    %818 = vector.shape_cast %817 : vector<2x1xf32> to vector<1x2x1xf32>
    %cst_231 = arith.constant dense<0.000000e+00> : vector<1xf32>
    %819 = vector.multi_reduction <add>, %818, %cst_231 [1, 2] : vector<1x2x1xf32> to vector<1xf32>
    %820 = vector.shape_cast %819 : vector<1xf32> to vector<1x1x1xf32>
    %821 = vector.extract %820[0, 0, 0] : f32 from vector<1x1x1xf32>
    %822 = vector.broadcast %821 : f32 to vector<1x1xf32>
    %823 = vector.shape_cast %788 : vector<2x1xf32> to vector<1x2x1xf32>
    %cst_232 = arith.constant dense<0.000000e+00> : vector<1xf32>
    %824 = vector.multi_reduction <add>, %823, %cst_232 [1, 2] : vector<1x2x1xf32> to vector<1xf32>
    %825 = vector.shape_cast %824 : vector<1xf32> to vector<1x1x1xf32>
    %826 = vector.extract %825[0, 0, 0] : f32 from vector<1x1x1xf32>
    %827 = vector.broadcast %826 : f32 to vector<1x1xf32>
    %cst_233 = arith.constant 9.99999974E-6 : f32
    %828 = vector.broadcast %cst_233 : f32 to vector<1x1xf32>
    %829 = arith.addf %827, %828 : vector<1x1xf32>
    %830 = tpu.reciprocal %829 {approx = true} : vector<1x1xf32> -> vector<1x1xf32>
    %831 = arith.mulf %822, %830 : vector<1x1xf32>
    %832 = arith.addf %763, %831 : vector<1x1xf32>
    %833 = arith.subf %814, %809 : vector<2x1xf32>
    %834 = vector.broadcast %833 : vector<2x1xf32> to vector<2x40xf32>
    %835 = arith.mulf %834, %19 : vector<2x40xf32>
    %836 = arith.addf %795, %835 : vector<2x40xf32>
    %cst_234 = arith.constant dense<0.000000e+00> : vector<2x40xf32>
    %837 = tpu.matmul %804, %1, %cst_234 {dimension_numbers = #tpu.dot_dimension_numbers<[1], [0], [0], [1], [0, 0, 1, 1], [], []>} : vector<2x10xf32>, vector<10x40xf32>, vector<2x40xf32> -> vector<2x40xf32>
    %838 = arith.addf %836, %837 : vector<2x40xf32>
    %839 = arith.negf %838 : vector<2x40xf32>
    %840 = math.exp %839 : vector<2x40xf32>
    %cst_235 = arith.constant 1.000000e+00 : f32
    %841 = vector.broadcast %cst_235 : f32 to vector<2x40xf32>
    %842 = arith.addf %841, %840 : vector<2x40xf32>
    %843 = arith.divf %841, %842 : vector<2x40xf32>
    %844 = math.tanh %838 : vector<2x40xf32>
    %845 = vector.extract_strided_slice %843 {offsets = [0, 0], sizes = [2, 10], strides = [1, 1]} : vector<2x40xf32> to vector<2x10xf32>
    %846 = vector.extract_strided_slice %843 {offsets = [0, 10], sizes = [2, 10], strides = [1, 1]} : vector<2x40xf32> to vector<2x10xf32>
    %847 = vector.extract_strided_slice %844 {offsets = [0, 20], sizes = [2, 10], strides = [1, 1]} : vector<2x40xf32> to vector<2x10xf32>
    %848 = vector.extract_strided_slice %843 {offsets = [0, 30], sizes = [2, 10], strides = [1, 1]} : vector<2x40xf32> to vector<2x10xf32>
    %849 = arith.mulf %846, %782 : vector<2x10xf32>
    %850 = arith.mulf %845, %847 : vector<2x10xf32>
    %851 = arith.addf %849, %850 : vector<2x10xf32>
    %852 = math.tanh %851 : vector<2x10xf32>
    %853 = arith.mulf %848, %852 : vector<2x10xf32>
    %c12 = arith.constant 12 : index
    %c0_236 = arith.constant 0 : index
    %c0_237 = arith.constant 0 : index
    %854 = vector.load %arg0[%c12, %c0_236, %c0_237] : memref<20x2x14xf32, #tpu.memory_space<vmem>>, vector<1x2x14xf32>
    %855 = vector.shape_cast %854 : vector<1x2x14xf32> to vector<2x14xf32>
    %c12_238 = arith.constant 12 : index
    %c0_239 = arith.constant 0 : index
    %c0_240 = arith.constant 0 : index
    %856 = vector.load %arg1[%c12_238, %c0_239, %c0_240] : memref<20x2x1xf32, #tpu.memory_space<vmem>>, vector<1x2x1xf32>
    %857 = vector.shape_cast %856 : vector<1x2x1xf32> to vector<2x1xf32>
    %c12_241 = arith.constant 12 : index
    %c0_242 = arith.constant 0 : index
    %c0_243 = arith.constant 0 : index
    %858 = vector.load %arg2[%c12_241, %c0_242, %c0_243] : memref<20x2x1xf32, #tpu.memory_space<vmem>>, vector<1x2x1xf32>
    %859 = vector.shape_cast %858 : vector<1x2x1xf32> to vector<2x1xf32>
    %cst_244 = arith.constant dense<0.000000e+00> : vector<2x40xf32>
    %860 = tpu.matmul %855, %0, %cst_244 {dimension_numbers = #tpu.dot_dimension_numbers<[1], [0], [0], [1], [0, 0, 1, 1], [], []>} : vector<2x14xf32>, vector<14x40xf32>, vector<2x40xf32> -> vector<2x40xf32>
    %861 = vector.broadcast %857 : vector<2x1xf32> to vector<2x40xf32>
    %862 = arith.mulf %861, %16 : vector<2x40xf32>
    %863 = arith.addf %860, %862 : vector<2x40xf32>
    %864 = arith.addf %863, %22 : vector<2x40xf32>
    %865 = vector.broadcast %859 : vector<2x1xf32> to vector<2x10xf32>
    %866 = arith.mulf %865, %4 : vector<2x10xf32>
    %867 = arith.addf %866, %7 : vector<2x10xf32>
    %cst_245 = arith.constant 0.000000e+00 : f32
    %868 = vector.broadcast %cst_245 : f32 to vector<2x10xf32>
    %869 = arith.maximumf %867, %868 : vector<2x10xf32>
    %cst_246 = arith.constant 0.000000e+00 : f32
    %870 = vector.broadcast %cst_246 : f32 to vector<2x10xf32>
    %871 = arith.subf %870, %869 : vector<2x10xf32>
    %872 = math.exp %871 : vector<2x10xf32>
    %873 = arith.mulf %853, %872 : vector<2x10xf32>
    %874 = arith.mulf %873, %10 : vector<2x10xf32>
    %cst_247 = arith.constant dense<0.000000e+00> : vector<2xf32>
    %875 = vector.multi_reduction <add>, %874, %cst_247 [1] : vector<2x10xf32> to vector<2xf32>
    %876 = vector.shape_cast %875 : vector<2xf32> to vector<2x1xf32>
    %877 = arith.addf %876, %13 : vector<2x1xf32>
    %878 = vector.extract_strided_slice %855 {offsets = [0, 2], sizes = [2, 1], strides = [1, 1]} : vector<2x14xf32> to vector<2x1xf32>
    %879 = arith.mulf %878, %857 : vector<2x1xf32>
    %cst_248 = arith.constant 1.000000e+00 : f32
    %880 = vector.broadcast %cst_248 : f32 to vector<2x1xf32>
    %881 = arith.subf %880, %857 : vector<2x1xf32>
    %882 = arith.mulf %881, %877 : vector<2x1xf32>
    %883 = arith.addf %879, %882 : vector<2x1xf32>
    %884 = arith.subf %883, %877 : vector<2x1xf32>
    %885 = math.absf %884 : vector<2x1xf32>
    %886 = arith.mulf %885, %857 : vector<2x1xf32>
    %887 = vector.shape_cast %886 : vector<2x1xf32> to vector<1x2x1xf32>
    %cst_249 = arith.constant dense<0.000000e+00> : vector<1xf32>
    %888 = vector.multi_reduction <add>, %887, %cst_249 [1, 2] : vector<1x2x1xf32> to vector<1xf32>
    %889 = vector.shape_cast %888 : vector<1xf32> to vector<1x1x1xf32>
    %890 = vector.extract %889[0, 0, 0] : f32 from vector<1x1x1xf32>
    %891 = vector.broadcast %890 : f32 to vector<1x1xf32>
    %892 = vector.shape_cast %857 : vector<2x1xf32> to vector<1x2x1xf32>
    %cst_250 = arith.constant dense<0.000000e+00> : vector<1xf32>
    %893 = vector.multi_reduction <add>, %892, %cst_250 [1, 2] : vector<1x2x1xf32> to vector<1xf32>
    %894 = vector.shape_cast %893 : vector<1xf32> to vector<1x1x1xf32>
    %895 = vector.extract %894[0, 0, 0] : f32 from vector<1x1x1xf32>
    %896 = vector.broadcast %895 : f32 to vector<1x1xf32>
    %cst_251 = arith.constant 9.99999974E-6 : f32
    %897 = vector.broadcast %cst_251 : f32 to vector<1x1xf32>
    %898 = arith.addf %896, %897 : vector<1x1xf32>
    %899 = tpu.reciprocal %898 {approx = true} : vector<1x1xf32> -> vector<1x1xf32>
    %900 = arith.mulf %891, %899 : vector<1x1xf32>
    %901 = arith.addf %832, %900 : vector<1x1xf32>
    %902 = arith.subf %883, %878 : vector<2x1xf32>
    %903 = vector.broadcast %902 : vector<2x1xf32> to vector<2x40xf32>
    %904 = arith.mulf %903, %19 : vector<2x40xf32>
    %905 = arith.addf %864, %904 : vector<2x40xf32>
    %cst_252 = arith.constant dense<0.000000e+00> : vector<2x40xf32>
    %906 = tpu.matmul %873, %1, %cst_252 {dimension_numbers = #tpu.dot_dimension_numbers<[1], [0], [0], [1], [0, 0, 1, 1], [], []>} : vector<2x10xf32>, vector<10x40xf32>, vector<2x40xf32> -> vector<2x40xf32>
    %907 = arith.addf %905, %906 : vector<2x40xf32>
    %908 = arith.negf %907 : vector<2x40xf32>
    %909 = math.exp %908 : vector<2x40xf32>
    %cst_253 = arith.constant 1.000000e+00 : f32
    %910 = vector.broadcast %cst_253 : f32 to vector<2x40xf32>
    %911 = arith.addf %910, %909 : vector<2x40xf32>
    %912 = arith.divf %910, %911 : vector<2x40xf32>
    %913 = math.tanh %907 : vector<2x40xf32>
    %914 = vector.extract_strided_slice %912 {offsets = [0, 0], sizes = [2, 10], strides = [1, 1]} : vector<2x40xf32> to vector<2x10xf32>
    %915 = vector.extract_strided_slice %912 {offsets = [0, 10], sizes = [2, 10], strides = [1, 1]} : vector<2x40xf32> to vector<2x10xf32>
    %916 = vector.extract_strided_slice %913 {offsets = [0, 20], sizes = [2, 10], strides = [1, 1]} : vector<2x40xf32> to vector<2x10xf32>
    %917 = vector.extract_strided_slice %912 {offsets = [0, 30], sizes = [2, 10], strides = [1, 1]} : vector<2x40xf32> to vector<2x10xf32>
    %918 = arith.mulf %915, %851 : vector<2x10xf32>
    %919 = arith.mulf %914, %916 : vector<2x10xf32>
    %920 = arith.addf %918, %919 : vector<2x10xf32>
    %921 = math.tanh %920 : vector<2x10xf32>
    %922 = arith.mulf %917, %921 : vector<2x10xf32>
    %c13 = arith.constant 13 : index
    %c0_254 = arith.constant 0 : index
    %c0_255 = arith.constant 0 : index
    %923 = vector.load %arg0[%c13, %c0_254, %c0_255] : memref<20x2x14xf32, #tpu.memory_space<vmem>>, vector<1x2x14xf32>
    %924 = vector.shape_cast %923 : vector<1x2x14xf32> to vector<2x14xf32>
    %c13_256 = arith.constant 13 : index
    %c0_257 = arith.constant 0 : index
    %c0_258 = arith.constant 0 : index
    %925 = vector.load %arg1[%c13_256, %c0_257, %c0_258] : memref<20x2x1xf32, #tpu.memory_space<vmem>>, vector<1x2x1xf32>
    %926 = vector.shape_cast %925 : vector<1x2x1xf32> to vector<2x1xf32>
    %c13_259 = arith.constant 13 : index
    %c0_260 = arith.constant 0 : index
    %c0_261 = arith.constant 0 : index
    %927 = vector.load %arg2[%c13_259, %c0_260, %c0_261] : memref<20x2x1xf32, #tpu.memory_space<vmem>>, vector<1x2x1xf32>
    %928 = vector.shape_cast %927 : vector<1x2x1xf32> to vector<2x1xf32>
    %cst_262 = arith.constant dense<0.000000e+00> : vector<2x40xf32>
    %929 = tpu.matmul %924, %0, %cst_262 {dimension_numbers = #tpu.dot_dimension_numbers<[1], [0], [0], [1], [0, 0, 1, 1], [], []>} : vector<2x14xf32>, vector<14x40xf32>, vector<2x40xf32> -> vector<2x40xf32>
    %930 = vector.broadcast %926 : vector<2x1xf32> to vector<2x40xf32>
    %931 = arith.mulf %930, %16 : vector<2x40xf32>
    %932 = arith.addf %929, %931 : vector<2x40xf32>
    %933 = arith.addf %932, %22 : vector<2x40xf32>
    %934 = vector.broadcast %928 : vector<2x1xf32> to vector<2x10xf32>
    %935 = arith.mulf %934, %4 : vector<2x10xf32>
    %936 = arith.addf %935, %7 : vector<2x10xf32>
    %cst_263 = arith.constant 0.000000e+00 : f32
    %937 = vector.broadcast %cst_263 : f32 to vector<2x10xf32>
    %938 = arith.maximumf %936, %937 : vector<2x10xf32>
    %cst_264 = arith.constant 0.000000e+00 : f32
    %939 = vector.broadcast %cst_264 : f32 to vector<2x10xf32>
    %940 = arith.subf %939, %938 : vector<2x10xf32>
    %941 = math.exp %940 : vector<2x10xf32>
    %942 = arith.mulf %922, %941 : vector<2x10xf32>
    %943 = arith.mulf %942, %10 : vector<2x10xf32>
    %cst_265 = arith.constant dense<0.000000e+00> : vector<2xf32>
    %944 = vector.multi_reduction <add>, %943, %cst_265 [1] : vector<2x10xf32> to vector<2xf32>
    %945 = vector.shape_cast %944 : vector<2xf32> to vector<2x1xf32>
    %946 = arith.addf %945, %13 : vector<2x1xf32>
    %947 = vector.extract_strided_slice %924 {offsets = [0, 2], sizes = [2, 1], strides = [1, 1]} : vector<2x14xf32> to vector<2x1xf32>
    %948 = arith.mulf %947, %926 : vector<2x1xf32>
    %cst_266 = arith.constant 1.000000e+00 : f32
    %949 = vector.broadcast %cst_266 : f32 to vector<2x1xf32>
    %950 = arith.subf %949, %926 : vector<2x1xf32>
    %951 = arith.mulf %950, %946 : vector<2x1xf32>
    %952 = arith.addf %948, %951 : vector<2x1xf32>
    %953 = arith.subf %952, %946 : vector<2x1xf32>
    %954 = math.absf %953 : vector<2x1xf32>
    %955 = arith.mulf %954, %926 : vector<2x1xf32>
    %956 = vector.shape_cast %955 : vector<2x1xf32> to vector<1x2x1xf32>
    %cst_267 = arith.constant dense<0.000000e+00> : vector<1xf32>
    %957 = vector.multi_reduction <add>, %956, %cst_267 [1, 2] : vector<1x2x1xf32> to vector<1xf32>
    %958 = vector.shape_cast %957 : vector<1xf32> to vector<1x1x1xf32>
    %959 = vector.extract %958[0, 0, 0] : f32 from vector<1x1x1xf32>
    %960 = vector.broadcast %959 : f32 to vector<1x1xf32>
    %961 = vector.shape_cast %926 : vector<2x1xf32> to vector<1x2x1xf32>
    %cst_268 = arith.constant dense<0.000000e+00> : vector<1xf32>
    %962 = vector.multi_reduction <add>, %961, %cst_268 [1, 2] : vector<1x2x1xf32> to vector<1xf32>
    %963 = vector.shape_cast %962 : vector<1xf32> to vector<1x1x1xf32>
    %964 = vector.extract %963[0, 0, 0] : f32 from vector<1x1x1xf32>
    %965 = vector.broadcast %964 : f32 to vector<1x1xf32>
    %cst_269 = arith.constant 9.99999974E-6 : f32
    %966 = vector.broadcast %cst_269 : f32 to vector<1x1xf32>
    %967 = arith.addf %965, %966 : vector<1x1xf32>
    %968 = tpu.reciprocal %967 {approx = true} : vector<1x1xf32> -> vector<1x1xf32>
    %969 = arith.mulf %960, %968 : vector<1x1xf32>
    %970 = arith.addf %901, %969 : vector<1x1xf32>
    %971 = arith.subf %952, %947 : vector<2x1xf32>
    %972 = vector.broadcast %971 : vector<2x1xf32> to vector<2x40xf32>
    %973 = arith.mulf %972, %19 : vector<2x40xf32>
    %974 = arith.addf %933, %973 : vector<2x40xf32>
    %cst_270 = arith.constant dense<0.000000e+00> : vector<2x40xf32>
    %975 = tpu.matmul %942, %1, %cst_270 {dimension_numbers = #tpu.dot_dimension_numbers<[1], [0], [0], [1], [0, 0, 1, 1], [], []>} : vector<2x10xf32>, vector<10x40xf32>, vector<2x40xf32> -> vector<2x40xf32>
    %976 = arith.addf %974, %975 : vector<2x40xf32>
    %977 = arith.negf %976 : vector<2x40xf32>
    %978 = math.exp %977 : vector<2x40xf32>
    %cst_271 = arith.constant 1.000000e+00 : f32
    %979 = vector.broadcast %cst_271 : f32 to vector<2x40xf32>
    %980 = arith.addf %979, %978 : vector<2x40xf32>
    %981 = arith.divf %979, %980 : vector<2x40xf32>
    %982 = math.tanh %976 : vector<2x40xf32>
    %983 = vector.extract_strided_slice %981 {offsets = [0, 0], sizes = [2, 10], strides = [1, 1]} : vector<2x40xf32> to vector<2x10xf32>
    %984 = vector.extract_strided_slice %981 {offsets = [0, 10], sizes = [2, 10], strides = [1, 1]} : vector<2x40xf32> to vector<2x10xf32>
    %985 = vector.extract_strided_slice %982 {offsets = [0, 20], sizes = [2, 10], strides = [1, 1]} : vector<2x40xf32> to vector<2x10xf32>
    %986 = vector.extract_strided_slice %981 {offsets = [0, 30], sizes = [2, 10], strides = [1, 1]} : vector<2x40xf32> to vector<2x10xf32>
    %987 = arith.mulf %984, %920 : vector<2x10xf32>
    %988 = arith.mulf %983, %985 : vector<2x10xf32>
    %989 = arith.addf %987, %988 : vector<2x10xf32>
    %990 = math.tanh %989 : vector<2x10xf32>
    %991 = arith.mulf %986, %990 : vector<2x10xf32>
    %c14 = arith.constant 14 : index
    %c0_272 = arith.constant 0 : index
    %c0_273 = arith.constant 0 : index
    %992 = vector.load %arg0[%c14, %c0_272, %c0_273] : memref<20x2x14xf32, #tpu.memory_space<vmem>>, vector<1x2x14xf32>
    %993 = vector.shape_cast %992 : vector<1x2x14xf32> to vector<2x14xf32>
    %c14_274 = arith.constant 14 : index
    %c0_275 = arith.constant 0 : index
    %c0_276 = arith.constant 0 : index
    %994 = vector.load %arg1[%c14_274, %c0_275, %c0_276] : memref<20x2x1xf32, #tpu.memory_space<vmem>>, vector<1x2x1xf32>
    %995 = vector.shape_cast %994 : vector<1x2x1xf32> to vector<2x1xf32>
    %c14_277 = arith.constant 14 : index
    %c0_278 = arith.constant 0 : index
    %c0_279 = arith.constant 0 : index
    %996 = vector.load %arg2[%c14_277, %c0_278, %c0_279] : memref<20x2x1xf32, #tpu.memory_space<vmem>>, vector<1x2x1xf32>
    %997 = vector.shape_cast %996 : vector<1x2x1xf32> to vector<2x1xf32>
    %cst_280 = arith.constant dense<0.000000e+00> : vector<2x40xf32>
    %998 = tpu.matmul %993, %0, %cst_280 {dimension_numbers = #tpu.dot_dimension_numbers<[1], [0], [0], [1], [0, 0, 1, 1], [], []>} : vector<2x14xf32>, vector<14x40xf32>, vector<2x40xf32> -> vector<2x40xf32>
    %999 = vector.broadcast %995 : vector<2x1xf32> to vector<2x40xf32>
    %1000 = arith.mulf %999, %16 : vector<2x40xf32>
    %1001 = arith.addf %998, %1000 : vector<2x40xf32>
    %1002 = arith.addf %1001, %22 : vector<2x40xf32>
    %1003 = vector.broadcast %997 : vector<2x1xf32> to vector<2x10xf32>
    %1004 = arith.mulf %1003, %4 : vector<2x10xf32>
    %1005 = arith.addf %1004, %7 : vector<2x10xf32>
    %cst_281 = arith.constant 0.000000e+00 : f32
    %1006 = vector.broadcast %cst_281 : f32 to vector<2x10xf32>
    %1007 = arith.maximumf %1005, %1006 : vector<2x10xf32>
    %cst_282 = arith.constant 0.000000e+00 : f32
    %1008 = vector.broadcast %cst_282 : f32 to vector<2x10xf32>
    %1009 = arith.subf %1008, %1007 : vector<2x10xf32>
    %1010 = math.exp %1009 : vector<2x10xf32>
    %1011 = arith.mulf %991, %1010 : vector<2x10xf32>
    %1012 = arith.mulf %1011, %10 : vector<2x10xf32>
    %cst_283 = arith.constant dense<0.000000e+00> : vector<2xf32>
    %1013 = vector.multi_reduction <add>, %1012, %cst_283 [1] : vector<2x10xf32> to vector<2xf32>
    %1014 = vector.shape_cast %1013 : vector<2xf32> to vector<2x1xf32>
    %1015 = arith.addf %1014, %13 : vector<2x1xf32>
    %1016 = vector.extract_strided_slice %993 {offsets = [0, 2], sizes = [2, 1], strides = [1, 1]} : vector<2x14xf32> to vector<2x1xf32>
    %1017 = arith.mulf %1016, %995 : vector<2x1xf32>
    %cst_284 = arith.constant 1.000000e+00 : f32
    %1018 = vector.broadcast %cst_284 : f32 to vector<2x1xf32>
    %1019 = arith.subf %1018, %995 : vector<2x1xf32>
    %1020 = arith.mulf %1019, %1015 : vector<2x1xf32>
    %1021 = arith.addf %1017, %1020 : vector<2x1xf32>
    %1022 = arith.subf %1021, %1015 : vector<2x1xf32>
    %1023 = math.absf %1022 : vector<2x1xf32>
    %1024 = arith.mulf %1023, %995 : vector<2x1xf32>
    %1025 = vector.shape_cast %1024 : vector<2x1xf32> to vector<1x2x1xf32>
    %cst_285 = arith.constant dense<0.000000e+00> : vector<1xf32>
    %1026 = vector.multi_reduction <add>, %1025, %cst_285 [1, 2] : vector<1x2x1xf32> to vector<1xf32>
    %1027 = vector.shape_cast %1026 : vector<1xf32> to vector<1x1x1xf32>
    %1028 = vector.extract %1027[0, 0, 0] : f32 from vector<1x1x1xf32>
    %1029 = vector.broadcast %1028 : f32 to vector<1x1xf32>
    %1030 = vector.shape_cast %995 : vector<2x1xf32> to vector<1x2x1xf32>
    %cst_286 = arith.constant dense<0.000000e+00> : vector<1xf32>
    %1031 = vector.multi_reduction <add>, %1030, %cst_286 [1, 2] : vector<1x2x1xf32> to vector<1xf32>
    %1032 = vector.shape_cast %1031 : vector<1xf32> to vector<1x1x1xf32>
    %1033 = vector.extract %1032[0, 0, 0] : f32 from vector<1x1x1xf32>
    %1034 = vector.broadcast %1033 : f32 to vector<1x1xf32>
    %cst_287 = arith.constant 9.99999974E-6 : f32
    %1035 = vector.broadcast %cst_287 : f32 to vector<1x1xf32>
    %1036 = arith.addf %1034, %1035 : vector<1x1xf32>
    %1037 = tpu.reciprocal %1036 {approx = true} : vector<1x1xf32> -> vector<1x1xf32>
    %1038 = arith.mulf %1029, %1037 : vector<1x1xf32>
    %1039 = arith.addf %970, %1038 : vector<1x1xf32>
    %1040 = arith.subf %1021, %1016 : vector<2x1xf32>
    %1041 = vector.broadcast %1040 : vector<2x1xf32> to vector<2x40xf32>
    %1042 = arith.mulf %1041, %19 : vector<2x40xf32>
    %1043 = arith.addf %1002, %1042 : vector<2x40xf32>
    %cst_288 = arith.constant dense<0.000000e+00> : vector<2x40xf32>
    %1044 = tpu.matmul %1011, %1, %cst_288 {dimension_numbers = #tpu.dot_dimension_numbers<[1], [0], [0], [1], [0, 0, 1, 1], [], []>} : vector<2x10xf32>, vector<10x40xf32>, vector<2x40xf32> -> vector<2x40xf32>
    %1045 = arith.addf %1043, %1044 : vector<2x40xf32>
    %1046 = arith.negf %1045 : vector<2x40xf32>
    %1047 = math.exp %1046 : vector<2x40xf32>
    %cst_289 = arith.constant 1.000000e+00 : f32
    %1048 = vector.broadcast %cst_289 : f32 to vector<2x40xf32>
    %1049 = arith.addf %1048, %1047 : vector<2x40xf32>
    %1050 = arith.divf %1048, %1049 : vector<2x40xf32>
    %1051 = math.tanh %1045 : vector<2x40xf32>
    %1052 = vector.extract_strided_slice %1050 {offsets = [0, 0], sizes = [2, 10], strides = [1, 1]} : vector<2x40xf32> to vector<2x10xf32>
    %1053 = vector.extract_strided_slice %1050 {offsets = [0, 10], sizes = [2, 10], strides = [1, 1]} : vector<2x40xf32> to vector<2x10xf32>
    %1054 = vector.extract_strided_slice %1051 {offsets = [0, 20], sizes = [2, 10], strides = [1, 1]} : vector<2x40xf32> to vector<2x10xf32>
    %1055 = vector.extract_strided_slice %1050 {offsets = [0, 30], sizes = [2, 10], strides = [1, 1]} : vector<2x40xf32> to vector<2x10xf32>
    %1056 = arith.mulf %1053, %989 : vector<2x10xf32>
    %1057 = arith.mulf %1052, %1054 : vector<2x10xf32>
    %1058 = arith.addf %1056, %1057 : vector<2x10xf32>
    %1059 = math.tanh %1058 : vector<2x10xf32>
    %1060 = arith.mulf %1055, %1059 : vector<2x10xf32>
    %c15 = arith.constant 15 : index
    %c0_290 = arith.constant 0 : index
    %c0_291 = arith.constant 0 : index
    %1061 = vector.load %arg0[%c15, %c0_290, %c0_291] : memref<20x2x14xf32, #tpu.memory_space<vmem>>, vector<1x2x14xf32>
    %1062 = vector.shape_cast %1061 : vector<1x2x14xf32> to vector<2x14xf32>
    %c15_292 = arith.constant 15 : index
    %c0_293 = arith.constant 0 : index
    %c0_294 = arith.constant 0 : index
    %1063 = vector.load %arg1[%c15_292, %c0_293, %c0_294] : memref<20x2x1xf32, #tpu.memory_space<vmem>>, vector<1x2x1xf32>
    %1064 = vector.shape_cast %1063 : vector<1x2x1xf32> to vector<2x1xf32>
    %c15_295 = arith.constant 15 : index
    %c0_296 = arith.constant 0 : index
    %c0_297 = arith.constant 0 : index
    %1065 = vector.load %arg2[%c15_295, %c0_296, %c0_297] : memref<20x2x1xf32, #tpu.memory_space<vmem>>, vector<1x2x1xf32>
    %1066 = vector.shape_cast %1065 : vector<1x2x1xf32> to vector<2x1xf32>
    %cst_298 = arith.constant dense<0.000000e+00> : vector<2x40xf32>
    %1067 = tpu.matmul %1062, %0, %cst_298 {dimension_numbers = #tpu.dot_dimension_numbers<[1], [0], [0], [1], [0, 0, 1, 1], [], []>} : vector<2x14xf32>, vector<14x40xf32>, vector<2x40xf32> -> vector<2x40xf32>
    %1068 = vector.broadcast %1064 : vector<2x1xf32> to vector<2x40xf32>
    %1069 = arith.mulf %1068, %16 : vector<2x40xf32>
    %1070 = arith.addf %1067, %1069 : vector<2x40xf32>
    %1071 = arith.addf %1070, %22 : vector<2x40xf32>
    %1072 = vector.broadcast %1066 : vector<2x1xf32> to vector<2x10xf32>
    %1073 = arith.mulf %1072, %4 : vector<2x10xf32>
    %1074 = arith.addf %1073, %7 : vector<2x10xf32>
    %cst_299 = arith.constant 0.000000e+00 : f32
    %1075 = vector.broadcast %cst_299 : f32 to vector<2x10xf32>
    %1076 = arith.maximumf %1074, %1075 : vector<2x10xf32>
    %cst_300 = arith.constant 0.000000e+00 : f32
    %1077 = vector.broadcast %cst_300 : f32 to vector<2x10xf32>
    %1078 = arith.subf %1077, %1076 : vector<2x10xf32>
    %1079 = math.exp %1078 : vector<2x10xf32>
    %1080 = arith.mulf %1060, %1079 : vector<2x10xf32>
    %1081 = arith.mulf %1080, %10 : vector<2x10xf32>
    %cst_301 = arith.constant dense<0.000000e+00> : vector<2xf32>
    %1082 = vector.multi_reduction <add>, %1081, %cst_301 [1] : vector<2x10xf32> to vector<2xf32>
    %1083 = vector.shape_cast %1082 : vector<2xf32> to vector<2x1xf32>
    %1084 = arith.addf %1083, %13 : vector<2x1xf32>
    %1085 = vector.extract_strided_slice %1062 {offsets = [0, 2], sizes = [2, 1], strides = [1, 1]} : vector<2x14xf32> to vector<2x1xf32>
    %1086 = arith.mulf %1085, %1064 : vector<2x1xf32>
    %cst_302 = arith.constant 1.000000e+00 : f32
    %1087 = vector.broadcast %cst_302 : f32 to vector<2x1xf32>
    %1088 = arith.subf %1087, %1064 : vector<2x1xf32>
    %1089 = arith.mulf %1088, %1084 : vector<2x1xf32>
    %1090 = arith.addf %1086, %1089 : vector<2x1xf32>
    %1091 = arith.subf %1090, %1084 : vector<2x1xf32>
    %1092 = math.absf %1091 : vector<2x1xf32>
    %1093 = arith.mulf %1092, %1064 : vector<2x1xf32>
    %1094 = vector.shape_cast %1093 : vector<2x1xf32> to vector<1x2x1xf32>
    %cst_303 = arith.constant dense<0.000000e+00> : vector<1xf32>
    %1095 = vector.multi_reduction <add>, %1094, %cst_303 [1, 2] : vector<1x2x1xf32> to vector<1xf32>
    %1096 = vector.shape_cast %1095 : vector<1xf32> to vector<1x1x1xf32>
    %1097 = vector.extract %1096[0, 0, 0] : f32 from vector<1x1x1xf32>
    %1098 = vector.broadcast %1097 : f32 to vector<1x1xf32>
    %1099 = vector.shape_cast %1064 : vector<2x1xf32> to vector<1x2x1xf32>
    %cst_304 = arith.constant dense<0.000000e+00> : vector<1xf32>
    %1100 = vector.multi_reduction <add>, %1099, %cst_304 [1, 2] : vector<1x2x1xf32> to vector<1xf32>
    %1101 = vector.shape_cast %1100 : vector<1xf32> to vector<1x1x1xf32>
    %1102 = vector.extract %1101[0, 0, 0] : f32 from vector<1x1x1xf32>
    %1103 = vector.broadcast %1102 : f32 to vector<1x1xf32>
    %cst_305 = arith.constant 9.99999974E-6 : f32
    %1104 = vector.broadcast %cst_305 : f32 to vector<1x1xf32>
    %1105 = arith.addf %1103, %1104 : vector<1x1xf32>
    %1106 = tpu.reciprocal %1105 {approx = true} : vector<1x1xf32> -> vector<1x1xf32>
    %1107 = arith.mulf %1098, %1106 : vector<1x1xf32>
    %1108 = arith.addf %1039, %1107 : vector<1x1xf32>
    %1109 = arith.subf %1090, %1085 : vector<2x1xf32>
    %1110 = vector.broadcast %1109 : vector<2x1xf32> to vector<2x40xf32>
    %1111 = arith.mulf %1110, %19 : vector<2x40xf32>
    %1112 = arith.addf %1071, %1111 : vector<2x40xf32>
    %cst_306 = arith.constant dense<0.000000e+00> : vector<2x40xf32>
    %1113 = tpu.matmul %1080, %1, %cst_306 {dimension_numbers = #tpu.dot_dimension_numbers<[1], [0], [0], [1], [0, 0, 1, 1], [], []>} : vector<2x10xf32>, vector<10x40xf32>, vector<2x40xf32> -> vector<2x40xf32>
    %1114 = arith.addf %1112, %1113 : vector<2x40xf32>
    %1115 = arith.negf %1114 : vector<2x40xf32>
    %1116 = math.exp %1115 : vector<2x40xf32>
    %cst_307 = arith.constant 1.000000e+00 : f32
    %1117 = vector.broadcast %cst_307 : f32 to vector<2x40xf32>
    %1118 = arith.addf %1117, %1116 : vector<2x40xf32>
    %1119 = arith.divf %1117, %1118 : vector<2x40xf32>
    %1120 = math.tanh %1114 : vector<2x40xf32>
    %1121 = vector.extract_strided_slice %1119 {offsets = [0, 0], sizes = [2, 10], strides = [1, 1]} : vector<2x40xf32> to vector<2x10xf32>
    %1122 = vector.extract_strided_slice %1119 {offsets = [0, 10], sizes = [2, 10], strides = [1, 1]} : vector<2x40xf32> to vector<2x10xf32>
    %1123 = vector.extract_strided_slice %1120 {offsets = [0, 20], sizes = [2, 10], strides = [1, 1]} : vector<2x40xf32> to vector<2x10xf32>
    %1124 = vector.extract_strided_slice %1119 {offsets = [0, 30], sizes = [2, 10], strides = [1, 1]} : vector<2x40xf32> to vector<2x10xf32>
    %1125 = arith.mulf %1122, %1058 : vector<2x10xf32>
    %1126 = arith.mulf %1121, %1123 : vector<2x10xf32>
    %1127 = arith.addf %1125, %1126 : vector<2x10xf32>
    %1128 = math.tanh %1127 : vector<2x10xf32>
    %1129 = arith.mulf %1124, %1128 : vector<2x10xf32>
    %c16 = arith.constant 16 : index
    %c0_308 = arith.constant 0 : index
    %c0_309 = arith.constant 0 : index
    %1130 = vector.load %arg0[%c16, %c0_308, %c0_309] : memref<20x2x14xf32, #tpu.memory_space<vmem>>, vector<1x2x14xf32>
    %1131 = vector.shape_cast %1130 : vector<1x2x14xf32> to vector<2x14xf32>
    %c16_310 = arith.constant 16 : index
    %c0_311 = arith.constant 0 : index
    %c0_312 = arith.constant 0 : index
    %1132 = vector.load %arg1[%c16_310, %c0_311, %c0_312] : memref<20x2x1xf32, #tpu.memory_space<vmem>>, vector<1x2x1xf32>
    %1133 = vector.shape_cast %1132 : vector<1x2x1xf32> to vector<2x1xf32>
    %c16_313 = arith.constant 16 : index
    %c0_314 = arith.constant 0 : index
    %c0_315 = arith.constant 0 : index
    %1134 = vector.load %arg2[%c16_313, %c0_314, %c0_315] : memref<20x2x1xf32, #tpu.memory_space<vmem>>, vector<1x2x1xf32>
    %1135 = vector.shape_cast %1134 : vector<1x2x1xf32> to vector<2x1xf32>
    %cst_316 = arith.constant dense<0.000000e+00> : vector<2x40xf32>
    %1136 = tpu.matmul %1131, %0, %cst_316 {dimension_numbers = #tpu.dot_dimension_numbers<[1], [0], [0], [1], [0, 0, 1, 1], [], []>} : vector<2x14xf32>, vector<14x40xf32>, vector<2x40xf32> -> vector<2x40xf32>
    %1137 = vector.broadcast %1133 : vector<2x1xf32> to vector<2x40xf32>
    %1138 = arith.mulf %1137, %16 : vector<2x40xf32>
    %1139 = arith.addf %1136, %1138 : vector<2x40xf32>
    %1140 = arith.addf %1139, %22 : vector<2x40xf32>
    %1141 = vector.broadcast %1135 : vector<2x1xf32> to vector<2x10xf32>
    %1142 = arith.mulf %1141, %4 : vector<2x10xf32>
    %1143 = arith.addf %1142, %7 : vector<2x10xf32>
    %cst_317 = arith.constant 0.000000e+00 : f32
    %1144 = vector.broadcast %cst_317 : f32 to vector<2x10xf32>
    %1145 = arith.maximumf %1143, %1144 : vector<2x10xf32>
    %cst_318 = arith.constant 0.000000e+00 : f32
    %1146 = vector.broadcast %cst_318 : f32 to vector<2x10xf32>
    %1147 = arith.subf %1146, %1145 : vector<2x10xf32>
    %1148 = math.exp %1147 : vector<2x10xf32>
    %1149 = arith.mulf %1129, %1148 : vector<2x10xf32>
    %1150 = arith.mulf %1149, %10 : vector<2x10xf32>
    %cst_319 = arith.constant dense<0.000000e+00> : vector<2xf32>
    %1151 = vector.multi_reduction <add>, %1150, %cst_319 [1] : vector<2x10xf32> to vector<2xf32>
    %1152 = vector.shape_cast %1151 : vector<2xf32> to vector<2x1xf32>
    %1153 = arith.addf %1152, %13 : vector<2x1xf32>
    %1154 = vector.extract_strided_slice %1131 {offsets = [0, 2], sizes = [2, 1], strides = [1, 1]} : vector<2x14xf32> to vector<2x1xf32>
    %1155 = arith.mulf %1154, %1133 : vector<2x1xf32>
    %cst_320 = arith.constant 1.000000e+00 : f32
    %1156 = vector.broadcast %cst_320 : f32 to vector<2x1xf32>
    %1157 = arith.subf %1156, %1133 : vector<2x1xf32>
    %1158 = arith.mulf %1157, %1153 : vector<2x1xf32>
    %1159 = arith.addf %1155, %1158 : vector<2x1xf32>
    %1160 = arith.subf %1159, %1153 : vector<2x1xf32>
    %1161 = math.absf %1160 : vector<2x1xf32>
    %1162 = arith.mulf %1161, %1133 : vector<2x1xf32>
    %1163 = vector.shape_cast %1162 : vector<2x1xf32> to vector<1x2x1xf32>
    %cst_321 = arith.constant dense<0.000000e+00> : vector<1xf32>
    %1164 = vector.multi_reduction <add>, %1163, %cst_321 [1, 2] : vector<1x2x1xf32> to vector<1xf32>
    %1165 = vector.shape_cast %1164 : vector<1xf32> to vector<1x1x1xf32>
    %1166 = vector.extract %1165[0, 0, 0] : f32 from vector<1x1x1xf32>
    %1167 = vector.broadcast %1166 : f32 to vector<1x1xf32>
    %1168 = vector.shape_cast %1133 : vector<2x1xf32> to vector<1x2x1xf32>
    %cst_322 = arith.constant dense<0.000000e+00> : vector<1xf32>
    %1169 = vector.multi_reduction <add>, %1168, %cst_322 [1, 2] : vector<1x2x1xf32> to vector<1xf32>
    %1170 = vector.shape_cast %1169 : vector<1xf32> to vector<1x1x1xf32>
    %1171 = vector.extract %1170[0, 0, 0] : f32 from vector<1x1x1xf32>
    %1172 = vector.broadcast %1171 : f32 to vector<1x1xf32>
    %cst_323 = arith.constant 9.99999974E-6 : f32
    %1173 = vector.broadcast %cst_323 : f32 to vector<1x1xf32>
    %1174 = arith.addf %1172, %1173 : vector<1x1xf32>
    %1175 = tpu.reciprocal %1174 {approx = true} : vector<1x1xf32> -> vector<1x1xf32>
    %1176 = arith.mulf %1167, %1175 : vector<1x1xf32>
    %1177 = arith.addf %1108, %1176 : vector<1x1xf32>
    %1178 = arith.subf %1159, %1154 : vector<2x1xf32>
    %1179 = vector.broadcast %1178 : vector<2x1xf32> to vector<2x40xf32>
    %1180 = arith.mulf %1179, %19 : vector<2x40xf32>
    %1181 = arith.addf %1140, %1180 : vector<2x40xf32>
    %cst_324 = arith.constant dense<0.000000e+00> : vector<2x40xf32>
    %1182 = tpu.matmul %1149, %1, %cst_324 {dimension_numbers = #tpu.dot_dimension_numbers<[1], [0], [0], [1], [0, 0, 1, 1], [], []>} : vector<2x10xf32>, vector<10x40xf32>, vector<2x40xf32> -> vector<2x40xf32>
    %1183 = arith.addf %1181, %1182 : vector<2x40xf32>
    %1184 = arith.negf %1183 : vector<2x40xf32>
    %1185 = math.exp %1184 : vector<2x40xf32>
    %cst_325 = arith.constant 1.000000e+00 : f32
    %1186 = vector.broadcast %cst_325 : f32 to vector<2x40xf32>
    %1187 = arith.addf %1186, %1185 : vector<2x40xf32>
    %1188 = arith.divf %1186, %1187 : vector<2x40xf32>
    %1189 = math.tanh %1183 : vector<2x40xf32>
    %1190 = vector.extract_strided_slice %1188 {offsets = [0, 0], sizes = [2, 10], strides = [1, 1]} : vector<2x40xf32> to vector<2x10xf32>
    %1191 = vector.extract_strided_slice %1188 {offsets = [0, 10], sizes = [2, 10], strides = [1, 1]} : vector<2x40xf32> to vector<2x10xf32>
    %1192 = vector.extract_strided_slice %1189 {offsets = [0, 20], sizes = [2, 10], strides = [1, 1]} : vector<2x40xf32> to vector<2x10xf32>
    %1193 = vector.extract_strided_slice %1188 {offsets = [0, 30], sizes = [2, 10], strides = [1, 1]} : vector<2x40xf32> to vector<2x10xf32>
    %1194 = arith.mulf %1191, %1127 : vector<2x10xf32>
    %1195 = arith.mulf %1190, %1192 : vector<2x10xf32>
    %1196 = arith.addf %1194, %1195 : vector<2x10xf32>
    %1197 = math.tanh %1196 : vector<2x10xf32>
    %1198 = arith.mulf %1193, %1197 : vector<2x10xf32>
    %c17 = arith.constant 17 : index
    %c0_326 = arith.constant 0 : index
    %c0_327 = arith.constant 0 : index
    %1199 = vector.load %arg0[%c17, %c0_326, %c0_327] : memref<20x2x14xf32, #tpu.memory_space<vmem>>, vector<1x2x14xf32>
    %1200 = vector.shape_cast %1199 : vector<1x2x14xf32> to vector<2x14xf32>
    %c17_328 = arith.constant 17 : index
    %c0_329 = arith.constant 0 : index
    %c0_330 = arith.constant 0 : index
    %1201 = vector.load %arg1[%c17_328, %c0_329, %c0_330] : memref<20x2x1xf32, #tpu.memory_space<vmem>>, vector<1x2x1xf32>
    %1202 = vector.shape_cast %1201 : vector<1x2x1xf32> to vector<2x1xf32>
    %c17_331 = arith.constant 17 : index
    %c0_332 = arith.constant 0 : index
    %c0_333 = arith.constant 0 : index
    %1203 = vector.load %arg2[%c17_331, %c0_332, %c0_333] : memref<20x2x1xf32, #tpu.memory_space<vmem>>, vector<1x2x1xf32>
    %1204 = vector.shape_cast %1203 : vector<1x2x1xf32> to vector<2x1xf32>
    %cst_334 = arith.constant dense<0.000000e+00> : vector<2x40xf32>
    %1205 = tpu.matmul %1200, %0, %cst_334 {dimension_numbers = #tpu.dot_dimension_numbers<[1], [0], [0], [1], [0, 0, 1, 1], [], []>} : vector<2x14xf32>, vector<14x40xf32>, vector<2x40xf32> -> vector<2x40xf32>
    %1206 = vector.broadcast %1202 : vector<2x1xf32> to vector<2x40xf32>
    %1207 = arith.mulf %1206, %16 : vector<2x40xf32>
    %1208 = arith.addf %1205, %1207 : vector<2x40xf32>
    %1209 = arith.addf %1208, %22 : vector<2x40xf32>
    %1210 = vector.broadcast %1204 : vector<2x1xf32> to vector<2x10xf32>
    %1211 = arith.mulf %1210, %4 : vector<2x10xf32>
    %1212 = arith.addf %1211, %7 : vector<2x10xf32>
    %cst_335 = arith.constant 0.000000e+00 : f32
    %1213 = vector.broadcast %cst_335 : f32 to vector<2x10xf32>
    %1214 = arith.maximumf %1212, %1213 : vector<2x10xf32>
    %cst_336 = arith.constant 0.000000e+00 : f32
    %1215 = vector.broadcast %cst_336 : f32 to vector<2x10xf32>
    %1216 = arith.subf %1215, %1214 : vector<2x10xf32>
    %1217 = math.exp %1216 : vector<2x10xf32>
    %1218 = arith.mulf %1198, %1217 : vector<2x10xf32>
    %1219 = arith.mulf %1218, %10 : vector<2x10xf32>
    %cst_337 = arith.constant dense<0.000000e+00> : vector<2xf32>
    %1220 = vector.multi_reduction <add>, %1219, %cst_337 [1] : vector<2x10xf32> to vector<2xf32>
    %1221 = vector.shape_cast %1220 : vector<2xf32> to vector<2x1xf32>
    %1222 = arith.addf %1221, %13 : vector<2x1xf32>
    %1223 = vector.extract_strided_slice %1200 {offsets = [0, 2], sizes = [2, 1], strides = [1, 1]} : vector<2x14xf32> to vector<2x1xf32>
    %1224 = arith.mulf %1223, %1202 : vector<2x1xf32>
    %cst_338 = arith.constant 1.000000e+00 : f32
    %1225 = vector.broadcast %cst_338 : f32 to vector<2x1xf32>
    %1226 = arith.subf %1225, %1202 : vector<2x1xf32>
    %1227 = arith.mulf %1226, %1222 : vector<2x1xf32>
    %1228 = arith.addf %1224, %1227 : vector<2x1xf32>
    %1229 = arith.subf %1228, %1222 : vector<2x1xf32>
    %1230 = math.absf %1229 : vector<2x1xf32>
    %1231 = arith.mulf %1230, %1202 : vector<2x1xf32>
    %1232 = vector.shape_cast %1231 : vector<2x1xf32> to vector<1x2x1xf32>
    %cst_339 = arith.constant dense<0.000000e+00> : vector<1xf32>
    %1233 = vector.multi_reduction <add>, %1232, %cst_339 [1, 2] : vector<1x2x1xf32> to vector<1xf32>
    %1234 = vector.shape_cast %1233 : vector<1xf32> to vector<1x1x1xf32>
    %1235 = vector.extract %1234[0, 0, 0] : f32 from vector<1x1x1xf32>
    %1236 = vector.broadcast %1235 : f32 to vector<1x1xf32>
    %1237 = vector.shape_cast %1202 : vector<2x1xf32> to vector<1x2x1xf32>
    %cst_340 = arith.constant dense<0.000000e+00> : vector<1xf32>
    %1238 = vector.multi_reduction <add>, %1237, %cst_340 [1, 2] : vector<1x2x1xf32> to vector<1xf32>
    %1239 = vector.shape_cast %1238 : vector<1xf32> to vector<1x1x1xf32>
    %1240 = vector.extract %1239[0, 0, 0] : f32 from vector<1x1x1xf32>
    %1241 = vector.broadcast %1240 : f32 to vector<1x1xf32>
    %cst_341 = arith.constant 9.99999974E-6 : f32
    %1242 = vector.broadcast %cst_341 : f32 to vector<1x1xf32>
    %1243 = arith.addf %1241, %1242 : vector<1x1xf32>
    %1244 = tpu.reciprocal %1243 {approx = true} : vector<1x1xf32> -> vector<1x1xf32>
    %1245 = arith.mulf %1236, %1244 : vector<1x1xf32>
    %1246 = arith.addf %1177, %1245 : vector<1x1xf32>
    %1247 = arith.subf %1228, %1223 : vector<2x1xf32>
    %1248 = vector.broadcast %1247 : vector<2x1xf32> to vector<2x40xf32>
    %1249 = arith.mulf %1248, %19 : vector<2x40xf32>
    %1250 = arith.addf %1209, %1249 : vector<2x40xf32>
    %cst_342 = arith.constant dense<0.000000e+00> : vector<2x40xf32>
    %1251 = tpu.matmul %1218, %1, %cst_342 {dimension_numbers = #tpu.dot_dimension_numbers<[1], [0], [0], [1], [0, 0, 1, 1], [], []>} : vector<2x10xf32>, vector<10x40xf32>, vector<2x40xf32> -> vector<2x40xf32>
    %1252 = arith.addf %1250, %1251 : vector<2x40xf32>
    %1253 = arith.negf %1252 : vector<2x40xf32>
    %1254 = math.exp %1253 : vector<2x40xf32>
    %cst_343 = arith.constant 1.000000e+00 : f32
    %1255 = vector.broadcast %cst_343 : f32 to vector<2x40xf32>
    %1256 = arith.addf %1255, %1254 : vector<2x40xf32>
    %1257 = arith.divf %1255, %1256 : vector<2x40xf32>
    %1258 = math.tanh %1252 : vector<2x40xf32>
    %1259 = vector.extract_strided_slice %1257 {offsets = [0, 0], sizes = [2, 10], strides = [1, 1]} : vector<2x40xf32> to vector<2x10xf32>
    %1260 = vector.extract_strided_slice %1257 {offsets = [0, 10], sizes = [2, 10], strides = [1, 1]} : vector<2x40xf32> to vector<2x10xf32>
    %1261 = vector.extract_strided_slice %1258 {offsets = [0, 20], sizes = [2, 10], strides = [1, 1]} : vector<2x40xf32> to vector<2x10xf32>
    %1262 = vector.extract_strided_slice %1257 {offsets = [0, 30], sizes = [2, 10], strides = [1, 1]} : vector<2x40xf32> to vector<2x10xf32>
    %1263 = arith.mulf %1260, %1196 : vector<2x10xf32>
    %1264 = arith.mulf %1259, %1261 : vector<2x10xf32>
    %1265 = arith.addf %1263, %1264 : vector<2x10xf32>
    %1266 = math.tanh %1265 : vector<2x10xf32>
    %1267 = arith.mulf %1262, %1266 : vector<2x10xf32>
    %c18 = arith.constant 18 : index
    %c0_344 = arith.constant 0 : index
    %c0_345 = arith.constant 0 : index
    %1268 = vector.load %arg0[%c18, %c0_344, %c0_345] : memref<20x2x14xf32, #tpu.memory_space<vmem>>, vector<1x2x14xf32>
    %1269 = vector.shape_cast %1268 : vector<1x2x14xf32> to vector<2x14xf32>
    %c18_346 = arith.constant 18 : index
    %c0_347 = arith.constant 0 : index
    %c0_348 = arith.constant 0 : index
    %1270 = vector.load %arg1[%c18_346, %c0_347, %c0_348] : memref<20x2x1xf32, #tpu.memory_space<vmem>>, vector<1x2x1xf32>
    %1271 = vector.shape_cast %1270 : vector<1x2x1xf32> to vector<2x1xf32>
    %c18_349 = arith.constant 18 : index
    %c0_350 = arith.constant 0 : index
    %c0_351 = arith.constant 0 : index
    %1272 = vector.load %arg2[%c18_349, %c0_350, %c0_351] : memref<20x2x1xf32, #tpu.memory_space<vmem>>, vector<1x2x1xf32>
    %1273 = vector.shape_cast %1272 : vector<1x2x1xf32> to vector<2x1xf32>
    %cst_352 = arith.constant dense<0.000000e+00> : vector<2x40xf32>
    %1274 = tpu.matmul %1269, %0, %cst_352 {dimension_numbers = #tpu.dot_dimension_numbers<[1], [0], [0], [1], [0, 0, 1, 1], [], []>} : vector<2x14xf32>, vector<14x40xf32>, vector<2x40xf32> -> vector<2x40xf32>
    %1275 = vector.broadcast %1271 : vector<2x1xf32> to vector<2x40xf32>
    %1276 = arith.mulf %1275, %16 : vector<2x40xf32>
    %1277 = arith.addf %1274, %1276 : vector<2x40xf32>
    %1278 = arith.addf %1277, %22 : vector<2x40xf32>
    %1279 = vector.broadcast %1273 : vector<2x1xf32> to vector<2x10xf32>
    %1280 = arith.mulf %1279, %4 : vector<2x10xf32>
    %1281 = arith.addf %1280, %7 : vector<2x10xf32>
    %cst_353 = arith.constant 0.000000e+00 : f32
    %1282 = vector.broadcast %cst_353 : f32 to vector<2x10xf32>
    %1283 = arith.maximumf %1281, %1282 : vector<2x10xf32>
    %cst_354 = arith.constant 0.000000e+00 : f32
    %1284 = vector.broadcast %cst_354 : f32 to vector<2x10xf32>
    %1285 = arith.subf %1284, %1283 : vector<2x10xf32>
    %1286 = math.exp %1285 : vector<2x10xf32>
    %1287 = arith.mulf %1267, %1286 : vector<2x10xf32>
    %1288 = arith.mulf %1287, %10 : vector<2x10xf32>
    %cst_355 = arith.constant dense<0.000000e+00> : vector<2xf32>
    %1289 = vector.multi_reduction <add>, %1288, %cst_355 [1] : vector<2x10xf32> to vector<2xf32>
    %1290 = vector.shape_cast %1289 : vector<2xf32> to vector<2x1xf32>
    %1291 = arith.addf %1290, %13 : vector<2x1xf32>
    %1292 = vector.extract_strided_slice %1269 {offsets = [0, 2], sizes = [2, 1], strides = [1, 1]} : vector<2x14xf32> to vector<2x1xf32>
    %1293 = arith.mulf %1292, %1271 : vector<2x1xf32>
    %cst_356 = arith.constant 1.000000e+00 : f32
    %1294 = vector.broadcast %cst_356 : f32 to vector<2x1xf32>
    %1295 = arith.subf %1294, %1271 : vector<2x1xf32>
    %1296 = arith.mulf %1295, %1291 : vector<2x1xf32>
    %1297 = arith.addf %1293, %1296 : vector<2x1xf32>
    %1298 = arith.subf %1297, %1291 : vector<2x1xf32>
    %1299 = math.absf %1298 : vector<2x1xf32>
    %1300 = arith.mulf %1299, %1271 : vector<2x1xf32>
    %1301 = vector.shape_cast %1300 : vector<2x1xf32> to vector<1x2x1xf32>
    %cst_357 = arith.constant dense<0.000000e+00> : vector<1xf32>
    %1302 = vector.multi_reduction <add>, %1301, %cst_357 [1, 2] : vector<1x2x1xf32> to vector<1xf32>
    %1303 = vector.shape_cast %1302 : vector<1xf32> to vector<1x1x1xf32>
    %1304 = vector.extract %1303[0, 0, 0] : f32 from vector<1x1x1xf32>
    %1305 = vector.broadcast %1304 : f32 to vector<1x1xf32>
    %1306 = vector.shape_cast %1271 : vector<2x1xf32> to vector<1x2x1xf32>
    %cst_358 = arith.constant dense<0.000000e+00> : vector<1xf32>
    %1307 = vector.multi_reduction <add>, %1306, %cst_358 [1, 2] : vector<1x2x1xf32> to vector<1xf32>
    %1308 = vector.shape_cast %1307 : vector<1xf32> to vector<1x1x1xf32>
    %1309 = vector.extract %1308[0, 0, 0] : f32 from vector<1x1x1xf32>
    %1310 = vector.broadcast %1309 : f32 to vector<1x1xf32>
    %cst_359 = arith.constant 9.99999974E-6 : f32
    %1311 = vector.broadcast %cst_359 : f32 to vector<1x1xf32>
    %1312 = arith.addf %1310, %1311 : vector<1x1xf32>
    %1313 = tpu.reciprocal %1312 {approx = true} : vector<1x1xf32> -> vector<1x1xf32>
    %1314 = arith.mulf %1305, %1313 : vector<1x1xf32>
    %1315 = arith.addf %1246, %1314 : vector<1x1xf32>
    %1316 = arith.subf %1297, %1292 : vector<2x1xf32>
    %1317 = vector.broadcast %1316 : vector<2x1xf32> to vector<2x40xf32>
    %1318 = arith.mulf %1317, %19 : vector<2x40xf32>
    %1319 = arith.addf %1278, %1318 : vector<2x40xf32>
    %cst_360 = arith.constant dense<0.000000e+00> : vector<2x40xf32>
    %1320 = tpu.matmul %1287, %1, %cst_360 {dimension_numbers = #tpu.dot_dimension_numbers<[1], [0], [0], [1], [0, 0, 1, 1], [], []>} : vector<2x10xf32>, vector<10x40xf32>, vector<2x40xf32> -> vector<2x40xf32>
    %1321 = arith.addf %1319, %1320 : vector<2x40xf32>
    %1322 = arith.negf %1321 : vector<2x40xf32>
    %1323 = math.exp %1322 : vector<2x40xf32>
    %cst_361 = arith.constant 1.000000e+00 : f32
    %1324 = vector.broadcast %cst_361 : f32 to vector<2x40xf32>
    %1325 = arith.addf %1324, %1323 : vector<2x40xf32>
    %1326 = arith.divf %1324, %1325 : vector<2x40xf32>
    %1327 = math.tanh %1321 : vector<2x40xf32>
    %1328 = vector.extract_strided_slice %1326 {offsets = [0, 0], sizes = [2, 10], strides = [1, 1]} : vector<2x40xf32> to vector<2x10xf32>
    %1329 = vector.extract_strided_slice %1326 {offsets = [0, 10], sizes = [2, 10], strides = [1, 1]} : vector<2x40xf32> to vector<2x10xf32>
    %1330 = vector.extract_strided_slice %1327 {offsets = [0, 20], sizes = [2, 10], strides = [1, 1]} : vector<2x40xf32> to vector<2x10xf32>
    %1331 = vector.extract_strided_slice %1326 {offsets = [0, 30], sizes = [2, 10], strides = [1, 1]} : vector<2x40xf32> to vector<2x10xf32>
    %1332 = arith.mulf %1329, %1265 : vector<2x10xf32>
    %1333 = arith.mulf %1328, %1330 : vector<2x10xf32>
    %1334 = arith.addf %1332, %1333 : vector<2x10xf32>
    %1335 = math.tanh %1334 : vector<2x10xf32>
    %1336 = arith.mulf %1331, %1335 : vector<2x10xf32>
    %c19 = arith.constant 19 : index
    %c0_362 = arith.constant 0 : index
    %c0_363 = arith.constant 0 : index
    %1337 = vector.load %arg0[%c19, %c0_362, %c0_363] : memref<20x2x14xf32, #tpu.memory_space<vmem>>, vector<1x2x14xf32>
    %1338 = vector.shape_cast %1337 : vector<1x2x14xf32> to vector<2x14xf32>
    %c19_364 = arith.constant 19 : index
    %c0_365 = arith.constant 0 : index
    %c0_366 = arith.constant 0 : index
    %1339 = vector.load %arg1[%c19_364, %c0_365, %c0_366] : memref<20x2x1xf32, #tpu.memory_space<vmem>>, vector<1x2x1xf32>
    %1340 = vector.shape_cast %1339 : vector<1x2x1xf32> to vector<2x1xf32>
    %c19_367 = arith.constant 19 : index
    %c0_368 = arith.constant 0 : index
    %c0_369 = arith.constant 0 : index
    %1341 = vector.load %arg2[%c19_367, %c0_368, %c0_369] : memref<20x2x1xf32, #tpu.memory_space<vmem>>, vector<1x2x1xf32>
    %1342 = vector.shape_cast %1341 : vector<1x2x1xf32> to vector<2x1xf32>
    %1343 = vector.broadcast %1342 : vector<2x1xf32> to vector<2x10xf32>
    %1344 = arith.mulf %1343, %4 : vector<2x10xf32>
    %1345 = arith.addf %1344, %7 : vector<2x10xf32>
    %cst_370 = arith.constant 0.000000e+00 : f32
    %1346 = vector.broadcast %cst_370 : f32 to vector<2x10xf32>
    %1347 = arith.maximumf %1345, %1346 : vector<2x10xf32>
    %cst_371 = arith.constant 0.000000e+00 : f32
    %1348 = vector.broadcast %cst_371 : f32 to vector<2x10xf32>
    %1349 = arith.subf %1348, %1347 : vector<2x10xf32>
    %1350 = math.exp %1349 : vector<2x10xf32>
    %1351 = arith.mulf %1336, %1350 : vector<2x10xf32>
    %1352 = arith.mulf %1351, %10 : vector<2x10xf32>
    %cst_372 = arith.constant dense<0.000000e+00> : vector<2xf32>
    %1353 = vector.multi_reduction <add>, %1352, %cst_372 [1] : vector<2x10xf32> to vector<2xf32>
    %1354 = vector.shape_cast %1353 : vector<2xf32> to vector<2x1xf32>
    %1355 = arith.addf %1354, %13 : vector<2x1xf32>
    %1356 = vector.extract_strided_slice %1338 {offsets = [0, 2], sizes = [2, 1], strides = [1, 1]} : vector<2x14xf32> to vector<2x1xf32>
    %1357 = arith.mulf %1356, %1340 : vector<2x1xf32>
    %cst_373 = arith.constant 1.000000e+00 : f32
    %1358 = vector.broadcast %cst_373 : f32 to vector<2x1xf32>
    %1359 = arith.subf %1358, %1340 : vector<2x1xf32>
    %1360 = arith.mulf %1359, %1355 : vector<2x1xf32>
    %1361 = arith.addf %1357, %1360 : vector<2x1xf32>
    %1362 = arith.subf %1361, %1355 : vector<2x1xf32>
    %1363 = math.absf %1362 : vector<2x1xf32>
    %1364 = arith.mulf %1363, %1340 : vector<2x1xf32>
    %1365 = vector.shape_cast %1364 : vector<2x1xf32> to vector<1x2x1xf32>
    %cst_374 = arith.constant dense<0.000000e+00> : vector<1xf32>
    %1366 = vector.multi_reduction <add>, %1365, %cst_374 [1, 2] : vector<1x2x1xf32> to vector<1xf32>
    %1367 = vector.shape_cast %1366 : vector<1xf32> to vector<1x1x1xf32>
    %1368 = vector.extract %1367[0, 0, 0] : f32 from vector<1x1x1xf32>
    %1369 = vector.broadcast %1368 : f32 to vector<1x1xf32>
    %1370 = vector.shape_cast %1340 : vector<2x1xf32> to vector<1x2x1xf32>
    %cst_375 = arith.constant dense<0.000000e+00> : vector<1xf32>
    %1371 = vector.multi_reduction <add>, %1370, %cst_375 [1, 2] : vector<1x2x1xf32> to vector<1xf32>
    %1372 = vector.shape_cast %1371 : vector<1xf32> to vector<1x1x1xf32>
    %1373 = vector.extract %1372[0, 0, 0] : f32 from vector<1x1x1xf32>
    %1374 = vector.broadcast %1373 : f32 to vector<1x1xf32>
    %cst_376 = arith.constant 9.99999974E-6 : f32
    %1375 = vector.broadcast %cst_376 : f32 to vector<1x1xf32>
    %1376 = arith.addf %1374, %1375 : vector<1x1xf32>
    %1377 = tpu.reciprocal %1376 {approx = true} : vector<1x1xf32> -> vector<1x1xf32>
    %1378 = arith.mulf %1369, %1377 : vector<1x1xf32>
    %1379 = arith.addf %1315, %1378 : vector<1x1xf32>
    %c0_377 = arith.constant 0 : index
    %c0_378 = arith.constant 0 : index
    %1380 = vector.load %arg12[%c0_377, %c0_378] : memref<1x1xf32, #tpu.memory_space<vmem>>, vector<1x1xf32>
    tpu.vector_store %arg12[%c0_377, %c0_378], %1379 {strides = array<i32>} : memref<1x1xf32, #tpu.memory_space<vmem>>, vector<1x1xf32>,
    %1381 = tpu.concatenate %55, %124, %193, %262, %331, %400, %469, %538, %607, %676, %745, %814, %883, %952, %1021, %1090 in 1 : vector<2x1xf32>, vector<2x1xf32>, vector<2x1xf32>, vector<2x1xf32>, vector<2x1xf32>, vector<2x1xf32>, vector<2x1xf32>, vector<2x1xf32>, vector<2x1xf32>, vector<2x1xf32>, vector<2x1xf32>, vector<2x1xf32>, vector<2x1xf32>, vector<2x1xf32>, vector<2x1xf32>, vector<2x1xf32> -> vector<2x16xf32>
    %1382 = tpu.concatenate %1159, %1228, %1297, %1361 in 1 : vector<2x1xf32>, vector<2x1xf32>, vector<2x1xf32>, vector<2x1xf32> -> vector<2x4xf32>
    %1383 = tpu.concatenate %1381, %1382 in 1 : vector<2x16xf32>, vector<2x4xf32> -> vector<2x20xf32>
    %c0_379 = arith.constant 0 : index
    %c0_380 = arith.constant 0 : index
    %1384 = vector.load %arg13[%c0_379, %c0_380] : memref<2x20xf32, #tpu.memory_space<vmem>>, vector<2x20xf32>
    tpu.vector_store %arg13[%c0_379, %c0_380], %1383 {strides = array<i32>} : memref<2x20xf32, #tpu.memory_space<vmem>>, vector<2x20xf32>,
    return
  }
}

</mosaic_0001>

<llo_original>
// kernel: tpu_custom_call.1
$region0: #{tpu_custom_call.1}
  #allocation0 [shape = 'u32[]', space=smem, size = 0x4, offset = 0x4, fixed_abs, tag = 'smem constant byte address 0x4 - core index']
  #allocation1 [shape = 'u32[144,128]{1,0:T(1,128)}', space=vmem, size = 0x12000, scoped, tag = 'internal scratch']
  #allocation2 [shape = 'f32[1,1]{1,0:T(1,128)S(1)}', space=vmem, size = 0x200, scoped, tag = 'scoped memory for tpu_custom_call.1']
  %s0 = inlined_call_operand.vmem [shape: f32[20,2,14], index: 0, kind: input, shape index: {}]
  %s1 = inlined_call_operand.vmem [shape: f32[20,2,1], index: 1, kind: input, shape index: {}]
  %s2 = inlined_call_operand.vmem [shape: f32[20,2,1], index: 2, kind: input, shape index: {}]
  %s3 = inlined_call_operand.vmem [shape: f32[1,10], index: 3, kind: input, shape index: {}]
  %s4 = inlined_call_operand.vmem [shape: f32[1,10], index: 4, kind: input, shape index: {}]
  %s5 = inlined_call_operand.vmem [shape: f32[1,10], index: 5, kind: input, shape index: {}]
  %s6 = inlined_call_operand.<no memory space> [shape: f32[1,1], index: 6, kind: input, shape index: {}]
  %s7 = inlined_call_operand.vmem [shape: f32[14,40], index: 7, kind: input, shape index: {}]
  %s8 = inlined_call_operand.vmem [shape: f32[1,40], index: 8, kind: input, shape index: {}]
  %s9 = inlined_call_operand.vmem [shape: f32[1,40], index: 9, kind: input, shape index: {}]
  %s10 = inlined_call_operand.vmem [shape: f32[10,40], index: 10, kind: input, shape index: {}]
  %s11 = inlined_call_operand.vmem [shape: f32[1,40], index: 11, kind: input, shape index: {}]
  %s12 = inlined_call_operand.hbm [shape: f32[1,1], index: 12, kind: output, shape index: {0}]
  %s13 = inlined_call_operand.hbm [shape: f32[2,20], index: 13, kind: output, shape index: {1}]
  %14 = xla_tuple %s12, %s13
  %s15 = sld [smem:[#allocation0]]
  $region66: #{tpu_custom_call.1} parent=0
    _
  %s17 = ssub.s32 1, %s15
  %s18 = scalar_select 0, %s17, %s15
  %v19 = vstv %s6
  %20 = vst [vmem:[#allocation2] sm:$0x1] %v19
  $region1: #{tpu_custom_call.1} parent=0
    #allocation3 [shape = 'u8[512]{0}', space=vmem, size = 0x400, scoped, tag = 'output window, operand 0, single buffered']
    #allocation4 [shape = 's32[1]{0}', space=sflag, size = 0x4, scoped, tag = 'scoped memory for tpu_custom_call.1']
    #allocation5 [shape = 'u8[1024]{0}', space=vmem, size = 0x400, scoped, tag = 'output window, operand 1, single buffered']
    #allocation6 [shape = 's32[1]{0}', space=sflag, size = 0x4, scoped, tag = 'scoped memory for tpu_custom_call.1']
    %21 = vsyncpa [#allocation4], 0
    %22 = vsyncpa [#allocation6], 0
    // Predicated region
    $region2: #{tpu_custom_call.1} parent=1 // pred_check
      _
    $region3: #{tpu_custom_call.1} parent=1 // pred_check_branch
      %24 = sbr.rel (0) target = $region5
    $region4: #{tpu_custom_call.1} parent=1 // pred_region
      _
    $region5: #{tpu_custom_call.1} parent=1 // pred_fallthru
      _
    // Predicated region
    $region6: #{tpu_custom_call.1} parent=1 // pred_check
      _
    $region7: #{tpu_custom_call.1} parent=1 // pred_check_branch
      %26 = sbr.rel (0) target = $region9
    $region8: #{tpu_custom_call.1} parent=1 // pred_region
      _
    $region9: #{tpu_custom_call.1} parent=1 // pred_fallthru
      _
    // Predicated region
    $region10: #{tpu_custom_call.1} parent=1 // pred_check
      _
    $region11: #{tpu_custom_call.1} parent=1 // pred_check_branch
      %28 = sbr.rel (0) target = $region13
    $region12: #{tpu_custom_call.1} parent=1 // pred_region
      _
    $region13: #{tpu_custom_call.1} parent=1 // pred_fallthru
      _
    // Predicated region
    $region14: #{tpu_custom_call.1} parent=1 // pred_check
      _
    $region15: #{tpu_custom_call.1} parent=1 // pred_check_branch
      %30 = sbr.rel (0) target = $region17
    $region16: #{tpu_custom_call.1} parent=1 // pred_region
      _
    $region17: #{tpu_custom_call.1} parent=1 // pred_fallthru
      _
    // Predicated region
    $region18: #{tpu_custom_call.1} parent=1 // pred_check
      _
    $region19: #{tpu_custom_call.1} parent=1 // pred_check_branch
      %32 = sbr.rel (0) target = $region21
    $region20: #{tpu_custom_call.1} parent=1 // pred_region
      _
    $region21: #{tpu_custom_call.1} parent=1 // pred_fallthru
      _
    // Predicated region
    $region22: #{tpu_custom_call.1} parent=1 // pred_check
      _
    $region23: #{tpu_custom_call.1} parent=1 // pred_check_branch
      %34 = sbr.rel (0) target = $region25
    $region24: #{tpu_custom_call.1} parent=1 // pred_region
      _
    $region25: #{tpu_custom_call.1} parent=1 // pred_fallthru
      _
    // Predicated region
    $region26: #{tpu_custom_call.1} parent=1 // pred_check
      _
    $region27: #{tpu_custom_call.1} parent=1 // pred_check_branch
      %36 = sbr.rel (0) target = $region29
    $region28: #{tpu_custom_call.1} parent=1 // pred_region
      _
    $region29: #{tpu_custom_call.1} parent=1 // pred_fallthru
      _
    // Predicated region
    $region30: #{tpu_custom_call.1} parent=1 // pred_check
      _
    $region31: #{tpu_custom_call.1} parent=1 // pred_check_branch
      %38 = sbr.rel (0) target = $region33
    $region32: #{tpu_custom_call.1} parent=1 // pred_region
      _
    $region33: #{tpu_custom_call.1} parent=1 // pred_fallthru
      _
    // Predicated region
    $region34: #{tpu_custom_call.1} parent=1 // pred_check
      _
    $region35: #{tpu_custom_call.1} parent=1 // pred_check_branch
      %40 = sbr.rel (0) target = $region37
    $region36: #{tpu_custom_call.1} parent=1 // pred_region
      _
    $region37: #{tpu_custom_call.1} parent=1 // pred_fallthru
      _
    // Predicated region
    $region38: #{tpu_custom_call.1} parent=1 // pred_check
      _
    $region39: #{tpu_custom_call.1} parent=1 // pred_check_branch
      %42 = sbr.rel (0) target = $region41
    $region40: #{tpu_custom_call.1} parent=1 // pred_region
      _
    $region41: #{tpu_custom_call.1} parent=1 // pred_fallthru
      _
    // Predicated region
    $region42: #{tpu_custom_call.1} parent=1 // pred_check
      _
    $region43: #{tpu_custom_call.1} parent=1 // pred_check_branch
      %44 = sbr.rel (0) target = $region45
    $region44: #{tpu_custom_call.1} parent=1 // pred_region
      _
    $region45: #{tpu_custom_call.1} parent=1 // pred_fallthru
      _
    // Predicated region
    $region46: #{tpu_custom_call.1} parent=1 // pred_check
      _
    $region47: #{tpu_custom_call.1} parent=1 // pred_check_branch
      %46 = sbr.rel (0) target = $region49
    $region48: #{tpu_custom_call.1} parent=1 // pred_region
      _
    $region49: #{tpu_custom_call.1} parent=1 // pred_fallthru
      _
    %v47 = vld [vmem:[%s7] sm:$0xff]
    %v48 = vld [vmem:[%s7 + $0x8] sm:$0x3f]
    %v49 = vld [vmem:[%s10] sm:$0xff]
    %v50 = vld [vmem:[%s10 + $0x8] sm:$0x3]
    %v51 = vld [vmem:[%s3] sm:$0x1]
    %v53 = vlaneseq
    %v54 = vshrl.u32 %v53, 7
    %v55 = vsub.s32 0, %v54
    %v56 = vrot.slane %v51, %v55
    %v58 = vld [vmem:[%s4] sm:$0x1]
    %v60 = vlaneseq
    %v61 = vshrl.u32 %v60, 7
    %v62 = vsub.s32 0, %v61
    %v63 = vrot.slane %v58, %v62
    %v65 = vld [vmem:[%s5] sm:$0x1]
    %v67 = vlaneseq
    %v68 = vshrl.u32 %v67, 7
    %v69 = vsub.s32 0, %v68
    %v70 = vrot.slane %v65, %v69
    %v72 = vld [vmem:[#allocation2] sm:$0x1]
    %v74 = vlaneseq
    %v75 = vshrl.u32 %v74, 7
    %v76 = vsub.s32 0, %v75
    %v77 = vrot.slane %v72, %v76
    %v79 = vld [vmem:[%s8] sm:$0x1]
    %v81 = vlaneseq
    %v82 = vshrl.u32 %v81, 7
    %v83 = vsub.s32 0, %v82
    %v84 = vrot.slane %v79, %v83
    %v86 = vld [vmem:[%s9] sm:$0x1]
    %v88 = vlaneseq
    %v89 = vshrl.u32 %v88, 7
    %v90 = vsub.s32 0, %v89
    %v91 = vrot.slane %v86, %v90
    %v93 = vld [vmem:[%s11] sm:$0x1]
    %v95 = vlaneseq
    %v96 = vshrl.u32 %v95, 7
    %v97 = vsub.s32 0, %v96
    %v98 = vrot.slane %v93, %v97
    %v100 = vld [vmem:[%s0] sm:$0x3]
    %v101 = vld [vmem:[%s1] sm:$0x3]
    %v102 = vld [vmem:[%s2] sm:$0x3]
    %104 = vset.pattern.permute.xlu0 0
    %105 = vperm.xlu0 %104, %v101
    %v106 = vpop.permute.xlu0 %105
    %v108 = vmul.f32 %v106, %v84
    %vm109 = vcmask 113664
    %v111 = vsel %vm109, %v100, 0
    %vm113 = vcmask 1045504
    %v115 = vsel %vm113, %v48, 0
    %117 = vmatprep.subr.mxu0 0.0
    %118 = vmatpush1.msra.mxu0 0.0
    %119 = vmatprep.subr.mxu0 0.0
    %120 = vmatpush1.msra.mxu0 0.0
    %121 = vmatprep.subr.mxu0 0.0
    %122 = vmatpush1.msra.mxu0 0.0
    %123 = vmatprep.subr.mxu0 0.0
    %124 = vmatpush1.msra.mxu0 0.0
    %125 = vmatprep.subr.mxu0 0.0
    %126 = vmatpush1.msra.mxu0 0.0
    %127 = vmatprep.subr.mxu0 0.0
    %128 = vmatpush1.msra.mxu0 0.0
    %129 = vmatprep.subr.mxu0 0.0
    %130 = vmatpush1.msra.mxu0 0.0
    %131 = vmatprep.subr.mxu0 0.0
    %132 = vmatpush1.msra.mxu0 0.0
    %133 = vmatprep.subr.mxu0 0.0
    %134 = vmatpush1.msra.mxu0 0.0
    %135 = vmatprep.subr.mxu0 0.0
    %136 = vmatpush1.msra.mxu0 0.0
    %137 = vmatprep.subr.mxu0 0.0
    %138 = vmatpush1.msra.mxu0 0.0
    %139 = vmatprep.subr.mxu0 0.0
    %140 = vmatpush1.msra.mxu0 0.0
    %141 = vmatprep.subr.mxu0 0.0
    %142 = vmatpush1.msra.mxu0 0.0
    %143 = vmatprep.subr.mxu0 0.0
    %144 = vmatpush1.msra.mxu0 0.0
    %145 = vmatprep.subr.mxu0 0.0
    %146 = vmatpush1.msra.mxu0 %v115
    %147 = vmatprep.subr.mxu0 0.0
    %148 = vmatpush1.msra.mxu0 %v47
    %149 = vmatprep.subr.mxu0 0.0
    %150 = vmatpush2.msra.mxu0 0.0
    %151 = vmatprep.subr.mxu0 0.0
    %152 = vmatpush2.msra.mxu0 0.0
    %153 = vmatprep.subr.mxu0 0.0
    %154 = vmatpush2.msra.mxu0 0.0
    %155 = vmatprep.subr.mxu0 0.0
    %156 = vmatpush2.msra.mxu0 0.0
    %157 = vmatprep.subr.mxu0 0.0
    %158 = vmatpush2.msra.mxu0 0.0
    %159 = vmatprep.subr.mxu0 0.0
    %160 = vmatpush2.msra.mxu0 0.0
    %161 = vmatprep.subr.mxu0 0.0
    %162 = vmatpush2.msra.mxu0 0.0
    %163 = vmatprep.subr.mxu0 0.0
    %164 = vmatpush2.msra.mxu0 0.0
    %165 = vmatprep.subr.mxu0 0.0
    %166 = vmatpush2.msra.mxu0 0.0
    %167 = vmatprep.subr.mxu0 0.0
    %168 = vmatpush2.msra.mxu0 0.0
    %169 = vmatprep.subr.mxu0 0.0
    %170 = vmatpush2.msra.mxu0 0.0
    %171 = vmatprep.subr.mxu0 0.0
    %172 = vmatpush2.msra.mxu0 0.0
    %173 = vmatprep.subr.mxu0 0.0
    %174 = vmatpush2.msra.mxu0 0.0
    %175 = vmatprep.subr.mxu0 0.0
    %176 = vmatpush2.msra.mxu0 0.0
    %177 = vmatprep.subr.mxu0 0.0
    %178 = vmatpush2.msra.mxu0 0.0
    %179 = vmatprep.subr.mxu0 0.0
    %180 = vmatpush2.msra.mxu0 0.0
    %181 = vmatprep.mubr.f32.mxu0 0.0
    %182 = vmatmul.mubr.f32.gmra.mxu0 %v111
    %v183 = vpop.f32.mrf.mxu0
    %v184 = vadd.f32 %v108, %v183
    %v185 = vpop.f32.mrf.mxu0
    %186 = vdwg.mxu0
    %v187 = vadd.f32 %v184, %v98
    %189 = vset.pattern.permute.xlu0 0
    %190 = vperm.xlu0 %189, %v102
    %v191 = vpop.permute.xlu0 %190
    %v193 = vmul.f32 %v191, %v56
    %v194 = vadd.f32 %v193, %v63
    %v195 = vmax.f32 %v194, 0.0
    %v196 = vsub.f32 0.0, %v195
    %v197 = vmul.f32 %v196, 1.442695
    %v198 = vpow.pop %v197
    %v199 = vmul.f32 %v198, 0.0
    %v200 = vmul.f32 %v199, %v70
    %vm201 = vcmask 74752
    %v202 = vsel %vm201, %v200, 0.0
    %203 = vadd.xlane.f32.xlu0 %v202
    %v204 = vpop.xlane.xlu0 %203
    %v205 = vadd.f32 %v204, %v77
    %206 = vrot.lane.b32.xlu0 %v101, 2
    %v207 = vpop.permute.xlu0 %206
    %v209 = vmul.f32 %v100, %v207
    %v210 = vsub.f32 1.0, %v101
    %v211 = vmul.f32 %v210, %v205
    %213 = vrot.lane.b32.xlu0 %v211, 2
    %v214 = vpop.permute.xlu0 %213
    %v216 = vadd.f32 %v209, %v214
    %218 = vrot.lane.b32.xlu0 %v205, 2
    %v219 = vpop.permute.xlu0 %218
    %v221 = vsub.f32 %v216, %v219
    %v222 = vand.u32 2147483647, %v221
    %v223 = vmul.f32 %v222, %v207
    %225 = vrot.lane.b32.xlu0 %v223, 126
    %v226 = vpop.permute.xlu0 %225
    %vm228 = vcmask 1024
    %v229 = vsel %vm228, %v226, 0.0
    %230 = vadd.xlane.f32.xlu0 %v229
    %v231 = vpop.xlane.xlu0 %230
    %v232 = vrot.slane %v231, 4
    %v233 = vadd.f32 %v231, %v232
    %v234 = vrot.slane %v233, 2
    %v235 = vadd.f32 %v233, %v234
    %v236 = vrot.slane %v235, 1
    %v237 = vadd.f32 %v235, %v236
    %s238 = vtos %v237
    %v239 = vstv %s238
    %v240 = vsel %vm228, %v101, 0.0
    %241 = vadd.xlane.f32.xlu0 %v240
    %v242 = vpop.xlane.xlu0 %241
    %v243 = vrot.slane %v242, 4
    %v244 = vadd.f32 %v242, %v243
    %v245 = vrot.slane %v244, 2
    %v246 = vadd.f32 %v244, %v245
    %v247 = vrot.slane %v246, 1
    %v248 = vadd.f32 %v246, %v247
    %s249 = vtos %v248
    %v250 = vstv %s249
    %v251 = vadd.f32 %v250, 1e-05
    %v252 = vrcp.pop %v251
    %v253 = vmul.f32 %v239, %v252
    %v254 = vadd.f32 %v253, 0.0
    %v255 = vsub.f32 %v216, %v100
    %257 = vset.pattern.permute.xlu0 2
    %258 = vperm.xlu0 %257, %v255
    %v259 = vpop.permute.xlu0 %258
    %v261 = vmul.f32 %v259, %v91
    %v262 = vadd.f32 %v187, %v261
    %vm263 = vcmask 80896
    %v265 = vsel %vm263, %v199, 0
    %vm267 = vcmask 1041408
    %v269 = vsel %vm267, %v50, 0
    %271 = vmatprep.subr.mxu0 0.0
    %272 = vmatpush1.msra.mxu0 0.0
    %273 = vmatprep.subr.mxu0 0.0
    %274 = vmatpush1.msra.mxu0 0.0
    %275 = vmatprep.subr.mxu0 0.0
    %276 = vmatpush1.msra.mxu0 0.0
    %277 = vmatprep.subr.mxu0 0.0
    %278 = vmatpush1.msra.mxu0 0.0
    %279 = vmatprep.subr.mxu0 0.0
    %280 = vmatpush1.msra.mxu0 0.0
    %281 = vmatprep.subr.mxu0 0.0
    %282 = vmatpush1.msra.mxu0 0.0
    %283 = vmatprep.subr.mxu0 0.0
    %284 = vmatpush1.msra.mxu0 0.0
    %285 = vmatprep.subr.mxu0 0.0
    %286 = vmatpush1.msra.mxu0 0.0
    %287 = vmatprep.subr.mxu0 0.0
    %288 = vmatpush1.msra.mxu0 0.0
    %289 = vmatprep.subr.mxu0 0.0
    %290 = vmatpush1.msra.mxu0 0.0
    %291 = vmatprep.subr.mxu0 0.0
    %292 = vmatpush1.msra.mxu0 0.0
    %293 = vmatprep.subr.mxu0 0.0
    %294 = vmatpush1.msra.mxu0 0.0
    %295 = vmatprep.subr.mxu0 0.0
    %296 = vmatpush1.msra.mxu0 0.0
    %297 = vmatprep.subr.mxu0 0.0
    %298 = vmatpush1.msra.mxu0 0.0
    %299 = vmatprep.subr.mxu0 0.0
    %300 = vmatpush1.msra.mxu0 %v269
    %301 = vmatprep.subr.mxu0 0.0
    %302 = vmatpush1.msra.mxu0 %v49
    %303 = vmatprep.subr.mxu0 0.0
    %304 = vmatpush2.msra.mxu0 0.0
    %305 = vmatprep.subr.mxu0 0.0
    %306 = vmatpush2.msra.mxu0 0.0
    %307 = vmatprep.subr.mxu0 0.0
    %308 = vmatpush2.msra.mxu0 0.0
    %309 = vmatprep.subr.mxu0 0.0
    %310 = vmatpush2.msra.mxu0 0.0
    %311 = vmatprep.subr.mxu0 0.0
    %312 = vmatpush2.msra.mxu0 0.0
    %313 = vmatprep.subr.mxu0 0.0
    %314 = vmatpush2.msra.mxu0 0.0
    %315 = vmatprep.subr.mxu0 0.0
    %316 = vmatpush2.msra.mxu0 0.0
    %317 = vmatprep.subr.mxu0 0.0
    %318 = vmatpush2.msra.mxu0 0.0
    %319 = vmatprep.subr.mxu0 0.0
    %320 = vmatpush2.msra.mxu0 0.0
    %321 = vmatprep.subr.mxu0 0.0
    %322 = vmatpush2.msra.mxu0 0.0
    %323 = vmatprep.subr.mxu0 0.0
    %324 = vmatpush2.msra.mxu0 0.0
    %325 = vmatprep.subr.mxu0 0.0
    %326 = vmatpush2.msra.mxu0 0.0
    %327 = vmatprep.subr.mxu0 0.0
    %328 = vmatpush2.msra.mxu0 0.0
    %329 = vmatprep.subr.mxu0 0.0
    %330 = vmatpush2.msra.mxu0 0.0
    %331 = vmatprep.subr.mxu0 0.0
    %332 = vmatpush2.msra.mxu0 0.0
    %333 = vmatprep.subr.mxu0 0.0
    %334 = vmatpush2.msra.mxu0 0.0
    %335 = vmatprep.mubr.f32.mxu0 0.0
    %336 = vmatmul.mubr.f32.gmra.mxu0 %v265
    %v337 = vpop.f32.mrf.mxu0
    %v338 = vadd.f32 0.0, %v337
    %v339 = vpop.f32.mrf.mxu0
    %340 = vdwg.mxu0
    %v341 = vadd.f32 %v262, %v338
    %v342 = vxor.u32 %v341, 2147483648
    %v343 = vmul.f32 %v342, 1.442695
    %v344 = vpow.pop %v343
    %v345 = vadd.f32 %v344, 1.0
    %v346 = vrcp.pop %v345
    %v347 = vmul.f32 1.0, %v346
    %v348 = vtanh.pop %v341
    %v349 = vmul.f32 %v347, 0.0
    %351 = vrot.lane.b32.xlu0 %v348, 108
    %v352 = vpop.permute.xlu0 %351
    %v354 = vmul.f32 %v347, %v352
    %356 = vrot.lane.b32.xlu0 %v354, 10
    %v357 = vpop.permute.xlu0 %356
    %v359 = vadd.f32 %v349, %v357
    %v360 = vtanh.pop %v359
    %362 = vrot.lane.b32.xlu0 %v360, 20
    %v363 = vpop.permute.xlu0 %362
    %v365 = vmul.f32 %v347, %v363
    %s366 = scalar_lea.vmem %s0, 2
    %v367 = vld [vmem:[%s366] sm:$0x3]
    %s368 = scalar_lea.vmem %s1, 2
    %v369 = vld [vmem:[%s368] sm:$0x3]
    %s370 = scalar_lea.vmem %s2, 2
    %v371 = vld [vmem:[%s370] sm:$0x3]
    %373 = vset.pattern.permute.xlu0 0
    %374 = vperm.xlu0 %373, %v369
    %v375 = vpop.permute.xlu0 %374
    %v377 = vmul.f32 %v375, %v84
    %v379 = vsel %vm109, %v367, 0
    %381 = vmatprep.subr.mxu0 0.0
    %382 = vmatpush1.msra.mxu0 0.0
    %383 = vmatprep.subr.mxu0 0.0
    %384 = vmatpush1.msra.mxu0 0.0
    %385 = vmatprep.subr.mxu0 0.0
    %386 = vmatpush1.msra.mxu0 0.0
    %387 = vmatprep.subr.mxu0 0.0
    %388 = vmatpush1.msra.mxu0 0.0
    %389 = vmatprep.subr.mxu0 0.0
    %390 = vmatpush1.msra.mxu0 0.0
    %391 = vmatprep.subr.mxu0 0.0
    %392 = vmatpush1.msra.mxu0 0.0
    %393 = vmatprep.subr.mxu0 0.0
    %394 = vmatpush1.msra.mxu0 0.0
    %395 = vmatprep.subr.mxu0 0.0
    %396 = vmatpush1.msra.mxu0 0.0
    %397 = vmatprep.subr.mxu0 0.0
    %398 = vmatpush1.msra.mxu0 0.0
    %399 = vmatprep.subr.mxu0 0.0
    %400 = vmatpush1.msra.mxu0 0.0
    %401 = vmatprep.subr.mxu0 0.0
    %402 = vmatpush1.msra.mxu0 0.0
    %403 = vmatprep.subr.mxu0 0.0
    %404 = vmatpush1.msra.mxu0 0.0
    %405 = vmatprep.subr.mxu0 0.0
    %406 = vmatpush1.msra.mxu0 0.0
    %407 = vmatprep.subr.mxu0 0.0
    %408 = vmatpush1.msra.mxu0 0.0
    %409 = vmatprep.subr.mxu0 0.0
    %410 = vmatpush1.msra.mxu0 %v115
    %411 = vmatprep.subr.mxu0 0.0
    %412 = vmatpush1.msra.mxu0 %v47
    %413 = vmatprep.subr.mxu0 0.0
    %414 = vmatpush2.msra.mxu0 0.0
    %415 = vmatprep.subr.mxu0 0.0
    %416 = vmatpush2.msra.mxu0 0.0
    %417 = vmatprep.subr.mxu0 0.0
    %418 = vmatpush2.msra.mxu0 0.0
    %419 = vmatprep.subr.mxu0 0.0
    %420 = vmatpush2.msra.mxu0 0.0
    %421 = vmatprep.subr.mxu0 0.0
    %422 = vmatpush2.msra.mxu0 0.0
    %423 = vmatprep.subr.mxu0 0.0
    %424 = vmatpush2.msra.mxu0 0.0
    %425 = vmatprep.subr.mxu0 0.0
    %426 = vmatpush2.msra.mxu0 0.0
    %427 = vmatprep.subr.mxu0 0.0
    %428 = vmatpush2.msra.mxu0 0.0
    %429 = vmatprep.subr.mxu0 0.0
    %430 = vmatpush2.msra.mxu0 0.0
    %431 = vmatprep.subr.mxu0 0.0
    %432 = vmatpush2.msra.mxu0 0.0
    %433 = vmatprep.subr.mxu0 0.0
    %434 = vmatpush2.msra.mxu0 0.0
    %435 = vmatprep.subr.mxu0 0.0
    %436 = vmatpush2.msra.mxu0 0.0
    %437 = vmatprep.subr.mxu0 0.0
    %438 = vmatpush2.msra.mxu0 0.0
    %439 = vmatprep.subr.mxu0 0.0
    %440 = vmatpush2.msra.mxu0 0.0
    %441 = vmatprep.subr.mxu0 0.0
    %442 = vmatpush2.msra.mxu0 0.0
    %443 = vmatprep.subr.mxu0 0.0
    %444 = vmatpush2.msra.mxu0 0.0
    %445 = vmatprep.mubr.f32.mxu0 0.0
    %446 = vmatmul.mubr.f32.gmra.mxu0 %v379
    %v447 = vpop.f32.mrf.mxu0
    %v448 = vadd.f32 %v377, %v447
    %v449 = vpop.f32.mrf.mxu0
    %450 = vdwg.mxu0
    %v451 = vadd.f32 %v448, %v98
    %453 = vset.pattern.permute.xlu0 0
    %454 = vperm.xlu0 %453, %v371
    %v455 = vpop.permute.xlu0 %454
    %v457 = vmul.f32 %v455, %v56
    %v458 = vadd.f32 %v457, %v63
    %v459 = vmax.f32 %v458, 0.0
    %v460 = vsub.f32 0.0, %v459
    %v461 = vmul.f32 %v460, 1.442695
    %v462 = vpow.pop %v461
    %464 = vrot.lane.b32.xlu0 %v462, 30
    %v465 = vpop.permute.xlu0 %464
    %v467 = vmul.f32 %v365, %v465
    %468 = vrot.lane.b32.xlu0 %v70, 30
    %v469 = vpop.permute.xlu0 %468
    %v471 = vmul.f32 %v467, %v469
    %473 = vrot.lane.b32.xlu0 %v471, 98
    %v474 = vpop.permute.xlu0 %473
    %v476 = vsel %vm201, %v474, 0.0
    %477 = vadd.xlane.f32.xlu0 %v476
    %v478 = vpop.xlane.xlu0 %477
    %v479 = vadd.f32 %v478, %v77
    %480 = vrot.lane.b32.xlu0 %v369, 2
    %v481 = vpop.permute.xlu0 %480
    %v483 = vmul.f32 %v367, %v481
    %v484 = vsub.f32 1.0, %v369
    %v485 = vmul.f32 %v484, %v479
    %487 = vrot.lane.b32.xlu0 %v485, 2
    %v488 = vpop.permute.xlu0 %487
    %v490 = vadd.f32 %v483, %v488
    %492 = vrot.lane.b32.xlu0 %v479, 2
    %v493 = vpop.permute.xlu0 %492
    %v495 = vsub.f32 %v490, %v493
    %v496 = vand.u32 2147483647, %v495
    %v497 = vmul.f32 %v496, %v481
    %499 = vrot.lane.b32.xlu0 %v497, 126
    %v500 = vpop.permute.xlu0 %499
    %v502 = vsel %vm228, %v500, 0.0
    %503 = vadd.xlane.f32.xlu0 %v502
    %v504 = vpop.xlane.xlu0 %503
    %v505 = vrot.slane %v504, 4
    %v506 = vadd.f32 %v504, %v505
    %v507 = vrot.slane %v506, 2
    %v508 = vadd.f32 %v506, %v507
    %v509 = vrot.slane %v508, 1
    %v510 = vadd.f32 %v508, %v509
    %s511 = vtos %v510
    %v512 = vstv %s511
    %v513 = vsel %vm228, %v369, 0.0
    %514 = vadd.xlane.f32.xlu0 %v513
    %v515 = vpop.xlane.xlu0 %514
    %v516 = vrot.slane %v515, 4
    %v517 = vadd.f32 %v515, %v516
    %v518 = vrot.slane %v517, 2
    %v519 = vadd.f32 %v517, %v518
    %v520 = vrot.slane %v519, 1
    %v521 = vadd.f32 %v519, %v520
    %s522 = vtos %v521
    %v523 = vstv %s522
    %v524 = vadd.f32 %v523, 1e-05
    %v525 = vrcp.pop %v524
    %v526 = vmul.f32 %v512, %v525
    %v527 = vadd.f32 %v254, %v526
    %v528 = vsub.f32 %v490, %v367
    %530 = vset.pattern.permute.xlu0 2
    %531 = vperm.xlu0 %530, %v528
    %v532 = vpop.permute.xlu0 %531
    %v534 = vmul.f32 %v532, %v91
    %v535 = vadd.f32 %v451, %v534
    %537 = vrot.lane.b32.xlu0 %v467, 98
    %v538 = vpop.permute.xlu0 %537
    %v539 = vsel %vm263, %v538, 0
    %541 = vmatprep.subr.mxu0 0.0
    %542 = vmatpush1.msra.mxu0 0.0
    %543 = vmatprep.subr.mxu0 0.0
    %544 = vmatpush1.msra.mxu0 0.0
    %545 = vmatprep.subr.mxu0 0.0
    %546 = vmatpush1.msra.mxu0 0.0
    %547 = vmatprep.subr.mxu0 0.0
    %548 = vmatpush1.msra.mxu0 0.0
    %549 = vmatprep.subr.mxu0 0.0
    %550 = vmatpush1.msra.mxu0 0.0
    %551 = vmatprep.subr.mxu0 0.0
    %552 = vmatpush1.msra.mxu0 0.0
    %553 = vmatprep.subr.mxu0 0.0
    %554 = vmatpush1.msra.mxu0 0.0
    %555 = vmatprep.subr.mxu0 0.0
    %556 = vmatpush1.msra.mxu0 0.0
    %557 = vmatprep.subr.mxu0 0.0
    %558 = vmatpush1.msra.mxu0 0.0
    %559 = vmatprep.subr.mxu0 0.0
    %560 = vmatpush1.msra.mxu0 0.0
    %561 = vmatprep.subr.mxu0 0.0
    %562 = vmatpush1.msra.mxu0 0.0
    %563 = vmatprep.subr.mxu0 0.0
    %564 = vmatpush1.msra.mxu0 0.0
    %565 = vmatprep.subr.mxu0 0.0
    %566 = vmatpush1.msra.mxu0 0.0
    %567 = vmatprep.subr.mxu0 0.0
    %568 = vmatpush1.msra.mxu0 0.0
    %569 = vmatprep.subr.mxu0 0.0
    %570 = vmatpush1.msra.mxu0 %v269
    %571 = vmatprep.subr.mxu0 0.0
    %572 = vmatpush1.msra.mxu0 %v49
    %573 = vmatprep.subr.mxu0 0.0
    %574 = vmatpush2.msra.mxu0 0.0
    %575 = vmatprep.subr.mxu0 0.0
    %576 = vmatpush2.msra.mxu0 0.0
    %577 = vmatprep.subr.mxu0 0.0
    %578 = vmatpush2.msra.mxu0 0.0
    %579 = vmatprep.subr.mxu0 0.0
    %580 = vmatpush2.msra.mxu0 0.0
    %581 = vmatprep.subr.mxu0 0.0
    %582 = vmatpush2.msra.mxu0 0.0
    %583 = vmatprep.subr.mxu0 0.0
    %584 = vmatpush2.msra.mxu0 0.0
    %585 = vmatprep.subr.mxu0 0.0
    %586 = vmatpush2.msra.mxu0 0.0
    %587 = vmatprep.subr.mxu0 0.0
    %588 = vmatpush2.msra.mxu0 0.0
    %589 = vmatprep.subr.mxu0 0.0
    %590 = vmatpush2.msra.mxu0 0.0
    %591 = vmatprep.subr.mxu0 0.0
    %592 = vmatpush2.msra.mxu0 0.0
    %593 = vmatprep.subr.mxu0 0.0
    %594 = vmatpush2.msra.mxu0 0.0
    %595 = vmatprep.subr.mxu0 0.0
    %596 = vmatpush2.msra.mxu0 0.0
    %597 = vmatprep.subr.mxu0 0.0
    %598 = vmatpush2.msra.mxu0 0.0
    %599 = vmatprep.subr.mxu0 0.0
    %600 = vmatpush2.msra.mxu0 0.0
    %601 = vmatprep.subr.mxu0 0.0
    %602 = vmatpush2.msra.mxu0 0.0
    %603 = vmatprep.subr.mxu0 0.0
    %604 = vmatpush2.msra.mxu0 0.0
    %605 = vmatprep.mubr.f32.mxu0 0.0
    %606 = vmatmul.mubr.f32.gmra.mxu0 %v539
    %v607 = vpop.f32.mrf.mxu0
    %v608 = vadd.f32 0.0, %v607
    %v609 = vpop.f32.mrf.mxu0
    %610 = vdwg.mxu0
    %v611 = vadd.f32 %v535, %v608
    %v612 = vxor.u32 %v611, 2147483648
    %v613 = vmul.f32 %v612, 1.442695
    %v614 = vpow.pop %v613
    %v615 = vadd.f32 %v614, 1.0
    %v616 = vrcp.pop %v615
    %v617 = vmul.f32 1.0, %v616
    %v618 = vtanh.pop %v611
    %v619 = vmul.f32 %v617, %v359
    %621 = vrot.lane.b32.xlu0 %v618, 108
    %v622 = vpop.permute.xlu0 %621
    %v624 = vmul.f32 %v617, %v622
    %626 = vrot.lane.b32.xlu0 %v624, 10
    %v627 = vpop.permute.xlu0 %626
    %v629 = vadd.f32 %v619, %v627
    %v630 = vtanh.pop %v629
    %632 = vrot.lane.b32.xlu0 %v630, 20
    %v633 = vpop.permute.xlu0 %632
    %v635 = vmul.f32 %v617, %v633
    %s636 = scalar_lea.vmem %s0, 4
    %v637 = vld [vmem:[%s636] sm:$0x3]
    %s638 = scalar_lea.vmem %s1, 4
    %v639 = vld [vmem:[%s638] sm:$0x3]
    %s640 = scalar_lea.vmem %s2, 4
    %v641 = vld [vmem:[%s640] sm:$0x3]
    %643 = vset.pattern.permute.xlu0 0
    %644 = vperm.xlu0 %643, %v639
    %v645 = vpop.permute.xlu0 %644
    %v647 = vmul.f32 %v645, %v84
    %v649 = vsel %vm109, %v637, 0
    %651 = vmatprep.subr.mxu0 0.0
    %652 = vmatpush1.msra.mxu0 0.0
    %653 = vmatprep.subr.mxu0 0.0
    %654 = vmatpush1.msra.mxu0 0.0
    %655 = vmatprep.subr.mxu0 0.0
    %656 = vmatpush1.msra.mxu0 0.0
    %657 = vmatprep.subr.mxu0 0.0
    %658 = vmatpush1.msra.mxu0 0.0
    %659 = vmatprep.subr.mxu0 0.0
    %660 = vmatpush1.msra.mxu0 0.0
    %661 = vmatprep.subr.mxu0 0.0
    %662 = vmatpush1.msra.mxu0 0.0
    %663 = vmatprep.subr.mxu0 0.0
    %664 = vmatpush1.msra.mxu0 0.0
    %665 = vmatprep.subr.mxu0 0.0
    %666 = vmatpush1.msra.mxu0 0.0
    %667 = vmatprep.subr.mxu0 0.0
    %668 = vmatpush1.msra.mxu0 0.0
    %669 = vmatprep.subr.mxu0 0.0
    %670 = vmatpush1.msra.mxu0 0.0
    %671 = vmatprep.subr.mxu0 0.0
    %672 = vmatpush1.msra.mxu0 0.0
    %673 = vmatprep.subr.mxu0 0.0
    %674 = vmatpush1.msra.mxu0 0.0
    %675 = vmatprep.subr.mxu0 0.0
    %676 = vmatpush1.msra.mxu0 0.0
    %677 = vmatprep.subr.mxu0 0.0
    %678 = vmatpush1.msra.mxu0 0.0
    %679 = vmatprep.subr.mxu0 0.0
    %680 = vmatpush1.msra.mxu0 %v115
    %681 = vmatprep.subr.mxu0 0.0
    %682 = vmatpush1.msra.mxu0 %v47
    %683 = vmatprep.subr.mxu0 0.0
    %684 = vmatpush2.msra.mxu0 0.0
    %685 = vmatprep.subr.mxu0 0.0
    %686 = vmatpush2.msra.mxu0 0.0
    %687 = vmatprep.subr.mxu0 0.0
    %688 = vmatpush2.msra.mxu0 0.0
    %689 = vmatprep.subr.mxu0 0.0
    %690 = vmatpush2.msra.mxu0 0.0
    %691 = vmatprep.subr.mxu0 0.0
    %692 = vmatpush2.msra.mxu0 0.0
    %693 = vmatprep.subr.mxu0 0.0
    %694 = vmatpush2.msra.mxu0 0.0
    %695 = vmatprep.subr.mxu0 0.0
    %696 = vmatpush2.msra.mxu0 0.0
    %697 = vmatprep.subr.mxu0 0.0
    %698 = vmatpush2.msra.mxu0 0.0
    %699 = vmatprep.subr.mxu0 0.0
    %700 = vmatpush2.msra.mxu0 0.0
    %701 = vmatprep.subr.mxu0 0.0
    %702 = vmatpush2.msra.mxu0 0.0
    %703 = vmatprep.subr.mxu0 0.0
    %704 = vmatpush2.msra.mxu0 0.0
    %705 = vmatprep.subr.mxu0 0.0
    %706 = vmatpush2.msra.mxu0 0.0
    %707 = vmatprep.subr.mxu0 0.0
    %708 = vmatpush2.msra.mxu0 0.0
    %709 = vmatprep.subr.mxu0 0.0
    %710 = vmatpush2.msra.mxu0 0.0
    %711 = vmatprep.subr.mxu0 0.0
    %712 = vmatpush2.msra.mxu0 0.0
    %713 = vmatprep.subr.mxu0 0.0
    %714 = vmatpush2.msra.mxu0 0.0
    %715 = vmatprep.mubr.f32.mxu0 0.0
    %716 = vmatmul.mubr.f32.gmra.mxu0 %v649
    %v717 = vpop.f32.mrf.mxu0
    %v718 = vadd.f32 %v647, %v717
    %v719 = vpop.f32.mrf.mxu0
    %720 = vdwg.mxu0
    %v721 = vadd.f32 %v718, %v98
    %723 = vset.pattern.permute.xlu0 0
    %724 = vperm.xlu0 %723, %v641
    %v725 = vpop.permute.xlu0 %724
    %v727 = vmul.f32 %v725, %v56
    %v728 = vadd.f32 %v727, %v63
    %v729 = vmax.f32 %v728, 0.0
    %v730 = vsub.f32 0.0, %v729
    %v731 = vmul.f32 %v730, 1.442695
    %v732 = vpow.pop %v731
    %734 = vrot.lane.b32.xlu0 %v732, 30
    %v735 = vpop.permute.xlu0 %734
    %v737 = vmul.f32 %v635, %v735
    %v738 = vmul.f32 %v737, %v469
    %740 = vrot.lane.b32.xlu0 %v738, 98
    %v741 = vpop.permute.xlu0 %740
    %v743 = vsel %vm201, %v741, 0.0
    %744 = vadd.xlane.f32.xlu0 %v743
    %v745 = vpop.xlane.xlu0 %744
    %v746 = vadd.f32 %v745, %v77
    %747 = vrot.lane.b32.xlu0 %v639, 2
    %v748 = vpop.permute.xlu0 %747
    %v750 = vmul.f32 %v637, %v748
    %v751 = vsub.f32 1.0, %v639
    %v752 = vmul.f32 %v751, %v746
    %754 = vrot.lane.b32.xlu0 %v752, 2
    %v755 = vpop.permute.xlu0 %754
    %v757 = vadd.f32 %v750, %v755
    %759 = vrot.lane.b32.xlu0 %v746, 2
    %v760 = vpop.permute.xlu0 %759
    %v762 = vsub.f32 %v757, %v760
    %v763 = vand.u32 2147483647, %v762
    %v764 = vmul.f32 %v763, %v748
    %766 = vrot.lane.b32.xlu0 %v764, 126
    %v767 = vpop.permute.xlu0 %766
    %v769 = vsel %vm228, %v767, 0.0
    %770 = vadd.xlane.f32.xlu0 %v769
    %v771 = vpop.xlane.xlu0 %770
    %v772 = vrot.slane %v771, 4
    %v773 = vadd.f32 %v771, %v772
    %v774 = vrot.slane %v773, 2
    %v775 = vadd.f32 %v773, %v774
    %v776 = vrot.slane %v775, 1
    %v777 = vadd.f32 %v775, %v776
    %s778 = vtos %v777
    %v779 = vstv %s778
    %v780 = vsel %vm228, %v639, 0.0
    %781 = vadd.xlane.f32.xlu0 %v780
    %v782 = vpop.xlane.xlu0 %781
    %v783 = vrot.slane %v782, 4
    %v784 = vadd.f32 %v782, %v783
    %v785 = vrot.slane %v784, 2
    %v786 = vadd.f32 %v784, %v785
    %v787 = vrot.slane %v786, 1
    %v788 = vadd.f32 %v786, %v787
    %s789 = vtos %v788
    %v790 = vstv %s789
    %v791 = vadd.f32 %v790, 1e-05
    %v792 = vrcp.pop %v791
    %v793 = vmul.f32 %v779, %v792
    %v794 = vadd.f32 %v527, %v793
    %v795 = vsub.f32 %v757, %v637
    %797 = vset.pattern.permute.xlu0 2
    %798 = vperm.xlu0 %797, %v795
    %v799 = vpop.permute.xlu0 %798
    %v801 = vmul.f32 %v799, %v91
    %v802 = vadd.f32 %v721, %v801
    %804 = vrot.lane.b32.xlu0 %v737, 98
    %v805 = vpop.permute.xlu0 %804
    %v806 = vsel %vm263, %v805, 0
    %808 = vmatprep.subr.mxu0 0.0
    %809 = vmatpush1.msra.mxu0 0.0
    %810 = vmatprep.subr.mxu0 0.0
    %811 = vmatpush1.msra.mxu0 0.0
    %812 = vmatprep.subr.mxu0 0.0
    %813 = vmatpush1.msra.mxu0 0.0
    %814 = vmatprep.subr.mxu0 0.0
    %815 = vmatpush1.msra.mxu0 0.0
    %816 = vmatprep.subr.mxu0 0.0
    %817 = vmatpush1.msra.mxu0 0.0
    %818 = vmatprep.subr.mxu0 0.0
    %819 = vmatpush1.msra.mxu0 0.0
    %820 = vmatprep.subr.mxu0 0.0
    %821 = vmatpush1.msra.mxu0 0.0
    %822 = vmatprep.subr.mxu0 0.0
    %823 = vmatpush1.msra.mxu0 0.0
    %824 = vmatprep.subr.mxu0 0.0
    %825 = vmatpush1.msra.mxu0 0.0
    %826 = vmatprep.subr.mxu0 0.0
    %827 = vmatpush1.msra.mxu0 0.0
    %828 = vmatprep.subr.mxu0 0.0
    %829 = vmatpush1.msra.mxu0 0.0
    %830 = vmatprep.subr.mxu0 0.0
    %831 = vmatpush1.msra.mxu0 0.0
    %832 = vmatprep.subr.mxu0 0.0
    %833 = vmatpush1.msra.mxu0 0.0
    %834 = vmatprep.subr.mxu0 0.0
    %835 = vmatpush1.msra.mxu0 0.0
    %836 = vmatprep.subr.mxu0 0.0
    %837 = vmatpush1.msra.mxu0 %v269
    %838 = vmatprep.subr.mxu0 0.0
    %839 = vmatpush1.msra.mxu0 %v49
    %840 = vmatprep.subr.mxu0 0.0
    %841 = vmatpush2.msra.mxu0 0.0
    %842 = vmatprep.subr.mxu0 0.0
    %843 = vmatpush2.msra.mxu0 0.0
    %844 = vmatprep.subr.mxu0 0.0
    %845 = vmatpush2.msra.mxu0 0.0
    %846 = vmatprep.subr.mxu0 0.0
    %847 = vmatpush2.msra.mxu0 0.0
    %848 = vmatprep.subr.mxu0 0.0
    %849 = vmatpush2.msra.mxu0 0.0
    %850 = vmatprep.subr.mxu0 0.0
    %851 = vmatpush2.msra.mxu0 0.0
    %852 = vmatprep.subr.mxu0 0.0
    %853 = vmatpush2.msra.mxu0 0.0
    %854 = vmatprep.subr.mxu0 0.0
    %855 = vmatpush2.msra.mxu0 0.0
    %856 = vmatprep.subr.mxu0 0.0
    %857 = vmatpush2.msra.mxu0 0.0
    %858 = vmatprep.subr.mxu0 0.0
    %859 = vmatpush2.msra.mxu0 0.0
    %860 = vmatprep.subr.mxu0 0.0
    %861 = vmatpush2.msra.mxu0 0.0
    %862 = vmatprep.subr.mxu0 0.0
    %863 = vmatpush2.msra.mxu0 0.0
    %864 = vmatprep.subr.mxu0 0.0
    %865 = vmatpush2.msra.mxu0 0.0
    %866 = vmatprep.subr.mxu0 0.0
    %867 = vmatpush2.msra.mxu0 0.0
    %868 = vmatprep.subr.mxu0 0.0
    %869 = vmatpush2.msra.mxu0 0.0
    %870 = vmatprep.subr.mxu0 0.0
    %871 = vmatpush2.msra.mxu0 0.0
    %872 = vmatprep.mubr.f32.mxu0 0.0
    %873 = vmatmul.mubr.f32.gmra.mxu0 %v806
    %v874 = vpop.f32.mrf.mxu0
    %v875 = vadd.f32 0.0, %v874
    %v876 = vpop.f32.mrf.mxu0
    %877 = vdwg.mxu0
    %v878 = vadd.f32 %v802, %v875
    %v879 = vxor.u32 %v878, 2147483648
    %v880 = vmul.f32 %v879, 1.442695
    %v881 = vpow.pop %v880
    %v882 = vadd.f32 %v881, 1.0
    %v883 = vrcp.pop %v882
    %v884 = vmul.f32 1.0, %v883
    %v885 = vtanh.pop %v878
    %v886 = vmul.f32 %v884, %v629
    %888 = vrot.lane.b32.xlu0 %v885, 108
    %v889 = vpop.permute.xlu0 %888
    %v891 = vmul.f32 %v884, %v889
    %893 = vrot.lane.b32.xlu0 %v891, 10
    %v894 = vpop.permute.xlu0 %893
    %v896 = vadd.f32 %v886, %v894
    %v897 = vtanh.pop %v896
    %899 = vrot.lane.b32.xlu0 %v897, 20
    %v900 = vpop.permute.xlu0 %899
    %v902 = vmul.f32 %v884, %v900
    %s903 = scalar_lea.vmem %s0, 6
    %v904 = vld [vmem:[%s903] sm:$0x3]
    %s905 = scalar_lea.vmem %s1, 6
    %v906 = vld [vmem:[%s905] sm:$0x3]
    %s907 = scalar_lea.vmem %s2, 6
    %v908 = vld [vmem:[%s907] sm:$0x3]
    %910 = vset.pattern.permute.xlu0 0
    %911 = vperm.xlu0 %910, %v906
    %v912 = vpop.permute.xlu0 %911
    %v914 = vmul.f32 %v912, %v84
    %v916 = vsel %vm109, %v904, 0
    %918 = vmatprep.subr.mxu0 0.0
    %919 = vmatpush1.msra.mxu0 0.0
    %920 = vmatprep.subr.mxu0 0.0
    %921 = vmatpush1.msra.mxu0 0.0
    %922 = vmatprep.subr.mxu0 0.0
    %923 = vmatpush1.msra.mxu0 0.0
    %924 = vmatprep.subr.mxu0 0.0
    %925 = vmatpush1.msra.mxu0 0.0
    %926 = vmatprep.subr.mxu0 0.0
    %927 = vmatpush1.msra.mxu0 0.0
    %928 = vmatprep.subr.mxu0 0.0
    %929 = vmatpush1.msra.mxu0 0.0
    %930 = vmatprep.subr.mxu0 0.0
    %931 = vmatpush1.msra.mxu0 0.0
    %932 = vmatprep.subr.mxu0 0.0
    %933 = vmatpush1.msra.mxu0 0.0
    %934 = vmatprep.subr.mxu0 0.0
    %935 = vmatpush1.msra.mxu0 0.0
    %936 = vmatprep.subr.mxu0 0.0
    %937 = vmatpush1.msra.mxu0 0.0
    %938 = vmatprep.subr.mxu0 0.0
    %939 = vmatpush1.msra.mxu0 0.0
    %940 = vmatprep.subr.mxu0 0.0
    %941 = vmatpush1.msra.mxu0 0.0
    %942 = vmatprep.subr.mxu0 0.0
    %943 = vmatpush1.msra.mxu0 0.0
    %944 = vmatprep.subr.mxu0 0.0
    %945 = vmatpush1.msra.mxu0 0.0
    %946 = vmatprep.subr.mxu0 0.0
    %947 = vmatpush1.msra.mxu0 %v115
    %948 = vmatprep.subr.mxu0 0.0
    %949 = vmatpush1.msra.mxu0 %v47
    %950 = vmatprep.subr.mxu0 0.0
    %951 = vmatpush2.msra.mxu0 0.0
    %952 = vmatprep.subr.mxu0 0.0
    %953 = vmatpush2.msra.mxu0 0.0
    %954 = vmatprep.subr.mxu0 0.0
    %955 = vmatpush2.msra.mxu0 0.0
    %956 = vmatprep.subr.mxu0 0.0
    %957 = vmatpush2.msra.mxu0 0.0
    %958 = vmatprep.subr.mxu0 0.0
    %959 = vmatpush2.msra.mxu0 0.0
    %960 = vmatprep.subr.mxu0 0.0
    %961 = vmatpush2.msra.mxu0 0.0
    %962 = vmatprep.subr.mxu0 0.0
    %963 = vmatpush2.msra.mxu0 0.0
    %964 = vmatprep.subr.mxu0 0.0
    %965 = vmatpush2.msra.mxu0 0.0
    %966 = vmatprep.subr.mxu0 0.0
    %967 = vmatpush2.msra.mxu0 0.0
    %968 = vmatprep.subr.mxu0 0.0
    %969 = vmatpush2.msra.mxu0 0.0
    %970 = vmatprep.subr.mxu0 0.0
    %971 = vmatpush2.msra.mxu0 0.0
    %972 = vmatprep.subr.mxu0 0.0
    %973 = vmatpush2.msra.mxu0 0.0
    %974 = vmatprep.subr.mxu0 0.0
    %975 = vmatpush2.msra.mxu0 0.0
    %976 = vmatprep.subr.mxu0 0.0
    %977 = vmatpush2.msra.mxu0 0.0
    %978 = vmatprep.subr.mxu0 0.0
    %979 = vmatpush2.msra.mxu0 0.0
    %980 = vmatprep.subr.mxu0 0.0
    %981 = vmatpush2.msra.mxu0 0.0
    %982 = vmatprep.mubr.f32.mxu0 0.0
    %983 = vmatmul.mubr.f32.gmra.mxu0 %v916
    %v984 = vpop.f32.mrf.mxu0
    %v985 = vadd.f32 %v914, %v984
    %v986 = vpop.f32.mrf.mxu0
    %987 = vdwg.mxu0
    %v988 = vadd.f32 %v985, %v98
    %990 = vset.pattern.permute.xlu0 0
    %991 = vperm.xlu0 %990, %v908
    %v992 = vpop.permute.xlu0 %991
    %v994 = vmul.f32 %v992, %v56
    %v995 = vadd.f32 %v994, %v63
    %v996 = vmax.f32 %v995, 0.0
    %v997 = vsub.f32 0.0, %v996
    %v998 = vmul.f32 %v997, 1.442695
    %v999 = vpow.pop %v998
    %1001 = vrot.lane.b32.xlu0 %v999, 30
    %v1002 = vpop.permute.xlu0 %1001
    %v1004 = vmul.f32 %v902, %v1002
    %v1005 = vmul.f32 %v1004, %v469
    %1007 = vrot.lane.b32.xlu0 %v1005, 98
    %v1008 = vpop.permute.xlu0 %1007
    %v1010 = vsel %vm201, %v1008, 0.0
    %1011 = vadd.xlane.f32.xlu0 %v1010
    %v1012 = vpop.xlane.xlu0 %1011
    %v1013 = vadd.f32 %v1012, %v77
    %1014 = vrot.lane.b32.xlu0 %v906, 2
    %v1015 = vpop.permute.xlu0 %1014
    %v1017 = vmul.f32 %v904, %v1015
    %v1018 = vsub.f32 1.0, %v906
    %v1019 = vmul.f32 %v1018, %v1013
    %1021 = vrot.lane.b32.xlu0 %v1019, 2
    %v1022 = vpop.permute.xlu0 %1021
    %v1024 = vadd.f32 %v1017, %v1022
    %1026 = vrot.lane.b32.xlu0 %v1013, 2
    %v1027 = vpop.permute.xlu0 %1026
    %v1029 = vsub.f32 %v1024, %v1027
    %v1030 = vand.u32 2147483647, %v1029
    %v1031 = vmul.f32 %v1030, %v1015
    %1033 = vrot.lane.b32.xlu0 %v1031, 126
    %v1034 = vpop.permute.xlu0 %1033
    %v1036 = vsel %vm228, %v1034, 0.0
    %1037 = vadd.xlane.f32.xlu0 %v1036
    %v1038 = vpop.xlane.xlu0 %1037
    %v1039 = vrot.slane %v1038, 4
    %v1040 = vadd.f32 %v1038, %v1039
    %v1041 = vrot.slane %v1040, 2
    %v1042 = vadd.f32 %v1040, %v1041
    %v1043 = vrot.slane %v1042, 1
    %v1044 = vadd.f32 %v1042, %v1043
    %s1045 = vtos %v1044
    %v1046 = vstv %s1045
    %v1047 = vsel %vm228, %v906, 0.0
    %1048 = vadd.xlane.f32.xlu0 %v1047
    %v1049 = vpop.xlane.xlu0 %1048
    %v1050 = vrot.slane %v1049, 4
    %v1051 = vadd.f32 %v1049, %v1050
    %v1052 = vrot.slane %v1051, 2
    %v1053 = vadd.f32 %v1051, %v1052
    %v1054 = vrot.slane %v1053, 1
    %v1055 = vadd.f32 %v1053, %v1054
    %s1056 = vtos %v1055
    %v1057 = vstv %s1056
    %v1058 = vadd.f32 %v1057, 1e-05
    %v1059 = vrcp.pop %v1058
    %v1060 = vmul.f32 %v1046, %v1059
    %v1061 = vadd.f32 %v794, %v1060
    %v1062 = vsub.f32 %v1024, %v904
    %1064 = vset.pattern.permute.xlu0 2
    %1065 = vperm.xlu0 %1064, %v1062
    %v1066 = vpop.permute.xlu0 %1065
    %v1068 = vmul.f32 %v1066, %v91
    %v1069 = vadd.f32 %v988, %v1068
    %1071 = vrot.lane.b32.xlu0 %v1004, 98
    %v1072 = vpop.permute.xlu0 %1071
    %v1073 = vsel %vm263, %v1072, 0
    %1075 = vmatprep.subr.mxu0 0.0
    %1076 = vmatpush1.msra.mxu0 0.0
    %1077 = vmatprep.subr.mxu0 0.0
    %1078 = vmatpush1.msra.mxu0 0.0
    %1079 = vmatprep.subr.mxu0 0.0
    %1080 = vmatpush1.msra.mxu0 0.0
    %1081 = vmatprep.subr.mxu0 0.0
    %1082 = vmatpush1.msra.mxu0 0.0
    %1083 = vmatprep.subr.mxu0 0.0
    %1084 = vmatpush1.msra.mxu0 0.0
    %1085 = vmatprep.subr.mxu0 0.0
    %1086 = vmatpush1.msra.mxu0 0.0
    %1087 = vmatprep.subr.mxu0 0.0
    %1088 = vmatpush1.msra.mxu0 0.0
    %1089 = vmatprep.subr.mxu0 0.0
    %1090 = vmatpush1.msra.mxu0 0.0
    %1091 = vmatprep.subr.mxu0 0.0
    %1092 = vmatpush1.msra.mxu0 0.0
    %1093 = vmatprep.subr.mxu0 0.0
    %1094 = vmatpush1.msra.mxu0 0.0
    %1095 = vmatprep.subr.mxu0 0.0
    %1096 = vmatpush1.msra.mxu0 0.0
    %1097 = vmatprep.subr.mxu0 0.0
    %1098 = vmatpush1.msra.mxu0 0.0
    %1099 = vmatprep.subr.mxu0 0.0
    %1100 = vmatpush1.msra.mxu0 0.0
    %1101 = vmatprep.subr.mxu0 0.0
    %1102 = vmatpush1.msra.mxu0 0.0
    %1103 = vmatprep.subr.mxu0 0.0
    %1104 = vmatpush1.msra.mxu0 %v269
    %1105 = vmatprep.subr.mxu0 0.0
    %1106 = vmatpush1.msra.mxu0 %v49
    %1107 = vmatprep.subr.mxu0 0.0
    %1108 = vmatpush2.msra.mxu0 0.0
    %1109 = vmatprep.subr.mxu0 0.0
    %1110 = vmatpush2.msra.mxu0 0.0
    %1111 = vmatprep.subr.mxu0 0.0
    %1112 = vmatpush2.msra.mxu0 0.0
    %1113 = vmatprep.subr.mxu0 0.0
    %1114 = vmatpush2.msra.mxu0 0.0
    %1115 = vmatprep.subr.mxu0 0.0
    %1116 = vmatpush2.msra.mxu0 0.0
    %1117 = vmatprep.subr.mxu0 0.0
    %1118 = vmatpush2.msra.mxu0 0.0
    %1119 = vmatprep.subr.mxu0 0.0
    %1120 = vmatpush2.msra.mxu0 0.0
    %1121 = vmatprep.subr.mxu0 0.0
    %1122 = vmatpush2.msra.mxu0 0.0
    %1123 = vmatprep.subr.mxu0 0.0
    %1124 = vmatpush2.msra.mxu0 0.0
    %1125 = vmatprep.subr.mxu0 0.0
    %1126 = vmatpush2.msra.mxu0 0.0
    %1127 = vmatprep.subr.mxu0 0.0
    %1128 = vmatpush2.msra.mxu0 0.0
    %1129 = vmatprep.subr.mxu0 0.0
    %1130 = vmatpush2.msra.mxu0 0.0
    %1131 = vmatprep.subr.mxu0 0.0
    %1132 = vmatpush2.msra.mxu0 0.0
    %1133 = vmatprep.subr.mxu0 0.0
    %1134 = vmatpush2.msra.mxu0 0.0
    %1135 = vmatprep.subr.mxu0 0.0
    %1136 = vmatpush2.msra.mxu0 0.0
    %1137 = vmatprep.subr.mxu0 0.0
    %1138 = vmatpush2.msra.mxu0 0.0
    %1139 = vmatprep.mubr.f32.mxu0 0.0
    %1140 = vmatmul.mubr.f32.gmra.mxu0 %v1073
    %v1141 = vpop.f32.mrf.mxu0
    %v1142 = vadd.f32 0.0, %v1141
    %v1143 = vpop.f32.mrf.mxu0
    %1144 = vdwg.mxu0
    %v1145 = vadd.f32 %v1069, %v1142
    %v1146 = vxor.u32 %v1145, 2147483648
    %v1147 = vmul.f32 %v1146, 1.442695
    %v1148 = vpow.pop %v1147
    %v1149 = vadd.f32 %v1148, 1.0
    %v1150 = vrcp.pop %v1149
    %v1151 = vmul.f32 1.0, %v1150
    %v1152 = vtanh.pop %v1145
    %v1153 = vmul.f32 %v1151, %v896
    %1155 = vrot.lane.b32.xlu0 %v1152, 108
    %v1156 = vpop.permute.xlu0 %1155
    %v1158 = vmul.f32 %v1151, %v1156
    %1160 = vrot.lane.b32.xlu0 %v1158, 10
    %v1161 = vpop.permute.xlu0 %1160
    %v1163 = vadd.f32 %v1153, %v1161
    %v1164 = vtanh.pop %v1163
    %1166 = vrot.lane.b32.xlu0 %v1164, 20
    %v1167 = vpop.permute.xlu0 %1166
    %v1169 = vmul.f32 %v1151, %v1167
    %s1170 = scalar_lea.vmem %s0, 8
    %v1171 = vld [vmem:[%s1170] sm:$0x3]
    %s1172 = scalar_lea.vmem %s1, 8
    %v1173 = vld [vmem:[%s1172] sm:$0x3]
    %s1174 = scalar_lea.vmem %s2, 8
    %v1175 = vld [vmem:[%s1174] sm:$0x3]
    %1177 = vset.pattern.permute.xlu0 0
    %1178 = vperm.xlu0 %1177, %v1173
    %v1179 = vpop.permute.xlu0 %1178
    %v1181 = vmul.f32 %v1179, %v84
    %v1183 = vsel %vm109, %v1171, 0
    %1185 = vmatprep.subr.mxu0 0.0
    %1186 = vmatpush1.msra.mxu0 0.0
    %1187 = vmatprep.subr.mxu0 0.0
    %1188 = vmatpush1.msra.mxu0 0.0
    %1189 = vmatprep.subr.mxu0 0.0
    %1190 = vmatpush1.msra.mxu0 0.0
    %1191 = vmatprep.subr.mxu0 0.0
    %1192 = vmatpush1.msra.mxu0 0.0
    %1193 = vmatprep.subr.mxu0 0.0
    %1194 = vmatpush1.msra.mxu0 0.0
    %1195 = vmatprep.subr.mxu0 0.0
    %1196 = vmatpush1.msra.mxu0 0.0
    %1197 = vmatprep.subr.mxu0 0.0
    %1198 = vmatpush1.msra.mxu0 0.0
    %1199 = vmatprep.subr.mxu0 0.0
    %1200 = vmatpush1.msra.mxu0 0.0
    %1201 = vmatprep.subr.mxu0 0.0
    %1202 = vmatpush1.msra.mxu0 0.0
    %1203 = vmatprep.subr.mxu0 0.0
    %1204 = vmatpush1.msra.mxu0 0.0
    %1205 = vmatprep.subr.mxu0 0.0
    %1206 = vmatpush1.msra.mxu0 0.0
    %1207 = vmatprep.subr.mxu0 0.0
    %1208 = vmatpush1.msra.mxu0 0.0
    %1209 = vmatprep.subr.mxu0 0.0
    %1210 = vmatpush1.msra.mxu0 0.0
    %1211 = vmatprep.subr.mxu0 0.0
    %1212 = vmatpush1.msra.mxu0 0.0
    %1213 = vmatprep.subr.mxu0 0.0
    %1214 = vmatpush1.msra.mxu0 %v115
    %1215 = vmatprep.subr.mxu0 0.0
    %1216 = vmatpush1.msra.mxu0 %v47
    %1217 = vmatprep.subr.mxu0 0.0
    %1218 = vmatpush2.msra.mxu0 0.0
    %1219 = vmatprep.subr.mxu0 0.0
    %1220 = vmatpush2.msra.mxu0 0.0
    %1221 = vmatprep.subr.mxu0 0.0
    %1222 = vmatpush2.msra.mxu0 0.0
    %1223 = vmatprep.subr.mxu0 0.0
    %1224 = vmatpush2.msra.mxu0 0.0
    %1225 = vmatprep.subr.mxu0 0.0
    %1226 = vmatpush2.msra.mxu0 0.0
    %1227 = vmatprep.subr.mxu0 0.0
    %1228 = vmatpush2.msra.mxu0 0.0
    %1229 = vmatprep.subr.mxu0 0.0
    %1230 = vmatpush2.msra.mxu0 0.0
    %1231 = vmatprep.subr.mxu0 0.0
    %1232 = vmatpush2.msra.mxu0 0.0
    %1233 = vmatprep.subr.mxu0 0.0
    %1234 = vmatpush2.msra.mxu0 0.0
    %1235 = vmatprep.subr.mxu0 0.0
    %1236 = vmatpush2.msra.mxu0 0.0
    %1237 = vmatprep.subr.mxu0 0.0
    %1238 = vmatpush2.msra.mxu0 0.0
    %1239 = vmatprep.subr.mxu0 0.0
    %1240 = vmatpush2.msra.mxu0 0.0
    %1241 = vmatprep.subr.mxu0 0.0
    %1242 = vmatpush2.msra.mxu0 0.0
    %1243 = vmatprep.subr.mxu0 0.0
    %1244 = vmatpush2.msra.mxu0 0.0
    %1245 = vmatprep.subr.mxu0 0.0
    %1246 = vmatpush2.msra.mxu0 0.0
    %1247 = vmatprep.subr.mxu0 0.0
    %1248 = vmatpush2.msra.mxu0 0.0
    %1249 = vmatprep.mubr.f32.mxu0 0.0
    %1250 = vmatmul.mubr.f32.gmra.mxu0 %v1183
    %v1251 = vpop.f32.mrf.mxu0
    %v1252 = vadd.f32 %v1181, %v1251
    %v1253 = vpop.f32.mrf.mxu0
    %1254 = vdwg.mxu0
    %v1255 = vadd.f32 %v1252, %v98
    %1257 = vset.pattern.permute.xlu0 0
    %1258 = vperm.xlu0 %1257, %v1175
    %v1259 = vpop.permute.xlu0 %1258
    %v1261 = vmul.f32 %v1259, %v56
    %v1262 = vadd.f32 %v1261, %v63
    %v1263 = vmax.f32 %v1262, 0.0
    %v1264 = vsub.f32 0.0, %v1263
    %v1265 = vmul.f32 %v1264, 1.442695
    %v1266 = vpow.pop %v1265
    %1268 = vrot.lane.b32.xlu0 %v1266, 30
    %v1269 = vpop.permute.xlu0 %1268
    %v1271 = vmul.f32 %v1169, %v1269
    %v1272 = vmul.f32 %v1271, %v469
    %1274 = vrot.lane.b32.xlu0 %v1272, 98
    %v1275 = vpop.permute.xlu0 %1274
    %v1277 = vsel %vm201, %v1275, 0.0
    %1278 = vadd.xlane.f32.xlu0 %v1277
    %v1279 = vpop.xlane.xlu0 %1278
    %v1280 = vadd.f32 %v1279, %v77
    %1281 = vrot.lane.b32.xlu0 %v1173, 2
    %v1282 = vpop.permute.xlu0 %1281
    %v1284 = vmul.f32 %v1171, %v1282
    %v1285 = vsub.f32 1.0, %v1173
    %v1286 = vmul.f32 %v1285, %v1280
    %1288 = vrot.lane.b32.xlu0 %v1286, 2
    %v1289 = vpop.permute.xlu0 %1288
    %v1291 = vadd.f32 %v1284, %v1289
    %1293 = vrot.lane.b32.xlu0 %v1280, 2
    %v1294 = vpop.permute.xlu0 %1293
    %v1296 = vsub.f32 %v1291, %v1294
    %v1297 = vand.u32 2147483647, %v1296
    %v1298 = vmul.f32 %v1297, %v1282
    %1300 = vrot.lane.b32.xlu0 %v1298, 126
    %v1301 = vpop.permute.xlu0 %1300
    %v1303 = vsel %vm228, %v1301, 0.0
    %1304 = vadd.xlane.f32.xlu0 %v1303
    %v1305 = vpop.xlane.xlu0 %1304
    %v1306 = vrot.slane %v1305, 4
    %v1307 = vadd.f32 %v1305, %v1306
    %v1308 = vrot.slane %v1307, 2
    %v1309 = vadd.f32 %v1307, %v1308
    %v1310 = vrot.slane %v1309, 1
    %v1311 = vadd.f32 %v1309, %v1310
    %s1312 = vtos %v1311
    %v1313 = vstv %s1312
    %v1314 = vsel %vm228, %v1173, 0.0
    %1315 = vadd.xlane.f32.xlu0 %v1314
    %v1316 = vpop.xlane.xlu0 %1315
    %v1317 = vrot.slane %v1316, 4
    %v1318 = vadd.f32 %v1316, %v1317
    %v1319 = vrot.slane %v1318, 2
    %v1320 = vadd.f32 %v1318, %v1319
    %v1321 = vrot.slane %v1320, 1
    %v1322 = vadd.f32 %v1320, %v1321
    %s1323 = vtos %v1322
    %v1324 = vstv %s1323
    %v1325 = vadd.f32 %v1324, 1e-05
    %v1326 = vrcp.pop %v1325
    %v1327 = vmul.f32 %v1313, %v1326
    %v1328 = vadd.f32 %v1061, %v1327
    %v1329 = vsub.f32 %v1291, %v1171
    %1331 = vset.pattern.permute.xlu0 2
    %1332 = vperm.xlu0 %1331, %v1329
    %v1333 = vpop.permute.xlu0 %1332
    %v1335 = vmul.f32 %v1333, %v91
    %v1336 = vadd.f32 %v1255, %v1335
    %1338 = vrot.lane.b32.xlu0 %v1271, 98
    %v1339 = vpop.permute.xlu0 %1338
    %v1340 = vsel %vm263, %v1339, 0
    %1342 = vmatprep.subr.mxu0 0.0
    %1343 = vmatpush1.msra.mxu0 0.0
    %1344 = vmatprep.subr.mxu0 0.0
    %1345 = vmatpush1.msra.mxu0 0.0
    %1346 = vmatprep.subr.mxu0 0.0
    %1347 = vmatpush1.msra.mxu0 0.0
    %1348 = vmatprep.subr.mxu0 0.0
    %1349 = vmatpush1.msra.mxu0 0.0
    %1350 = vmatprep.subr.mxu0 0.0
    %1351 = vmatpush1.msra.mxu0 0.0
    %1352 = vmatprep.subr.mxu0 0.0
    %1353 = vmatpush1.msra.mxu0 0.0
    %1354 = vmatprep.subr.mxu0 0.0
    %1355 = vmatpush1.msra.mxu0 0.0
    %1356 = vmatprep.subr.mxu0 0.0
    %1357 = vmatpush1.msra.mxu0 0.0
    %1358 = vmatprep.subr.mxu0 0.0
    %1359 = vmatpush1.msra.mxu0 0.0
    %1360 = vmatprep.subr.mxu0 0.0
    %1361 = vmatpush1.msra.mxu0 0.0
    %1362 = vmatprep.subr.mxu0 0.0
    %1363 = vmatpush1.msra.mxu0 0.0
    %1364 = vmatprep.subr.mxu0 0.0
    %1365 = vmatpush1.msra.mxu0 0.0
    %1366 = vmatprep.subr.mxu0 0.0
    %1367 = vmatpush1.msra.mxu0 0.0
    %1368 = vmatprep.subr.mxu0 0.0
    %1369 = vmatpush1.msra.mxu0 0.0
    %1370 = vmatprep.subr.mxu0 0.0
    %1371 = vmatpush1.msra.mxu0 %v269
    %1372 = vmatprep.subr.mxu0 0.0
    %1373 = vmatpush1.msra.mxu0 %v49
    %1374 = vmatprep.subr.mxu0 0.0
    %1375 = vmatpush2.msra.mxu0 0.0
    %1376 = vmatprep.subr.mxu0 0.0
    %1377 = vmatpush2.msra.mxu0 0.0
    %1378 = vmatprep.subr.mxu0 0.0
    %1379 = vmatpush2.msra.mxu0 0.0
    %1380 = vmatprep.subr.mxu0 0.0
    %1381 = vmatpush2.msra.mxu0 0.0
    %1382 = vmatprep.subr.mxu0 0.0
    %1383 = vmatpush2.msra.mxu0 0.0
    %1384 = vmatprep.subr.mxu0 0.0
    %1385 = vmatpush2.msra.mxu0 0.0
    %1386 = vmatprep.subr.mxu0 0.0
    %1387 = vmatpush2.msra.mxu0 0.0
    %1388 = vmatprep.subr.mxu0 0.0
    %1389 = vmatpush2.msra.mxu0 0.0
    %1390 = vmatprep.subr.mxu0 0.0
    %1391 = vmatpush2.msra.mxu0 0.0
    %1392 = vmatprep.subr.mxu0 0.0
    %1393 = vmatpush2.msra.mxu0 0.0
    %1394 = vmatprep.subr.mxu0 0.0
    %1395 = vmatpush2.msra.mxu0 0.0
    %1396 = vmatprep.subr.mxu0 0.0
    %1397 = vmatpush2.msra.mxu0 0.0
    %1398 = vmatprep.subr.mxu0 0.0
    %1399 = vmatpush2.msra.mxu0 0.0
    %1400 = vmatprep.subr.mxu0 0.0
    %1401 = vmatpush2.msra.mxu0 0.0
    %1402 = vmatprep.subr.mxu0 0.0
    %1403 = vmatpush2.msra.mxu0 0.0
    %1404 = vmatprep.subr.mxu0 0.0
    %1405 = vmatpush2.msra.mxu0 0.0
    %1406 = vmatprep.mubr.f32.mxu0 0.0
    %1407 = vmatmul.mubr.f32.gmra.mxu0 %v1340
    %v1408 = vpop.f32.mrf.mxu0
    %v1409 = vadd.f32 0.0, %v1408
    %v1410 = vpop.f32.mrf.mxu0
    %1411 = vdwg.mxu0
    %v1412 = vadd.f32 %v1336, %v1409
    %v1413 = vxor.u32 %v1412, 2147483648
    %v1414 = vmul.f32 %v1413, 1.442695
    %v1415 = vpow.pop %v1414
    %v1416 = vadd.f32 %v1415, 1.0
    %v1417 = vrcp.pop %v1416
    %v1418 = vmul.f32 1.0, %v1417
    %v1419 = vtanh.pop %v1412
    %v1420 = vmul.f32 %v1418, %v1163
    %1422 = vrot.lane.b32.xlu0 %v1419, 108
    %v1423 = vpop.permute.xlu0 %1422
    %v1425 = vmul.f32 %v1418, %v1423
    %1427 = vrot.lane.b32.xlu0 %v1425, 10
    %v1428 = vpop.permute.xlu0 %1427
    %v1430 = vadd.f32 %v1420, %v1428
    %v1431 = vtanh.pop %v1430
    %1433 = vrot.lane.b32.xlu0 %v1431, 20
    %v1434 = vpop.permute.xlu0 %1433
    %v1436 = vmul.f32 %v1418, %v1434
    %s1437 = scalar_lea.vmem %s0, 10
    %v1438 = vld [vmem:[%s1437] sm:$0x3]
    %s1439 = scalar_lea.vmem %s1, 10
    %v1440 = vld [vmem:[%s1439] sm:$0x3]
    %s1441 = scalar_lea.vmem %s2, 10
    %v1442 = vld [vmem:[%s1441] sm:$0x3]
    %1444 = vset.pattern.permute.xlu0 0
    %1445 = vperm.xlu0 %1444, %v1440
    %v1446 = vpop.permute.xlu0 %1445
    %v1448 = vmul.f32 %v1446, %v84
    %v1450 = vsel %vm109, %v1438, 0
    %1452 = vmatprep.subr.mxu0 0.0
    %1453 = vmatpush1.msra.mxu0 0.0
    %1454 = vmatprep.subr.mxu0 0.0
    %1455 = vmatpush1.msra.mxu0 0.0
    %1456 = vmatprep.subr.mxu0 0.0
    %1457 = vmatpush1.msra.mxu0 0.0
    %1458 = vmatprep.subr.mxu0 0.0
    %1459 = vmatpush1.msra.mxu0 0.0
    %1460 = vmatprep.subr.mxu0 0.0
    %1461 = vmatpush1.msra.mxu0 0.0
    %1462 = vmatprep.subr.mxu0 0.0
    %1463 = vmatpush1.msra.mxu0 0.0
    %1464 = vmatprep.subr.mxu0 0.0
    %1465 = vmatpush1.msra.mxu0 0.0
    %1466 = vmatprep.subr.mxu0 0.0
    %1467 = vmatpush1.msra.mxu0 0.0
    %1468 = vmatprep.subr.mxu0 0.0
    %1469 = vmatpush1.msra.mxu0 0.0
    %1470 = vmatprep.subr.mxu0 0.0
    %1471 = vmatpush1.msra.mxu0 0.0
    %1472 = vmatprep.subr.mxu0 0.0
    %1473 = vmatpush1.msra.mxu0 0.0
    %1474 = vmatprep.subr.mxu0 0.0
    %1475 = vmatpush1.msra.mxu0 0.0
    %1476 = vmatprep.subr.mxu0 0.0
    %1477 = vmatpush1.msra.mxu0 0.0
    %1478 = vmatprep.subr.mxu0 0.0
    %1479 = vmatpush1.msra.mxu0 0.0
    %1480 = vmatprep.subr.mxu0 0.0
    %1481 = vmatpush1.msra.mxu0 %v115
    %1482 = vmatprep.subr.mxu0 0.0
    %1483 = vmatpush1.msra.mxu0 %v47
    %1484 = vmatprep.subr.mxu0 0.0
    %1485 = vmatpush2.msra.mxu0 0.0
    %1486 = vmatprep.subr.mxu0 0.0
    %1487 = vmatpush2.msra.mxu0 0.0
    %1488 = vmatprep.subr.mxu0 0.0
    %1489 = vmatpush2.msra.mxu0 0.0
    %1490 = vmatprep.subr.mxu0 0.0
    %1491 = vmatpush2.msra.mxu0 0.0
    %1492 = vmatprep.subr.mxu0 0.0
    %1493 = vmatpush2.msra.mxu0 0.0
    %1494 = vmatprep.subr.mxu0 0.0
    %1495 = vmatpush2.msra.mxu0 0.0
    %1496 = vmatprep.subr.mxu0 0.0
    %1497 = vmatpush2.msra.mxu0 0.0
    %1498 = vmatprep.subr.mxu0 0.0
    %1499 = vmatpush2.msra.mxu0 0.0
    %1500 = vmatprep.subr.mxu0 0.0
    %1501 = vmatpush2.msra.mxu0 0.0
    %1502 = vmatprep.subr.mxu0 0.0
    %1503 = vmatpush2.msra.mxu0 0.0
    %1504 = vmatprep.subr.mxu0 0.0
    %1505 = vmatpush2.msra.mxu0 0.0
    %1506 = vmatprep.subr.mxu0 0.0
    %1507 = vmatpush2.msra.mxu0 0.0
    %1508 = vmatprep.subr.mxu0 0.0
    %1509 = vmatpush2.msra.mxu0 0.0
    %1510 = vmatprep.subr.mxu0 0.0
    %1511 = vmatpush2.msra.mxu0 0.0
    %1512 = vmatprep.subr.mxu0 0.0
    %1513 = vmatpush2.msra.mxu0 0.0
    %1514 = vmatprep.subr.mxu0 0.0
    %1515 = vmatpush2.msra.mxu0 0.0
    %1516 = vmatprep.mubr.f32.mxu0 0.0
    %1517 = vmatmul.mubr.f32.gmra.mxu0 %v1450
    %v1518 = vpop.f32.mrf.mxu0
    %v1519 = vadd.f32 %v1448, %v1518
    %v1520 = vpop.f32.mrf.mxu0
    %1521 = vdwg.mxu0
    %v1522 = vadd.f32 %v1519, %v98
    %1524 = vset.pattern.permute.xlu0 0
    %1525 = vperm.xlu0 %1524, %v1442
    %v1526 = vpop.permute.xlu0 %1525
    %v1528 = vmul.f32 %v1526, %v56
    %v1529 = vadd.f32 %v1528, %v63
    %v1530 = vmax.f32 %v1529, 0.0
    %v1531 = vsub.f32 0.0, %v1530
    %v1532 = vmul.f32 %v1531, 1.442695
    %v1533 = vpow.pop %v1532
    %1535 = vrot.lane.b32.xlu0 %v1533, 30
    %v1536 = vpop.permute.xlu0 %1535
    %v1538 = vmul.f32 %v1436, %v1536
    %v1539 = vmul.f32 %v1538, %v469
    %1541 = vrot.lane.b32.xlu0 %v1539, 98
    %v1542 = vpop.permute.xlu0 %1541
    %v1544 = vsel %vm201, %v1542, 0.0
    %1545 = vadd.xlane.f32.xlu0 %v1544
    %v1546 = vpop.xlane.xlu0 %1545
    %v1547 = vadd.f32 %v1546, %v77
    %1548 = vrot.lane.b32.xlu0 %v1440, 2
    %v1549 = vpop.permute.xlu0 %1548
    %v1551 = vmul.f32 %v1438, %v1549
    %v1552 = vsub.f32 1.0, %v1440
    %v1553 = vmul.f32 %v1552, %v1547
    %1555 = vrot.lane.b32.xlu0 %v1553, 2
    %v1556 = vpop.permute.xlu0 %1555
    %v1558 = vadd.f32 %v1551, %v1556
    %1560 = vrot.lane.b32.xlu0 %v1547, 2
    %v1561 = vpop.permute.xlu0 %1560
    %v1563 = vsub.f32 %v1558, %v1561
    %v1564 = vand.u32 2147483647, %v1563
    %v1565 = vmul.f32 %v1564, %v1549
    %1567 = vrot.lane.b32.xlu0 %v1565, 126
    %v1568 = vpop.permute.xlu0 %1567
    %v1570 = vsel %vm228, %v1568, 0.0
    %1571 = vadd.xlane.f32.xlu0 %v1570
    %v1572 = vpop.xlane.xlu0 %1571
    %v1573 = vrot.slane %v1572, 4
    %v1574 = vadd.f32 %v1572, %v1573
    %v1575 = vrot.slane %v1574, 2
    %v1576 = vadd.f32 %v1574, %v1575
    %v1577 = vrot.slane %v1576, 1
    %v1578 = vadd.f32 %v1576, %v1577
    %s1579 = vtos %v1578
    %v1580 = vstv %s1579
    %v1581 = vsel %vm228, %v1440, 0.0
    %1582 = vadd.xlane.f32.xlu0 %v1581
    %v1583 = vpop.xlane.xlu0 %1582
    %v1584 = vrot.slane %v1583, 4
    %v1585 = vadd.f32 %v1583, %v1584
    %v1586 = vrot.slane %v1585, 2
    %v1587 = vadd.f32 %v1585, %v1586
    %v1588 = vrot.slane %v1587, 1
    %v1589 = vadd.f32 %v1587, %v1588
    %s1590 = vtos %v1589
    %v1591 = vstv %s1590
    %v1592 = vadd.f32 %v1591, 1e-05
    %v1593 = vrcp.pop %v1592
    %v1594 = vmul.f32 %v1580, %v1593
    %v1595 = vadd.f32 %v1328, %v1594
    %v1596 = vsub.f32 %v1558, %v1438
    %1598 = vset.pattern.permute.xlu0 2
    %1599 = vperm.xlu0 %1598, %v1596
    %v1600 = vpop.permute.xlu0 %1599
    %v1602 = vmul.f32 %v1600, %v91
    %v1603 = vadd.f32 %v1522, %v1602
    %1605 = vrot.lane.b32.xlu0 %v1538, 98
    %v1606 = vpop.permute.xlu0 %1605
    %v1607 = vsel %vm263, %v1606, 0
    %1609 = vmatprep.subr.mxu0 0.0
    %1610 = vmatpush1.msra.mxu0 0.0
    %1611 = vmatprep.subr.mxu0 0.0
    %1612 = vmatpush1.msra.mxu0 0.0
    %1613 = vmatprep.subr.mxu0 0.0
    %1614 = vmatpush1.msra.mxu0 0.0
    %1615 = vmatprep.subr.mxu0 0.0
    %1616 = vmatpush1.msra.mxu0 0.0
    %1617 = vmatprep.subr.mxu0 0.0
    %1618 = vmatpush1.msra.mxu0 0.0
    %1619 = vmatprep.subr.mxu0 0.0
    %1620 = vmatpush1.msra.mxu0 0.0
    %1621 = vmatprep.subr.mxu0 0.0
    %1622 = vmatpush1.msra.mxu0 0.0
    %1623 = vmatprep.subr.mxu0 0.0
    %1624 = vmatpush1.msra.mxu0 0.0
    %1625 = vmatprep.subr.mxu0 0.0
    %1626 = vmatpush1.msra.mxu0 0.0
    %1627 = vmatprep.subr.mxu0 0.0
    %1628 = vmatpush1.msra.mxu0 0.0
    %1629 = vmatprep.subr.mxu0 0.0
    %1630 = vmatpush1.msra.mxu0 0.0
    %1631 = vmatprep.subr.mxu0 0.0
    %1632 = vmatpush1.msra.mxu0 0.0
    %1633 = vmatprep.subr.mxu0 0.0
    %1634 = vmatpush1.msra.mxu0 0.0
    %1635 = vmatprep.subr.mxu0 0.0
    %1636 = vmatpush1.msra.mxu0 0.0
    %1637 = vmatprep.subr.mxu0 0.0
    %1638 = vmatpush1.msra.mxu0 %v269
    %1639 = vmatprep.subr.mxu0 0.0
    %1640 = vmatpush1.msra.mxu0 %v49
    %1641 = vmatprep.subr.mxu0 0.0
    %1642 = vmatpush2.msra.mxu0 0.0
    %1643 = vmatprep.subr.mxu0 0.0
    %1644 = vmatpush2.msra.mxu0 0.0
    %1645 = vmatprep.subr.mxu0 0.0
    %1646 = vmatpush2.msra.mxu0 0.0
    %1647 = vmatprep.subr.mxu0 0.0
    %1648 = vmatpush2.msra.mxu0 0.0
    %1649 = vmatprep.subr.mxu0 0.0
    %1650 = vmatpush2.msra.mxu0 0.0
    %1651 = vmatprep.subr.mxu0 0.0
    %1652 = vmatpush2.msra.mxu0 0.0
    %1653 = vmatprep.subr.mxu0 0.0
    %1654 = vmatpush2.msra.mxu0 0.0
    %1655 = vmatprep.subr.mxu0 0.0
    %1656 = vmatpush2.msra.mxu0 0.0
    %1657 = vmatprep.subr.mxu0 0.0
    %1658 = vmatpush2.msra.mxu0 0.0
    %1659 = vmatprep.subr.mxu0 0.0
    %1660 = vmatpush2.msra.mxu0 0.0
    %1661 = vmatprep.subr.mxu0 0.0
    %1662 = vmatpush2.msra.mxu0 0.0
    %1663 = vmatprep.subr.mxu0 0.0
    %1664 = vmatpush2.msra.mxu0 0.0
    %1665 = vmatprep.subr.mxu0 0.0
    %1666 = vmatpush2.msra.mxu0 0.0
    %1667 = vmatprep.subr.mxu0 0.0
    %1668 = vmatpush2.msra.mxu0 0.0
    %1669 = vmatprep.subr.mxu0 0.0
    %1670 = vmatpush2.msra.mxu0 0.0
    %1671 = vmatprep.subr.mxu0 0.0
    %1672 = vmatpush2.msra.mxu0 0.0
    %1673 = vmatprep.mubr.f32.mxu0 0.0
    %1674 = vmatmul.mubr.f32.gmra.mxu0 %v1607
    %v1675 = vpop.f32.mrf.mxu0
    %v1676 = vadd.f32 0.0, %v1675
    %v1677 = vpop.f32.mrf.mxu0
    %1678 = vdwg.mxu0
    %v1679 = vadd.f32 %v1603, %v1676
    %v1680 = vxor.u32 %v1679, 2147483648
    %v1681 = vmul.f32 %v1680, 1.442695
    %v1682 = vpow.pop %v1681
    %v1683 = vadd.f32 %v1682, 1.0
    %v1684 = vrcp.pop %v1683
    %v1685 = vmul.f32 1.0, %v1684
    %v1686 = vtanh.pop %v1679
    %v1687 = vmul.f32 %v1685, %v1430
    %1689 = vrot.lane.b32.xlu0 %v1686, 108
    %v1690 = vpop.permute.xlu0 %1689
    %v1692 = vmul.f32 %v1685, %v1690
    %1694 = vrot.lane.b32.xlu0 %v1692, 10
    %v1695 = vpop.permute.xlu0 %1694
    %v1697 = vadd.f32 %v1687, %v1695
    %v1698 = vtanh.pop %v1697
    %1700 = vrot.lane.b32.xlu0 %v1698, 20
    %v1701 = vpop.permute.xlu0 %1700
    %v1703 = vmul.f32 %v1685, %v1701
    %s1704 = scalar_lea.vmem %s0, 12
    %v1705 = vld [vmem:[%s1704] sm:$0x3]
    %s1706 = scalar_lea.vmem %s1, 12
    %v1707 = vld [vmem:[%s1706] sm:$0x3]
    %s1708 = scalar_lea.vmem %s2, 12
    %v1709 = vld [vmem:[%s1708] sm:$0x3]
    %1711 = vset.pattern.permute.xlu0 0
    %1712 = vperm.xlu0 %1711, %v1707
    %v1713 = vpop.permute.xlu0 %1712
    %v1715 = vmul.f32 %v1713, %v84
    %v1717 = vsel %vm109, %v1705, 0
    %1719 = vmatprep.subr.mxu0 0.0
    %1720 = vmatpush1.msra.mxu0 0.0
    %1721 = vmatprep.subr.mxu0 0.0
    %1722 = vmatpush1.msra.mxu0 0.0
    %1723 = vmatprep.subr.mxu0 0.0
    %1724 = vmatpush1.msra.mxu0 0.0
    %1725 = vmatprep.subr.mxu0 0.0
    %1726 = vmatpush1.msra.mxu0 0.0
    %1727 = vmatprep.subr.mxu0 0.0
    %1728 = vmatpush1.msra.mxu0 0.0
    %1729 = vmatprep.subr.mxu0 0.0
    %1730 = vmatpush1.msra.mxu0 0.0
    %1731 = vmatprep.subr.mxu0 0.0
    %1732 = vmatpush1.msra.mxu0 0.0
    %1733 = vmatprep.subr.mxu0 0.0
    %1734 = vmatpush1.msra.mxu0 0.0
    %1735 = vmatprep.subr.mxu0 0.0
    %1736 = vmatpush1.msra.mxu0 0.0
    %1737 = vmatprep.subr.mxu0 0.0
    %1738 = vmatpush1.msra.mxu0 0.0
    %1739 = vmatprep.subr.mxu0 0.0
    %1740 = vmatpush1.msra.mxu0 0.0
    %1741 = vmatprep.subr.mxu0 0.0
    %1742 = vmatpush1.msra.mxu0 0.0
    %1743 = vmatprep.subr.mxu0 0.0
    %1744 = vmatpush1.msra.mxu0 0.0
    %1745 = vmatprep.subr.mxu0 0.0
    %1746 = vmatpush1.msra.mxu0 0.0
    %1747 = vmatprep.subr.mxu0 0.0
    %1748 = vmatpush1.msra.mxu0 %v115
    %1749 = vmatprep.subr.mxu0 0.0
    %1750 = vmatpush1.msra.mxu0 %v47
    %1751 = vmatprep.subr.mxu0 0.0
    %1752 = vmatpush2.msra.mxu0 0.0
    %1753 = vmatprep.subr.mxu0 0.0
    %1754 = vmatpush2.msra.mxu0 0.0
    %1755 = vmatprep.subr.mxu0 0.0
    %1756 = vmatpush2.msra.mxu0 0.0
    %1757 = vmatprep.subr.mxu0 0.0
    %1758 = vmatpush2.msra.mxu0 0.0
    %1759 = vmatprep.subr.mxu0 0.0
    %1760 = vmatpush2.msra.mxu0 0.0
    %1761 = vmatprep.subr.mxu0 0.0
    %1762 = vmatpush2.msra.mxu0 0.0
    %1763 = vmatprep.subr.mxu0 0.0
    %1764 = vmatpush2.msra.mxu0 0.0
    %1765 = vmatprep.subr.mxu0 0.0
    %1766 = vmatpush2.msra.mxu0 0.0
    %1767 = vmatprep.subr.mxu0 0.0
    %1768 = vmatpush2.msra.mxu0 0.0
    %1769 = vmatprep.subr.mxu0 0.0
    %1770 = vmatpush2.msra.mxu0 0.0
    %1771 = vmatprep.subr.mxu0 0.0
    %1772 = vmatpush2.msra.mxu0 0.0
    %1773 = vmatprep.subr.mxu0 0.0
    %1774 = vmatpush2.msra.mxu0 0.0
    %1775 = vmatprep.subr.mxu0 0.0
    %1776 = vmatpush2.msra.mxu0 0.0
    %1777 = vmatprep.subr.mxu0 0.0
    %1778 = vmatpush2.msra.mxu0 0.0
    %1779 = vmatprep.subr.mxu0 0.0
    %1780 = vmatpush2.msra.mxu0 0.0
    %1781 = vmatprep.subr.mxu0 0.0
    %1782 = vmatpush2.msra.mxu0 0.0
    %1783 = vmatprep.mubr.f32.mxu0 0.0
    %1784 = vmatmul.mubr.f32.gmra.mxu0 %v1717
    %v1785 = vpop.f32.mrf.mxu0
    %v1786 = vadd.f32 %v1715, %v1785
    %v1787 = vpop.f32.mrf.mxu0
    %1788 = vdwg.mxu0
    %v1789 = vadd.f32 %v1786, %v98
    %1791 = vset.pattern.permute.xlu0 0
    %1792 = vperm.xlu0 %1791, %v1709
    %v1793 = vpop.permute.xlu0 %1792
    %v1795 = vmul.f32 %v1793, %v56
    %v1796 = vadd.f32 %v1795, %v63
    %v1797 = vmax.f32 %v1796, 0.0
    %v1798 = vsub.f32 0.0, %v1797
    %v1799 = vmul.f32 %v1798, 1.442695
    %v1800 = vpow.pop %v1799
    %1802 = vrot.lane.b32.xlu0 %v1800, 30
    %v1803 = vpop.permute.xlu0 %1802
    %v1805 = vmul.f32 %v1703, %v1803
    %v1806 = vmul.f32 %v1805, %v469
    %1808 = vrot.lane.b32.xlu0 %v1806, 98
    %v1809 = vpop.permute.xlu0 %1808
    %v1811 = vsel %vm201, %v1809, 0.0
    %1812 = vadd.xlane.f32.xlu0 %v1811
    %v1813 = vpop.xlane.xlu0 %1812
    %v1814 = vadd.f32 %v1813, %v77
    %1815 = vrot.lane.b32.xlu0 %v1707, 2
    %v1816 = vpop.permute.xlu0 %1815
    %v1818 = vmul.f32 %v1705, %v1816
    %v1819 = vsub.f32 1.0, %v1707
    %v1820 = vmul.f32 %v1819, %v1814
    %1822 = vrot.lane.b32.xlu0 %v1820, 2
    %v1823 = vpop.permute.xlu0 %1822
    %v1825 = vadd.f32 %v1818, %v1823
    %1827 = vrot.lane.b32.xlu0 %v1814, 2
    %v1828 = vpop.permute.xlu0 %1827
    %v1830 = vsub.f32 %v1825, %v1828
    %v1831 = vand.u32 2147483647, %v1830
    %v1832 = vmul.f32 %v1831, %v1816
    %1834 = vrot.lane.b32.xlu0 %v1832, 126
    %v1835 = vpop.permute.xlu0 %1834
    %v1837 = vsel %vm228, %v1835, 0.0
    %1838 = vadd.xlane.f32.xlu0 %v1837
    %v1839 = vpop.xlane.xlu0 %1838
    %v1840 = vrot.slane %v1839, 4
    %v1841 = vadd.f32 %v1839, %v1840
    %v1842 = vrot.slane %v1841, 2
    %v1843 = vadd.f32 %v1841, %v1842
    %v1844 = vrot.slane %v1843, 1
    %v1845 = vadd.f32 %v1843, %v1844
    %s1846 = vtos %v1845
    %v1847 = vstv %s1846
    %v1848 = vsel %vm228, %v1707, 0.0
    %1849 = vadd.xlane.f32.xlu0 %v1848
    %v1850 = vpop.xlane.xlu0 %1849
    %v1851 = vrot.slane %v1850, 4
    %v1852 = vadd.f32 %v1850, %v1851
    %v1853 = vrot.slane %v1852, 2
    %v1854 = vadd.f32 %v1852, %v1853
    %v1855 = vrot.slane %v1854, 1
    %v1856 = vadd.f32 %v1854, %v1855
    %s1857 = vtos %v1856
    %v1858 = vstv %s1857
    %v1859 = vadd.f32 %v1858, 1e-05
    %v1860 = vrcp.pop %v1859
    %v1861 = vmul.f32 %v1847, %v1860
    %v1862 = vadd.f32 %v1595, %v1861
    %v1863 = vsub.f32 %v1825, %v1705
    %1865 = vset.pattern.permute.xlu0 2
    %1866 = vperm.xlu0 %1865, %v1863
    %v1867 = vpop.permute.xlu0 %1866
    %v1869 = vmul.f32 %v1867, %v91
    %v1870 = vadd.f32 %v1789, %v1869
    %1872 = vrot.lane.b32.xlu0 %v1805, 98
    %v1873 = vpop.permute.xlu0 %1872
    %v1874 = vsel %vm263, %v1873, 0
    %1876 = vmatprep.subr.mxu0 0.0
    %1877 = vmatpush1.msra.mxu0 0.0
    %1878 = vmatprep.subr.mxu0 0.0
    %1879 = vmatpush1.msra.mxu0 0.0
    %1880 = vmatprep.subr.mxu0 0.0
    %1881 = vmatpush1.msra.mxu0 0.0
    %1882 = vmatprep.subr.mxu0 0.0
    %1883 = vmatpush1.msra.mxu0 0.0
    %1884 = vmatprep.subr.mxu0 0.0
    %1885 = vmatpush1.msra.mxu0 0.0
    %1886 = vmatprep.subr.mxu0 0.0
    %1887 = vmatpush1.msra.mxu0 0.0
    %1888 = vmatprep.subr.mxu0 0.0
    %1889 = vmatpush1.msra.mxu0 0.0
    %1890 = vmatprep.subr.mxu0 0.0
    %1891 = vmatpush1.msra.mxu0 0.0
    %1892 = vmatprep.subr.mxu0 0.0
    %1893 = vmatpush1.msra.mxu0 0.0
    %1894 = vmatprep.subr.mxu0 0.0
    %1895 = vmatpush1.msra.mxu0 0.0
    %1896 = vmatprep.subr.mxu0 0.0
    %1897 = vmatpush1.msra.mxu0 0.0
    %1898 = vmatprep.subr.mxu0 0.0
    %1899 = vmatpush1.msra.mxu0 0.0
    %1900 = vmatprep.subr.mxu0 0.0
    %1901 = vmatpush1.msra.mxu0 0.0
    %1902 = vmatprep.subr.mxu0 0.0
    %1903 = vmatpush1.msra.mxu0 0.0
    %1904 = vmatprep.subr.mxu0 0.0
    %1905 = vmatpush1.msra.mxu0 %v269
    %1906 = vmatprep.subr.mxu0 0.0
    %1907 = vmatpush1.msra.mxu0 %v49
    %1908 = vmatprep.subr.mxu0 0.0
    %1909 = vmatpush2.msra.mxu0 0.0
    %1910 = vmatprep.subr.mxu0 0.0
    %1911 = vmatpush2.msra.mxu0 0.0
    %1912 = vmatprep.subr.mxu0 0.0
    %1913 = vmatpush2.msra.mxu0 0.0
    %1914 = vmatprep.subr.mxu0 0.0
    %1915 = vmatpush2.msra.mxu0 0.0
    %1916 = vmatprep.subr.mxu0 0.0
    %1917 = vmatpush2.msra.mxu0 0.0
    %1918 = vmatprep.subr.mxu0 0.0
    %1919 = vmatpush2.msra.mxu0 0.0
    %1920 = vmatprep.subr.mxu0 0.0
    %1921 = vmatpush2.msra.mxu0 0.0
    %1922 = vmatprep.subr.mxu0 0.0
    %1923 = vmatpush2.msra.mxu0 0.0
    %1924 = vmatprep.subr.mxu0 0.0
    %1925 = vmatpush2.msra.mxu0 0.0
    %1926 = vmatprep.subr.mxu0 0.0
    %1927 = vmatpush2.msra.mxu0 0.0
    %1928 = vmatprep.subr.mxu0 0.0
    %1929 = vmatpush2.msra.mxu0 0.0
    %1930 = vmatprep.subr.mxu0 0.0
    %1931 = vmatpush2.msra.mxu0 0.0
    %1932 = vmatprep.subr.mxu0 0.0
    %1933 = vmatpush2.msra.mxu0 0.0
    %1934 = vmatprep.subr.mxu0 0.0
    %1935 = vmatpush2.msra.mxu0 0.0
    %1936 = vmatprep.subr.mxu0 0.0
    %1937 = vmatpush2.msra.mxu0 0.0
    %1938 = vmatprep.subr.mxu0 0.0
    %1939 = vmatpush2.msra.mxu0 0.0
    %1940 = vmatprep.mubr.f32.mxu0 0.0
    %1941 = vmatmul.mubr.f32.gmra.mxu0 %v1874
    %v1942 = vpop.f32.mrf.mxu0
    %v1943 = vadd.f32 0.0, %v1942
    %v1944 = vpop.f32.mrf.mxu0
    %1945 = vdwg.mxu0
    %v1946 = vadd.f32 %v1870, %v1943
    %v1947 = vxor.u32 %v1946, 2147483648
    %v1948 = vmul.f32 %v1947, 1.442695
    %v1949 = vpow.pop %v1948
    %v1950 = vadd.f32 %v1949, 1.0
    %v1951 = vrcp.pop %v1950
    %v1952 = vmul.f32 1.0, %v1951
    %v1953 = vtanh.pop %v1946
    %v1954 = vmul.f32 %v1952, %v1697
    %1956 = vrot.lane.b32.xlu0 %v1953, 108
    %v1957 = vpop.permute.xlu0 %1956
    %v1959 = vmul.f32 %v1952, %v1957
    %1961 = vrot.lane.b32.xlu0 %v1959, 10
    %v1962 = vpop.permute.xlu0 %1961
    %v1964 = vadd.f32 %v1954, %v1962
    %v1965 = vtanh.pop %v1964
    %1967 = vrot.lane.b32.xlu0 %v1965, 20
    %v1968 = vpop.permute.xlu0 %1967
    %v1970 = vmul.f32 %v1952, %v1968
    %s1971 = scalar_lea.vmem %s0, 14
    %v1972 = vld [vmem:[%s1971] sm:$0x3]
    %s1973 = scalar_lea.vmem %s1, 14
    %v1974 = vld [vmem:[%s1973] sm:$0x3]
    %s1975 = scalar_lea.vmem %s2, 14
    %v1976 = vld [vmem:[%s1975] sm:$0x3]
    %1978 = vset.pattern.permute.xlu0 0
    %1979 = vperm.xlu0 %1978, %v1974
    %v1980 = vpop.permute.xlu0 %1979
    %v1982 = vmul.f32 %v1980, %v84
    %v1984 = vsel %vm109, %v1972, 0
    %1986 = vmatprep.subr.mxu0 0.0
    %1987 = vmatpush1.msra.mxu0 0.0
    %1988 = vmatprep.subr.mxu0 0.0
    %1989 = vmatpush1.msra.mxu0 0.0
    %1990 = vmatprep.subr.mxu0 0.0
    %1991 = vmatpush1.msra.mxu0 0.0
    %1992 = vmatprep.subr.mxu0 0.0
    %1993 = vmatpush1.msra.mxu0 0.0
    %1994 = vmatprep.subr.mxu0 0.0
    %1995 = vmatpush1.msra.mxu0 0.0
    %1996 = vmatprep.subr.mxu0 0.0
    %1997 = vmatpush1.msra.mxu0 0.0
    %1998 = vmatprep.subr.mxu0 0.0
    %1999 = vmatpush1.msra.mxu0 0.0
    %2000 = vmatprep.subr.mxu0 0.0
    %2001 = vmatpush1.msra.mxu0 0.0
    %2002 = vmatprep.subr.mxu0 0.0
    %2003 = vmatpush1.msra.mxu0 0.0
    %2004 = vmatprep.subr.mxu0 0.0
    %2005 = vmatpush1.msra.mxu0 0.0
    %2006 = vmatprep.subr.mxu0 0.0
    %2007 = vmatpush1.msra.mxu0 0.0
    %2008 = vmatprep.subr.mxu0 0.0
    %2009 = vmatpush1.msra.mxu0 0.0
    %2010 = vmatprep.subr.mxu0 0.0
    %2011 = vmatpush1.msra.mxu0 0.0
    %2012 = vmatprep.subr.mxu0 0.0
    %2013 = vmatpush1.msra.mxu0 0.0
    %2014 = vmatprep.subr.mxu0 0.0
    %2015 = vmatpush1.msra.mxu0 %v115
    %2016 = vmatprep.subr.mxu0 0.0
    %2017 = vmatpush1.msra.mxu0 %v47
    %2018 = vmatprep.subr.mxu0 0.0
    %2019 = vmatpush2.msra.mxu0 0.0
    %2020 = vmatprep.subr.mxu0 0.0
    %2021 = vmatpush2.msra.mxu0 0.0
    %2022 = vmatprep.subr.mxu0 0.0
    %2023 = vmatpush2.msra.mxu0 0.0
    %2024 = vmatprep.subr.mxu0 0.0
    %2025 = vmatpush2.msra.mxu0 0.0
    %2026 = vmatprep.subr.mxu0 0.0
    %2027 = vmatpush2.msra.mxu0 0.0
    %2028 = vmatprep.subr.mxu0 0.0
    %2029 = vmatpush2.msra.mxu0 0.0
    %2030 = vmatprep.subr.mxu0 0.0
    %2031 = vmatpush2.msra.mxu0 0.0
    %2032 = vmatprep.subr.mxu0 0.0
    %2033 = vmatpush2.msra.mxu0 0.0
    %2034 = vmatprep.subr.mxu0 0.0
    %2035 = vmatpush2.msra.mxu0 0.0
    %2036 = vmatprep.subr.mxu0 0.0
    %2037 = vmatpush2.msra.mxu0 0.0
    %2038 = vmatprep.subr.mxu0 0.0
    %2039 = vmatpush2.msra.mxu0 0.0
    %2040 = vmatprep.subr.mxu0 0.0
    %2041 = vmatpush2.msra.mxu0 0.0
    %2042 = vmatprep.subr.mxu0 0.0
    %2043 = vmatpush2.msra.mxu0 0.0
    %2044 = vmatprep.subr.mxu0 0.0
    %2045 = vmatpush2.msra.mxu0 0.0
    %2046 = vmatprep.subr.mxu0 0.0
    %2047 = vmatpush2.msra.mxu0 0.0
    %2048 = vmatprep.subr.mxu0 0.0
    %2049 = vmatpush2.msra.mxu0 0.0
    %2050 = vmatprep.mubr.f32.mxu0 0.0
    %2051 = vmatmul.mubr.f32.gmra.mxu0 %v1984
    %v2052 = vpop.f32.mrf.mxu0
    %v2053 = vadd.f32 %v1982, %v2052
    %v2054 = vpop.f32.mrf.mxu0
    %2055 = vdwg.mxu0
    %v2056 = vadd.f32 %v2053, %v98
    %2058 = vset.pattern.permute.xlu0 0
    %2059 = vperm.xlu0 %2058, %v1976
    %v2060 = vpop.permute.xlu0 %2059
    %v2062 = vmul.f32 %v2060, %v56
    %v2063 = vadd.f32 %v2062, %v63
    %v2064 = vmax.f32 %v2063, 0.0
    %v2065 = vsub.f32 0.0, %v2064
    %v2066 = vmul.f32 %v2065, 1.442695
    %v2067 = vpow.pop %v2066
    %2069 = vrot.lane.b32.xlu0 %v2067, 30
    %v2070 = vpop.permute.xlu0 %2069
    %v2072 = vmul.f32 %v1970, %v2070
    %v2073 = vmul.f32 %v2072, %v469
    %2075 = vrot.lane.b32.xlu0 %v2073, 98
    %v2076 = vpop.permute.xlu0 %2075
    %v2078 = vsel %vm201, %v2076, 0.0
    %2079 = vadd.xlane.f32.xlu0 %v2078
    %v2080 = vpop.xlane.xlu0 %2079
    %v2081 = vadd.f32 %v2080, %v77
    %2082 = vrot.lane.b32.xlu0 %v1974, 2
    %v2083 = vpop.permute.xlu0 %2082
    %v2085 = vmul.f32 %v1972, %v2083
    %v2086 = vsub.f32 1.0, %v1974
    %v2087 = vmul.f32 %v2086, %v2081
    %2089 = vrot.lane.b32.xlu0 %v2087, 2
    %v2090 = vpop.permute.xlu0 %2089
    %v2092 = vadd.f32 %v2085, %v2090
    %2094 = vrot.lane.b32.xlu0 %v2081, 2
    %v2095 = vpop.permute.xlu0 %2094
    %v2097 = vsub.f32 %v2092, %v2095
    %v2098 = vand.u32 2147483647, %v2097
    %v2099 = vmul.f32 %v2098, %v2083
    %2101 = vrot.lane.b32.xlu0 %v2099, 126
    %v2102 = vpop.permute.xlu0 %2101
    %v2104 = vsel %vm228, %v2102, 0.0
    %2105 = vadd.xlane.f32.xlu0 %v2104
    %v2106 = vpop.xlane.xlu0 %2105
    %v2107 = vrot.slane %v2106, 4
    %v2108 = vadd.f32 %v2106, %v2107
    %v2109 = vrot.slane %v2108, 2
    %v2110 = vadd.f32 %v2108, %v2109
    %v2111 = vrot.slane %v2110, 1
    %v2112 = vadd.f32 %v2110, %v2111
    %s2113 = vtos %v2112
    %v2114 = vstv %s2113
    %v2115 = vsel %vm228, %v1974, 0.0
    %2116 = vadd.xlane.f32.xlu0 %v2115
    %v2117 = vpop.xlane.xlu0 %2116
    %v2118 = vrot.slane %v2117, 4
    %v2119 = vadd.f32 %v2117, %v2118
    %v2120 = vrot.slane %v2119, 2
    %v2121 = vadd.f32 %v2119, %v2120
    %v2122 = vrot.slane %v2121, 1
    %v2123 = vadd.f32 %v2121, %v2122
    %s2124 = vtos %v2123
    %v2125 = vstv %s2124
    %v2126 = vadd.f32 %v2125, 1e-05
    %v2127 = vrcp.pop %v2126
    %v2128 = vmul.f32 %v2114, %v2127
    %v2129 = vadd.f32 %v1862, %v2128
    %v2130 = vsub.f32 %v2092, %v1972
    %2132 = vset.pattern.permute.xlu0 2
    %2133 = vperm.xlu0 %2132, %v2130
    %v2134 = vpop.permute.xlu0 %2133
    %v2136 = vmul.f32 %v2134, %v91
    %v2137 = vadd.f32 %v2056, %v2136
    %2139 = vrot.lane.b32.xlu0 %v2072, 98
    %v2140 = vpop.permute.xlu0 %2139
    %v2141 = vsel %vm263, %v2140, 0
    %2143 = vmatprep.subr.mxu0 0.0
    %2144 = vmatpush1.msra.mxu0 0.0
    %2145 = vmatprep.subr.mxu0 0.0
    %2146 = vmatpush1.msra.mxu0 0.0
    %2147 = vmatprep.subr.mxu0 0.0
    %2148 = vmatpush1.msra.mxu0 0.0
    %2149 = vmatprep.subr.mxu0 0.0
    %2150 = vmatpush1.msra.mxu0 0.0
    %2151 = vmatprep.subr.mxu0 0.0
    %2152 = vmatpush1.msra.mxu0 0.0
    %2153 = vmatprep.subr.mxu0 0.0
    %2154 = vmatpush1.msra.mxu0 0.0
    %2155 = vmatprep.subr.mxu0 0.0
    %2156 = vmatpush1.msra.mxu0 0.0
    %2157 = vmatprep.subr.mxu0 0.0
    %2158 = vmatpush1.msra.mxu0 0.0
    %2159 = vmatprep.subr.mxu0 0.0
    %2160 = vmatpush1.msra.mxu0 0.0
    %2161 = vmatprep.subr.mxu0 0.0
    %2162 = vmatpush1.msra.mxu0 0.0
    %2163 = vmatprep.subr.mxu0 0.0
    %2164 = vmatpush1.msra.mxu0 0.0
    %2165 = vmatprep.subr.mxu0 0.0
    %2166 = vmatpush1.msra.mxu0 0.0
    %2167 = vmatprep.subr.mxu0 0.0
    %2168 = vmatpush1.msra.mxu0 0.0
    %2169 = vmatprep.subr.mxu0 0.0
    %2170 = vmatpush1.msra.mxu0 0.0
    %2171 = vmatprep.subr.mxu0 0.0
    %2172 = vmatpush1.msra.mxu0 %v269
    %2173 = vmatprep.subr.mxu0 0.0
    %2174 = vmatpush1.msra.mxu0 %v49
    %2175 = vmatprep.subr.mxu0 0.0
    %2176 = vmatpush2.msra.mxu0 0.0
    %2177 = vmatprep.subr.mxu0 0.0
    %2178 = vmatpush2.msra.mxu0 0.0
    %2179 = vmatprep.subr.mxu0 0.0
    %2180 = vmatpush2.msra.mxu0 0.0
    %2181 = vmatprep.subr.mxu0 0.0
    %2182 = vmatpush2.msra.mxu0 0.0
    %2183 = vmatprep.subr.mxu0 0.0
    %2184 = vmatpush2.msra.mxu0 0.0
    %2185 = vmatprep.subr.mxu0 0.0
    %2186 = vmatpush2.msra.mxu0 0.0
    %2187 = vmatprep.subr.mxu0 0.0
    %2188 = vmatpush2.msra.mxu0 0.0
    %2189 = vmatprep.subr.mxu0 0.0
    %2190 = vmatpush2.msra.mxu0 0.0
    %2191 = vmatprep.subr.mxu0 0.0
    %2192 = vmatpush2.msra.mxu0 0.0
    %2193 = vmatprep.subr.mxu0 0.0
    %2194 = vmatpush2.msra.mxu0 0.0
    %2195 = vmatprep.subr.mxu0 0.0
    %2196 = vmatpush2.msra.mxu0 0.0
    %2197 = vmatprep.subr.mxu0 0.0
    %2198 = vmatpush2.msra.mxu0 0.0
    %2199 = vmatprep.subr.mxu0 0.0
    %2200 = vmatpush2.msra.mxu0 0.0
    %2201 = vmatprep.subr.mxu0 0.0
    %2202 = vmatpush2.msra.mxu0 0.0
    %2203 = vmatprep.subr.mxu0 0.0
    %2204 = vmatpush2.msra.mxu0 0.0
    %2205 = vmatprep.subr.mxu0 0.0
    %2206 = vmatpush2.msra.mxu0 0.0
    %2207 = vmatprep.mubr.f32.mxu0 0.0
    %2208 = vmatmul.mubr.f32.gmra.mxu0 %v2141
    %v2209 = vpop.f32.mrf.mxu0
    %v2210 = vadd.f32 0.0, %v2209
    %v2211 = vpop.f32.mrf.mxu0
    %2212 = vdwg.mxu0
    %v2213 = vadd.f32 %v2137, %v2210
    %v2214 = vxor.u32 %v2213, 2147483648
    %v2215 = vmul.f32 %v2214, 1.442695
    %v2216 = vpow.pop %v2215
    %v2217 = vadd.f32 %v2216, 1.0
    %v2218 = vrcp.pop %v2217
    %v2219 = vmul.f32 1.0, %v2218
    %v2220 = vtanh.pop %v2213
    %v2221 = vmul.f32 %v2219, %v1964
    %2223 = vrot.lane.b32.xlu0 %v2220, 108
    %v2224 = vpop.permute.xlu0 %2223
    %v2226 = vmul.f32 %v2219, %v2224
    %2228 = vrot.lane.b32.xlu0 %v2226, 10
    %v2229 = vpop.permute.xlu0 %2228
    %v2231 = vadd.f32 %v2221, %v2229
    %v2232 = vtanh.pop %v2231
    %2234 = vrot.lane.b32.xlu0 %v2232, 20
    %v2235 = vpop.permute.xlu0 %2234
    %v2237 = vmul.f32 %v2219, %v2235
    %s2238 = scalar_lea.vmem %s0, 16
    %v2239 = vld [vmem:[%s2238] sm:$0x3]
    %s2240 = scalar_lea.vmem %s1, 16
    %v2241 = vld [vmem:[%s2240] sm:$0x3]
    %s2242 = scalar_lea.vmem %s2, 16
    %v2243 = vld [vmem:[%s2242] sm:$0x3]
    %2245 = vset.pattern.permute.xlu0 0
    %2246 = vperm.xlu0 %2245, %v2241
    %v2247 = vpop.permute.xlu0 %2246
    %v2249 = vmul.f32 %v2247, %v84
    %v2251 = vsel %vm109, %v2239, 0
    %2253 = vmatprep.subr.mxu0 0.0
    %2254 = vmatpush1.msra.mxu0 0.0
    %2255 = vmatprep.subr.mxu0 0.0
    %2256 = vmatpush1.msra.mxu0 0.0
    %2257 = vmatprep.subr.mxu0 0.0
    %2258 = vmatpush1.msra.mxu0 0.0
    %2259 = vmatprep.subr.mxu0 0.0
    %2260 = vmatpush1.msra.mxu0 0.0
    %2261 = vmatprep.subr.mxu0 0.0
    %2262 = vmatpush1.msra.mxu0 0.0
    %2263 = vmatprep.subr.mxu0 0.0
    %2264 = vmatpush1.msra.mxu0 0.0
    %2265 = vmatprep.subr.mxu0 0.0
    %2266 = vmatpush1.msra.mxu0 0.0
    %2267 = vmatprep.subr.mxu0 0.0
    %2268 = vmatpush1.msra.mxu0 0.0
    %2269 = vmatprep.subr.mxu0 0.0
    %2270 = vmatpush1.msra.mxu0 0.0
    %2271 = vmatprep.subr.mxu0 0.0
    %2272 = vmatpush1.msra.mxu0 0.0
    %2273 = vmatprep.subr.mxu0 0.0
    %2274 = vmatpush1.msra.mxu0 0.0
    %2275 = vmatprep.subr.mxu0 0.0
    %2276 = vmatpush1.msra.mxu0 0.0
    %2277 = vmatprep.subr.mxu0 0.0
    %2278 = vmatpush1.msra.mxu0 0.0
    %2279 = vmatprep.subr.mxu0 0.0
    %2280 = vmatpush1.msra.mxu0 0.0
    %2281 = vmatprep.subr.mxu0 0.0
    %2282 = vmatpush1.msra.mxu0 %v115
    %2283 = vmatprep.subr.mxu0 0.0
    %2284 = vmatpush1.msra.mxu0 %v47
    %2285 = vmatprep.subr.mxu0 0.0
    %2286 = vmatpush2.msra.mxu0 0.0
    %2287 = vmatprep.subr.mxu0 0.0
    %2288 = vmatpush2.msra.mxu0 0.0
    %2289 = vmatprep.subr.mxu0 0.0
    %2290 = vmatpush2.msra.mxu0 0.0
    %2291 = vmatprep.subr.mxu0 0.0
    %2292 = vmatpush2.msra.mxu0 0.0
    %2293 = vmatprep.subr.mxu0 0.0
    %2294 = vmatpush2.msra.mxu0 0.0
    %2295 = vmatprep.subr.mxu0 0.0
    %2296 = vmatpush2.msra.mxu0 0.0
    %2297 = vmatprep.subr.mxu0 0.0
    %2298 = vmatpush2.msra.mxu0 0.0
    %2299 = vmatprep.subr.mxu0 0.0
    %2300 = vmatpush2.msra.mxu0 0.0
    %2301 = vmatprep.subr.mxu0 0.0
    %2302 = vmatpush2.msra.mxu0 0.0
    %2303 = vmatprep.subr.mxu0 0.0
    %2304 = vmatpush2.msra.mxu0 0.0
    %2305 = vmatprep.subr.mxu0 0.0
    %2306 = vmatpush2.msra.mxu0 0.0
    %2307 = vmatprep.subr.mxu0 0.0
    %2308 = vmatpush2.msra.mxu0 0.0
    %2309 = vmatprep.subr.mxu0 0.0
    %2310 = vmatpush2.msra.mxu0 0.0
    %2311 = vmatprep.subr.mxu0 0.0
    %2312 = vmatpush2.msra.mxu0 0.0
    %2313 = vmatprep.subr.mxu0 0.0
    %2314 = vmatpush2.msra.mxu0 0.0
    %2315 = vmatprep.subr.mxu0 0.0
    %2316 = vmatpush2.msra.mxu0 0.0
    %2317 = vmatprep.mubr.f32.mxu0 0.0
    %2318 = vmatmul.mubr.f32.gmra.mxu0 %v2251
    %v2319 = vpop.f32.mrf.mxu0
    %v2320 = vadd.f32 %v2249, %v2319
    %v2321 = vpop.f32.mrf.mxu0
    %2322 = vdwg.mxu0
    %v2323 = vadd.f32 %v2320, %v98
    %2325 = vset.pattern.permute.xlu0 0
    %2326 = vperm.xlu0 %2325, %v2243
    %v2327 = vpop.permute.xlu0 %2326
    %v2329 = vmul.f32 %v2327, %v56
    %v2330 = vadd.f32 %v2329, %v63
    %v2331 = vmax.f32 %v2330, 0.0
    %v2332 = vsub.f32 0.0, %v2331
    %v2333 = vmul.f32 %v2332, 1.442695
    %v2334 = vpow.pop %v2333
    %2336 = vrot.lane.b32.xlu0 %v2334, 30
    %v2337 = vpop.permute.xlu0 %2336
    %v2339 = vmul.f32 %v2237, %v2337
    %v2340 = vmul.f32 %v2339, %v469
    %2342 = vrot.lane.b32.xlu0 %v2340, 98
    %v2343 = vpop.permute.xlu0 %2342
    %v2345 = vsel %vm201, %v2343, 0.0
    %2346 = vadd.xlane.f32.xlu0 %v2345
    %v2347 = vpop.xlane.xlu0 %2346
    %v2348 = vadd.f32 %v2347, %v77
    %2349 = vrot.lane.b32.xlu0 %v2241, 2
    %v2350 = vpop.permute.xlu0 %2349
    %v2352 = vmul.f32 %v2239, %v2350
    %v2353 = vsub.f32 1.0, %v2241
    %v2354 = vmul.f32 %v2353, %v2348
    %2356 = vrot.lane.b32.xlu0 %v2354, 2
    %v2357 = vpop.permute.xlu0 %2356
    %v2359 = vadd.f32 %v2352, %v2357
    %2361 = vrot.lane.b32.xlu0 %v2348, 2
    %v2362 = vpop.permute.xlu0 %2361
    %v2364 = vsub.f32 %v2359, %v2362
    %v2365 = vand.u32 2147483647, %v2364
    %v2366 = vmul.f32 %v2365, %v2350
    %2368 = vrot.lane.b32.xlu0 %v2366, 126
    %v2369 = vpop.permute.xlu0 %2368
    %v2371 = vsel %vm228, %v2369, 0.0
    %2372 = vadd.xlane.f32.xlu0 %v2371
    %v2373 = vpop.xlane.xlu0 %2372
    %v2374 = vrot.slane %v2373, 4
    %v2375 = vadd.f32 %v2373, %v2374
    %v2376 = vrot.slane %v2375, 2
    %v2377 = vadd.f32 %v2375, %v2376
    %v2378 = vrot.slane %v2377, 1
    %v2379 = vadd.f32 %v2377, %v2378
    %s2380 = vtos %v2379
    %v2381 = vstv %s2380
    %v2382 = vsel %vm228, %v2241, 0.0
    %2383 = vadd.xlane.f32.xlu0 %v2382
    %v2384 = vpop.xlane.xlu0 %2383
    %v2385 = vrot.slane %v2384, 4
    %v2386 = vadd.f32 %v2384, %v2385
    %v2387 = vrot.slane %v2386, 2
    %v2388 = vadd.f32 %v2386, %v2387
    %v2389 = vrot.slane %v2388, 1
    %v2390 = vadd.f32 %v2388, %v2389
    %s2391 = vtos %v2390
    %v2392 = vstv %s2391
    %v2393 = vadd.f32 %v2392, 1e-05
    %v2394 = vrcp.pop %v2393
    %v2395 = vmul.f32 %v2381, %v2394
    %v2396 = vadd.f32 %v2129, %v2395
    %v2397 = vsub.f32 %v2359, %v2239
    %2399 = vset.pattern.permute.xlu0 2
    %2400 = vperm.xlu0 %2399, %v2397
    %v2401 = vpop.permute.xlu0 %2400
    %v2403 = vmul.f32 %v2401, %v91
    %v2404 = vadd.f32 %v2323, %v2403
    %2406 = vrot.lane.b32.xlu0 %v2339, 98
    %v2407 = vpop.permute.xlu0 %2406
    %v2408 = vsel %vm263, %v2407, 0
    %2410 = vmatprep.subr.mxu0 0.0
    %2411 = vmatpush1.msra.mxu0 0.0
    %2412 = vmatprep.subr.mxu0 0.0
    %2413 = vmatpush1.msra.mxu0 0.0
    %2414 = vmatprep.subr.mxu0 0.0
    %2415 = vmatpush1.msra.mxu0 0.0
    %2416 = vmatprep.subr.mxu0 0.0
    %2417 = vmatpush1.msra.mxu0 0.0
    %2418 = vmatprep.subr.mxu0 0.0
    %2419 = vmatpush1.msra.mxu0 0.0
    %2420 = vmatprep.subr.mxu0 0.0
    %2421 = vmatpush1.msra.mxu0 0.0
    %2422 = vmatprep.subr.mxu0 0.0
    %2423 = vmatpush1.msra.mxu0 0.0
    %2424 = vmatprep.subr.mxu0 0.0
    %2425 = vmatpush1.msra.mxu0 0.0
    %2426 = vmatprep.subr.mxu0 0.0
    %2427 = vmatpush1.msra.mxu0 0.0
    %2428 = vmatprep.subr.mxu0 0.0
    %2429 = vmatpush1.msra.mxu0 0.0
    %2430 = vmatprep.subr.mxu0 0.0
    %2431 = vmatpush1.msra.mxu0 0.0
    %2432 = vmatprep.subr.mxu0 0.0
    %2433 = vmatpush1.msra.mxu0 0.0
    %2434 = vmatprep.subr.mxu0 0.0
    %2435 = vmatpush1.msra.mxu0 0.0
    %2436 = vmatprep.subr.mxu0 0.0
    %2437 = vmatpush1.msra.mxu0 0.0
    %2438 = vmatprep.subr.mxu0 0.0
    %2439 = vmatpush1.msra.mxu0 %v269
    %2440 = vmatprep.subr.mxu0 0.0
    %2441 = vmatpush1.msra.mxu0 %v49
    %2442 = vmatprep.subr.mxu0 0.0
    %2443 = vmatpush2.msra.mxu0 0.0
    %2444 = vmatprep.subr.mxu0 0.0
    %2445 = vmatpush2.msra.mxu0 0.0
    %2446 = vmatprep.subr.mxu0 0.0
    %2447 = vmatpush2.msra.mxu0 0.0
    %2448 = vmatprep.subr.mxu0 0.0
    %2449 = vmatpush2.msra.mxu0 0.0
    %2450 = vmatprep.subr.mxu0 0.0
    %2451 = vmatpush2.msra.mxu0 0.0
    %2452 = vmatprep.subr.mxu0 0.0
    %2453 = vmatpush2.msra.mxu0 0.0
    %2454 = vmatprep.subr.mxu0 0.0
    %2455 = vmatpush2.msra.mxu0 0.0
    %2456 = vmatprep.subr.mxu0 0.0
    %2457 = vmatpush2.msra.mxu0 0.0
    %2458 = vmatprep.subr.mxu0 0.0
    %2459 = vmatpush2.msra.mxu0 0.0
    %2460 = vmatprep.subr.mxu0 0.0
    %2461 = vmatpush2.msra.mxu0 0.0
    %2462 = vmatprep.subr.mxu0 0.0
    %2463 = vmatpush2.msra.mxu0 0.0
    %2464 = vmatprep.subr.mxu0 0.0
    %2465 = vmatpush2.msra.mxu0 0.0
    %2466 = vmatprep.subr.mxu0 0.0
    %2467 = vmatpush2.msra.mxu0 0.0
    %2468 = vmatprep.subr.mxu0 0.0
    %2469 = vmatpush2.msra.mxu0 0.0
    %2470 = vmatprep.subr.mxu0 0.0
    %2471 = vmatpush2.msra.mxu0 0.0
    %2472 = vmatprep.subr.mxu0 0.0
    %2473 = vmatpush2.msra.mxu0 0.0
    %2474 = vmatprep.mubr.f32.mxu0 0.0
    %2475 = vmatmul.mubr.f32.gmra.mxu0 %v2408
    %v2476 = vpop.f32.mrf.mxu0
    %v2477 = vadd.f32 0.0, %v2476
    %v2478 = vpop.f32.mrf.mxu0
    %2479 = vdwg.mxu0
    %v2480 = vadd.f32 %v2404, %v2477
    %v2481 = vxor.u32 %v2480, 2147483648
    %v2482 = vmul.f32 %v2481, 1.442695
    %v2483 = vpow.pop %v2482
    %v2484 = vadd.f32 %v2483, 1.0
    %v2485 = vrcp.pop %v2484
    %v2486 = vmul.f32 1.0, %v2485
    %v2487 = vtanh.pop %v2480
    %v2488 = vmul.f32 %v2486, %v2231
    %2490 = vrot.lane.b32.xlu0 %v2487, 108
    %v2491 = vpop.permute.xlu0 %2490
    %v2493 = vmul.f32 %v2486, %v2491
    %2495 = vrot.lane.b32.xlu0 %v2493, 10
    %v2496 = vpop.permute.xlu0 %2495
    %v2498 = vadd.f32 %v2488, %v2496
    %v2499 = vtanh.pop %v2498
    %2501 = vrot.lane.b32.xlu0 %v2499, 20
    %v2502 = vpop.permute.xlu0 %2501
    %v2504 = vmul.f32 %v2486, %v2502
    %s2505 = scalar_lea.vmem %s0, 18
    %v2506 = vld [vmem:[%s2505] sm:$0x3]
    %s2507 = scalar_lea.vmem %s1, 18
    %v2508 = vld [vmem:[%s2507] sm:$0x3]
    %s2509 = scalar_lea.vmem %s2, 18
    %v2510 = vld [vmem:[%s2509] sm:$0x3]
    %2512 = vset.pattern.permute.xlu0 0
    %2513 = vperm.xlu0 %2512, %v2508
    %v2514 = vpop.permute.xlu0 %2513
    %v2516 = vmul.f32 %v2514, %v84
    %v2518 = vsel %vm109, %v2506, 0
    %2520 = vmatprep.subr.mxu0 0.0
    %2521 = vmatpush1.msra.mxu0 0.0
    %2522 = vmatprep.subr.mxu0 0.0
    %2523 = vmatpush1.msra.mxu0 0.0
    %2524 = vmatprep.subr.mxu0 0.0
    %2525 = vmatpush1.msra.mxu0 0.0
    %2526 = vmatprep.subr.mxu0 0.0
    %2527 = vmatpush1.msra.mxu0 0.0
    %2528 = vmatprep.subr.mxu0 0.0
    %2529 = vmatpush1.msra.mxu0 0.0
    %2530 = vmatprep.subr.mxu0 0.0
    %2531 = vmatpush1.msra.mxu0 0.0
    %2532 = vmatprep.subr.mxu0 0.0
    %2533 = vmatpush1.msra.mxu0 0.0
    %2534 = vmatprep.subr.mxu0 0.0
    %2535 = vmatpush1.msra.mxu0 0.0
    %2536 = vmatprep.subr.mxu0 0.0
    %2537 = vmatpush1.msra.mxu0 0.0
    %2538 = vmatprep.subr.mxu0 0.0
    %2539 = vmatpush1.msra.mxu0 0.0
    %2540 = vmatprep.subr.mxu0 0.0
    %2541 = vmatpush1.msra.mxu0 0.0
    %2542 = vmatprep.subr.mxu0 0.0
    %2543 = vmatpush1.msra.mxu0 0.0
    %2544 = vmatprep.subr.mxu0 0.0
    %2545 = vmatpush1.msra.mxu0 0.0
    %2546 = vmatprep.subr.mxu0 0.0
    %2547 = vmatpush1.msra.mxu0 0.0
    %2548 = vmatprep.subr.mxu0 0.0
    %2549 = vmatpush1.msra.mxu0 %v115
    %2550 = vmatprep.subr.mxu0 0.0
    %2551 = vmatpush1.msra.mxu0 %v47
    %2552 = vmatprep.subr.mxu0 0.0
    %2553 = vmatpush2.msra.mxu0 0.0
    %2554 = vmatprep.subr.mxu0 0.0
    %2555 = vmatpush2.msra.mxu0 0.0
    %2556 = vmatprep.subr.mxu0 0.0
    %2557 = vmatpush2.msra.mxu0 0.0
    %2558 = vmatprep.subr.mxu0 0.0
    %2559 = vmatpush2.msra.mxu0 0.0
    %2560 = vmatprep.subr.mxu0 0.0
    %2561 = vmatpush2.msra.mxu0 0.0
    %2562 = vmatprep.subr.mxu0 0.0
    %2563 = vmatpush2.msra.mxu0 0.0
    %2564 = vmatprep.subr.mxu0 0.0
    %2565 = vmatpush2.msra.mxu0 0.0
    %2566 = vmatprep.subr.mxu0 0.0
    %2567 = vmatpush2.msra.mxu0 0.0
    %2568 = vmatprep.subr.mxu0 0.0
    %2569 = vmatpush2.msra.mxu0 0.0
    %2570 = vmatprep.subr.mxu0 0.0
    %2571 = vmatpush2.msra.mxu0 0.0
    %2572 = vmatprep.subr.mxu0 0.0
    %2573 = vmatpush2.msra.mxu0 0.0
    %2574 = vmatprep.subr.mxu0 0.0
    %2575 = vmatpush2.msra.mxu0 0.0
    %2576 = vmatprep.subr.mxu0 0.0
    %2577 = vmatpush2.msra.mxu0 0.0
    %2578 = vmatprep.subr.mxu0 0.0
    %2579 = vmatpush2.msra.mxu0 0.0
    %2580 = vmatprep.subr.mxu0 0.0
    %2581 = vmatpush2.msra.mxu0 0.0
    %2582 = vmatprep.subr.mxu0 0.0
    %2583 = vmatpush2.msra.mxu0 0.0
    %2584 = vmatprep.mubr.f32.mxu0 0.0
    %2585 = vmatmul.mubr.f32.gmra.mxu0 %v2518
    %v2586 = vpop.f32.mrf.mxu0
    %v2587 = vadd.f32 %v2516, %v2586
    %v2588 = vpop.f32.mrf.mxu0
    %2589 = vdwg.mxu0
    %v2590 = vadd.f32 %v2587, %v98
    %2592 = vset.pattern.permute.xlu0 0
    %2593 = vperm.xlu0 %2592, %v2510
    %v2594 = vpop.permute.xlu0 %2593
    %v2596 = vmul.f32 %v2594, %v56
    %v2597 = vadd.f32 %v2596, %v63
    %v2598 = vmax.f32 %v2597, 0.0
    %v2599 = vsub.f32 0.0, %v2598
    %v2600 = vmul.f32 %v2599, 1.442695
    %v2601 = vpow.pop %v2600
    %2603 = vrot.lane.b32.xlu0 %v2601, 30
    %v2604 = vpop.permute.xlu0 %2603
    %v2606 = vmul.f32 %v2504, %v2604
    %v2607 = vmul.f32 %v2606, %v469
    %2609 = vrot.lane.b32.xlu0 %v2607, 98
    %v2610 = vpop.permute.xlu0 %2609
    %v2612 = vsel %vm201, %v2610, 0.0
    %2613 = vadd.xlane.f32.xlu0 %v2612
    %v2614 = vpop.xlane.xlu0 %2613
    %v2615 = vadd.f32 %v2614, %v77
    %2616 = vrot.lane.b32.xlu0 %v2508, 2
    %v2617 = vpop.permute.xlu0 %2616
    %v2619 = vmul.f32 %v2506, %v2617
    %v2620 = vsub.f32 1.0, %v2508
    %v2621 = vmul.f32 %v2620, %v2615
    %2623 = vrot.lane.b32.xlu0 %v2621, 2
    %v2624 = vpop.permute.xlu0 %2623
    %v2626 = vadd.f32 %v2619, %v2624
    %2628 = vrot.lane.b32.xlu0 %v2615, 2
    %v2629 = vpop.permute.xlu0 %2628
    %v2631 = vsub.f32 %v2626, %v2629
    %v2632 = vand.u32 2147483647, %v2631
    %v2633 = vmul.f32 %v2632, %v2617
    %2635 = vrot.lane.b32.xlu0 %v2633, 126
    %v2636 = vpop.permute.xlu0 %2635
    %v2638 = vsel %vm228, %v2636, 0.0
    %2639 = vadd.xlane.f32.xlu0 %v2638
    %v2640 = vpop.xlane.xlu0 %2639
    %v2641 = vrot.slane %v2640, 4
    %v2642 = vadd.f32 %v2640, %v2641
    %v2643 = vrot.slane %v2642, 2
    %v2644 = vadd.f32 %v2642, %v2643
    %v2645 = vrot.slane %v2644, 1
    %v2646 = vadd.f32 %v2644, %v2645
    %s2647 = vtos %v2646
    %v2648 = vstv %s2647
    %v2649 = vsel %vm228, %v2508, 0.0
    %2650 = vadd.xlane.f32.xlu0 %v2649
    %v2651 = vpop.xlane.xlu0 %2650
    %v2652 = vrot.slane %v2651, 4
    %v2653 = vadd.f32 %v2651, %v2652
    %v2654 = vrot.slane %v2653, 2
    %v2655 = vadd.f32 %v2653, %v2654
    %v2656 = vrot.slane %v2655, 1
    %v2657 = vadd.f32 %v2655, %v2656
    %s2658 = vtos %v2657
    %v2659 = vstv %s2658
    %v2660 = vadd.f32 %v2659, 1e-05
    %v2661 = vrcp.pop %v2660
    %v2662 = vmul.f32 %v2648, %v2661
    %v2663 = vadd.f32 %v2396, %v2662
    %v2664 = vsub.f32 %v2626, %v2506
    %2666 = vset.pattern.permute.xlu0 2
    %2667 = vperm.xlu0 %2666, %v2664
    %v2668 = vpop.permute.xlu0 %2667
    %v2670 = vmul.f32 %v2668, %v91
    %v2671 = vadd.f32 %v2590, %v2670
    %2673 = vrot.lane.b32.xlu0 %v2606, 98
    %v2674 = vpop.permute.xlu0 %2673
    %v2675 = vsel %vm263, %v2674, 0
    %2677 = vmatprep.subr.mxu0 0.0
    %2678 = vmatpush1.msra.mxu0 0.0
    %2679 = vmatprep.subr.mxu0 0.0
    %2680 = vmatpush1.msra.mxu0 0.0
    %2681 = vmatprep.subr.mxu0 0.0
    %2682 = vmatpush1.msra.mxu0 0.0
    %2683 = vmatprep.subr.mxu0 0.0
    %2684 = vmatpush1.msra.mxu0 0.0
    %2685 = vmatprep.subr.mxu0 0.0
    %2686 = vmatpush1.msra.mxu0 0.0
    %2687 = vmatprep.subr.mxu0 0.0
    %2688 = vmatpush1.msra.mxu0 0.0
    %2689 = vmatprep.subr.mxu0 0.0
    %2690 = vmatpush1.msra.mxu0 0.0
    %2691 = vmatprep.subr.mxu0 0.0
    %2692 = vmatpush1.msra.mxu0 0.0
    %2693 = vmatprep.subr.mxu0 0.0
    %2694 = vmatpush1.msra.mxu0 0.0
    %2695 = vmatprep.subr.mxu0 0.0
    %2696 = vmatpush1.msra.mxu0 0.0
    %2697 = vmatprep.subr.mxu0 0.0
    %2698 = vmatpush1.msra.mxu0 0.0
    %2699 = vmatprep.subr.mxu0 0.0
    %2700 = vmatpush1.msra.mxu0 0.0
    %2701 = vmatprep.subr.mxu0 0.0
    %2702 = vmatpush1.msra.mxu0 0.0
    %2703 = vmatprep.subr.mxu0 0.0
    %2704 = vmatpush1.msra.mxu0 0.0
    %2705 = vmatprep.subr.mxu0 0.0
    %2706 = vmatpush1.msra.mxu0 %v269
    %2707 = vmatprep.subr.mxu0 0.0
    %2708 = vmatpush1.msra.mxu0 %v49
    %2709 = vmatprep.subr.mxu0 0.0
    %2710 = vmatpush2.msra.mxu0 0.0
    %2711 = vmatprep.subr.mxu0 0.0
    %2712 = vmatpush2.msra.mxu0 0.0
    %2713 = vmatprep.subr.mxu0 0.0
    %2714 = vmatpush2.msra.mxu0 0.0
    %2715 = vmatprep.subr.mxu0 0.0
    %2716 = vmatpush2.msra.mxu0 0.0
    %2717 = vmatprep.subr.mxu0 0.0
    %2718 = vmatpush2.msra.mxu0 0.0
    %2719 = vmatprep.subr.mxu0 0.0
    %2720 = vmatpush2.msra.mxu0 0.0
    %2721 = vmatprep.subr.mxu0 0.0
    %2722 = vmatpush2.msra.mxu0 0.0
    %2723 = vmatprep.subr.mxu0 0.0
    %2724 = vmatpush2.msra.mxu0 0.0
    %2725 = vmatprep.subr.mxu0 0.0
    %2726 = vmatpush2.msra.mxu0 0.0
    %2727 = vmatprep.subr.mxu0 0.0
    %2728 = vmatpush2.msra.mxu0 0.0
    %2729 = vmatprep.subr.mxu0 0.0
    %2730 = vmatpush2.msra.mxu0 0.0
    %2731 = vmatprep.subr.mxu0 0.0
    %2732 = vmatpush2.msra.mxu0 0.0
    %2733 = vmatprep.subr.mxu0 0.0
    %2734 = vmatpush2.msra.mxu0 0.0
    %2735 = vmatprep.subr.mxu0 0.0
    %2736 = vmatpush2.msra.mxu0 0.0
    %2737 = vmatprep.subr.mxu0 0.0
    %2738 = vmatpush2.msra.mxu0 0.0
    %2739 = vmatprep.subr.mxu0 0.0
    %2740 = vmatpush2.msra.mxu0 0.0
    %2741 = vmatprep.mubr.f32.mxu0 0.0
    %2742 = vmatmul.mubr.f32.gmra.mxu0 %v2675
    %v2743 = vpop.f32.mrf.mxu0
    %v2744 = vadd.f32 0.0, %v2743
    %v2745 = vpop.f32.mrf.mxu0
    %2746 = vdwg.mxu0
    %v2747 = vadd.f32 %v2671, %v2744
    %v2748 = vxor.u32 %v2747, 2147483648
    %v2749 = vmul.f32 %v2748, 1.442695
    %v2750 = vpow.pop %v2749
    %v2751 = vadd.f32 %v2750, 1.0
    %v2752 = vrcp.pop %v2751
    %v2753 = vmul.f32 1.0, %v2752
    %v2754 = vtanh.pop %v2747
    %v2755 = vmul.f32 %v2753, %v2498
    %2757 = vrot.lane.b32.xlu0 %v2754, 108
    %v2758 = vpop.permute.xlu0 %2757
    %v2760 = vmul.f32 %v2753, %v2758
    %2762 = vrot.lane.b32.xlu0 %v2760, 10
    %v2763 = vpop.permute.xlu0 %2762
    %v2765 = vadd.f32 %v2755, %v2763
    %v2766 = vtanh.pop %v2765
    %2768 = vrot.lane.b32.xlu0 %v2766, 20
    %v2769 = vpop.permute.xlu0 %2768
    %v2771 = vmul.f32 %v2753, %v2769
    %s2772 = scalar_lea.vmem %s0, 20
    %v2773 = vld [vmem:[%s2772] sm:$0x3]
    %s2774 = scalar_lea.vmem %s1, 20
    %v2775 = vld [vmem:[%s2774] sm:$0x3]
    %s2776 = scalar_lea.vmem %s2, 20
    %v2777 = vld [vmem:[%s2776] sm:$0x3]
    %2779 = vset.pattern.permute.xlu0 0
    %2780 = vperm.xlu0 %2779, %v2775
    %v2781 = vpop.permute.xlu0 %2780
    %v2783 = vmul.f32 %v2781, %v84
    %v2785 = vsel %vm109, %v2773, 0
    %2787 = vmatprep.subr.mxu0 0.0
    %2788 = vmatpush1.msra.mxu0 0.0
    %2789 = vmatprep.subr.mxu0 0.0
    %2790 = vmatpush1.msra.mxu0 0.0
    %2791 = vmatprep.subr.mxu0 0.0
    %2792 = vmatpush1.msra.mxu0 0.0
    %2793 = vmatprep.subr.mxu0 0.0
    %2794 = vmatpush1.msra.mxu0 0.0
    %2795 = vmatprep.subr.mxu0 0.0
    %2796 = vmatpush1.msra.mxu0 0.0
    %2797 = vmatprep.subr.mxu0 0.0
    %2798 = vmatpush1.msra.mxu0 0.0
    %2799 = vmatprep.subr.mxu0 0.0
    %2800 = vmatpush1.msra.mxu0 0.0
    %2801 = vmatprep.subr.mxu0 0.0
    %2802 = vmatpush1.msra.mxu0 0.0
    %2803 = vmatprep.subr.mxu0 0.0
    %2804 = vmatpush1.msra.mxu0 0.0
    %2805 = vmatprep.subr.mxu0 0.0
    %2806 = vmatpush1.msra.mxu0 0.0
    %2807 = vmatprep.subr.mxu0 0.0
    %2808 = vmatpush1.msra.mxu0 0.0
    %2809 = vmatprep.subr.mxu0 0.0
    %2810 = vmatpush1.msra.mxu0 0.0
    %2811 = vmatprep.subr.mxu0 0.0
    %2812 = vmatpush1.msra.mxu0 0.0
    %2813 = vmatprep.subr.mxu0 0.0
    %2814 = vmatpush1.msra.mxu0 0.0
    %2815 = vmatprep.subr.mxu0 0.0
    %2816 = vmatpush1.msra.mxu0 %v115
    %2817 = vmatprep.subr.mxu0 0.0
    %2818 = vmatpush1.msra.mxu0 %v47
    %2819 = vmatprep.subr.mxu0 0.0
    %2820 = vmatpush2.msra.mxu0 0.0
    %2821 = vmatprep.subr.mxu0 0.0
    %2822 = vmatpush2.msra.mxu0 0.0
    %2823 = vmatprep.subr.mxu0 0.0
    %2824 = vmatpush2.msra.mxu0 0.0
    %2825 = vmatprep.subr.mxu0 0.0
    %2826 = vmatpush2.msra.mxu0 0.0
    %2827 = vmatprep.subr.mxu0 0.0
    %2828 = vmatpush2.msra.mxu0 0.0
    %2829 = vmatprep.subr.mxu0 0.0
    %2830 = vmatpush2.msra.mxu0 0.0
    %2831 = vmatprep.subr.mxu0 0.0
    %2832 = vmatpush2.msra.mxu0 0.0
    %2833 = vmatprep.subr.mxu0 0.0
    %2834 = vmatpush2.msra.mxu0 0.0
    %2835 = vmatprep.subr.mxu0 0.0
    %2836 = vmatpush2.msra.mxu0 0.0
    %2837 = vmatprep.subr.mxu0 0.0
    %2838 = vmatpush2.msra.mxu0 0.0
    %2839 = vmatprep.subr.mxu0 0.0
    %2840 = vmatpush2.msra.mxu0 0.0
    %2841 = vmatprep.subr.mxu0 0.0
    %2842 = vmatpush2.msra.mxu0 0.0
    %2843 = vmatprep.subr.mxu0 0.0
    %2844 = vmatpush2.msra.mxu0 0.0
    %2845 = vmatprep.subr.mxu0 0.0
    %2846 = vmatpush2.msra.mxu0 0.0
    %2847 = vmatprep.subr.mxu0 0.0
    %2848 = vmatpush2.msra.mxu0 0.0
    %2849 = vmatprep.subr.mxu0 0.0
    %2850 = vmatpush2.msra.mxu0 0.0
    %2851 = vmatprep.mubr.f32.mxu0 0.0
    %2852 = vmatmul.mubr.f32.gmra.mxu0 %v2785
    %v2853 = vpop.f32.mrf.mxu0
    %v2854 = vadd.f32 %v2783, %v2853
    %v2855 = vpop.f32.mrf.mxu0
    %2856 = vdwg.mxu0
    %v2857 = vadd.f32 %v2854, %v98
    %2859 = vset.pattern.permute.xlu0 0
    %2860 = vperm.xlu0 %2859, %v2777
    %v2861 = vpop.permute.xlu0 %2860
    %v2863 = vmul.f32 %v2861, %v56
    %v2864 = vadd.f32 %v2863, %v63
    %v2865 = vmax.f32 %v2864, 0.0
    %v2866 = vsub.f32 0.0, %v2865
    %v2867 = vmul.f32 %v2866, 1.442695
    %v2868 = vpow.pop %v2867
    %2870 = vrot.lane.b32.xlu0 %v2868, 30
    %v2871 = vpop.permute.xlu0 %2870
    %v2873 = vmul.f32 %v2771, %v2871
    %v2874 = vmul.f32 %v2873, %v469
    %2876 = vrot.lane.b32.xlu0 %v2874, 98
    %v2877 = vpop.permute.xlu0 %2876
    %v2879 = vsel %vm201, %v2877, 0.0
    %2880 = vadd.xlane.f32.xlu0 %v2879
    %v2881 = vpop.xlane.xlu0 %2880
    %v2882 = vadd.f32 %v2881, %v77
    %2883 = vrot.lane.b32.xlu0 %v2775, 2
    %v2884 = vpop.permute.xlu0 %2883
    %v2886 = vmul.f32 %v2773, %v2884
    %v2887 = vsub.f32 1.0, %v2775
    %v2888 = vmul.f32 %v2887, %v2882
    %2890 = vrot.lane.b32.xlu0 %v2888, 2
    %v2891 = vpop.permute.xlu0 %2890
    %v2893 = vadd.f32 %v2886, %v2891
    %2895 = vrot.lane.b32.xlu0 %v2882, 2
    %v2896 = vpop.permute.xlu0 %2895
    %v2898 = vsub.f32 %v2893, %v2896
    %v2899 = vand.u32 2147483647, %v2898
    %v2900 = vmul.f32 %v2899, %v2884
    %2902 = vrot.lane.b32.xlu0 %v2900, 126
    %v2903 = vpop.permute.xlu0 %2902
    %v2905 = vsel %vm228, %v2903, 0.0
    %2906 = vadd.xlane.f32.xlu0 %v2905
    %v2907 = vpop.xlane.xlu0 %2906
    %v2908 = vrot.slane %v2907, 4
    %v2909 = vadd.f32 %v2907, %v2908
    %v2910 = vrot.slane %v2909, 2
    %v2911 = vadd.f32 %v2909, %v2910
    %v2912 = vrot.slane %v2911, 1
    %v2913 = vadd.f32 %v2911, %v2912
    %s2914 = vtos %v2913
    %v2915 = vstv %s2914
    %v2916 = vsel %vm228, %v2775, 0.0
    %2917 = vadd.xlane.f32.xlu0 %v2916
    %v2918 = vpop.xlane.xlu0 %2917
    %v2919 = vrot.slane %v2918, 4
    %v2920 = vadd.f32 %v2918, %v2919
    %v2921 = vrot.slane %v2920, 2
    %v2922 = vadd.f32 %v2920, %v2921
    %v2923 = vrot.slane %v2922, 1
    %v2924 = vadd.f32 %v2922, %v2923
    %s2925 = vtos %v2924
    %v2926 = vstv %s2925
    %v2927 = vadd.f32 %v2926, 1e-05
    %v2928 = vrcp.pop %v2927
    %v2929 = vmul.f32 %v2915, %v2928
    %v2930 = vadd.f32 %v2663, %v2929
    %v2931 = vsub.f32 %v2893, %v2773
    %2933 = vset.pattern.permute.xlu0 2
    %2934 = vperm.xlu0 %2933, %v2931
    %v2935 = vpop.permute.xlu0 %2934
    %v2937 = vmul.f32 %v2935, %v91
    %v2938 = vadd.f32 %v2857, %v2937
    %2940 = vrot.lane.b32.xlu0 %v2873, 98
    %v2941 = vpop.permute.xlu0 %2940
    %v2942 = vsel %vm263, %v2941, 0
    %2944 = vmatprep.subr.mxu0 0.0
    %2945 = vmatpush1.msra.mxu0 0.0
    %2946 = vmatprep.subr.mxu0 0.0
    %2947 = vmatpush1.msra.mxu0 0.0
    %2948 = vmatprep.subr.mxu0 0.0
    %2949 = vmatpush1.msra.mxu0 0.0
    %2950 = vmatprep.subr.mxu0 0.0
    %2951 = vmatpush1.msra.mxu0 0.0
    %2952 = vmatprep.subr.mxu0 0.0
    %2953 = vmatpush1.msra.mxu0 0.0
    %2954 = vmatprep.subr.mxu0 0.0
    %2955 = vmatpush1.msra.mxu0 0.0
    %2956 = vmatprep.subr.mxu0 0.0
    %2957 = vmatpush1.msra.mxu0 0.0
    %2958 = vmatprep.subr.mxu0 0.0
    %2959 = vmatpush1.msra.mxu0 0.0
    %2960 = vmatprep.subr.mxu0 0.0
    %2961 = vmatpush1.msra.mxu0 0.0
    %2962 = vmatprep.subr.mxu0 0.0
    %2963 = vmatpush1.msra.mxu0 0.0
    %2964 = vmatprep.subr.mxu0 0.0
    %2965 = vmatpush1.msra.mxu0 0.0
    %2966 = vmatprep.subr.mxu0 0.0
    %2967 = vmatpush1.msra.mxu0 0.0
    %2968 = vmatprep.subr.mxu0 0.0
    %2969 = vmatpush1.msra.mxu0 0.0
    %2970 = vmatprep.subr.mxu0 0.0
    %2971 = vmatpush1.msra.mxu0 0.0
    %2972 = vmatprep.subr.mxu0 0.0
    %2973 = vmatpush1.msra.mxu0 %v269
    %2974 = vmatprep.subr.mxu0 0.0
    %2975 = vmatpush1.msra.mxu0 %v49
    %2976 = vmatprep.subr.mxu0 0.0
    %2977 = vmatpush2.msra.mxu0 0.0
    %2978 = vmatprep.subr.mxu0 0.0
    %2979 = vmatpush2.msra.mxu0 0.0
    %2980 = vmatprep.subr.mxu0 0.0
    %2981 = vmatpush2.msra.mxu0 0.0
    %2982 = vmatprep.subr.mxu0 0.0
    %2983 = vmatpush2.msra.mxu0 0.0
    %2984 = vmatprep.subr.mxu0 0.0
    %2985 = vmatpush2.msra.mxu0 0.0
    %2986 = vmatprep.subr.mxu0 0.0
    %2987 = vmatpush2.msra.mxu0 0.0
    %2988 = vmatprep.subr.mxu0 0.0
    %2989 = vmatpush2.msra.mxu0 0.0
    %2990 = vmatprep.subr.mxu0 0.0
    %2991 = vmatpush2.msra.mxu0 0.0
    %2992 = vmatprep.subr.mxu0 0.0
    %2993 = vmatpush2.msra.mxu0 0.0
    %2994 = vmatprep.subr.mxu0 0.0
    %2995 = vmatpush2.msra.mxu0 0.0
    %2996 = vmatprep.subr.mxu0 0.0
    %2997 = vmatpush2.msra.mxu0 0.0
    %2998 = vmatprep.subr.mxu0 0.0
    %2999 = vmatpush2.msra.mxu0 0.0
    %3000 = vmatprep.subr.mxu0 0.0
    %3001 = vmatpush2.msra.mxu0 0.0
    %3002 = vmatprep.subr.mxu0 0.0
    %3003 = vmatpush2.msra.mxu0 0.0
    %3004 = vmatprep.subr.mxu0 0.0
    %3005 = vmatpush2.msra.mxu0 0.0
    %3006 = vmatprep.subr.mxu0 0.0
    %3007 = vmatpush2.msra.mxu0 0.0
    %3008 = vmatprep.mubr.f32.mxu0 0.0
    %3009 = vmatmul.mubr.f32.gmra.mxu0 %v2942
    %v3010 = vpop.f32.mrf.mxu0
    %v3011 = vadd.f32 0.0, %v3010
    %v3012 = vpop.f32.mrf.mxu0
    %3013 = vdwg.mxu0
    %v3014 = vadd.f32 %v2938, %v3011
    %v3015 = vxor.u32 %v3014, 2147483648
    %v3016 = vmul.f32 %v3015, 1.442695
    %v3017 = vpow.pop %v3016
    %v3018 = vadd.f32 %v3017, 1.0
    %v3019 = vrcp.pop %v3018
    %v3020 = vmul.f32 1.0, %v3019
    %v3021 = vtanh.pop %v3014
    %v3022 = vmul.f32 %v3020, %v2765
    %3024 = vrot.lane.b32.xlu0 %v3021, 108
    %v3025 = vpop.permute.xlu0 %3024
    %v3027 = vmul.f32 %v3020, %v3025
    %3029 = vrot.lane.b32.xlu0 %v3027, 10
    %v3030 = vpop.permute.xlu0 %3029
    %v3032 = vadd.f32 %v3022, %v3030
    %v3033 = vtanh.pop %v3032
    %3035 = vrot.lane.b32.xlu0 %v3033, 20
    %v3036 = vpop.permute.xlu0 %3035
    %v3038 = vmul.f32 %v3020, %v3036
    %s3039 = scalar_lea.vmem %s0, 22
    %v3040 = vld [vmem:[%s3039] sm:$0x3]
    %s3041 = scalar_lea.vmem %s1, 22
    %v3042 = vld [vmem:[%s3041] sm:$0x3]
    %s3043 = scalar_lea.vmem %s2, 22
    %v3044 = vld [vmem:[%s3043] sm:$0x3]
    %3046 = vset.pattern.permute.xlu0 0
    %3047 = vperm.xlu0 %3046, %v3042
    %v3048 = vpop.permute.xlu0 %3047
    %v3050 = vmul.f32 %v3048, %v84
    %v3052 = vsel %vm109, %v3040, 0
    %3054 = vmatprep.subr.mxu0 0.0
    %3055 = vmatpush1.msra.mxu0 0.0
    %3056 = vmatprep.subr.mxu0 0.0
    %3057 = vmatpush1.msra.mxu0 0.0
    %3058 = vmatprep.subr.mxu0 0.0
    %3059 = vmatpush1.msra.mxu0 0.0
    %3060 = vmatprep.subr.mxu0 0.0
    %3061 = vmatpush1.msra.mxu0 0.0
    %3062 = vmatprep.subr.mxu0 0.0
    %3063 = vmatpush1.msra.mxu0 0.0
    %3064 = vmatprep.subr.mxu0 0.0
    %3065 = vmatpush1.msra.mxu0 0.0
    %3066 = vmatprep.subr.mxu0 0.0
    %3067 = vmatpush1.msra.mxu0 0.0
    %3068 = vmatprep.subr.mxu0 0.0
    %3069 = vmatpush1.msra.mxu0 0.0
    %3070 = vmatprep.subr.mxu0 0.0
    %3071 = vmatpush1.msra.mxu0 0.0
    %3072 = vmatprep.subr.mxu0 0.0
    %3073 = vmatpush1.msra.mxu0 0.0
    %3074 = vmatprep.subr.mxu0 0.0
    %3075 = vmatpush1.msra.mxu0 0.0
    %3076 = vmatprep.subr.mxu0 0.0
    %3077 = vmatpush1.msra.mxu0 0.0
    %3078 = vmatprep.subr.mxu0 0.0
    %3079 = vmatpush1.msra.mxu0 0.0
    %3080 = vmatprep.subr.mxu0 0.0
    %3081 = vmatpush1.msra.mxu0 0.0
    %3082 = vmatprep.subr.mxu0 0.0
    %3083 = vmatpush1.msra.mxu0 %v115
    %3084 = vmatprep.subr.mxu0 0.0
    %3085 = vmatpush1.msra.mxu0 %v47
    %3086 = vmatprep.subr.mxu0 0.0
    %3087 = vmatpush2.msra.mxu0 0.0
    %3088 = vmatprep.subr.mxu0 0.0
    %3089 = vmatpush2.msra.mxu0 0.0
    %3090 = vmatprep.subr.mxu0 0.0
    %3091 = vmatpush2.msra.mxu0 0.0
    %3092 = vmatprep.subr.mxu0 0.0
    %3093 = vmatpush2.msra.mxu0 0.0
    %3094 = vmatprep.subr.mxu0 0.0
    %3095 = vmatpush2.msra.mxu0 0.0
    %3096 = vmatprep.subr.mxu0 0.0
    %3097 = vmatpush2.msra.mxu0 0.0
    %3098 = vmatprep.subr.mxu0 0.0
    %3099 = vmatpush2.msra.mxu0 0.0
    %3100 = vmatprep.subr.mxu0 0.0
    %3101 = vmatpush2.msra.mxu0 0.0
    %3102 = vmatprep.subr.mxu0 0.0
    %3103 = vmatpush2.msra.mxu0 0.0
    %3104 = vmatprep.subr.mxu0 0.0
    %3105 = vmatpush2.msra.mxu0 0.0
    %3106 = vmatprep.subr.mxu0 0.0
    %3107 = vmatpush2.msra.mxu0 0.0
    %3108 = vmatprep.subr.mxu0 0.0
    %3109 = vmatpush2.msra.mxu0 0.0
    %3110 = vmatprep.subr.mxu0 0.0
    %3111 = vmatpush2.msra.mxu0 0.0
    %3112 = vmatprep.subr.mxu0 0.0
    %3113 = vmatpush2.msra.mxu0 0.0
    %3114 = vmatprep.subr.mxu0 0.0
    %3115 = vmatpush2.msra.mxu0 0.0
    %3116 = vmatprep.subr.mxu0 0.0
    %3117 = vmatpush2.msra.mxu0 0.0
    %3118 = vmatprep.mubr.f32.mxu0 0.0
    %3119 = vmatmul.mubr.f32.gmra.mxu0 %v3052
    %v3120 = vpop.f32.mrf.mxu0
    %v3121 = vadd.f32 %v3050, %v3120
    %v3122 = vpop.f32.mrf.mxu0
    %3123 = vdwg.mxu0
    %v3124 = vadd.f32 %v3121, %v98
    %3126 = vset.pattern.permute.xlu0 0
    %3127 = vperm.xlu0 %3126, %v3044
    %v3128 = vpop.permute.xlu0 %3127
    %v3130 = vmul.f32 %v3128, %v56
    %v3131 = vadd.f32 %v3130, %v63
    %v3132 = vmax.f32 %v3131, 0.0
    %v3133 = vsub.f32 0.0, %v3132
    %v3134 = vmul.f32 %v3133, 1.442695
    %v3135 = vpow.pop %v3134
    %3137 = vrot.lane.b32.xlu0 %v3135, 30
    %v3138 = vpop.permute.xlu0 %3137
    %v3140 = vmul.f32 %v3038, %v3138
    %v3141 = vmul.f32 %v3140, %v469
    %3143 = vrot.lane.b32.xlu0 %v3141, 98
    %v3144 = vpop.permute.xlu0 %3143
    %v3146 = vsel %vm201, %v3144, 0.0
    %3147 = vadd.xlane.f32.xlu0 %v3146
    %v3148 = vpop.xlane.xlu0 %3147
    %v3149 = vadd.f32 %v3148, %v77
    %3150 = vrot.lane.b32.xlu0 %v3042, 2
    %v3151 = vpop.permute.xlu0 %3150
    %v3153 = vmul.f32 %v3040, %v3151
    %v3154 = vsub.f32 1.0, %v3042
    %v3155 = vmul.f32 %v3154, %v3149
    %3157 = vrot.lane.b32.xlu0 %v3155, 2
    %v3158 = vpop.permute.xlu0 %3157
    %v3160 = vadd.f32 %v3153, %v3158
    %3162 = vrot.lane.b32.xlu0 %v3149, 2
    %v3163 = vpop.permute.xlu0 %3162
    %v3165 = vsub.f32 %v3160, %v3163
    %v3166 = vand.u32 2147483647, %v3165
    %v3167 = vmul.f32 %v3166, %v3151
    %3169 = vrot.lane.b32.xlu0 %v3167, 126
    %v3170 = vpop.permute.xlu0 %3169
    %v3172 = vsel %vm228, %v3170, 0.0
    %3173 = vadd.xlane.f32.xlu0 %v3172
    %v3174 = vpop.xlane.xlu0 %3173
    %v3175 = vrot.slane %v3174, 4
    %v3176 = vadd.f32 %v3174, %v3175
    %v3177 = vrot.slane %v3176, 2
    %v3178 = vadd.f32 %v3176, %v3177
    %v3179 = vrot.slane %v3178, 1
    %v3180 = vadd.f32 %v3178, %v3179
    %s3181 = vtos %v3180
    %v3182 = vstv %s3181
    %v3183 = vsel %vm228, %v3042, 0.0
    %3184 = vadd.xlane.f32.xlu0 %v3183
    %v3185 = vpop.xlane.xlu0 %3184
    %v3186 = vrot.slane %v3185, 4
    %v3187 = vadd.f32 %v3185, %v3186
    %v3188 = vrot.slane %v3187, 2
    %v3189 = vadd.f32 %v3187, %v3188
    %v3190 = vrot.slane %v3189, 1
    %v3191 = vadd.f32 %v3189, %v3190
    %s3192 = vtos %v3191
    %v3193 = vstv %s3192
    %v3194 = vadd.f32 %v3193, 1e-05
    %v3195 = vrcp.pop %v3194
    %v3196 = vmul.f32 %v3182, %v3195
    %v3197 = vadd.f32 %v2930, %v3196
    %v3198 = vsub.f32 %v3160, %v3040
    %3200 = vset.pattern.permute.xlu0 2
    %3201 = vperm.xlu0 %3200, %v3198
    %v3202 = vpop.permute.xlu0 %3201
    %v3204 = vmul.f32 %v3202, %v91
    %v3205 = vadd.f32 %v3124, %v3204
    %3207 = vrot.lane.b32.xlu0 %v3140, 98
    %v3208 = vpop.permute.xlu0 %3207
    %v3209 = vsel %vm263, %v3208, 0
    %3211 = vmatprep.subr.mxu0 0.0
    %3212 = vmatpush1.msra.mxu0 0.0
    %3213 = vmatprep.subr.mxu0 0.0
    %3214 = vmatpush1.msra.mxu0 0.0
    %3215 = vmatprep.subr.mxu0 0.0
    %3216 = vmatpush1.msra.mxu0 0.0
    %3217 = vmatprep.subr.mxu0 0.0
    %3218 = vmatpush1.msra.mxu0 0.0
    %3219 = vmatprep.subr.mxu0 0.0
    %3220 = vmatpush1.msra.mxu0 0.0
    %3221 = vmatprep.subr.mxu0 0.0
    %3222 = vmatpush1.msra.mxu0 0.0
    %3223 = vmatprep.subr.mxu0 0.0
    %3224 = vmatpush1.msra.mxu0 0.0
    %3225 = vmatprep.subr.mxu0 0.0
    %3226 = vmatpush1.msra.mxu0 0.0
    %3227 = vmatprep.subr.mxu0 0.0
    %3228 = vmatpush1.msra.mxu0 0.0
    %3229 = vmatprep.subr.mxu0 0.0
    %3230 = vmatpush1.msra.mxu0 0.0
    %3231 = vmatprep.subr.mxu0 0.0
    %3232 = vmatpush1.msra.mxu0 0.0
    %3233 = vmatprep.subr.mxu0 0.0
    %3234 = vmatpush1.msra.mxu0 0.0
    %3235 = vmatprep.subr.mxu0 0.0
    %3236 = vmatpush1.msra.mxu0 0.0
    %3237 = vmatprep.subr.mxu0 0.0
    %3238 = vmatpush1.msra.mxu0 0.0
    %3239 = vmatprep.subr.mxu0 0.0
    %3240 = vmatpush1.msra.mxu0 %v269
    %3241 = vmatprep.subr.mxu0 0.0
    %3242 = vmatpush1.msra.mxu0 %v49
    %3243 = vmatprep.subr.mxu0 0.0
    %3244 = vmatpush2.msra.mxu0 0.0
    %3245 = vmatprep.subr.mxu0 0.0
    %3246 = vmatpush2.msra.mxu0 0.0
    %3247 = vmatprep.subr.mxu0 0.0
    %3248 = vmatpush2.msra.mxu0 0.0
    %3249 = vmatprep.subr.mxu0 0.0
    %3250 = vmatpush2.msra.mxu0 0.0
    %3251 = vmatprep.subr.mxu0 0.0
    %3252 = vmatpush2.msra.mxu0 0.0
    %3253 = vmatprep.subr.mxu0 0.0
    %3254 = vmatpush2.msra.mxu0 0.0
    %3255 = vmatprep.subr.mxu0 0.0
    %3256 = vmatpush2.msra.mxu0 0.0
    %3257 = vmatprep.subr.mxu0 0.0
    %3258 = vmatpush2.msra.mxu0 0.0
    %3259 = vmatprep.subr.mxu0 0.0
    %3260 = vmatpush2.msra.mxu0 0.0
    %3261 = vmatprep.subr.mxu0 0.0
    %3262 = vmatpush2.msra.mxu0 0.0
    %3263 = vmatprep.subr.mxu0 0.0
    %3264 = vmatpush2.msra.mxu0 0.0
    %3265 = vmatprep.subr.mxu0 0.0
    %3266 = vmatpush2.msra.mxu0 0.0
    %3267 = vmatprep.subr.mxu0 0.0
    %3268 = vmatpush2.msra.mxu0 0.0
    %3269 = vmatprep.subr.mxu0 0.0
    %3270 = vmatpush2.msra.mxu0 0.0
    %3271 = vmatprep.subr.mxu0 0.0
    %3272 = vmatpush2.msra.mxu0 0.0
    %3273 = vmatprep.subr.mxu0 0.0
    %3274 = vmatpush2.msra.mxu0 0.0
    %3275 = vmatprep.mubr.f32.mxu0 0.0
    %3276 = vmatmul.mubr.f32.gmra.mxu0 %v3209
    %v3277 = vpop.f32.mrf.mxu0
    %v3278 = vadd.f32 0.0, %v3277
    %v3279 = vpop.f32.mrf.mxu0
    %3280 = vdwg.mxu0
    %v3281 = vadd.f32 %v3205, %v3278
    %v3282 = vxor.u32 %v3281, 2147483648
    %v3283 = vmul.f32 %v3282, 1.442695
    %v3284 = vpow.pop %v3283
    %v3285 = vadd.f32 %v3284, 1.0
    %v3286 = vrcp.pop %v3285
    %v3287 = vmul.f32 1.0, %v3286
    %v3288 = vtanh.pop %v3281
    %v3289 = vmul.f32 %v3287, %v3032
    %3291 = vrot.lane.b32.xlu0 %v3288, 108
    %v3292 = vpop.permute.xlu0 %3291
    %v3294 = vmul.f32 %v3287, %v3292
    %3296 = vrot.lane.b32.xlu0 %v3294, 10
    %v3297 = vpop.permute.xlu0 %3296
    %v3299 = vadd.f32 %v3289, %v3297
    %v3300 = vtanh.pop %v3299
    %3302 = vrot.lane.b32.xlu0 %v3300, 20
    %v3303 = vpop.permute.xlu0 %3302
    %v3305 = vmul.f32 %v3287, %v3303
    %s3306 = scalar_lea.vmem %s0, 24
    %v3307 = vld [vmem:[%s3306] sm:$0x3]
    %s3308 = scalar_lea.vmem %s1, 24
    %v3309 = vld [vmem:[%s3308] sm:$0x3]
    %s3310 = scalar_lea.vmem %s2, 24
    %v3311 = vld [vmem:[%s3310] sm:$0x3]
    %3313 = vset.pattern.permute.xlu0 0
    %3314 = vperm.xlu0 %3313, %v3309
    %v3315 = vpop.permute.xlu0 %3314
    %v3317 = vmul.f32 %v3315, %v84
    %v3319 = vsel %vm109, %v3307, 0
    %3321 = vmatprep.subr.mxu0 0.0
    %3322 = vmatpush1.msra.mxu0 0.0
    %3323 = vmatprep.subr.mxu0 0.0
    %3324 = vmatpush1.msra.mxu0 0.0
    %3325 = vmatprep.subr.mxu0 0.0
    %3326 = vmatpush1.msra.mxu0 0.0
    %3327 = vmatprep.subr.mxu0 0.0
    %3328 = vmatpush1.msra.mxu0 0.0
    %3329 = vmatprep.subr.mxu0 0.0
    %3330 = vmatpush1.msra.mxu0 0.0
    %3331 = vmatprep.subr.mxu0 0.0
    %3332 = vmatpush1.msra.mxu0 0.0
    %3333 = vmatprep.subr.mxu0 0.0
    %3334 = vmatpush1.msra.mxu0 0.0
    %3335 = vmatprep.subr.mxu0 0.0
    %3336 = vmatpush1.msra.mxu0 0.0
    %3337 = vmatprep.subr.mxu0 0.0
    %3338 = vmatpush1.msra.mxu0 0.0
    %3339 = vmatprep.subr.mxu0 0.0
    %3340 = vmatpush1.msra.mxu0 0.0
    %3341 = vmatprep.subr.mxu0 0.0
    %3342 = vmatpush1.msra.mxu0 0.0
    %3343 = vmatprep.subr.mxu0 0.0
    %3344 = vmatpush1.msra.mxu0 0.0
    %3345 = vmatprep.subr.mxu0 0.0
    %3346 = vmatpush1.msra.mxu0 0.0
    %3347 = vmatprep.subr.mxu0 0.0
    %3348 = vmatpush1.msra.mxu0 0.0
    %3349 = vmatprep.subr.mxu0 0.0
    %3350 = vmatpush1.msra.mxu0 %v115
    %3351 = vmatprep.subr.mxu0 0.0
    %3352 = vmatpush1.msra.mxu0 %v47
    %3353 = vmatprep.subr.mxu0 0.0
    %3354 = vmatpush2.msra.mxu0 0.0
    %3355 = vmatprep.subr.mxu0 0.0
    %3356 = vmatpush2.msra.mxu0 0.0
    %3357 = vmatprep.subr.mxu0 0.0
    %3358 = vmatpush2.msra.mxu0 0.0
    %3359 = vmatprep.subr.mxu0 0.0
    %3360 = vmatpush2.msra.mxu0 0.0
    %3361 = vmatprep.subr.mxu0 0.0
    %3362 = vmatpush2.msra.mxu0 0.0
    %3363 = vmatprep.subr.mxu0 0.0
    %3364 = vmatpush2.msra.mxu0 0.0
    %3365 = vmatprep.subr.mxu0 0.0
    %3366 = vmatpush2.msra.mxu0 0.0
    %3367 = vmatprep.subr.mxu0 0.0
    %3368 = vmatpush2.msra.mxu0 0.0
    %3369 = vmatprep.subr.mxu0 0.0
    %3370 = vmatpush2.msra.mxu0 0.0
    %3371 = vmatprep.subr.mxu0 0.0
    %3372 = vmatpush2.msra.mxu0 0.0
    %3373 = vmatprep.subr.mxu0 0.0
    %3374 = vmatpush2.msra.mxu0 0.0
    %3375 = vmatprep.subr.mxu0 0.0
    %3376 = vmatpush2.msra.mxu0 0.0
    %3377 = vmatprep.subr.mxu0 0.0
    %3378 = vmatpush2.msra.mxu0 0.0
    %3379 = vmatprep.subr.mxu0 0.0
    %3380 = vmatpush2.msra.mxu0 0.0
    %3381 = vmatprep.subr.mxu0 0.0
    %3382 = vmatpush2.msra.mxu0 0.0
    %3383 = vmatprep.subr.mxu0 0.0
    %3384 = vmatpush2.msra.mxu0 0.0
    %3385 = vmatprep.mubr.f32.mxu0 0.0
    %3386 = vmatmul.mubr.f32.gmra.mxu0 %v3319
    %v3387 = vpop.f32.mrf.mxu0
    %v3388 = vadd.f32 %v3317, %v3387
    %v3389 = vpop.f32.mrf.mxu0
    %3390 = vdwg.mxu0
    %v3391 = vadd.f32 %v3388, %v98
    %3393 = vset.pattern.permute.xlu0 0
    %3394 = vperm.xlu0 %3393, %v3311
    %v3395 = vpop.permute.xlu0 %3394
    %v3397 = vmul.f32 %v3395, %v56
    %v3398 = vadd.f32 %v3397, %v63
    %v3399 = vmax.f32 %v3398, 0.0
    %v3400 = vsub.f32 0.0, %v3399
    %v3401 = vmul.f32 %v3400, 1.442695
    %v3402 = vpow.pop %v3401
    %3404 = vrot.lane.b32.xlu0 %v3402, 30
    %v3405 = vpop.permute.xlu0 %3404
    %v3407 = vmul.f32 %v3305, %v3405
    %v3408 = vmul.f32 %v3407, %v469
    %3410 = vrot.lane.b32.xlu0 %v3408, 98
    %v3411 = vpop.permute.xlu0 %3410
    %v3413 = vsel %vm201, %v3411, 0.0
    %3414 = vadd.xlane.f32.xlu0 %v3413
    %v3415 = vpop.xlane.xlu0 %3414
    %v3416 = vadd.f32 %v3415, %v77
    %3417 = vrot.lane.b32.xlu0 %v3309, 2
    %v3418 = vpop.permute.xlu0 %3417
    %v3420 = vmul.f32 %v3307, %v3418
    %v3421 = vsub.f32 1.0, %v3309
    %v3422 = vmul.f32 %v3421, %v3416
    %3424 = vrot.lane.b32.xlu0 %v3422, 2
    %v3425 = vpop.permute.xlu0 %3424
    %v3427 = vadd.f32 %v3420, %v3425
    %3429 = vrot.lane.b32.xlu0 %v3416, 2
    %v3430 = vpop.permute.xlu0 %3429
    %v3432 = vsub.f32 %v3427, %v3430
    %v3433 = vand.u32 2147483647, %v3432
    %v3434 = vmul.f32 %v3433, %v3418
    %3436 = vrot.lane.b32.xlu0 %v3434, 126
    %v3437 = vpop.permute.xlu0 %3436
    %v3439 = vsel %vm228, %v3437, 0.0
    %3440 = vadd.xlane.f32.xlu0 %v3439
    %v3441 = vpop.xlane.xlu0 %3440
    %v3442 = vrot.slane %v3441, 4
    %v3443 = vadd.f32 %v3441, %v3442
    %v3444 = vrot.slane %v3443, 2
    %v3445 = vadd.f32 %v3443, %v3444
    %v3446 = vrot.slane %v3445, 1
    %v3447 = vadd.f32 %v3445, %v3446
    %s3448 = vtos %v3447
    %v3449 = vstv %s3448
    %v3450 = vsel %vm228, %v3309, 0.0
    %3451 = vadd.xlane.f32.xlu0 %v3450
    %v3452 = vpop.xlane.xlu0 %3451
    %v3453 = vrot.slane %v3452, 4
    %v3454 = vadd.f32 %v3452, %v3453
    %v3455 = vrot.slane %v3454, 2
    %v3456 = vadd.f32 %v3454, %v3455
    %v3457 = vrot.slane %v3456, 1
    %v3458 = vadd.f32 %v3456, %v3457
    %s3459 = vtos %v3458
    %v3460 = vstv %s3459
    %v3461 = vadd.f32 %v3460, 1e-05
    %v3462 = vrcp.pop %v3461
    %v3463 = vmul.f32 %v3449, %v3462
    %v3464 = vadd.f32 %v3197, %v3463
    %v3465 = vsub.f32 %v3427, %v3307
    %3467 = vset.pattern.permute.xlu0 2
    %3468 = vperm.xlu0 %3467, %v3465
    %v3469 = vpop.permute.xlu0 %3468
    %v3471 = vmul.f32 %v3469, %v91
    %v3472 = vadd.f32 %v3391, %v3471
    %3474 = vrot.lane.b32.xlu0 %v3407, 98
    %v3475 = vpop.permute.xlu0 %3474
    %v3476 = vsel %vm263, %v3475, 0
    %3478 = vmatprep.subr.mxu0 0.0
    %3479 = vmatpush1.msra.mxu0 0.0
    %3480 = vmatprep.subr.mxu0 0.0
    %3481 = vmatpush1.msra.mxu0 0.0
    %3482 = vmatprep.subr.mxu0 0.0
    %3483 = vmatpush1.msra.mxu0 0.0
    %3484 = vmatprep.subr.mxu0 0.0
    %3485 = vmatpush1.msra.mxu0 0.0
    %3486 = vmatprep.subr.mxu0 0.0
    %3487 = vmatpush1.msra.mxu0 0.0
    %3488 = vmatprep.subr.mxu0 0.0
    %3489 = vmatpush1.msra.mxu0 0.0
    %3490 = vmatprep.subr.mxu0 0.0
    %3491 = vmatpush1.msra.mxu0 0.0
    %3492 = vmatprep.subr.mxu0 0.0
    %3493 = vmatpush1.msra.mxu0 0.0
    %3494 = vmatprep.subr.mxu0 0.0
    %3495 = vmatpush1.msra.mxu0 0.0
    %3496 = vmatprep.subr.mxu0 0.0
    %3497 = vmatpush1.msra.mxu0 0.0
    %3498 = vmatprep.subr.mxu0 0.0
    %3499 = vmatpush1.msra.mxu0 0.0
    %3500 = vmatprep.subr.mxu0 0.0
    %3501 = vmatpush1.msra.mxu0 0.0
    %3502 = vmatprep.subr.mxu0 0.0
    %3503 = vmatpush1.msra.mxu0 0.0
    %3504 = vmatprep.subr.mxu0 0.0
    %3505 = vmatpush1.msra.mxu0 0.0
    %3506 = vmatprep.subr.mxu0 0.0
    %3507 = vmatpush1.msra.mxu0 %v269
    %3508 = vmatprep.subr.mxu0 0.0
    %3509 = vmatpush1.msra.mxu0 %v49
    %3510 = vmatprep.subr.mxu0 0.0
    %3511 = vmatpush2.msra.mxu0 0.0
    %3512 = vmatprep.subr.mxu0 0.0
    %3513 = vmatpush2.msra.mxu0 0.0
    %3514 = vmatprep.subr.mxu0 0.0
    %3515 = vmatpush2.msra.mxu0 0.0
    %3516 = vmatprep.subr.mxu0 0.0
    %3517 = vmatpush2.msra.mxu0 0.0
    %3518 = vmatprep.subr.mxu0 0.0
    %3519 = vmatpush2.msra.mxu0 0.0
    %3520 = vmatprep.subr.mxu0 0.0
    %3521 = vmatpush2.msra.mxu0 0.0
    %3522 = vmatprep.subr.mxu0 0.0
    %3523 = vmatpush2.msra.mxu0 0.0
    %3524 = vmatprep.subr.mxu0 0.0
    %3525 = vmatpush2.msra.mxu0 0.0
    %3526 = vmatprep.subr.mxu0 0.0
    %3527 = vmatpush2.msra.mxu0 0.0
    %3528 = vmatprep.subr.mxu0 0.0
    %3529 = vmatpush2.msra.mxu0 0.0
    %3530 = vmatprep.subr.mxu0 0.0
    %3531 = vmatpush2.msra.mxu0 0.0
    %3532 = vmatprep.subr.mxu0 0.0
    %3533 = vmatpush2.msra.mxu0 0.0
    %3534 = vmatprep.subr.mxu0 0.0
    %3535 = vmatpush2.msra.mxu0 0.0
    %3536 = vmatprep.subr.mxu0 0.0
    %3537 = vmatpush2.msra.mxu0 0.0
    %3538 = vmatprep.subr.mxu0 0.0
    %3539 = vmatpush2.msra.mxu0 0.0
    %3540 = vmatprep.subr.mxu0 0.0
    %3541 = vmatpush2.msra.mxu0 0.0
    %3542 = vmatprep.mubr.f32.mxu0 0.0
    %3543 = vmatmul.mubr.f32.gmra.mxu0 %v3476
    %v3544 = vpop.f32.mrf.mxu0
    %v3545 = vadd.f32 0.0, %v3544
    %v3546 = vpop.f32.mrf.mxu0
    %3547 = vdwg.mxu0
    %v3548 = vadd.f32 %v3472, %v3545
    %v3549 = vxor.u32 %v3548, 2147483648
    %v3550 = vmul.f32 %v3549, 1.442695
    %v3551 = vpow.pop %v3550
    %v3552 = vadd.f32 %v3551, 1.0
    %v3553 = vrcp.pop %v3552
    %v3554 = vmul.f32 1.0, %v3553
    %v3555 = vtanh.pop %v3548
    %v3556 = vmul.f32 %v3554, %v3299
    %3558 = vrot.lane.b32.xlu0 %v3555, 108
    %v3559 = vpop.permute.xlu0 %3558
    %v3561 = vmul.f32 %v3554, %v3559
    %3563 = vrot.lane.b32.xlu0 %v3561, 10
    %v3564 = vpop.permute.xlu0 %3563
    %v3566 = vadd.f32 %v3556, %v3564
    %v3567 = vtanh.pop %v3566
    %3569 = vrot.lane.b32.xlu0 %v3567, 20
    %v3570 = vpop.permute.xlu0 %3569
    %v3572 = vmul.f32 %v3554, %v3570
    %s3573 = scalar_lea.vmem %s0, 26
    %v3574 = vld [vmem:[%s3573] sm:$0x3]
    %s3575 = scalar_lea.vmem %s1, 26
    %v3576 = vld [vmem:[%s3575] sm:$0x3]
    %s3577 = scalar_lea.vmem %s2, 26
    %v3578 = vld [vmem:[%s3577] sm:$0x3]
    %3580 = vset.pattern.permute.xlu0 0
    %3581 = vperm.xlu0 %3580, %v3576
    %v3582 = vpop.permute.xlu0 %3581
    %v3584 = vmul.f32 %v3582, %v84
    %v3586 = vsel %vm109, %v3574, 0
    %3588 = vmatprep.subr.mxu0 0.0
    %3589 = vmatpush1.msra.mxu0 0.0
    %3590 = vmatprep.subr.mxu0 0.0
    %3591 = vmatpush1.msra.mxu0 0.0
    %3592 = vmatprep.subr.mxu0 0.0
    %3593 = vmatpush1.msra.mxu0 0.0
    %3594 = vmatprep.subr.mxu0 0.0
    %3595 = vmatpush1.msra.mxu0 0.0
    %3596 = vmatprep.subr.mxu0 0.0
    %3597 = vmatpush1.msra.mxu0 0.0
    %3598 = vmatprep.subr.mxu0 0.0
    %3599 = vmatpush1.msra.mxu0 0.0
    %3600 = vmatprep.subr.mxu0 0.0
    %3601 = vmatpush1.msra.mxu0 0.0
    %3602 = vmatprep.subr.mxu0 0.0
    %3603 = vmatpush1.msra.mxu0 0.0
    %3604 = vmatprep.subr.mxu0 0.0
    %3605 = vmatpush1.msra.mxu0 0.0
    %3606 = vmatprep.subr.mxu0 0.0
    %3607 = vmatpush1.msra.mxu0 0.0
    %3608 = vmatprep.subr.mxu0 0.0
    %3609 = vmatpush1.msra.mxu0 0.0
    %3610 = vmatprep.subr.mxu0 0.0
    %3611 = vmatpush1.msra.mxu0 0.0
    %3612 = vmatprep.subr.mxu0 0.0
    %3613 = vmatpush1.msra.mxu0 0.0
    %3614 = vmatprep.subr.mxu0 0.0
    %3615 = vmatpush1.msra.mxu0 0.0
    %3616 = vmatprep.subr.mxu0 0.0
    %3617 = vmatpush1.msra.mxu0 %v115
    %3618 = vmatprep.subr.mxu0 0.0
    %3619 = vmatpush1.msra.mxu0 %v47
    %3620 = vmatprep.subr.mxu0 0.0
    %3621 = vmatpush2.msra.mxu0 0.0
    %3622 = vmatprep.subr.mxu0 0.0
    %3623 = vmatpush2.msra.mxu0 0.0
    %3624 = vmatprep.subr.mxu0 0.0
    %3625 = vmatpush2.msra.mxu0 0.0
    %3626 = vmatprep.subr.mxu0 0.0
    %3627 = vmatpush2.msra.mxu0 0.0
    %3628 = vmatprep.subr.mxu0 0.0
    %3629 = vmatpush2.msra.mxu0 0.0
    %3630 = vmatprep.subr.mxu0 0.0
    %3631 = vmatpush2.msra.mxu0 0.0
    %3632 = vmatprep.subr.mxu0 0.0
    %3633 = vmatpush2.msra.mxu0 0.0
    %3634 = vmatprep.subr.mxu0 0.0
    %3635 = vmatpush2.msra.mxu0 0.0
    %3636 = vmatprep.subr.mxu0 0.0
    %3637 = vmatpush2.msra.mxu0 0.0
    %3638 = vmatprep.subr.mxu0 0.0
    %3639 = vmatpush2.msra.mxu0 0.0
    %3640 = vmatprep.subr.mxu0 0.0
    %3641 = vmatpush2.msra.mxu0 0.0
    %3642 = vmatprep.subr.mxu0 0.0
    %3643 = vmatpush2.msra.mxu0 0.0
    %3644 = vmatprep.subr.mxu0 0.0
    %3645 = vmatpush2.msra.mxu0 0.0
    %3646 = vmatprep.subr.mxu0 0.0
    %3647 = vmatpush2.msra.mxu0 0.0
    %3648 = vmatprep.subr.mxu0 0.0
    %3649 = vmatpush2.msra.mxu0 0.0
    %3650 = vmatprep.subr.mxu0 0.0
    %3651 = vmatpush2.msra.mxu0 0.0
    %3652 = vmatprep.mubr.f32.mxu0 0.0
    %3653 = vmatmul.mubr.f32.gmra.mxu0 %v3586
    %v3654 = vpop.f32.mrf.mxu0
    %v3655 = vadd.f32 %v3584, %v3654
    %v3656 = vpop.f32.mrf.mxu0
    %3657 = vdwg.mxu0
    %v3658 = vadd.f32 %v3655, %v98
    %3660 = vset.pattern.permute.xlu0 0
    %3661 = vperm.xlu0 %3660, %v3578
    %v3662 = vpop.permute.xlu0 %3661
    %v3664 = vmul.f32 %v3662, %v56
    %v3665 = vadd.f32 %v3664, %v63
    %v3666 = vmax.f32 %v3665, 0.0
    %v3667 = vsub.f32 0.0, %v3666
    %v3668 = vmul.f32 %v3667, 1.442695
    %v3669 = vpow.pop %v3668
    %3671 = vrot.lane.b32.xlu0 %v3669, 30
    %v3672 = vpop.permute.xlu0 %3671
    %v3674 = vmul.f32 %v3572, %v3672
    %v3675 = vmul.f32 %v3674, %v469
    %3677 = vrot.lane.b32.xlu0 %v3675, 98
    %v3678 = vpop.permute.xlu0 %3677
    %v3680 = vsel %vm201, %v3678, 0.0
    %3681 = vadd.xlane.f32.xlu0 %v3680
    %v3682 = vpop.xlane.xlu0 %3681
    %v3683 = vadd.f32 %v3682, %v77
    %3684 = vrot.lane.b32.xlu0 %v3576, 2
    %v3685 = vpop.permute.xlu0 %3684
    %v3687 = vmul.f32 %v3574, %v3685
    %v3688 = vsub.f32 1.0, %v3576
    %v3689 = vmul.f32 %v3688, %v3683
    %3691 = vrot.lane.b32.xlu0 %v3689, 2
    %v3692 = vpop.permute.xlu0 %3691
    %v3694 = vadd.f32 %v3687, %v3692
    %3696 = vrot.lane.b32.xlu0 %v3683, 2
    %v3697 = vpop.permute.xlu0 %3696
    %v3699 = vsub.f32 %v3694, %v3697
    %v3700 = vand.u32 2147483647, %v3699
    %v3701 = vmul.f32 %v3700, %v3685
    %3703 = vrot.lane.b32.xlu0 %v3701, 126
    %v3704 = vpop.permute.xlu0 %3703
    %v3706 = vsel %vm228, %v3704, 0.0
    %3707 = vadd.xlane.f32.xlu0 %v3706
    %v3708 = vpop.xlane.xlu0 %3707
    %v3709 = vrot.slane %v3708, 4
    %v3710 = vadd.f32 %v3708, %v3709
    %v3711 = vrot.slane %v3710, 2
    %v3712 = vadd.f32 %v3710, %v3711
    %v3713 = vrot.slane %v3712, 1
    %v3714 = vadd.f32 %v3712, %v3713
    %s3715 = vtos %v3714
    %v3716 = vstv %s3715
    %v3717 = vsel %vm228, %v3576, 0.0
    %3718 = vadd.xlane.f32.xlu0 %v3717
    %v3719 = vpop.xlane.xlu0 %3718
    %v3720 = vrot.slane %v3719, 4
    %v3721 = vadd.f32 %v3719, %v3720
    %v3722 = vrot.slane %v3721, 2
    %v3723 = vadd.f32 %v3721, %v3722
    %v3724 = vrot.slane %v3723, 1
    %v3725 = vadd.f32 %v3723, %v3724
    %s3726 = vtos %v3725
    %v3727 = vstv %s3726
    %v3728 = vadd.f32 %v3727, 1e-05
    %v3729 = vrcp.pop %v3728
    %v3730 = vmul.f32 %v3716, %v3729
    %v3731 = vadd.f32 %v3464, %v3730
    %v3732 = vsub.f32 %v3694, %v3574
    %3734 = vset.pattern.permute.xlu0 2
    %3735 = vperm.xlu0 %3734, %v3732
    %v3736 = vpop.permute.xlu0 %3735
    %v3738 = vmul.f32 %v3736, %v91
    %v3739 = vadd.f32 %v3658, %v3738
    %3741 = vrot.lane.b32.xlu0 %v3674, 98
    %v3742 = vpop.permute.xlu0 %3741
    %v3743 = vsel %vm263, %v3742, 0
    %3745 = vmatprep.subr.mxu0 0.0
    %3746 = vmatpush1.msra.mxu0 0.0
    %3747 = vmatprep.subr.mxu0 0.0
    %3748 = vmatpush1.msra.mxu0 0.0
    %3749 = vmatprep.subr.mxu0 0.0
    %3750 = vmatpush1.msra.mxu0 0.0
    %3751 = vmatprep.subr.mxu0 0.0
    %3752 = vmatpush1.msra.mxu0 0.0
    %3753 = vmatprep.subr.mxu0 0.0
    %3754 = vmatpush1.msra.mxu0 0.0
    %3755 = vmatprep.subr.mxu0 0.0
    %3756 = vmatpush1.msra.mxu0 0.0
    %3757 = vmatprep.subr.mxu0 0.0
    %3758 = vmatpush1.msra.mxu0 0.0
    %3759 = vmatprep.subr.mxu0 0.0
    %3760 = vmatpush1.msra.mxu0 0.0
    %3761 = vmatprep.subr.mxu0 0.0
    %3762 = vmatpush1.msra.mxu0 0.0
    %3763 = vmatprep.subr.mxu0 0.0
    %3764 = vmatpush1.msra.mxu0 0.0
    %3765 = vmatprep.subr.mxu0 0.0
    %3766 = vmatpush1.msra.mxu0 0.0
    %3767 = vmatprep.subr.mxu0 0.0
    %3768 = vmatpush1.msra.mxu0 0.0
    %3769 = vmatprep.subr.mxu0 0.0
    %3770 = vmatpush1.msra.mxu0 0.0
    %3771 = vmatprep.subr.mxu0 0.0
    %3772 = vmatpush1.msra.mxu0 0.0
    %3773 = vmatprep.subr.mxu0 0.0
    %3774 = vmatpush1.msra.mxu0 %v269
    %3775 = vmatprep.subr.mxu0 0.0
    %3776 = vmatpush1.msra.mxu0 %v49
    %3777 = vmatprep.subr.mxu0 0.0
    %3778 = vmatpush2.msra.mxu0 0.0
    %3779 = vmatprep.subr.mxu0 0.0
    %3780 = vmatpush2.msra.mxu0 0.0
    %3781 = vmatprep.subr.mxu0 0.0
    %3782 = vmatpush2.msra.mxu0 0.0
    %3783 = vmatprep.subr.mxu0 0.0
    %3784 = vmatpush2.msra.mxu0 0.0
    %3785 = vmatprep.subr.mxu0 0.0
    %3786 = vmatpush2.msra.mxu0 0.0
    %3787 = vmatprep.subr.mxu0 0.0
    %3788 = vmatpush2.msra.mxu0 0.0
    %3789 = vmatprep.subr.mxu0 0.0
    %3790 = vmatpush2.msra.mxu0 0.0
    %3791 = vmatprep.subr.mxu0 0.0
    %3792 = vmatpush2.msra.mxu0 0.0
    %3793 = vmatprep.subr.mxu0 0.0
    %3794 = vmatpush2.msra.mxu0 0.0
    %3795 = vmatprep.subr.mxu0 0.0
    %3796 = vmatpush2.msra.mxu0 0.0
    %3797 = vmatprep.subr.mxu0 0.0
    %3798 = vmatpush2.msra.mxu0 0.0
    %3799 = vmatprep.subr.mxu0 0.0
    %3800 = vmatpush2.msra.mxu0 0.0
    %3801 = vmatprep.subr.mxu0 0.0
    %3802 = vmatpush2.msra.mxu0 0.0
    %3803 = vmatprep.subr.mxu0 0.0
    %3804 = vmatpush2.msra.mxu0 0.0
    %3805 = vmatprep.subr.mxu0 0.0
    %3806 = vmatpush2.msra.mxu0 0.0
    %3807 = vmatprep.subr.mxu0 0.0
    %3808 = vmatpush2.msra.mxu0 0.0
    %3809 = vmatprep.mubr.f32.mxu0 0.0
    %3810 = vmatmul.mubr.f32.gmra.mxu0 %v3743
    %v3811 = vpop.f32.mrf.mxu0
    %v3812 = vadd.f32 0.0, %v3811
    %v3813 = vpop.f32.mrf.mxu0
    %3814 = vdwg.mxu0
    %v3815 = vadd.f32 %v3739, %v3812
    %v3816 = vxor.u32 %v3815, 2147483648
    %v3817 = vmul.f32 %v3816, 1.442695
    %v3818 = vpow.pop %v3817
    %v3819 = vadd.f32 %v3818, 1.0
    %v3820 = vrcp.pop %v3819
    %v3821 = vmul.f32 1.0, %v3820
    %v3822 = vtanh.pop %v3815
    %v3823 = vmul.f32 %v3821, %v3566
    %3825 = vrot.lane.b32.xlu0 %v3822, 108
    %v3826 = vpop.permute.xlu0 %3825
    %v3828 = vmul.f32 %v3821, %v3826
    %3830 = vrot.lane.b32.xlu0 %v3828, 10
    %v3831 = vpop.permute.xlu0 %3830
    %v3833 = vadd.f32 %v3823, %v3831
    %v3834 = vtanh.pop %v3833
    %3836 = vrot.lane.b32.xlu0 %v3834, 20
    %v3837 = vpop.permute.xlu0 %3836
    %v3839 = vmul.f32 %v3821, %v3837
    %s3840 = scalar_lea.vmem %s0, 28
    %v3841 = vld [vmem:[%s3840] sm:$0x3]
    %s3842 = scalar_lea.vmem %s1, 28
    %v3843 = vld [vmem:[%s3842] sm:$0x3]
    %s3844 = scalar_lea.vmem %s2, 28
    %v3845 = vld [vmem:[%s3844] sm:$0x3]
    %3847 = vset.pattern.permute.xlu0 0
    %3848 = vperm.xlu0 %3847, %v3843
    %v3849 = vpop.permute.xlu0 %3848
    %v3851 = vmul.f32 %v3849, %v84
    %v3853 = vsel %vm109, %v3841, 0
    %3855 = vmatprep.subr.mxu0 0.0
    %3856 = vmatpush1.msra.mxu0 0.0
    %3857 = vmatprep.subr.mxu0 0.0
    %3858 = vmatpush1.msra.mxu0 0.0
    %3859 = vmatprep.subr.mxu0 0.0
    %3860 = vmatpush1.msra.mxu0 0.0
    %3861 = vmatprep.subr.mxu0 0.0
    %3862 = vmatpush1.msra.mxu0 0.0
    %3863 = vmatprep.subr.mxu0 0.0
    %3864 = vmatpush1.msra.mxu0 0.0
    %3865 = vmatprep.subr.mxu0 0.0
    %3866 = vmatpush1.msra.mxu0 0.0
    %3867 = vmatprep.subr.mxu0 0.0
    %3868 = vmatpush1.msra.mxu0 0.0
    %3869 = vmatprep.subr.mxu0 0.0
    %3870 = vmatpush1.msra.mxu0 0.0
    %3871 = vmatprep.subr.mxu0 0.0
    %3872 = vmatpush1.msra.mxu0 0.0
    %3873 = vmatprep.subr.mxu0 0.0
    %3874 = vmatpush1.msra.mxu0 0.0
    %3875 = vmatprep.subr.mxu0 0.0
    %3876 = vmatpush1.msra.mxu0 0.0
    %3877 = vmatprep.subr.mxu0 0.0
    %3878 = vmatpush1.msra.mxu0 0.0
    %3879 = vmatprep.subr.mxu0 0.0
    %3880 = vmatpush1.msra.mxu0 0.0
    %3881 = vmatprep.subr.mxu0 0.0
    %3882 = vmatpush1.msra.mxu0 0.0
    %3883 = vmatprep.subr.mxu0 0.0
    %3884 = vmatpush1.msra.mxu0 %v115
    %3885 = vmatprep.subr.mxu0 0.0
    %3886 = vmatpush1.msra.mxu0 %v47
    %3887 = vmatprep.subr.mxu0 0.0
    %3888 = vmatpush2.msra.mxu0 0.0
    %3889 = vmatprep.subr.mxu0 0.0
    %3890 = vmatpush2.msra.mxu0 0.0
    %3891 = vmatprep.subr.mxu0 0.0
    %3892 = vmatpush2.msra.mxu0 0.0
    %3893 = vmatprep.subr.mxu0 0.0
    %3894 = vmatpush2.msra.mxu0 0.0
    %3895 = vmatprep.subr.mxu0 0.0
    %3896 = vmatpush2.msra.mxu0 0.0
    %3897 = vmatprep.subr.mxu0 0.0
    %3898 = vmatpush2.msra.mxu0 0.0
    %3899 = vmatprep.subr.mxu0 0.0
    %3900 = vmatpush2.msra.mxu0 0.0
    %3901 = vmatprep.subr.mxu0 0.0
    %3902 = vmatpush2.msra.mxu0 0.0
    %3903 = vmatprep.subr.mxu0 0.0
    %3904 = vmatpush2.msra.mxu0 0.0
    %3905 = vmatprep.subr.mxu0 0.0
    %3906 = vmatpush2.msra.mxu0 0.0
    %3907 = vmatprep.subr.mxu0 0.0
    %3908 = vmatpush2.msra.mxu0 0.0
    %3909 = vmatprep.subr.mxu0 0.0
    %3910 = vmatpush2.msra.mxu0 0.0
    %3911 = vmatprep.subr.mxu0 0.0
    %3912 = vmatpush2.msra.mxu0 0.0
    %3913 = vmatprep.subr.mxu0 0.0
    %3914 = vmatpush2.msra.mxu0 0.0
    %3915 = vmatprep.subr.mxu0 0.0
    %3916 = vmatpush2.msra.mxu0 0.0
    %3917 = vmatprep.subr.mxu0 0.0
    %3918 = vmatpush2.msra.mxu0 0.0
    %3919 = vmatprep.mubr.f32.mxu0 0.0
    %3920 = vmatmul.mubr.f32.gmra.mxu0 %v3853
    %v3921 = vpop.f32.mrf.mxu0
    %v3922 = vadd.f32 %v3851, %v3921
    %v3923 = vpop.f32.mrf.mxu0
    %3924 = vdwg.mxu0
    %v3925 = vadd.f32 %v3922, %v98
    %3927 = vset.pattern.permute.xlu0 0
    %3928 = vperm.xlu0 %3927, %v3845
    %v3929 = vpop.permute.xlu0 %3928
    %v3931 = vmul.f32 %v3929, %v56
    %v3932 = vadd.f32 %v3931, %v63
    %v3933 = vmax.f32 %v3932, 0.0
    %v3934 = vsub.f32 0.0, %v3933
    %v3935 = vmul.f32 %v3934, 1.442695
    %v3936 = vpow.pop %v3935
    %3938 = vrot.lane.b32.xlu0 %v3936, 30
    %v3939 = vpop.permute.xlu0 %3938
    %v3941 = vmul.f32 %v3839, %v3939
    %v3942 = vmul.f32 %v3941, %v469
    %3944 = vrot.lane.b32.xlu0 %v3942, 98
    %v3945 = vpop.permute.xlu0 %3944
    %v3947 = vsel %vm201, %v3945, 0.0
    %3948 = vadd.xlane.f32.xlu0 %v3947
    %v3949 = vpop.xlane.xlu0 %3948
    %v3950 = vadd.f32 %v3949, %v77
    %3951 = vrot.lane.b32.xlu0 %v3843, 2
    %v3952 = vpop.permute.xlu0 %3951
    %v3954 = vmul.f32 %v3841, %v3952
    %v3955 = vsub.f32 1.0, %v3843
    %v3956 = vmul.f32 %v3955, %v3950
    %3958 = vrot.lane.b32.xlu0 %v3956, 2
    %v3959 = vpop.permute.xlu0 %3958
    %v3961 = vadd.f32 %v3954, %v3959
    %3963 = vrot.lane.b32.xlu0 %v3950, 2
    %v3964 = vpop.permute.xlu0 %3963
    %v3966 = vsub.f32 %v3961, %v3964
    %v3967 = vand.u32 2147483647, %v3966
    %v3968 = vmul.f32 %v3967, %v3952
    %3970 = vrot.lane.b32.xlu0 %v3968, 126
    %v3971 = vpop.permute.xlu0 %3970
    %v3973 = vsel %vm228, %v3971, 0.0
    %3974 = vadd.xlane.f32.xlu0 %v3973
    %v3975 = vpop.xlane.xlu0 %3974
    %v3976 = vrot.slane %v3975, 4
    %v3977 = vadd.f32 %v3975, %v3976
    %v3978 = vrot.slane %v3977, 2
    %v3979 = vadd.f32 %v3977, %v3978
    %v3980 = vrot.slane %v3979, 1
    %v3981 = vadd.f32 %v3979, %v3980
    %s3982 = vtos %v3981
    %v3983 = vstv %s3982
    %v3984 = vsel %vm228, %v3843, 0.0
    %3985 = vadd.xlane.f32.xlu0 %v3984
    %v3986 = vpop.xlane.xlu0 %3985
    %v3987 = vrot.slane %v3986, 4
    %v3988 = vadd.f32 %v3986, %v3987
    %v3989 = vrot.slane %v3988, 2
    %v3990 = vadd.f32 %v3988, %v3989
    %v3991 = vrot.slane %v3990, 1
    %v3992 = vadd.f32 %v3990, %v3991
    %s3993 = vtos %v3992
    %v3994 = vstv %s3993
    %v3995 = vadd.f32 %v3994, 1e-05
    %v3996 = vrcp.pop %v3995
    %v3997 = vmul.f32 %v3983, %v3996
    %v3998 = vadd.f32 %v3731, %v3997
    %v3999 = vsub.f32 %v3961, %v3841
    %4001 = vset.pattern.permute.xlu0 2
    %4002 = vperm.xlu0 %4001, %v3999
    %v4003 = vpop.permute.xlu0 %4002
    %v4005 = vmul.f32 %v4003, %v91
    %v4006 = vadd.f32 %v3925, %v4005
    %4008 = vrot.lane.b32.xlu0 %v3941, 98
    %v4009 = vpop.permute.xlu0 %4008
    %v4010 = vsel %vm263, %v4009, 0
    %4012 = vmatprep.subr.mxu0 0.0
    %4013 = vmatpush1.msra.mxu0 0.0
    %4014 = vmatprep.subr.mxu0 0.0
    %4015 = vmatpush1.msra.mxu0 0.0
    %4016 = vmatprep.subr.mxu0 0.0
    %4017 = vmatpush1.msra.mxu0 0.0
    %4018 = vmatprep.subr.mxu0 0.0
    %4019 = vmatpush1.msra.mxu0 0.0
    %4020 = vmatprep.subr.mxu0 0.0
    %4021 = vmatpush1.msra.mxu0 0.0
    %4022 = vmatprep.subr.mxu0 0.0
    %4023 = vmatpush1.msra.mxu0 0.0
    %4024 = vmatprep.subr.mxu0 0.0
    %4025 = vmatpush1.msra.mxu0 0.0
    %4026 = vmatprep.subr.mxu0 0.0
    %4027 = vmatpush1.msra.mxu0 0.0
    %4028 = vmatprep.subr.mxu0 0.0
    %4029 = vmatpush1.msra.mxu0 0.0
    %4030 = vmatprep.subr.mxu0 0.0
    %4031 = vmatpush1.msra.mxu0 0.0
    %4032 = vmatprep.subr.mxu0 0.0
    %4033 = vmatpush1.msra.mxu0 0.0
    %4034 = vmatprep.subr.mxu0 0.0
    %4035 = vmatpush1.msra.mxu0 0.0
    %4036 = vmatprep.subr.mxu0 0.0
    %4037 = vmatpush1.msra.mxu0 0.0
    %4038 = vmatprep.subr.mxu0 0.0
    %4039 = vmatpush1.msra.mxu0 0.0
    %4040 = vmatprep.subr.mxu0 0.0
    %4041 = vmatpush1.msra.mxu0 %v269
    %4042 = vmatprep.subr.mxu0 0.0
    %4043 = vmatpush1.msra.mxu0 %v49
    %4044 = vmatprep.subr.mxu0 0.0
    %4045 = vmatpush2.msra.mxu0 0.0
    %4046 = vmatprep.subr.mxu0 0.0
    %4047 = vmatpush2.msra.mxu0 0.0
    %4048 = vmatprep.subr.mxu0 0.0
    %4049 = vmatpush2.msra.mxu0 0.0
    %4050 = vmatprep.subr.mxu0 0.0
    %4051 = vmatpush2.msra.mxu0 0.0
    %4052 = vmatprep.subr.mxu0 0.0
    %4053 = vmatpush2.msra.mxu0 0.0
    %4054 = vmatprep.subr.mxu0 0.0
    %4055 = vmatpush2.msra.mxu0 0.0
    %4056 = vmatprep.subr.mxu0 0.0
    %4057 = vmatpush2.msra.mxu0 0.0
    %4058 = vmatprep.subr.mxu0 0.0
    %4059 = vmatpush2.msra.mxu0 0.0
    %4060 = vmatprep.subr.mxu0 0.0
    %4061 = vmatpush2.msra.mxu0 0.0
    %4062 = vmatprep.subr.mxu0 0.0
    %4063 = vmatpush2.msra.mxu0 0.0
    %4064 = vmatprep.subr.mxu0 0.0
    %4065 = vmatpush2.msra.mxu0 0.0
    %4066 = vmatprep.subr.mxu0 0.0
    %4067 = vmatpush2.msra.mxu0 0.0
    %4068 = vmatprep.subr.mxu0 0.0
    %4069 = vmatpush2.msra.mxu0 0.0
    %4070 = vmatprep.subr.mxu0 0.0
    %4071 = vmatpush2.msra.mxu0 0.0
    %4072 = vmatprep.subr.mxu0 0.0
    %4073 = vmatpush2.msra.mxu0 0.0
    %4074 = vmatprep.subr.mxu0 0.0
    %4075 = vmatpush2.msra.mxu0 0.0
    %4076 = vmatprep.mubr.f32.mxu0 0.0
    %4077 = vmatmul.mubr.f32.gmra.mxu0 %v4010
    %v4078 = vpop.f32.mrf.mxu0
    %v4079 = vadd.f32 0.0, %v4078
    %v4080 = vpop.f32.mrf.mxu0
    %4081 = vdwg.mxu0
    %v4082 = vadd.f32 %v4006, %v4079
    %v4083 = vxor.u32 %v4082, 2147483648
    %v4084 = vmul.f32 %v4083, 1.442695
    %v4085 = vpow.pop %v4084
    %v4086 = vadd.f32 %v4085, 1.0
    %v4087 = vrcp.pop %v4086
    %v4088 = vmul.f32 1.0, %v4087
    %v4089 = vtanh.pop %v4082
    %v4090 = vmul.f32 %v4088, %v3833
    %4092 = vrot.lane.b32.xlu0 %v4089, 108
    %v4093 = vpop.permute.xlu0 %4092
    %v4095 = vmul.f32 %v4088, %v4093
    %4097 = vrot.lane.b32.xlu0 %v4095, 10
    %v4098 = vpop.permute.xlu0 %4097
    %v4100 = vadd.f32 %v4090, %v4098
    %v4101 = vtanh.pop %v4100
    %4103 = vrot.lane.b32.xlu0 %v4101, 20
    %v4104 = vpop.permute.xlu0 %4103
    %v4106 = vmul.f32 %v4088, %v4104
    %s4107 = scalar_lea.vmem %s0, 30
    %v4108 = vld [vmem:[%s4107] sm:$0x3]
    %s4109 = scalar_lea.vmem %s1, 30
    %v4110 = vld [vmem:[%s4109] sm:$0x3]
    %s4111 = scalar_lea.vmem %s2, 30
    %v4112 = vld [vmem:[%s4111] sm:$0x3]
    %4114 = vset.pattern.permute.xlu0 0
    %4115 = vperm.xlu0 %4114, %v4110
    %v4116 = vpop.permute.xlu0 %4115
    %v4118 = vmul.f32 %v4116, %v84
    %v4120 = vsel %vm109, %v4108, 0
    %4122 = vmatprep.subr.mxu0 0.0
    %4123 = vmatpush1.msra.mxu0 0.0
    %4124 = vmatprep.subr.mxu0 0.0
    %4125 = vmatpush1.msra.mxu0 0.0
    %4126 = vmatprep.subr.mxu0 0.0
    %4127 = vmatpush1.msra.mxu0 0.0
    %4128 = vmatprep.subr.mxu0 0.0
    %4129 = vmatpush1.msra.mxu0 0.0
    %4130 = vmatprep.subr.mxu0 0.0
    %4131 = vmatpush1.msra.mxu0 0.0
    %4132 = vmatprep.subr.mxu0 0.0
    %4133 = vmatpush1.msra.mxu0 0.0
    %4134 = vmatprep.subr.mxu0 0.0
    %4135 = vmatpush1.msra.mxu0 0.0
    %4136 = vmatprep.subr.mxu0 0.0
    %4137 = vmatpush1.msra.mxu0 0.0
    %4138 = vmatprep.subr.mxu0 0.0
    %4139 = vmatpush1.msra.mxu0 0.0
    %4140 = vmatprep.subr.mxu0 0.0
    %4141 = vmatpush1.msra.mxu0 0.0
    %4142 = vmatprep.subr.mxu0 0.0
    %4143 = vmatpush1.msra.mxu0 0.0
    %4144 = vmatprep.subr.mxu0 0.0
    %4145 = vmatpush1.msra.mxu0 0.0
    %4146 = vmatprep.subr.mxu0 0.0
    %4147 = vmatpush1.msra.mxu0 0.0
    %4148 = vmatprep.subr.mxu0 0.0
    %4149 = vmatpush1.msra.mxu0 0.0
    %4150 = vmatprep.subr.mxu0 0.0
    %4151 = vmatpush1.msra.mxu0 %v115
    %4152 = vmatprep.subr.mxu0 0.0
    %4153 = vmatpush1.msra.mxu0 %v47
    %4154 = vmatprep.subr.mxu0 0.0
    %4155 = vmatpush2.msra.mxu0 0.0
    %4156 = vmatprep.subr.mxu0 0.0
    %4157 = vmatpush2.msra.mxu0 0.0
    %4158 = vmatprep.subr.mxu0 0.0
    %4159 = vmatpush2.msra.mxu0 0.0
    %4160 = vmatprep.subr.mxu0 0.0
    %4161 = vmatpush2.msra.mxu0 0.0
    %4162 = vmatprep.subr.mxu0 0.0
    %4163 = vmatpush2.msra.mxu0 0.0
    %4164 = vmatprep.subr.mxu0 0.0
    %4165 = vmatpush2.msra.mxu0 0.0
    %4166 = vmatprep.subr.mxu0 0.0
    %4167 = vmatpush2.msra.mxu0 0.0
    %4168 = vmatprep.subr.mxu0 0.0
    %4169 = vmatpush2.msra.mxu0 0.0
    %4170 = vmatprep.subr.mxu0 0.0
    %4171 = vmatpush2.msra.mxu0 0.0
    %4172 = vmatprep.subr.mxu0 0.0
    %4173 = vmatpush2.msra.mxu0 0.0
    %4174 = vmatprep.subr.mxu0 0.0
    %4175 = vmatpush2.msra.mxu0 0.0
    %4176 = vmatprep.subr.mxu0 0.0
    %4177 = vmatpush2.msra.mxu0 0.0
    %4178 = vmatprep.subr.mxu0 0.0
    %4179 = vmatpush2.msra.mxu0 0.0
    %4180 = vmatprep.subr.mxu0 0.0
    %4181 = vmatpush2.msra.mxu0 0.0
    %4182 = vmatprep.subr.mxu0 0.0
    %4183 = vmatpush2.msra.mxu0 0.0
    %4184 = vmatprep.subr.mxu0 0.0
    %4185 = vmatpush2.msra.mxu0 0.0
    %4186 = vmatprep.mubr.f32.mxu0 0.0
    %4187 = vmatmul.mubr.f32.gmra.mxu0 %v4120
    %v4188 = vpop.f32.mrf.mxu0
    %v4189 = vadd.f32 %v4118, %v4188
    %v4190 = vpop.f32.mrf.mxu0
    %4191 = vdwg.mxu0
    %v4192 = vadd.f32 %v4189, %v98
    %4194 = vset.pattern.permute.xlu0 0
    %4195 = vperm.xlu0 %4194, %v4112
    %v4196 = vpop.permute.xlu0 %4195
    %v4198 = vmul.f32 %v4196, %v56
    %v4199 = vadd.f32 %v4198, %v63
    %v4200 = vmax.f32 %v4199, 0.0
    %v4201 = vsub.f32 0.0, %v4200
    %v4202 = vmul.f32 %v4201, 1.442695
    %v4203 = vpow.pop %v4202
    %4205 = vrot.lane.b32.xlu0 %v4203, 30
    %v4206 = vpop.permute.xlu0 %4205
    %v4208 = vmul.f32 %v4106, %v4206
    %v4209 = vmul.f32 %v4208, %v469
    %4211 = vrot.lane.b32.xlu0 %v4209, 98
    %v4212 = vpop.permute.xlu0 %4211
    %v4214 = vsel %vm201, %v4212, 0.0
    %4215 = vadd.xlane.f32.xlu0 %v4214
    %v4216 = vpop.xlane.xlu0 %4215
    %v4217 = vadd.f32 %v4216, %v77
    %4218 = vrot.lane.b32.xlu0 %v4110, 2
    %v4219 = vpop.permute.xlu0 %4218
    %v4221 = vmul.f32 %v4108, %v4219
    %v4222 = vsub.f32 1.0, %v4110
    %v4223 = vmul.f32 %v4222, %v4217
    %4225 = vrot.lane.b32.xlu0 %v4223, 2
    %v4226 = vpop.permute.xlu0 %4225
    %v4228 = vadd.f32 %v4221, %v4226
    %4230 = vrot.lane.b32.xlu0 %v4217, 2
    %v4231 = vpop.permute.xlu0 %4230
    %v4233 = vsub.f32 %v4228, %v4231
    %v4234 = vand.u32 2147483647, %v4233
    %v4235 = vmul.f32 %v4234, %v4219
    %4237 = vrot.lane.b32.xlu0 %v4235, 126
    %v4238 = vpop.permute.xlu0 %4237
    %v4240 = vsel %vm228, %v4238, 0.0
    %4241 = vadd.xlane.f32.xlu0 %v4240
    %v4242 = vpop.xlane.xlu0 %4241
    %v4243 = vrot.slane %v4242, 4
    %v4244 = vadd.f32 %v4242, %v4243
    %v4245 = vrot.slane %v4244, 2
    %v4246 = vadd.f32 %v4244, %v4245
    %v4247 = vrot.slane %v4246, 1
    %v4248 = vadd.f32 %v4246, %v4247
    %s4249 = vtos %v4248
    %v4250 = vstv %s4249
    %v4251 = vsel %vm228, %v4110, 0.0
    %4252 = vadd.xlane.f32.xlu0 %v4251
    %v4253 = vpop.xlane.xlu0 %4252
    %v4254 = vrot.slane %v4253, 4
    %v4255 = vadd.f32 %v4253, %v4254
    %v4256 = vrot.slane %v4255, 2
    %v4257 = vadd.f32 %v4255, %v4256
    %v4258 = vrot.slane %v4257, 1
    %v4259 = vadd.f32 %v4257, %v4258
    %s4260 = vtos %v4259
    %v4261 = vstv %s4260
    %v4262 = vadd.f32 %v4261, 1e-05
    %v4263 = vrcp.pop %v4262
    %v4264 = vmul.f32 %v4250, %v4263
    %v4265 = vadd.f32 %v3998, %v4264
    %v4266 = vsub.f32 %v4228, %v4108
    %4268 = vset.pattern.permute.xlu0 2
    %4269 = vperm.xlu0 %4268, %v4266
    %v4270 = vpop.permute.xlu0 %4269
    %v4272 = vmul.f32 %v4270, %v91
    %v4273 = vadd.f32 %v4192, %v4272
    %4275 = vrot.lane.b32.xlu0 %v4208, 98
    %v4276 = vpop.permute.xlu0 %4275
    %v4277 = vsel %vm263, %v4276, 0
    %4279 = vmatprep.subr.mxu0 0.0
    %4280 = vmatpush1.msra.mxu0 0.0
    %4281 = vmatprep.subr.mxu0 0.0
    %4282 = vmatpush1.msra.mxu0 0.0
    %4283 = vmatprep.subr.mxu0 0.0
    %4284 = vmatpush1.msra.mxu0 0.0
    %4285 = vmatprep.subr.mxu0 0.0
    %4286 = vmatpush1.msra.mxu0 0.0
    %4287 = vmatprep.subr.mxu0 0.0
    %4288 = vmatpush1.msra.mxu0 0.0
    %4289 = vmatprep.subr.mxu0 0.0
    %4290 = vmatpush1.msra.mxu0 0.0
    %4291 = vmatprep.subr.mxu0 0.0
    %4292 = vmatpush1.msra.mxu0 0.0
    %4293 = vmatprep.subr.mxu0 0.0
    %4294 = vmatpush1.msra.mxu0 0.0
    %4295 = vmatprep.subr.mxu0 0.0
    %4296 = vmatpush1.msra.mxu0 0.0
    %4297 = vmatprep.subr.mxu0 0.0
    %4298 = vmatpush1.msra.mxu0 0.0
    %4299 = vmatprep.subr.mxu0 0.0
    %4300 = vmatpush1.msra.mxu0 0.0
    %4301 = vmatprep.subr.mxu0 0.0
    %4302 = vmatpush1.msra.mxu0 0.0
    %4303 = vmatprep.subr.mxu0 0.0
    %4304 = vmatpush1.msra.mxu0 0.0
    %4305 = vmatprep.subr.mxu0 0.0
    %4306 = vmatpush1.msra.mxu0 0.0
    %4307 = vmatprep.subr.mxu0 0.0
    %4308 = vmatpush1.msra.mxu0 %v269
    %4309 = vmatprep.subr.mxu0 0.0
    %4310 = vmatpush1.msra.mxu0 %v49
    %4311 = vmatprep.subr.mxu0 0.0
    %4312 = vmatpush2.msra.mxu0 0.0
    %4313 = vmatprep.subr.mxu0 0.0
    %4314 = vmatpush2.msra.mxu0 0.0
    %4315 = vmatprep.subr.mxu0 0.0
    %4316 = vmatpush2.msra.mxu0 0.0
    %4317 = vmatprep.subr.mxu0 0.0
    %4318 = vmatpush2.msra.mxu0 0.0
    %4319 = vmatprep.subr.mxu0 0.0
    %4320 = vmatpush2.msra.mxu0 0.0
    %4321 = vmatprep.subr.mxu0 0.0
    %4322 = vmatpush2.msra.mxu0 0.0
    %4323 = vmatprep.subr.mxu0 0.0
    %4324 = vmatpush2.msra.mxu0 0.0
    %4325 = vmatprep.subr.mxu0 0.0
    %4326 = vmatpush2.msra.mxu0 0.0
    %4327 = vmatprep.subr.mxu0 0.0
    %4328 = vmatpush2.msra.mxu0 0.0
    %4329 = vmatprep.subr.mxu0 0.0
    %4330 = vmatpush2.msra.mxu0 0.0
    %4331 = vmatprep.subr.mxu0 0.0
    %4332 = vmatpush2.msra.mxu0 0.0
    %4333 = vmatprep.subr.mxu0 0.0
    %4334 = vmatpush2.msra.mxu0 0.0
    %4335 = vmatprep.subr.mxu0 0.0
    %4336 = vmatpush2.msra.mxu0 0.0
    %4337 = vmatprep.subr.mxu0 0.0
    %4338 = vmatpush2.msra.mxu0 0.0
    %4339 = vmatprep.subr.mxu0 0.0
    %4340 = vmatpush2.msra.mxu0 0.0
    %4341 = vmatprep.subr.mxu0 0.0
    %4342 = vmatpush2.msra.mxu0 0.0
    %4343 = vmatprep.mubr.f32.mxu0 0.0
    %4344 = vmatmul.mubr.f32.gmra.mxu0 %v4277
    %v4345 = vpop.f32.mrf.mxu0
    %v4346 = vadd.f32 0.0, %v4345
    %v4347 = vpop.f32.mrf.mxu0
    %4348 = vdwg.mxu0
    %v4349 = vadd.f32 %v4273, %v4346
    %v4350 = vxor.u32 %v4349, 2147483648
    %v4351 = vmul.f32 %v4350, 1.442695
    %v4352 = vpow.pop %v4351
    %v4353 = vadd.f32 %v4352, 1.0
    %v4354 = vrcp.pop %v4353
    %v4355 = vmul.f32 1.0, %v4354
    %v4356 = vtanh.pop %v4349
    %v4357 = vmul.f32 %v4355, %v4100
    %4359 = vrot.lane.b32.xlu0 %v4356, 108
    %v4360 = vpop.permute.xlu0 %4359
    %v4362 = vmul.f32 %v4355, %v4360
    %4364 = vrot.lane.b32.xlu0 %v4362, 10
    %v4365 = vpop.permute.xlu0 %4364
    %v4367 = vadd.f32 %v4357, %v4365
    %v4368 = vtanh.pop %v4367
    %4370 = vrot.lane.b32.xlu0 %v4368, 20
    %v4371 = vpop.permute.xlu0 %4370
    %v4373 = vmul.f32 %v4355, %v4371
    %s4374 = scalar_lea.vmem %s0, 32
    %v4375 = vld [vmem:[%s4374] sm:$0x3]
    %s4376 = scalar_lea.vmem %s1, 32
    %v4377 = vld [vmem:[%s4376] sm:$0x3]
    %s4378 = scalar_lea.vmem %s2, 32
    %v4379 = vld [vmem:[%s4378] sm:$0x3]
    %4381 = vset.pattern.permute.xlu0 0
    %4382 = vperm.xlu0 %4381, %v4377
    %v4383 = vpop.permute.xlu0 %4382
    %v4385 = vmul.f32 %v4383, %v84
    %v4387 = vsel %vm109, %v4375, 0
    %4389 = vmatprep.subr.mxu0 0.0
    %4390 = vmatpush1.msra.mxu0 0.0
    %4391 = vmatprep.subr.mxu0 0.0
    %4392 = vmatpush1.msra.mxu0 0.0
    %4393 = vmatprep.subr.mxu0 0.0
    %4394 = vmatpush1.msra.mxu0 0.0
    %4395 = vmatprep.subr.mxu0 0.0
    %4396 = vmatpush1.msra.mxu0 0.0
    %4397 = vmatprep.subr.mxu0 0.0
    %4398 = vmatpush1.msra.mxu0 0.0
    %4399 = vmatprep.subr.mxu0 0.0
    %4400 = vmatpush1.msra.mxu0 0.0
    %4401 = vmatprep.subr.mxu0 0.0
    %4402 = vmatpush1.msra.mxu0 0.0
    %4403 = vmatprep.subr.mxu0 0.0
    %4404 = vmatpush1.msra.mxu0 0.0
    %4405 = vmatprep.subr.mxu0 0.0
    %4406 = vmatpush1.msra.mxu0 0.0
    %4407 = vmatprep.subr.mxu0 0.0
    %4408 = vmatpush1.msra.mxu0 0.0
    %4409 = vmatprep.subr.mxu0 0.0
    %4410 = vmatpush1.msra.mxu0 0.0
    %4411 = vmatprep.subr.mxu0 0.0
    %4412 = vmatpush1.msra.mxu0 0.0
    %4413 = vmatprep.subr.mxu0 0.0
    %4414 = vmatpush1.msra.mxu0 0.0
    %4415 = vmatprep.subr.mxu0 0.0
    %4416 = vmatpush1.msra.mxu0 0.0
    %4417 = vmatprep.subr.mxu0 0.0
    %4418 = vmatpush1.msra.mxu0 %v115
    %4419 = vmatprep.subr.mxu0 0.0
    %4420 = vmatpush1.msra.mxu0 %v47
    %4421 = vmatprep.subr.mxu0 0.0
    %4422 = vmatpush2.msra.mxu0 0.0
    %4423 = vmatprep.subr.mxu0 0.0
    %4424 = vmatpush2.msra.mxu0 0.0
    %4425 = vmatprep.subr.mxu0 0.0
    %4426 = vmatpush2.msra.mxu0 0.0
    %4427 = vmatprep.subr.mxu0 0.0
    %4428 = vmatpush2.msra.mxu0 0.0
    %4429 = vmatprep.subr.mxu0 0.0
    %4430 = vmatpush2.msra.mxu0 0.0
    %4431 = vmatprep.subr.mxu0 0.0
    %4432 = vmatpush2.msra.mxu0 0.0
    %4433 = vmatprep.subr.mxu0 0.0
    %4434 = vmatpush2.msra.mxu0 0.0
    %4435 = vmatprep.subr.mxu0 0.0
    %4436 = vmatpush2.msra.mxu0 0.0
    %4437 = vmatprep.subr.mxu0 0.0
    %4438 = vmatpush2.msra.mxu0 0.0
    %4439 = vmatprep.subr.mxu0 0.0
    %4440 = vmatpush2.msra.mxu0 0.0
    %4441 = vmatprep.subr.mxu0 0.0
    %4442 = vmatpush2.msra.mxu0 0.0
    %4443 = vmatprep.subr.mxu0 0.0
    %4444 = vmatpush2.msra.mxu0 0.0
    %4445 = vmatprep.subr.mxu0 0.0
    %4446 = vmatpush2.msra.mxu0 0.0
    %4447 = vmatprep.subr.mxu0 0.0
    %4448 = vmatpush2.msra.mxu0 0.0
    %4449 = vmatprep.subr.mxu0 0.0
    %4450 = vmatpush2.msra.mxu0 0.0
    %4451 = vmatprep.subr.mxu0 0.0
    %4452 = vmatpush2.msra.mxu0 0.0
    %4453 = vmatprep.mubr.f32.mxu0 0.0
    %4454 = vmatmul.mubr.f32.gmra.mxu0 %v4387
    %v4455 = vpop.f32.mrf.mxu0
    %v4456 = vadd.f32 %v4385, %v4455
    %v4457 = vpop.f32.mrf.mxu0
    %4458 = vdwg.mxu0
    %v4459 = vadd.f32 %v4456, %v98
    %4461 = vset.pattern.permute.xlu0 0
    %4462 = vperm.xlu0 %4461, %v4379
    %v4463 = vpop.permute.xlu0 %4462
    %v4465 = vmul.f32 %v4463, %v56
    %v4466 = vadd.f32 %v4465, %v63
    %v4467 = vmax.f32 %v4466, 0.0
    %v4468 = vsub.f32 0.0, %v4467
    %v4469 = vmul.f32 %v4468, 1.442695
    %v4470 = vpow.pop %v4469
    %4472 = vrot.lane.b32.xlu0 %v4470, 30
    %v4473 = vpop.permute.xlu0 %4472
    %v4475 = vmul.f32 %v4373, %v4473
    %v4476 = vmul.f32 %v4475, %v469
    %4478 = vrot.lane.b32.xlu0 %v4476, 98
    %v4479 = vpop.permute.xlu0 %4478
    %v4481 = vsel %vm201, %v4479, 0.0
    %4482 = vadd.xlane.f32.xlu0 %v4481
    %v4483 = vpop.xlane.xlu0 %4482
    %v4484 = vadd.f32 %v4483, %v77
    %4485 = vrot.lane.b32.xlu0 %v4377, 2
    %v4486 = vpop.permute.xlu0 %4485
    %v4488 = vmul.f32 %v4375, %v4486
    %v4489 = vsub.f32 1.0, %v4377
    %v4490 = vmul.f32 %v4489, %v4484
    %4492 = vrot.lane.b32.xlu0 %v4490, 2
    %v4493 = vpop.permute.xlu0 %4492
    %v4495 = vadd.f32 %v4488, %v4493
    %4497 = vrot.lane.b32.xlu0 %v4484, 2
    %v4498 = vpop.permute.xlu0 %4497
    %v4500 = vsub.f32 %v4495, %v4498
    %v4501 = vand.u32 2147483647, %v4500
    %v4502 = vmul.f32 %v4501, %v4486
    %4504 = vrot.lane.b32.xlu0 %v4502, 126
    %v4505 = vpop.permute.xlu0 %4504
    %v4507 = vsel %vm228, %v4505, 0.0
    %4508 = vadd.xlane.f32.xlu0 %v4507
    %v4509 = vpop.xlane.xlu0 %4508
    %v4510 = vrot.slane %v4509, 4
    %v4511 = vadd.f32 %v4509, %v4510
    %v4512 = vrot.slane %v4511, 2
    %v4513 = vadd.f32 %v4511, %v4512
    %v4514 = vrot.slane %v4513, 1
    %v4515 = vadd.f32 %v4513, %v4514
    %s4516 = vtos %v4515
    %v4517 = vstv %s4516
    %v4518 = vsel %vm228, %v4377, 0.0
    %4519 = vadd.xlane.f32.xlu0 %v4518
    %v4520 = vpop.xlane.xlu0 %4519
    %v4521 = vrot.slane %v4520, 4
    %v4522 = vadd.f32 %v4520, %v4521
    %v4523 = vrot.slane %v4522, 2
    %v4524 = vadd.f32 %v4522, %v4523
    %v4525 = vrot.slane %v4524, 1
    %v4526 = vadd.f32 %v4524, %v4525
    %s4527 = vtos %v4526
    %v4528 = vstv %s4527
    %v4529 = vadd.f32 %v4528, 1e-05
    %v4530 = vrcp.pop %v4529
    %v4531 = vmul.f32 %v4517, %v4530
    %v4532 = vadd.f32 %v4265, %v4531
    %v4533 = vsub.f32 %v4495, %v4375
    %4535 = vset.pattern.permute.xlu0 2
    %4536 = vperm.xlu0 %4535, %v4533
    %v4537 = vpop.permute.xlu0 %4536
    %v4539 = vmul.f32 %v4537, %v91
    %v4540 = vadd.f32 %v4459, %v4539
    %4542 = vrot.lane.b32.xlu0 %v4475, 98
    %v4543 = vpop.permute.xlu0 %4542
    %v4544 = vsel %vm263, %v4543, 0
    %4546 = vmatprep.subr.mxu0 0.0
    %4547 = vmatpush1.msra.mxu0 0.0
    %4548 = vmatprep.subr.mxu0 0.0
    %4549 = vmatpush1.msra.mxu0 0.0
    %4550 = vmatprep.subr.mxu0 0.0
    %4551 = vmatpush1.msra.mxu0 0.0
    %4552 = vmatprep.subr.mxu0 0.0
    %4553 = vmatpush1.msra.mxu0 0.0
    %4554 = vmatprep.subr.mxu0 0.0
    %4555 = vmatpush1.msra.mxu0 0.0
    %4556 = vmatprep.subr.mxu0 0.0
    %4557 = vmatpush1.msra.mxu0 0.0
    %4558 = vmatprep.subr.mxu0 0.0
    %4559 = vmatpush1.msra.mxu0 0.0
    %4560 = vmatprep.subr.mxu0 0.0
    %4561 = vmatpush1.msra.mxu0 0.0
    %4562 = vmatprep.subr.mxu0 0.0
    %4563 = vmatpush1.msra.mxu0 0.0
    %4564 = vmatprep.subr.mxu0 0.0
    %4565 = vmatpush1.msra.mxu0 0.0
    %4566 = vmatprep.subr.mxu0 0.0
    %4567 = vmatpush1.msra.mxu0 0.0
    %4568 = vmatprep.subr.mxu0 0.0
    %4569 = vmatpush1.msra.mxu0 0.0
    %4570 = vmatprep.subr.mxu0 0.0
    %4571 = vmatpush1.msra.mxu0 0.0
    %4572 = vmatprep.subr.mxu0 0.0
    %4573 = vmatpush1.msra.mxu0 0.0
    %4574 = vmatprep.subr.mxu0 0.0
    %4575 = vmatpush1.msra.mxu0 %v269
    %4576 = vmatprep.subr.mxu0 0.0
    %4577 = vmatpush1.msra.mxu0 %v49
    %4578 = vmatprep.subr.mxu0 0.0
    %4579 = vmatpush2.msra.mxu0 0.0
    %4580 = vmatprep.subr.mxu0 0.0
    %4581 = vmatpush2.msra.mxu0 0.0
    %4582 = vmatprep.subr.mxu0 0.0
    %4583 = vmatpush2.msra.mxu0 0.0
    %4584 = vmatprep.subr.mxu0 0.0
    %4585 = vmatpush2.msra.mxu0 0.0
    %4586 = vmatprep.subr.mxu0 0.0
    %4587 = vmatpush2.msra.mxu0 0.0
    %4588 = vmatprep.subr.mxu0 0.0
    %4589 = vmatpush2.msra.mxu0 0.0
    %4590 = vmatprep.subr.mxu0 0.0
    %4591 = vmatpush2.msra.mxu0 0.0
    %4592 = vmatprep.subr.mxu0 0.0
    %4593 = vmatpush2.msra.mxu0 0.0
    %4594 = vmatprep.subr.mxu0 0.0
    %4595 = vmatpush2.msra.mxu0 0.0
    %4596 = vmatprep.subr.mxu0 0.0
    %4597 = vmatpush2.msra.mxu0 0.0
    %4598 = vmatprep.subr.mxu0 0.0
    %4599 = vmatpush2.msra.mxu0 0.0
    %4600 = vmatprep.subr.mxu0 0.0
    %4601 = vmatpush2.msra.mxu0 0.0
    %4602 = vmatprep.subr.mxu0 0.0
    %4603 = vmatpush2.msra.mxu0 0.0
    %4604 = vmatprep.subr.mxu0 0.0
    %4605 = vmatpush2.msra.mxu0 0.0
    %4606 = vmatprep.subr.mxu0 0.0
    %4607 = vmatpush2.msra.mxu0 0.0
    %4608 = vmatprep.subr.mxu0 0.0
    %4609 = vmatpush2.msra.mxu0 0.0
    %4610 = vmatprep.mubr.f32.mxu0 0.0
    %4611 = vmatmul.mubr.f32.gmra.mxu0 %v4544
    %v4612 = vpop.f32.mrf.mxu0
    %v4613 = vadd.f32 0.0, %v4612
    %v4614 = vpop.f32.mrf.mxu0
    %4615 = vdwg.mxu0
    %v4616 = vadd.f32 %v4540, %v4613
    %v4617 = vxor.u32 %v4616, 2147483648
    %v4618 = vmul.f32 %v4617, 1.442695
    %v4619 = vpow.pop %v4618
    %v4620 = vadd.f32 %v4619, 1.0
    %v4621 = vrcp.pop %v4620
    %v4622 = vmul.f32 1.0, %v4621
    %v4623 = vtanh.pop %v4616
    %v4624 = vmul.f32 %v4622, %v4367
    %4626 = vrot.lane.b32.xlu0 %v4623, 108
    %v4627 = vpop.permute.xlu0 %4626
    %v4629 = vmul.f32 %v4622, %v4627
    %4631 = vrot.lane.b32.xlu0 %v4629, 10
    %v4632 = vpop.permute.xlu0 %4631
    %v4634 = vadd.f32 %v4624, %v4632
    %v4635 = vtanh.pop %v4634
    %4637 = vrot.lane.b32.xlu0 %v4635, 20
    %v4638 = vpop.permute.xlu0 %4637
    %v4640 = vmul.f32 %v4622, %v4638
    %s4641 = scalar_lea.vmem %s0, 34
    %v4642 = vld [vmem:[%s4641] sm:$0x3]
    %s4643 = scalar_lea.vmem %s1, 34
    %v4644 = vld [vmem:[%s4643] sm:$0x3]
    %s4645 = scalar_lea.vmem %s2, 34
    %v4646 = vld [vmem:[%s4645] sm:$0x3]
    %4648 = vset.pattern.permute.xlu0 0
    %4649 = vperm.xlu0 %4648, %v4644
    %v4650 = vpop.permute.xlu0 %4649
    %v4652 = vmul.f32 %v4650, %v84
    %v4654 = vsel %vm109, %v4642, 0
    %4656 = vmatprep.subr.mxu0 0.0
    %4657 = vmatpush1.msra.mxu0 0.0
    %4658 = vmatprep.subr.mxu0 0.0
    %4659 = vmatpush1.msra.mxu0 0.0
    %4660 = vmatprep.subr.mxu0 0.0
    %4661 = vmatpush1.msra.mxu0 0.0
    %4662 = vmatprep.subr.mxu0 0.0
    %4663 = vmatpush1.msra.mxu0 0.0
    %4664 = vmatprep.subr.mxu0 0.0
    %4665 = vmatpush1.msra.mxu0 0.0
    %4666 = vmatprep.subr.mxu0 0.0
    %4667 = vmatpush1.msra.mxu0 0.0
    %4668 = vmatprep.subr.mxu0 0.0
    %4669 = vmatpush1.msra.mxu0 0.0
    %4670 = vmatprep.subr.mxu0 0.0
    %4671 = vmatpush1.msra.mxu0 0.0
    %4672 = vmatprep.subr.mxu0 0.0
    %4673 = vmatpush1.msra.mxu0 0.0
    %4674 = vmatprep.subr.mxu0 0.0
    %4675 = vmatpush1.msra.mxu0 0.0
    %4676 = vmatprep.subr.mxu0 0.0
    %4677 = vmatpush1.msra.mxu0 0.0
    %4678 = vmatprep.subr.mxu0 0.0
    %4679 = vmatpush1.msra.mxu0 0.0
    %4680 = vmatprep.subr.mxu0 0.0
    %4681 = vmatpush1.msra.mxu0 0.0
    %4682 = vmatprep.subr.mxu0 0.0
    %4683 = vmatpush1.msra.mxu0 0.0
    %4684 = vmatprep.subr.mxu0 0.0
    %4685 = vmatpush1.msra.mxu0 %v115
    %4686 = vmatprep.subr.mxu0 0.0
    %4687 = vmatpush1.msra.mxu0 %v47
    %4688 = vmatprep.subr.mxu0 0.0
    %4689 = vmatpush2.msra.mxu0 0.0
    %4690 = vmatprep.subr.mxu0 0.0
    %4691 = vmatpush2.msra.mxu0 0.0
    %4692 = vmatprep.subr.mxu0 0.0
    %4693 = vmatpush2.msra.mxu0 0.0
    %4694 = vmatprep.subr.mxu0 0.0
    %4695 = vmatpush2.msra.mxu0 0.0
    %4696 = vmatprep.subr.mxu0 0.0
    %4697 = vmatpush2.msra.mxu0 0.0
    %4698 = vmatprep.subr.mxu0 0.0
    %4699 = vmatpush2.msra.mxu0 0.0
    %4700 = vmatprep.subr.mxu0 0.0
    %4701 = vmatpush2.msra.mxu0 0.0
    %4702 = vmatprep.subr.mxu0 0.0
    %4703 = vmatpush2.msra.mxu0 0.0
    %4704 = vmatprep.subr.mxu0 0.0
    %4705 = vmatpush2.msra.mxu0 0.0
    %4706 = vmatprep.subr.mxu0 0.0
    %4707 = vmatpush2.msra.mxu0 0.0
    %4708 = vmatprep.subr.mxu0 0.0
    %4709 = vmatpush2.msra.mxu0 0.0
    %4710 = vmatprep.subr.mxu0 0.0
    %4711 = vmatpush2.msra.mxu0 0.0
    %4712 = vmatprep.subr.mxu0 0.0
    %4713 = vmatpush2.msra.mxu0 0.0
    %4714 = vmatprep.subr.mxu0 0.0
    %4715 = vmatpush2.msra.mxu0 0.0
    %4716 = vmatprep.subr.mxu0 0.0
    %4717 = vmatpush2.msra.mxu0 0.0
    %4718 = vmatprep.subr.mxu0 0.0
    %4719 = vmatpush2.msra.mxu0 0.0
    %4720 = vmatprep.mubr.f32.mxu0 0.0
    %4721 = vmatmul.mubr.f32.gmra.mxu0 %v4654
    %v4722 = vpop.f32.mrf.mxu0
    %v4723 = vadd.f32 %v4652, %v4722
    %v4724 = vpop.f32.mrf.mxu0
    %4725 = vdwg.mxu0
    %v4726 = vadd.f32 %v4723, %v98
    %4728 = vset.pattern.permute.xlu0 0
    %4729 = vperm.xlu0 %4728, %v4646
    %v4730 = vpop.permute.xlu0 %4729
    %v4732 = vmul.f32 %v4730, %v56
    %v4733 = vadd.f32 %v4732, %v63
    %v4734 = vmax.f32 %v4733, 0.0
    %v4735 = vsub.f32 0.0, %v4734
    %v4736 = vmul.f32 %v4735, 1.442695
    %v4737 = vpow.pop %v4736
    %4739 = vrot.lane.b32.xlu0 %v4737, 30
    %v4740 = vpop.permute.xlu0 %4739
    %v4742 = vmul.f32 %v4640, %v4740
    %v4743 = vmul.f32 %v4742, %v469
    %4745 = vrot.lane.b32.xlu0 %v4743, 98
    %v4746 = vpop.permute.xlu0 %4745
    %v4748 = vsel %vm201, %v4746, 0.0
    %4749 = vadd.xlane.f32.xlu0 %v4748
    %v4750 = vpop.xlane.xlu0 %4749
    %v4751 = vadd.f32 %v4750, %v77
    %4752 = vrot.lane.b32.xlu0 %v4644, 2
    %v4753 = vpop.permute.xlu0 %4752
    %v4755 = vmul.f32 %v4642, %v4753
    %v4756 = vsub.f32 1.0, %v4644
    %v4757 = vmul.f32 %v4756, %v4751
    %4759 = vrot.lane.b32.xlu0 %v4757, 2
    %v4760 = vpop.permute.xlu0 %4759
    %v4762 = vadd.f32 %v4755, %v4760
    %4764 = vrot.lane.b32.xlu0 %v4751, 2
    %v4765 = vpop.permute.xlu0 %4764
    %v4767 = vsub.f32 %v4762, %v4765
    %v4768 = vand.u32 2147483647, %v4767
    %v4769 = vmul.f32 %v4768, %v4753
    %4771 = vrot.lane.b32.xlu0 %v4769, 126
    %v4772 = vpop.permute.xlu0 %4771
    %v4774 = vsel %vm228, %v4772, 0.0
    %4775 = vadd.xlane.f32.xlu0 %v4774
    %v4776 = vpop.xlane.xlu0 %4775
    %v4777 = vrot.slane %v4776, 4
    %v4778 = vadd.f32 %v4776, %v4777
    %v4779 = vrot.slane %v4778, 2
    %v4780 = vadd.f32 %v4778, %v4779
    %v4781 = vrot.slane %v4780, 1
    %v4782 = vadd.f32 %v4780, %v4781
    %s4783 = vtos %v4782
    %v4784 = vstv %s4783
    %v4785 = vsel %vm228, %v4644, 0.0
    %4786 = vadd.xlane.f32.xlu0 %v4785
    %v4787 = vpop.xlane.xlu0 %4786
    %v4788 = vrot.slane %v4787, 4
    %v4789 = vadd.f32 %v4787, %v4788
    %v4790 = vrot.slane %v4789, 2
    %v4791 = vadd.f32 %v4789, %v4790
    %v4792 = vrot.slane %v4791, 1
    %v4793 = vadd.f32 %v4791, %v4792
    %s4794 = vtos %v4793
    %v4795 = vstv %s4794
    %v4796 = vadd.f32 %v4795, 1e-05
    %v4797 = vrcp.pop %v4796
    %v4798 = vmul.f32 %v4784, %v4797
    %v4799 = vadd.f32 %v4532, %v4798
    %v4800 = vsub.f32 %v4762, %v4642
    %4802 = vset.pattern.permute.xlu0 2
    %4803 = vperm.xlu0 %4802, %v4800
    %v4804 = vpop.permute.xlu0 %4803
    %v4806 = vmul.f32 %v4804, %v91
    %v4807 = vadd.f32 %v4726, %v4806
    %4809 = vrot.lane.b32.xlu0 %v4742, 98
    %v4810 = vpop.permute.xlu0 %4809
    %v4811 = vsel %vm263, %v4810, 0
    %4813 = vmatprep.subr.mxu0 0.0
    %4814 = vmatpush1.msra.mxu0 0.0
    %4815 = vmatprep.subr.mxu0 0.0
    %4816 = vmatpush1.msra.mxu0 0.0
    %4817 = vmatprep.subr.mxu0 0.0
    %4818 = vmatpush1.msra.mxu0 0.0
    %4819 = vmatprep.subr.mxu0 0.0
    %4820 = vmatpush1.msra.mxu0 0.0
    %4821 = vmatprep.subr.mxu0 0.0
    %4822 = vmatpush1.msra.mxu0 0.0
    %4823 = vmatprep.subr.mxu0 0.0
    %4824 = vmatpush1.msra.mxu0 0.0
    %4825 = vmatprep.subr.mxu0 0.0
    %4826 = vmatpush1.msra.mxu0 0.0
    %4827 = vmatprep.subr.mxu0 0.0
    %4828 = vmatpush1.msra.mxu0 0.0
    %4829 = vmatprep.subr.mxu0 0.0
    %4830 = vmatpush1.msra.mxu0 0.0
    %4831 = vmatprep.subr.mxu0 0.0
    %4832 = vmatpush1.msra.mxu0 0.0
    %4833 = vmatprep.subr.mxu0 0.0
    %4834 = vmatpush1.msra.mxu0 0.0
    %4835 = vmatprep.subr.mxu0 0.0
    %4836 = vmatpush1.msra.mxu0 0.0
    %4837 = vmatprep.subr.mxu0 0.0
    %4838 = vmatpush1.msra.mxu0 0.0
    %4839 = vmatprep.subr.mxu0 0.0
    %4840 = vmatpush1.msra.mxu0 0.0
    %4841 = vmatprep.subr.mxu0 0.0
    %4842 = vmatpush1.msra.mxu0 %v269
    %4843 = vmatprep.subr.mxu0 0.0
    %4844 = vmatpush1.msra.mxu0 %v49
    %4845 = vmatprep.subr.mxu0 0.0
    %4846 = vmatpush2.msra.mxu0 0.0
    %4847 = vmatprep.subr.mxu0 0.0
    %4848 = vmatpush2.msra.mxu0 0.0
    %4849 = vmatprep.subr.mxu0 0.0
    %4850 = vmatpush2.msra.mxu0 0.0
    %4851 = vmatprep.subr.mxu0 0.0
    %4852 = vmatpush2.msra.mxu0 0.0
    %4853 = vmatprep.subr.mxu0 0.0
    %4854 = vmatpush2.msra.mxu0 0.0
    %4855 = vmatprep.subr.mxu0 0.0
    %4856 = vmatpush2.msra.mxu0 0.0
    %4857 = vmatprep.subr.mxu0 0.0
    %4858 = vmatpush2.msra.mxu0 0.0
    %4859 = vmatprep.subr.mxu0 0.0
    %4860 = vmatpush2.msra.mxu0 0.0
    %4861 = vmatprep.subr.mxu0 0.0
    %4862 = vmatpush2.msra.mxu0 0.0
    %4863 = vmatprep.subr.mxu0 0.0
    %4864 = vmatpush2.msra.mxu0 0.0
    %4865 = vmatprep.subr.mxu0 0.0
    %4866 = vmatpush2.msra.mxu0 0.0
    %4867 = vmatprep.subr.mxu0 0.0
    %4868 = vmatpush2.msra.mxu0 0.0
    %4869 = vmatprep.subr.mxu0 0.0
    %4870 = vmatpush2.msra.mxu0 0.0
    %4871 = vmatprep.subr.mxu0 0.0
    %4872 = vmatpush2.msra.mxu0 0.0
    %4873 = vmatprep.subr.mxu0 0.0
    %4874 = vmatpush2.msra.mxu0 0.0
    %4875 = vmatprep.subr.mxu0 0.0
    %4876 = vmatpush2.msra.mxu0 0.0
    %4877 = vmatprep.mubr.f32.mxu0 0.0
    %4878 = vmatmul.mubr.f32.gmra.mxu0 %v4811
    %v4879 = vpop.f32.mrf.mxu0
    %v4880 = vadd.f32 0.0, %v4879
    %v4881 = vpop.f32.mrf.mxu0
    %4882 = vdwg.mxu0
    %v4883 = vadd.f32 %v4807, %v4880
    %v4884 = vxor.u32 %v4883, 2147483648
    %v4885 = vmul.f32 %v4884, 1.442695
    %v4886 = vpow.pop %v4885
    %v4887 = vadd.f32 %v4886, 1.0
    %v4888 = vrcp.pop %v4887
    %v4889 = vmul.f32 1.0, %v4888
    %v4890 = vtanh.pop %v4883
    %v4891 = vmul.f32 %v4889, %v4634
    %4893 = vrot.lane.b32.xlu0 %v4890, 108
    %v4894 = vpop.permute.xlu0 %4893
    %v4896 = vmul.f32 %v4889, %v4894
    %4898 = vrot.lane.b32.xlu0 %v4896, 10
    %v4899 = vpop.permute.xlu0 %4898
    %v4901 = vadd.f32 %v4891, %v4899
    %v4902 = vtanh.pop %v4901
    %4904 = vrot.lane.b32.xlu0 %v4902, 20
    %v4905 = vpop.permute.xlu0 %4904
    %v4907 = vmul.f32 %v4889, %v4905
    %s4908 = scalar_lea.vmem %s0, 36
    %v4909 = vld [vmem:[%s4908] sm:$0x3]
    %s4910 = scalar_lea.vmem %s1, 36
    %v4911 = vld [vmem:[%s4910] sm:$0x3]
    %s4912 = scalar_lea.vmem %s2, 36
    %v4913 = vld [vmem:[%s4912] sm:$0x3]
    %4915 = vset.pattern.permute.xlu0 0
    %4916 = vperm.xlu0 %4915, %v4911
    %v4917 = vpop.permute.xlu0 %4916
    %v4919 = vmul.f32 %v4917, %v84
    %v4921 = vsel %vm109, %v4909, 0
    %4923 = vmatprep.subr.mxu0 0.0
    %4924 = vmatpush1.msra.mxu0 0.0
    %4925 = vmatprep.subr.mxu0 0.0
    %4926 = vmatpush1.msra.mxu0 0.0
    %4927 = vmatprep.subr.mxu0 0.0
    %4928 = vmatpush1.msra.mxu0 0.0
    %4929 = vmatprep.subr.mxu0 0.0
    %4930 = vmatpush1.msra.mxu0 0.0
    %4931 = vmatprep.subr.mxu0 0.0
    %4932 = vmatpush1.msra.mxu0 0.0
    %4933 = vmatprep.subr.mxu0 0.0
    %4934 = vmatpush1.msra.mxu0 0.0
    %4935 = vmatprep.subr.mxu0 0.0
    %4936 = vmatpush1.msra.mxu0 0.0
    %4937 = vmatprep.subr.mxu0 0.0
    %4938 = vmatpush1.msra.mxu0 0.0
    %4939 = vmatprep.subr.mxu0 0.0
    %4940 = vmatpush1.msra.mxu0 0.0
    %4941 = vmatprep.subr.mxu0 0.0
    %4942 = vmatpush1.msra.mxu0 0.0
    %4943 = vmatprep.subr.mxu0 0.0
    %4944 = vmatpush1.msra.mxu0 0.0
    %4945 = vmatprep.subr.mxu0 0.0
    %4946 = vmatpush1.msra.mxu0 0.0
    %4947 = vmatprep.subr.mxu0 0.0
    %4948 = vmatpush1.msra.mxu0 0.0
    %4949 = vmatprep.subr.mxu0 0.0
    %4950 = vmatpush1.msra.mxu0 0.0
    %4951 = vmatprep.subr.mxu0 0.0
    %4952 = vmatpush1.msra.mxu0 %v115
    %4953 = vmatprep.subr.mxu0 0.0
    %4954 = vmatpush1.msra.mxu0 %v47
    %4955 = vmatprep.subr.mxu0 0.0
    %4956 = vmatpush2.msra.mxu0 0.0
    %4957 = vmatprep.subr.mxu0 0.0
    %4958 = vmatpush2.msra.mxu0 0.0
    %4959 = vmatprep.subr.mxu0 0.0
    %4960 = vmatpush2.msra.mxu0 0.0
    %4961 = vmatprep.subr.mxu0 0.0
    %4962 = vmatpush2.msra.mxu0 0.0
    %4963 = vmatprep.subr.mxu0 0.0
    %4964 = vmatpush2.msra.mxu0 0.0
    %4965 = vmatprep.subr.mxu0 0.0
    %4966 = vmatpush2.msra.mxu0 0.0
    %4967 = vmatprep.subr.mxu0 0.0
    %4968 = vmatpush2.msra.mxu0 0.0
    %4969 = vmatprep.subr.mxu0 0.0
    %4970 = vmatpush2.msra.mxu0 0.0
    %4971 = vmatprep.subr.mxu0 0.0
    %4972 = vmatpush2.msra.mxu0 0.0
    %4973 = vmatprep.subr.mxu0 0.0
    %4974 = vmatpush2.msra.mxu0 0.0
    %4975 = vmatprep.subr.mxu0 0.0
    %4976 = vmatpush2.msra.mxu0 0.0
    %4977 = vmatprep.subr.mxu0 0.0
    %4978 = vmatpush2.msra.mxu0 0.0
    %4979 = vmatprep.subr.mxu0 0.0
    %4980 = vmatpush2.msra.mxu0 0.0
    %4981 = vmatprep.subr.mxu0 0.0
    %4982 = vmatpush2.msra.mxu0 0.0
    %4983 = vmatprep.subr.mxu0 0.0
    %4984 = vmatpush2.msra.mxu0 0.0
    %4985 = vmatprep.subr.mxu0 0.0
    %4986 = vmatpush2.msra.mxu0 0.0
    %4987 = vmatprep.mubr.f32.mxu0 0.0
    %4988 = vmatmul.mubr.f32.gmra.mxu0 %v4921
    %v4989 = vpop.f32.mrf.mxu0
    %v4990 = vadd.f32 %v4919, %v4989
    %v4991 = vpop.f32.mrf.mxu0
    %4992 = vdwg.mxu0
    %v4993 = vadd.f32 %v4990, %v98
    %4995 = vset.pattern.permute.xlu0 0
    %4996 = vperm.xlu0 %4995, %v4913
    %v4997 = vpop.permute.xlu0 %4996
    %v4999 = vmul.f32 %v4997, %v56
    %v5000 = vadd.f32 %v4999, %v63
    %v5001 = vmax.f32 %v5000, 0.0
    %v5002 = vsub.f32 0.0, %v5001
    %v5003 = vmul.f32 %v5002, 1.442695
    %v5004 = vpow.pop %v5003
    %5006 = vrot.lane.b32.xlu0 %v5004, 30
    %v5007 = vpop.permute.xlu0 %5006
    %v5009 = vmul.f32 %v4907, %v5007
    %v5010 = vmul.f32 %v5009, %v469
    %5012 = vrot.lane.b32.xlu0 %v5010, 98
    %v5013 = vpop.permute.xlu0 %5012
    %v5015 = vsel %vm201, %v5013, 0.0
    %5016 = vadd.xlane.f32.xlu0 %v5015
    %v5017 = vpop.xlane.xlu0 %5016
    %v5018 = vadd.f32 %v5017, %v77
    %5019 = vrot.lane.b32.xlu0 %v4911, 2
    %v5020 = vpop.permute.xlu0 %5019
    %v5022 = vmul.f32 %v4909, %v5020
    %v5023 = vsub.f32 1.0, %v4911
    %v5024 = vmul.f32 %v5023, %v5018
    %5026 = vrot.lane.b32.xlu0 %v5024, 2
    %v5027 = vpop.permute.xlu0 %5026
    %v5029 = vadd.f32 %v5022, %v5027
    %5031 = vrot.lane.b32.xlu0 %v5018, 2
    %v5032 = vpop.permute.xlu0 %5031
    %v5034 = vsub.f32 %v5029, %v5032
    %v5035 = vand.u32 2147483647, %v5034
    %v5036 = vmul.f32 %v5035, %v5020
    %5038 = vrot.lane.b32.xlu0 %v5036, 126
    %v5039 = vpop.permute.xlu0 %5038
    %v5041 = vsel %vm228, %v5039, 0.0
    %5042 = vadd.xlane.f32.xlu0 %v5041
    %v5043 = vpop.xlane.xlu0 %5042
    %v5044 = vrot.slane %v5043, 4
    %v5045 = vadd.f32 %v5043, %v5044
    %v5046 = vrot.slane %v5045, 2
    %v5047 = vadd.f32 %v5045, %v5046
    %v5048 = vrot.slane %v5047, 1
    %v5049 = vadd.f32 %v5047, %v5048
    %s5050 = vtos %v5049
    %v5051 = vstv %s5050
    %v5052 = vsel %vm228, %v4911, 0.0
    %5053 = vadd.xlane.f32.xlu0 %v5052
    %v5054 = vpop.xlane.xlu0 %5053
    %v5055 = vrot.slane %v5054, 4
    %v5056 = vadd.f32 %v5054, %v5055
    %v5057 = vrot.slane %v5056, 2
    %v5058 = vadd.f32 %v5056, %v5057
    %v5059 = vrot.slane %v5058, 1
    %v5060 = vadd.f32 %v5058, %v5059
    %s5061 = vtos %v5060
    %v5062 = vstv %s5061
    %v5063 = vadd.f32 %v5062, 1e-05
    %v5064 = vrcp.pop %v5063
    %v5065 = vmul.f32 %v5051, %v5064
    %v5066 = vadd.f32 %v4799, %v5065
    %v5067 = vsub.f32 %v5029, %v4909
    %5069 = vset.pattern.permute.xlu0 2
    %5070 = vperm.xlu0 %5069, %v5067
    %v5071 = vpop.permute.xlu0 %5070
    %v5073 = vmul.f32 %v5071, %v91
    %v5074 = vadd.f32 %v4993, %v5073
    %5076 = vrot.lane.b32.xlu0 %v5009, 98
    %v5077 = vpop.permute.xlu0 %5076
    %v5078 = vsel %vm263, %v5077, 0
    %5080 = vmatprep.subr.mxu0 0.0
    %5081 = vmatpush1.msra.mxu0 0.0
    %5082 = vmatprep.subr.mxu0 0.0
    %5083 = vmatpush1.msra.mxu0 0.0
    %5084 = vmatprep.subr.mxu0 0.0
    %5085 = vmatpush1.msra.mxu0 0.0
    %5086 = vmatprep.subr.mxu0 0.0
    %5087 = vmatpush1.msra.mxu0 0.0
    %5088 = vmatprep.subr.mxu0 0.0
    %5089 = vmatpush1.msra.mxu0 0.0
    %5090 = vmatprep.subr.mxu0 0.0
    %5091 = vmatpush1.msra.mxu0 0.0
    %5092 = vmatprep.subr.mxu0 0.0
    %5093 = vmatpush1.msra.mxu0 0.0
    %5094 = vmatprep.subr.mxu0 0.0
    %5095 = vmatpush1.msra.mxu0 0.0
    %5096 = vmatprep.subr.mxu0 0.0
    %5097 = vmatpush1.msra.mxu0 0.0
    %5098 = vmatprep.subr.mxu0 0.0
    %5099 = vmatpush1.msra.mxu0 0.0
    %5100 = vmatprep.subr.mxu0 0.0
    %5101 = vmatpush1.msra.mxu0 0.0
    %5102 = vmatprep.subr.mxu0 0.0
    %5103 = vmatpush1.msra.mxu0 0.0
    %5104 = vmatprep.subr.mxu0 0.0
    %5105 = vmatpush1.msra.mxu0 0.0
    %5106 = vmatprep.subr.mxu0 0.0
    %5107 = vmatpush1.msra.mxu0 0.0
    %5108 = vmatprep.subr.mxu0 0.0
    %5109 = vmatpush1.msra.mxu0 %v269
    %5110 = vmatprep.subr.mxu0 0.0
    %5111 = vmatpush1.msra.mxu0 %v49
    %5112 = vmatprep.subr.mxu0 0.0
    %5113 = vmatpush2.msra.mxu0 0.0
    %5114 = vmatprep.subr.mxu0 0.0
    %5115 = vmatpush2.msra.mxu0 0.0
    %5116 = vmatprep.subr.mxu0 0.0
    %5117 = vmatpush2.msra.mxu0 0.0
    %5118 = vmatprep.subr.mxu0 0.0
    %5119 = vmatpush2.msra.mxu0 0.0
    %5120 = vmatprep.subr.mxu0 0.0
    %5121 = vmatpush2.msra.mxu0 0.0
    %5122 = vmatprep.subr.mxu0 0.0
    %5123 = vmatpush2.msra.mxu0 0.0
    %5124 = vmatprep.subr.mxu0 0.0
    %5125 = vmatpush2.msra.mxu0 0.0
    %5126 = vmatprep.subr.mxu0 0.0
    %5127 = vmatpush2.msra.mxu0 0.0
    %5128 = vmatprep.subr.mxu0 0.0
    %5129 = vmatpush2.msra.mxu0 0.0
    %5130 = vmatprep.subr.mxu0 0.0
    %5131 = vmatpush2.msra.mxu0 0.0
    %5132 = vmatprep.subr.mxu0 0.0
    %5133 = vmatpush2.msra.mxu0 0.0
    %5134 = vmatprep.subr.mxu0 0.0
    %5135 = vmatpush2.msra.mxu0 0.0
    %5136 = vmatprep.subr.mxu0 0.0
    %5137 = vmatpush2.msra.mxu0 0.0
    %5138 = vmatprep.subr.mxu0 0.0
    %5139 = vmatpush2.msra.mxu0 0.0
    %5140 = vmatprep.subr.mxu0 0.0
    %5141 = vmatpush2.msra.mxu0 0.0
    %5142 = vmatprep.subr.mxu0 0.0
    %5143 = vmatpush2.msra.mxu0 0.0
    %5144 = vmatprep.mubr.f32.mxu0 0.0
    %5145 = vmatmul.mubr.f32.gmra.mxu0 %v5078
    %v5146 = vpop.f32.mrf.mxu0
    %v5147 = vadd.f32 0.0, %v5146
    %v5148 = vpop.f32.mrf.mxu0
    %5149 = vdwg.mxu0
    %v5150 = vadd.f32 %v5074, %v5147
    %v5151 = vxor.u32 %v5150, 2147483648
    %v5152 = vmul.f32 %v5151, 1.442695
    %v5153 = vpow.pop %v5152
    %v5154 = vadd.f32 %v5153, 1.0
    %v5155 = vrcp.pop %v5154
    %v5156 = vmul.f32 1.0, %v5155
    %v5157 = vtanh.pop %v5150
    %v5158 = vmul.f32 %v5156, %v4901
    %5160 = vrot.lane.b32.xlu0 %v5157, 108
    %v5161 = vpop.permute.xlu0 %5160
    %v5163 = vmul.f32 %v5156, %v5161
    %5165 = vrot.lane.b32.xlu0 %v5163, 10
    %v5166 = vpop.permute.xlu0 %5165
    %v5168 = vadd.f32 %v5158, %v5166
    %v5169 = vtanh.pop %v5168
    %5171 = vrot.lane.b32.xlu0 %v5169, 20
    %v5172 = vpop.permute.xlu0 %5171
    %v5174 = vmul.f32 %v5156, %v5172
    %s5175 = scalar_lea.vmem %s0, 38
    %v5176 = vld [vmem:[%s5175] sm:$0x3]
    %s5177 = scalar_lea.vmem %s1, 38
    %v5178 = vld [vmem:[%s5177] sm:$0x3]
    %s5179 = scalar_lea.vmem %s2, 38
    %v5180 = vld [vmem:[%s5179] sm:$0x3]
    %5182 = vset.pattern.permute.xlu0 0
    %5183 = vperm.xlu0 %5182, %v5180
    %v5184 = vpop.permute.xlu0 %5183
    %v5186 = vmul.f32 %v5184, %v56
    %v5187 = vadd.f32 %v5186, %v63
    %v5188 = vmax.f32 %v5187, 0.0
    %v5189 = vsub.f32 0.0, %v5188
    %v5190 = vmul.f32 %v5189, 1.442695
    %v5191 = vpow.pop %v5190
    %5193 = vrot.lane.b32.xlu0 %v5191, 30
    %v5194 = vpop.permute.xlu0 %5193
    %v5196 = vmul.f32 %v5174, %v5194
    %v5197 = vmul.f32 %v5196, %v469
    %5199 = vrot.lane.b32.xlu0 %v5197, 98
    %v5200 = vpop.permute.xlu0 %5199
    %v5202 = vsel %vm201, %v5200, 0.0
    %5203 = vadd.xlane.f32.xlu0 %v5202
    %v5204 = vpop.xlane.xlu0 %5203
    %v5205 = vadd.f32 %v5204, %v77
    %5207 = vrot.lane.b32.xlu0 %v5178, 2
    %v5208 = vpop.permute.xlu0 %5207
    %v5210 = vmul.f32 %v5176, %v5208
    %v5211 = vsub.f32 1.0, %v5178
    %v5212 = vmul.f32 %v5211, %v5205
    %5214 = vrot.lane.b32.xlu0 %v5212, 2
    %v5215 = vpop.permute.xlu0 %5214
    %v5217 = vadd.f32 %v5210, %v5215
    %5219 = vrot.lane.b32.xlu0 %v5205, 2
    %v5220 = vpop.permute.xlu0 %5219
    %v5222 = vsub.f32 %v5217, %v5220
    %v5223 = vand.u32 2147483647, %v5222
    %v5224 = vmul.f32 %v5223, %v5208
    %5226 = vrot.lane.b32.xlu0 %v5224, 126
    %v5227 = vpop.permute.xlu0 %5226
    %v5229 = vsel %vm228, %v5227, 0.0
    %5230 = vadd.xlane.f32.xlu0 %v5229
    %v5231 = vpop.xlane.xlu0 %5230
    %v5232 = vrot.slane %v5231, 4
    %v5233 = vadd.f32 %v5231, %v5232
    %v5234 = vrot.slane %v5233, 2
    %v5235 = vadd.f32 %v5233, %v5234
    %v5236 = vrot.slane %v5235, 1
    %v5237 = vadd.f32 %v5235, %v5236
    %s5238 = vtos %v5237
    %v5239 = vstv %s5238
    %v5240 = vsel %vm228, %v5178, 0.0
    %5241 = vadd.xlane.f32.xlu0 %v5240
    %v5242 = vpop.xlane.xlu0 %5241
    %v5243 = vrot.slane %v5242, 4
    %v5244 = vadd.f32 %v5242, %v5243
    %v5245 = vrot.slane %v5244, 2
    %v5246 = vadd.f32 %v5244, %v5245
    %v5247 = vrot.slane %v5246, 1
    %v5248 = vadd.f32 %v5246, %v5247
    %s5249 = vtos %v5248
    %v5250 = vstv %s5249
    %v5251 = vadd.f32 %v5250, 1e-05
    %v5252 = vrcp.pop %v5251
    %v5253 = vmul.f32 %v5239, %v5252
    %v5254 = vadd.f32 %v5066, %v5253
    %vm5255 = vcmask 0
    %5256 = vst.msk [vmem:[#allocation3] sm:$0x1] %vm5255, %v5254
    %5258 = vrot.lane.b32.xlu0 %v216, 126
    %v5259 = vpop.permute.xlu0 %5258
    %5262 = vrot.lane.b32.xlu0 %v490, 127
    %v5263 = vpop.permute.xlu0 %5262
    %5266 = vrot.lane.b32.xlu0 %v1024, 1
    %v5267 = vpop.permute.xlu0 %5266
    %5270 = vrot.lane.b32.xlu0 %v1291, 2
    %v5271 = vpop.permute.xlu0 %5270
    %5274 = vrot.lane.b32.xlu0 %v1558, 3
    %v5275 = vpop.permute.xlu0 %5274
    %5278 = vrot.lane.b32.xlu0 %v1825, 4
    %v5279 = vpop.permute.xlu0 %5278
    %5282 = vrot.lane.b32.xlu0 %v2092, 5
    %v5283 = vpop.permute.xlu0 %5282
    %5286 = vrot.lane.b32.xlu0 %v2359, 6
    %v5287 = vpop.permute.xlu0 %5286
    %5290 = vrot.lane.b32.xlu0 %v2626, 7
    %v5291 = vpop.permute.xlu0 %5290
    %5294 = vrot.lane.b32.xlu0 %v2893, 8
    %v5295 = vpop.permute.xlu0 %5294
    %5298 = vrot.lane.b32.xlu0 %v3160, 9
    %v5299 = vpop.permute.xlu0 %5298
    %5302 = vrot.lane.b32.xlu0 %v3427, 10
    %v5303 = vpop.permute.xlu0 %5302
    %5306 = vrot.lane.b32.xlu0 %v3694, 11
    %v5307 = vpop.permute.xlu0 %5306
    %5310 = vrot.lane.b32.xlu0 %v3961, 12
    %v5311 = vpop.permute.xlu0 %5310
    %5314 = vrot.lane.b32.xlu0 %v4228, 13
    %v5315 = vpop.permute.xlu0 %5314
    %vm5317 = vcmask 7168
    %v5318 = vsel %vm5317, %v5259, %v5263
    %vm5319 = vcmask 15360
    %v5320 = vsel %vm5319, %v5318, %v757
    %vm5321 = vcmask 23552
    %v5322 = vsel %vm5321, %v5320, %v5267
    %vm5323 = vcmask 31744
    %v5324 = vsel %vm5323, %v5322, %v5271
    %vm5325 = vcmask 39936
    %v5326 = vsel %vm5325, %v5324, %v5275
    %vm5327 = vcmask 48128
    %v5328 = vsel %vm5327, %v5326, %v5279
    %vm5329 = vcmask 56320
    %v5330 = vsel %vm5329, %v5328, %v5283
    %vm5331 = vcmask 64512
    %v5332 = vsel %vm5331, %v5330, %v5287
    %vm5333 = vcmask 72704
    %v5334 = vsel %vm5333, %v5332, %v5291
    %v5335 = vsel %vm263, %v5334, %v5295
    %vm5336 = vcmask 89088
    %v5337 = vsel %vm5336, %v5335, %v5299
    %vm5338 = vcmask 97280
    %v5339 = vsel %vm5338, %v5337, %v5303
    %vm5340 = vcmask 105472
    %v5341 = vsel %vm5340, %v5339, %v5307
    %v5342 = vsel %vm109, %v5341, %v5311
    %vm5343 = vcmask 121856
    %v5344 = vsel %vm5343, %v5342, %v5315
    %5346 = vrot.lane.b32.xlu0 %v4495, 126
    %v5347 = vpop.permute.xlu0 %5346
    %5350 = vrot.lane.b32.xlu0 %v4762, 127
    %v5351 = vpop.permute.xlu0 %5350
    %5354 = vrot.lane.b32.xlu0 %v5217, 1
    %v5355 = vpop.permute.xlu0 %5354
    %v5357 = vsel %vm5317, %v5347, %v5351
    %v5358 = vsel %vm5319, %v5357, %v5029
    %v5359 = vsel %vm5321, %v5358, %v5355
    %5361 = vrot.lane.b32.xlu0 %v5359, 16
    %v5362 = vpop.permute.xlu0 %5361
    %vm5364 = vcmask 130048
    %v5365 = vsel %vm5364, %v5344, %v5362
    %vm5366 = vcmask 156672
    %5367 = vst.msk [vmem:[#allocation5] sm:$0x3] %vm5366, %v5365
    // Predicated region
    $region50: #{tpu_custom_call.1} parent=1 // pred_check
      _
    $region51: #{tpu_custom_call.1} parent=1 // pred_check_branch
      %5369 = sbr.rel (0) target = $region53
    $region52: #{tpu_custom_call.1} parent=1 // pred_region
      %s5371 = ssub.s32 16, 16
      %5372 = vsyncadd [#allocation4], %s5371
      %s5374 = sshll.u32 [#allocation3], 4
      %s5375 = int_to_ptr.vmem [resolvable:$true] %s5374
      %5377 = dma.vmem_to_hbm [thread:$0]  %s5375, 16, %s12, [#allocation4]
    $region53: #{tpu_custom_call.1} parent=1 // pred_fallthru
      _
    // Predicated region
    $region54: #{tpu_custom_call.1} parent=1 // pred_check
      _
    $region55: #{tpu_custom_call.1} parent=1 // pred_check_branch
      %5379 = sbr.rel (0) target = $region57
    $region56: #{tpu_custom_call.1} parent=1 // pred_region
      %s5381 = ssub.s32 32, 32
      %5382 = vsyncadd [#allocation6], %s5381
      %s5384 = sshll.u32 [#allocation5], 4
      %s5385 = int_to_ptr.vmem [resolvable:$true] %s5384
      %5387 = dma.vmem_to_hbm [thread:$0]  %s5385, 32, %s13, [#allocation6]
    $region57: #{tpu_custom_call.1} parent=1 // pred_fallthru
      _
    // Predicated region
    $region58: #{tpu_custom_call.1} parent=1 // pred_check
      _
    $region59: #{tpu_custom_call.1} parent=1 // pred_check_branch
      %5389 = sbr.rel (0) target = $region61
    $region60: #{tpu_custom_call.1} parent=1 // pred_region
      %5390 = dma.done [#allocation4], 16
    $region61: #{tpu_custom_call.1} parent=1 // pred_fallthru
      _
    // Predicated region
    $region62: #{tpu_custom_call.1} parent=1 // pred_check
      _
    $region63: #{tpu_custom_call.1} parent=1 // pred_check_branch
      %5392 = sbr.rel (0) target = $region65
    $region64: #{tpu_custom_call.1} parent=1 // pred_region
      %5393 = dma.done [#allocation6], 32
    $region65: #{tpu_custom_call.1} parent=1 // pred_fallthru
      _
    %5394 = vsyncpa [#allocation4], 1
    %5395 = vsyncpa [#allocation6], 1

</llo_original>
